<compile_context>
chip_gen: v7x
topology: tpu7x:2x2x1
jax: 0.10.0
libtpu: 0.0.40
codegen_flags: <defaults>
</compile_context>

<pallas_src>
import jax
import jax.numpy as jnp
from jax.experimental import pallas as pl
from jax.experimental.pallas import tpu as pltpu


_ROW_CHUNK = 8   # output rows per inner chunk -> matmul M = _ROW_CHUNK * W
_MID_PAD = 16    # left column pad of the bf16 mid scratch (sublane-aligned store)


def _conv3x3_fused(src_ref, cbase, w_ref, b_ref, H, W, Cp, emit):
    """3x3 stride-1 conv over a zero-padded bf16 source ref.

    Output column c, kernel column kw reads source column cbase + c + kw;
    rows have a symmetric 1-row zero border.  `w_ref` is (3, 3*Cp, Cp) bf16
    with BN scale folded in and the K axis ordered (kh, cin); `b_ref` is
    (1, Cp) f32.  For each chunk of output rows, `emit(r0, ch, z)` is called
    with the f32 pre-activation z of shape (ch*W, Cp).
    """
    for r0 in range(0, H, _ROW_CHUNK):
        ch = min(_ROW_CHUNK, H - r0)
        acc = jnp.zeros((ch * W, Cp), jnp.float32)
        for kw in range(3):
            # one column (sublane) shift per kw; row shifts are free major-axis
            # slices.  The 3 kh taps are fused along lanes -> K = 3*Cp matmul.
            xs = src_ref[r0:r0 + ch + 2, cbase + kw:cbase + kw + W, :]
            patch = jnp.concatenate(
                [xs[0:ch], xs[1:ch + 1], xs[2:ch + 2]], axis=-1
            ).reshape(ch * W, 3 * Cp)
            acc = acc + jnp.dot(patch, w_ref[kw],
                                preferred_element_type=jnp.float32)
        emit(r0, ch, acc + b_ref[...])


def basic_block_kernel(xpad_ref, w1_ref, b1_ref, w2_ref, b2_ref,
                       out_ref, mid_ref):
    Hp, Wp, Cp = xpad_ref.shape
    H, W = Hp - 2, Wp - 2
    Wm = mid_ref.shape[1]

    # Zero the mid borders with sublane-aligned 16-wide stripes / full rows;
    # the interior [1:H+1, _MID_PAD:_MID_PAD+W, :] is fully overwritten by
    # conv1 below.  (Done every grid step -> no cross-step scratch state is
    # assumed; safe with a megacore-parallel batch axis.)
    mid_ref[:, 0:_MID_PAD, :] = jnp.zeros((Hp, _MID_PAD, Cp), jnp.bfloat16)
    mid_ref[:, _MID_PAD + W:Wm, :] = jnp.zeros((Hp, Wm - _MID_PAD - W, Cp),
                                               jnp.bfloat16)
    mid_ref[0:1, :, :] = jnp.zeros((1, Wm, Cp), jnp.bfloat16)
    mid_ref[Hp - 1:Hp, :, :] = jnp.zeros((1, Wm, Cp), jnp.bfloat16)

    # ---- conv1 + bn1 (scale folded into weights) + relu -> bf16 mid scratch ----
    def emit1(r0, ch, z):
        act = jnp.maximum(z, 0.0).astype(jnp.bfloat16)
        mid_ref[1 + r0:1 + r0 + ch, _MID_PAD:_MID_PAD + W, :] = \
            act.reshape(ch, W, Cp)

    _conv3x3_fused(xpad_ref, 0, w1_ref, b1_ref, H, W, Cp, emit1)

    # ---- conv2 + bn2 + identity residual + relu -> output ----
    def emit2(r0, ch, z):
        # residual comes from the interior of the already-resident padded
        # input block (VMEM read, no extra HBM traffic); add/relu in f32.
        res = xpad_ref[1 + r0:1 + r0 + ch, 1:1 + W, :].astype(jnp.float32)
        out = jnp.maximum(z + res.reshape(ch * W, Cp), 0.0)
        out_ref[r0:r0 + ch, :, :] = out.reshape(ch, W, Cp)

    _conv3x3_fused(mid_ref, _MID_PAD - 1, w2_ref, b2_ref, H, W, Cp, emit2)


def basic_block_pallas(x_nchw, params, eps=1e-5):
    w1, g1, b1, m1, v1, w2, g2, b2, m2, v2 = params
    N, C, H, W = x_nchw.shape
    Cout = w1.shape[0]
    assert Cout == C, "identity shortcut requires inplanes == planes (downsample=None, stride=1)"

    Cp = ((max(C, Cout) + 127) // 128) * 128     # lane-dense channel padding
    Wm = _MID_PAD + ((W + 1 + 15) // 16) * 16    # mid scratch width (aligned pads)

    # NHWC, channel-padded, spatially 1-padded, staged to HBM in bf16.
    x = jnp.transpose(x_nchw, (0, 2, 3, 1)).astype(jnp.float32)
    x = jnp.pad(x, ((0, 0), (0, 0), (0, 0), (0, Cp - C)))
    x_pad = jnp.pad(x, ((0, 0), (1, 1), (1, 1), (0, 0))).astype(jnp.bfloat16)

    def fold(w, g, b, m, v):
        # torch conv weight (Cout, Cin, kh, kw) -> (kh, kw, Cin, Cout); fold BN
        # scale along Cout, keep bias separate; then repack to the kh-fused
        # layout (kw, kh*Cp + cin, Cout) so each kw tap is one K=3*Cp matmul.
        s = g / jnp.sqrt(v + eps)                                     # (Cout,)
        wk = jnp.transpose(w, (2, 3, 1, 0)).astype(jnp.float32) * s   # scale Cout
        bias = b - m * s
        ci, co = wk.shape[2], wk.shape[3]
        wp = jnp.zeros((3, 3, Cp, Cp), jnp.float32).at[:, :, :ci, :co].set(wk)
        wfused = jnp.transpose(wp, (1, 0, 2, 3)).reshape(3, 3 * Cp, Cp)
        bp = jnp.zeros((1, Cp), jnp.float32).at[0, :co].set(bias)
        return wfused.astype(jnp.bfloat16), bp

    w1_p, b1_p = fold(w1, g1, b1, m1, v1)
    w2_p, b2_p = fold(w2, g2, b2, m2, v2)

    out_nhwc = pl.pallas_call(
        basic_block_kernel,
        # bf16 output is a drop-in change here if the downstream consumer
        # accepts it (halves store-side HBM traffic); kept f32 to match the
        # PyTorch module's interface.
        out_shape=jax.ShapeDtypeStruct((N, H, W, Cp), jnp.float32),
        grid_spec=pltpu.PrefetchScalarGridSpec(
            num_scalar_prefetch=0,
            grid=(N,),
            in_specs=[
                pl.BlockSpec((None, H + 2, W + 2, Cp), lambda n: (n, 0, 0, 0)),
                pl.BlockSpec((3, 3 * Cp, Cp), lambda n: (0, 0, 0)),
                pl.BlockSpec((1, Cp), lambda n: (0, 0)),
                pl.BlockSpec((3, 3 * Cp, Cp), lambda n: (0, 0, 0)),
                pl.BlockSpec((1, Cp), lambda n: (0, 0)),
            ],
            out_specs=pl.BlockSpec((None, H, W, Cp), lambda n: (n, 0, 0, 0)),
            scratch_shapes=[pltpu.VMEM((H + 2, Wm, Cp), jnp.bfloat16)],
        ),
        compiler_params=pltpu.CompilerParams(
            dimension_semantics=("parallel",),
            vmem_limit_bytes=64 * 1024 * 1024,   # headroom beyond 16/32 MiB defaults
        ),
    )(x_pad, w1_p, b1_p, w2_p, b2_p)

    out = out_nhwc[:, :, :, :C]                  # drop channel pad (provably zero)
    return jnp.transpose(out, (0, 3, 1, 2))      # back to NCHW


def basic_block_ref(x, params, eps=1e-5):
    """Pure-JAX f32 reference (PyTorch eval-mode semantics)."""
    w1, g1, b1, m1, v1, w2, g2, b2, m2, v2 = params

    def conv(x, w):
        return jax.lax.conv_general_dilated(
            x, w, window_strides=(1, 1), padding=((1, 1), (1, 1)),
            dimension_numbers=("NCHW", "OIHW", "NCHW"))

    def bn(x, g, b, m, v):
        g, b, m, v = (t[None, :, None, None] for t in (g, b, m, v))
        return (x - m) / jnp.sqrt(v + eps) * g + b

    out = jax.nn.relu(bn(conv(x, w1), g1, b1, m1, v1))
    out = bn(conv(out, w2), g2, b2, m2, v2)
    return jax.nn.relu(out + x)


if __name__ == "__main__":
    key = jax.random.PRNGKey(0)
    N, C, H, W = 2, 4, 16, 16       # inplanes = planes = 4, stride = 1
    ks = jax.random.split(key, 11)

    x = jax.random.normal(ks[0], (N, C, H, W), jnp.float32)

    fan_in = C * 3 * 3
    w1 = jax.random.normal(ks[1], (C, C, 3, 3), jnp.float32) * (2.0 / fan_in) ** 0.5
    w2 = jax.random.normal(ks[2], (C, C, 3, 3), jnp.float32) * (2.0 / fan_in) ** 0.5
    g1 = 1.0 + 0.1 * jax.random.normal(ks[3], (C,), jnp.float32)
    b1 = 0.1 * jax.random.normal(ks[4], (C,), jnp.float32)
    m1 = 0.1 * jax.random.normal(ks[5], (C,), jnp.float32)
    v1 = jax.random.uniform(ks[6], (C,), jnp.float32, 0.5, 1.5)
    g2 = 1.0 + 0.1 * jax.random.normal(ks[7], (C,), jnp.float32)
    b2 = 0.1 * jax.random.normal(ks[8], (C,), jnp.float32)
    m2 = 0.1 * jax.random.normal(ks[9], (C,), jnp.float32)
    v2 = jax.random.uniform(ks[10], (C,), jnp.float32, 0.5, 1.5)

    params = (w1, g1, b1, m1, v1, w2, g2, b2, m2, v2)

    out = jax.block_until_ready(basic_block_pallas(x, params))
    ref = jax.block_until_ready(basic_block_ref(x, params))

    assert out.shape == (N, C, H, W)
    # bf16 activation staging + bf16 MXU operands (f32 accumulation / epilogue)
    # give ~1e-2 level deviations vs the pure-f32 reference.
    rel_l2 = float(jnp.linalg.norm(out - ref) / jnp.linalg.norm(ref))
    max_abs = float(jnp.max(jnp.abs(out - ref)))
    assert rel_l2 < 2e-2, f"relative L2 error too large: {rel_l2}"
    assert max_abs < 2.5e-1, f"max abs error too large: {max_abs}"
    print("KERNEL_OK")
</pallas_src>

<mosaic_0001>
module attributes {stable_mosaic.version = 11 : i64} {
  func.func @basic_block_kernel(%arg0: i32, %arg1: memref<1x18x18x128xbf16, #tpu.memory_space<vmem>>, %arg2: memref<3x384x128xbf16, #tpu.memory_space<vmem>>, %arg3: memref<1x128xf32, #tpu.memory_space<vmem>>, %arg4: memref<3x384x128xbf16, #tpu.memory_space<vmem>>, %arg5: memref<1x128xf32, #tpu.memory_space<vmem>>, %arg6: memref<1x16x16x128xf32, #tpu.memory_space<vmem>>, %arg7: memref<18x48x128xbf16, #tpu.memory_space<vmem>>) attributes {dimension_semantics = [#tpu.dimension_semantics<parallel>], iteration_bounds = array<i64: 2>, scalar_prefetch = 0 : i64, scratch_operands = 1 : i64, tpu.core_type = #tpu.core_type<tc>, window_params = [{transform_indices = @transform_0, window_bounds = array<i64: 1, 18, 18, 128>}, {pipeline_mode = #tpu.pipeline_mode<synchronous>, transform_indices = @transform_1, window_bounds = array<i64: 3, 384, 128>}, {pipeline_mode = #tpu.pipeline_mode<synchronous>, transform_indices = @transform_2, window_bounds = array<i64: 1, 128>}, {pipeline_mode = #tpu.pipeline_mode<synchronous>, transform_indices = @transform_3, window_bounds = array<i64: 3, 384, 128>}, {pipeline_mode = #tpu.pipeline_mode<synchronous>, transform_indices = @transform_4, window_bounds = array<i64: 1, 128>}, {transform_indices = @transform_5, window_bounds = array<i64: 1, 16, 16, 128>}]} {
    %cst = arith.constant 0.000000e+00 : bf16
    %0 = vector.broadcast %cst : bf16 to vector<18x16x128xbf16>
    %c0 = arith.constant 0 : index
    %c0_0 = arith.constant 0 : index
    %c0_1 = arith.constant 0 : index
    %1 = vector.load %arg7[%c0, %c0_0, %c0_1] : memref<18x48x128xbf16, #tpu.memory_space<vmem>>, vector<18x16x128xbf16>
    tpu.vector_store %arg7[%c0, %c0_0, %c0_1], %0 {strides = array<i32>} : memref<18x48x128xbf16, #tpu.memory_space<vmem>>, vector<18x16x128xbf16>,
    %cst_2 = arith.constant 0.000000e+00 : bf16
    %2 = vector.broadcast %cst_2 : bf16 to vector<18x16x128xbf16>
    %c0_3 = arith.constant 0 : index
    %c32 = arith.constant 32 : index
    %c0_4 = arith.constant 0 : index
    %3 = vector.load %arg7[%c0_3, %c32, %c0_4] : memref<18x48x128xbf16, #tpu.memory_space<vmem>>, vector<18x16x128xbf16>
    tpu.vector_store %arg7[%c0_3, %c32, %c0_4], %2 {strides = array<i32>} : memref<18x48x128xbf16, #tpu.memory_space<vmem>>, vector<18x16x128xbf16>,
    %cst_5 = arith.constant 0.000000e+00 : bf16
    %4 = vector.broadcast %cst_5 : bf16 to vector<1x48x128xbf16>
    %c0_6 = arith.constant 0 : index
    %c0_7 = arith.constant 0 : index
    %c0_8 = arith.constant 0 : index
    %5 = vector.load %arg7[%c0_6, %c0_7, %c0_8] : memref<18x48x128xbf16, #tpu.memory_space<vmem>>, vector<1x48x128xbf16>
    tpu.vector_store %arg7[%c0_6, %c0_7, %c0_8], %4 {strides = array<i32>} : memref<18x48x128xbf16, #tpu.memory_space<vmem>>, vector<1x48x128xbf16>,
    %cst_9 = arith.constant 0.000000e+00 : bf16
    %6 = vector.broadcast %cst_9 : bf16 to vector<1x48x128xbf16>
    %c17 = arith.constant 17 : index
    %c0_10 = arith.constant 0 : index
    %c0_11 = arith.constant 0 : index
    %7 = vector.load %arg7[%c17, %c0_10, %c0_11] : memref<18x48x128xbf16, #tpu.memory_space<vmem>>, vector<1x48x128xbf16>
    tpu.vector_store %arg7[%c17, %c0_10, %c0_11], %6 {strides = array<i32>} : memref<18x48x128xbf16, #tpu.memory_space<vmem>>, vector<1x48x128xbf16>,
    %cst_12 = arith.constant 0.000000e+00 : f32
    %8 = vector.broadcast %cst_12 : f32 to vector<128x128xf32>
    %c0_13 = arith.constant 0 : index
    %c0_14 = arith.constant 0 : index
    %c0_15 = arith.constant 0 : index
    %c0_16 = arith.constant 0 : index
    %9 = vector.load %arg1[%c0_13, %c0_14, %c0_15, %c0_16] : memref<1x18x18x128xbf16, #tpu.memory_space<vmem>>, vector<1x10x16x128xbf16>
    %10 = vector.shape_cast %9 : vector<1x10x16x128xbf16> to vector<10x16x128xbf16>
    %11 = vector.extract_strided_slice %10 {offsets = [0, 0, 0], sizes = [8, 16, 128], strides = [1, 1, 1]} : vector<10x16x128xbf16> to vector<8x16x128xbf16>
    %12 = vector.extract_strided_slice %10 {offsets = [1, 0, 0], sizes = [8, 16, 128], strides = [1, 1, 1]} : vector<10x16x128xbf16> to vector<8x16x128xbf16>
    %13 = vector.extract_strided_slice %10 {offsets = [2, 0, 0], sizes = [8, 16, 128], strides = [1, 1, 1]} : vector<10x16x128xbf16> to vector<8x16x128xbf16>
    %14 = tpu.concatenate %11, %12, %13 in 2 : vector<8x16x128xbf16>, vector<8x16x128xbf16>, vector<8x16x128xbf16> -> vector<8x16x384xbf16>
    %15 = vector.shape_cast %14 : vector<8x16x384xbf16> to vector<128x384xbf16>
    %c0_17 = arith.constant 0 : index
    %c0_18 = arith.constant 0 : index
    %c0_19 = arith.constant 0 : index
    %16 = vector.load %arg2[%c0_17, %c0_18, %c0_19] : memref<3x384x128xbf16, #tpu.memory_space<vmem>>, vector<1x384x128xbf16>
    %17 = vector.shape_cast %16 : vector<1x384x128xbf16> to vector<384x128xbf16>
    %cst_20 = arith.constant dense<0.000000e+00> : vector<128x128xf32>
    %18 = tpu.matmul %15, %17, %cst_20 {dimension_numbers = #tpu.dot_dimension_numbers<[1], [0], [0], [1], [0, 0, 1, 1], [], []>} : vector<128x384xbf16>, vector<384x128xbf16>, vector<128x128xf32> -> vector<128x128xf32>
    %19 = arith.addf %8, %18 : vector<128x128xf32>
    %c0_21 = arith.constant 0 : index
    %c0_22 = arith.constant 0 : index
    %c1 = arith.constant 1 : index
    %c0_23 = arith.constant 0 : index
    %20 = vector.load %arg1[%c0_21, %c0_22, %c1, %c0_23] : memref<1x18x18x128xbf16, #tpu.memory_space<vmem>>, vector<1x10x16x128xbf16>
    %21 = vector.shape_cast %20 : vector<1x10x16x128xbf16> to vector<10x16x128xbf16>
    %22 = vector.extract_strided_slice %21 {offsets = [0, 0, 0], sizes = [8, 16, 128], strides = [1, 1, 1]} : vector<10x16x128xbf16> to vector<8x16x128xbf16>
    %23 = vector.extract_strided_slice %21 {offsets = [1, 0, 0], sizes = [8, 16, 128], strides = [1, 1, 1]} : vector<10x16x128xbf16> to vector<8x16x128xbf16>
    %24 = vector.extract_strided_slice %21 {offsets = [2, 0, 0], sizes = [8, 16, 128], strides = [1, 1, 1]} : vector<10x16x128xbf16> to vector<8x16x128xbf16>
    %25 = tpu.concatenate %22, %23, %24 in 2 : vector<8x16x128xbf16>, vector<8x16x128xbf16>, vector<8x16x128xbf16> -> vector<8x16x384xbf16>
    %26 = vector.shape_cast %25 : vector<8x16x384xbf16> to vector<128x384xbf16>
    %c1_24 = arith.constant 1 : index
    %c0_25 = arith.constant 0 : index
    %c0_26 = arith.constant 0 : index
    %27 = vector.load %arg2[%c1_24, %c0_25, %c0_26] : memref<3x384x128xbf16, #tpu.memory_space<vmem>>, vector<1x384x128xbf16>
    %28 = vector.shape_cast %27 : vector<1x384x128xbf16> to vector<384x128xbf16>
    %cst_27 = arith.constant dense<0.000000e+00> : vector<128x128xf32>
    %29 = tpu.matmul %26, %28, %cst_27 {dimension_numbers = #tpu.dot_dimension_numbers<[1], [0], [0], [1], [0, 0, 1, 1], [], []>} : vector<128x384xbf16>, vector<384x128xbf16>, vector<128x128xf32> -> vector<128x128xf32>
    %30 = arith.addf %19, %29 : vector<128x128xf32>
    %c0_28 = arith.constant 0 : index
    %c0_29 = arith.constant 0 : index
    %c2 = arith.constant 2 : index
    %c0_30 = arith.constant 0 : index
    %31 = vector.load %arg1[%c0_28, %c0_29, %c2, %c0_30] : memref<1x18x18x128xbf16, #tpu.memory_space<vmem>>, vector<1x10x16x128xbf16>
    %32 = vector.shape_cast %31 : vector<1x10x16x128xbf16> to vector<10x16x128xbf16>
    %33 = vector.extract_strided_slice %32 {offsets = [0, 0, 0], sizes = [8, 16, 128], strides = [1, 1, 1]} : vector<10x16x128xbf16> to vector<8x16x128xbf16>
    %34 = vector.extract_strided_slice %32 {offsets = [1, 0, 0], sizes = [8, 16, 128], strides = [1, 1, 1]} : vector<10x16x128xbf16> to vector<8x16x128xbf16>
    %35 = vector.extract_strided_slice %32 {offsets = [2, 0, 0], sizes = [8, 16, 128], strides = [1, 1, 1]} : vector<10x16x128xbf16> to vector<8x16x128xbf16>
    %36 = tpu.concatenate %33, %34, %35 in 2 : vector<8x16x128xbf16>, vector<8x16x128xbf16>, vector<8x16x128xbf16> -> vector<8x16x384xbf16>
    %37 = vector.shape_cast %36 : vector<8x16x384xbf16> to vector<128x384xbf16>
    %c2_31 = arith.constant 2 : index
    %c0_32 = arith.constant 0 : index
    %c0_33 = arith.constant 0 : index
    %38 = vector.load %arg2[%c2_31, %c0_32, %c0_33] : memref<3x384x128xbf16, #tpu.memory_space<vmem>>, vector<1x384x128xbf16>
    %39 = vector.shape_cast %38 : vector<1x384x128xbf16> to vector<384x128xbf16>
    %cst_34 = arith.constant dense<0.000000e+00> : vector<128x128xf32>
    %40 = tpu.matmul %37, %39, %cst_34 {dimension_numbers = #tpu.dot_dimension_numbers<[1], [0], [0], [1], [0, 0, 1, 1], [], []>} : vector<128x384xbf16>, vector<384x128xbf16>, vector<128x128xf32> -> vector<128x128xf32>
    %41 = arith.addf %30, %40 : vector<128x128xf32>
    %c0_35 = arith.constant 0 : index
    %c0_36 = arith.constant 0 : index
    %42 = vector.load %arg3[%c0_35, %c0_36] : memref<1x128xf32, #tpu.memory_space<vmem>>, vector<1x128xf32>
    %43 = vector.broadcast %42 : vector<1x128xf32> to vector<128x128xf32>
    %44 = arith.addf %41, %43 : vector<128x128xf32>
    %cst_37 = arith.constant 0.000000e+00 : f32
    %45 = vector.broadcast %cst_37 : f32 to vector<128x128xf32>
    %46 = arith.maximumf %44, %45 : vector<128x128xf32>
    %47 = arith.truncf %46 : vector<128x128xf32> to vector<128x128xbf16>
    %48 = vector.shape_cast %47 : vector<128x128xbf16> to vector<8x16x128xbf16>
    %c1_38 = arith.constant 1 : index
    %c16 = arith.constant 16 : index
    %c0_39 = arith.constant 0 : index
    %49 = vector.load %arg7[%c1_38, %c16, %c0_39] : memref<18x48x128xbf16, #tpu.memory_space<vmem>>, vector<8x16x128xbf16>
    tpu.vector_store %arg7[%c1_38, %c16, %c0_39], %48 {strides = array<i32>} : memref<18x48x128xbf16, #tpu.memory_space<vmem>>, vector<8x16x128xbf16>,
    %cst_40 = arith.constant 0.000000e+00 : f32
    %50 = vector.broadcast %cst_40 : f32 to vector<128x128xf32>
    %c0_41 = arith.constant 0 : index
    %c8 = arith.constant 8 : index
    %c0_42 = arith.constant 0 : index
    %c0_43 = arith.constant 0 : index
    %51 = vector.load %arg1[%c0_41, %c8, %c0_42, %c0_43] : memref<1x18x18x128xbf16, #tpu.memory_space<vmem>>, vector<1x10x16x128xbf16>
    %52 = vector.shape_cast %51 : vector<1x10x16x128xbf16> to vector<10x16x128xbf16>
    %53 = vector.extract_strided_slice %52 {offsets = [0, 0, 0], sizes = [8, 16, 128], strides = [1, 1, 1]} : vector<10x16x128xbf16> to vector<8x16x128xbf16>
    %54 = vector.extract_strided_slice %52 {offsets = [1, 0, 0], sizes = [8, 16, 128], strides = [1, 1, 1]} : vector<10x16x128xbf16> to vector<8x16x128xbf16>
    %55 = vector.extract_strided_slice %52 {offsets = [2, 0, 0], sizes = [8, 16, 128], strides = [1, 1, 1]} : vector<10x16x128xbf16> to vector<8x16x128xbf16>
    %56 = tpu.concatenate %53, %54, %55 in 2 : vector<8x16x128xbf16>, vector<8x16x128xbf16>, vector<8x16x128xbf16> -> vector<8x16x384xbf16>
    %57 = vector.shape_cast %56 : vector<8x16x384xbf16> to vector<128x384xbf16>
    %c0_44 = arith.constant 0 : index
    %c0_45 = arith.constant 0 : index
    %c0_46 = arith.constant 0 : index
    %58 = vector.load %arg2[%c0_44, %c0_45, %c0_46] : memref<3x384x128xbf16, #tpu.memory_space<vmem>>, vector<1x384x128xbf16>
    %59 = vector.shape_cast %58 : vector<1x384x128xbf16> to vector<384x128xbf16>
    %cst_47 = arith.constant dense<0.000000e+00> : vector<128x128xf32>
    %60 = tpu.matmul %57, %59, %cst_47 {dimension_numbers = #tpu.dot_dimension_numbers<[1], [0], [0], [1], [0, 0, 1, 1], [], []>} : vector<128x384xbf16>, vector<384x128xbf16>, vector<128x128xf32> -> vector<128x128xf32>
    %61 = arith.addf %50, %60 : vector<128x128xf32>
    %c0_48 = arith.constant 0 : index
    %c8_49 = arith.constant 8 : index
    %c1_50 = arith.constant 1 : index
    %c0_51 = arith.constant 0 : index
    %62 = vector.load %arg1[%c0_48, %c8_49, %c1_50, %c0_51] : memref<1x18x18x128xbf16, #tpu.memory_space<vmem>>, vector<1x10x16x128xbf16>
    %63 = vector.shape_cast %62 : vector<1x10x16x128xbf16> to vector<10x16x128xbf16>
    %64 = vector.extract_strided_slice %63 {offsets = [0, 0, 0], sizes = [8, 16, 128], strides = [1, 1, 1]} : vector<10x16x128xbf16> to vector<8x16x128xbf16>
    %65 = vector.extract_strided_slice %63 {offsets = [1, 0, 0], sizes = [8, 16, 128], strides = [1, 1, 1]} : vector<10x16x128xbf16> to vector<8x16x128xbf16>
    %66 = vector.extract_strided_slice %63 {offsets = [2, 0, 0], sizes = [8, 16, 128], strides = [1, 1, 1]} : vector<10x16x128xbf16> to vector<8x16x128xbf16>
    %67 = tpu.concatenate %64, %65, %66 in 2 : vector<8x16x128xbf16>, vector<8x16x128xbf16>, vector<8x16x128xbf16> -> vector<8x16x384xbf16>
    %68 = vector.shape_cast %67 : vector<8x16x384xbf16> to vector<128x384xbf16>
    %c1_52 = arith.constant 1 : index
    %c0_53 = arith.constant 0 : index
    %c0_54 = arith.constant 0 : index
    %69 = vector.load %arg2[%c1_52, %c0_53, %c0_54] : memref<3x384x128xbf16, #tpu.memory_space<vmem>>, vector<1x384x128xbf16>
    %70 = vector.shape_cast %69 : vector<1x384x128xbf16> to vector<384x128xbf16>
    %cst_55 = arith.constant dense<0.000000e+00> : vector<128x128xf32>
    %71 = tpu.matmul %68, %70, %cst_55 {dimension_numbers = #tpu.dot_dimension_numbers<[1], [0], [0], [1], [0, 0, 1, 1], [], []>} : vector<128x384xbf16>, vector<384x128xbf16>, vector<128x128xf32> -> vector<128x128xf32>
    %72 = arith.addf %61, %71 : vector<128x128xf32>
    %c0_56 = arith.constant 0 : index
    %c8_57 = arith.constant 8 : index
    %c2_58 = arith.constant 2 : index
    %c0_59 = arith.constant 0 : index
    %73 = vector.load %arg1[%c0_56, %c8_57, %c2_58, %c0_59] : memref<1x18x18x128xbf16, #tpu.memory_space<vmem>>, vector<1x10x16x128xbf16>
    %74 = vector.shape_cast %73 : vector<1x10x16x128xbf16> to vector<10x16x128xbf16>
    %75 = vector.extract_strided_slice %74 {offsets = [0, 0, 0], sizes = [8, 16, 128], strides = [1, 1, 1]} : vector<10x16x128xbf16> to vector<8x16x128xbf16>
    %76 = vector.extract_strided_slice %74 {offsets = [1, 0, 0], sizes = [8, 16, 128], strides = [1, 1, 1]} : vector<10x16x128xbf16> to vector<8x16x128xbf16>
    %77 = vector.extract_strided_slice %74 {offsets = [2, 0, 0], sizes = [8, 16, 128], strides = [1, 1, 1]} : vector<10x16x128xbf16> to vector<8x16x128xbf16>
    %78 = tpu.concatenate %75, %76, %77 in 2 : vector<8x16x128xbf16>, vector<8x16x128xbf16>, vector<8x16x128xbf16> -> vector<8x16x384xbf16>
    %79 = vector.shape_cast %78 : vector<8x16x384xbf16> to vector<128x384xbf16>
    %c2_60 = arith.constant 2 : index
    %c0_61 = arith.constant 0 : index
    %c0_62 = arith.constant 0 : index
    %80 = vector.load %arg2[%c2_60, %c0_61, %c0_62] : memref<3x384x128xbf16, #tpu.memory_space<vmem>>, vector<1x384x128xbf16>
    %81 = vector.shape_cast %80 : vector<1x384x128xbf16> to vector<384x128xbf16>
    %cst_63 = arith.constant dense<0.000000e+00> : vector<128x128xf32>
    %82 = tpu.matmul %79, %81, %cst_63 {dimension_numbers = #tpu.dot_dimension_numbers<[1], [0], [0], [1], [0, 0, 1, 1], [], []>} : vector<128x384xbf16>, vector<384x128xbf16>, vector<128x128xf32> -> vector<128x128xf32>
    %83 = arith.addf %72, %82 : vector<128x128xf32>
    %c0_64 = arith.constant 0 : index
    %c0_65 = arith.constant 0 : index
    %84 = vector.load %arg3[%c0_64, %c0_65] : memref<1x128xf32, #tpu.memory_space<vmem>>, vector<1x128xf32>
    %85 = vector.broadcast %84 : vector<1x128xf32> to vector<128x128xf32>
    %86 = arith.addf %83, %85 : vector<128x128xf32>
    %cst_66 = arith.constant 0.000000e+00 : f32
    %87 = vector.broadcast %cst_66 : f32 to vector<128x128xf32>
    %88 = arith.maximumf %86, %87 : vector<128x128xf32>
    %89 = arith.truncf %88 : vector<128x128xf32> to vector<128x128xbf16>
    %90 = vector.shape_cast %89 : vector<128x128xbf16> to vector<8x16x128xbf16>
    %c9 = arith.constant 9 : index
    %c16_67 = arith.constant 16 : index
    %c0_68 = arith.constant 0 : index
    %91 = vector.load %arg7[%c9, %c16_67, %c0_68] : memref<18x48x128xbf16, #tpu.memory_space<vmem>>, vector<8x16x128xbf16>
    tpu.vector_store %arg7[%c9, %c16_67, %c0_68], %90 {strides = array<i32>} : memref<18x48x128xbf16, #tpu.memory_space<vmem>>, vector<8x16x128xbf16>,
    %cst_69 = arith.constant 0.000000e+00 : f32
    %92 = vector.broadcast %cst_69 : f32 to vector<128x128xf32>
    %c0_70 = arith.constant 0 : index
    %c15 = arith.constant 15 : index
    %c0_71 = arith.constant 0 : index
    %93 = vector.load %arg7[%c0_70, %c15, %c0_71] : memref<18x48x128xbf16, #tpu.memory_space<vmem>>, vector<10x16x128xbf16>
    %94 = vector.extract_strided_slice %93 {offsets = [0, 0, 0], sizes = [8, 16, 128], strides = [1, 1, 1]} : vector<10x16x128xbf16> to vector<8x16x128xbf16>
    %95 = vector.extract_strided_slice %93 {offsets = [1, 0, 0], sizes = [8, 16, 128], strides = [1, 1, 1]} : vector<10x16x128xbf16> to vector<8x16x128xbf16>
    %96 = vector.extract_strided_slice %93 {offsets = [2, 0, 0], sizes = [8, 16, 128], strides = [1, 1, 1]} : vector<10x16x128xbf16> to vector<8x16x128xbf16>
    %97 = tpu.concatenate %94, %95, %96 in 2 : vector<8x16x128xbf16>, vector<8x16x128xbf16>, vector<8x16x128xbf16> -> vector<8x16x384xbf16>
    %98 = vector.shape_cast %97 : vector<8x16x384xbf16> to vector<128x384xbf16>
    %c0_72 = arith.constant 0 : index
    %c0_73 = arith.constant 0 : index
    %c0_74 = arith.constant 0 : index
    %99 = vector.load %arg4[%c0_72, %c0_73, %c0_74] : memref<3x384x128xbf16, #tpu.memory_space<vmem>>, vector<1x384x128xbf16>
    %100 = vector.shape_cast %99 : vector<1x384x128xbf16> to vector<384x128xbf16>
    %cst_75 = arith.constant dense<0.000000e+00> : vector<128x128xf32>
    %101 = tpu.matmul %98, %100, %cst_75 {dimension_numbers = #tpu.dot_dimension_numbers<[1], [0], [0], [1], [0, 0, 1, 1], [], []>} : vector<128x384xbf16>, vector<384x128xbf16>, vector<128x128xf32> -> vector<128x128xf32>
    %102 = arith.addf %92, %101 : vector<128x128xf32>
    %c0_76 = arith.constant 0 : index
    %c16_77 = arith.constant 16 : index
    %c0_78 = arith.constant 0 : index
    %103 = vector.load %arg7[%c0_76, %c16_77, %c0_78] : memref<18x48x128xbf16, #tpu.memory_space<vmem>>, vector<10x16x128xbf16>
    %104 = vector.extract_strided_slice %103 {offsets = [0, 0, 0], sizes = [8, 16, 128], strides = [1, 1, 1]} : vector<10x16x128xbf16> to vector<8x16x128xbf16>
    %105 = vector.extract_strided_slice %103 {offsets = [1, 0, 0], sizes = [8, 16, 128], strides = [1, 1, 1]} : vector<10x16x128xbf16> to vector<8x16x128xbf16>
    %106 = vector.extract_strided_slice %103 {offsets = [2, 0, 0], sizes = [8, 16, 128], strides = [1, 1, 1]} : vector<10x16x128xbf16> to vector<8x16x128xbf16>
    %107 = tpu.concatenate %104, %105, %106 in 2 : vector<8x16x128xbf16>, vector<8x16x128xbf16>, vector<8x16x128xbf16> -> vector<8x16x384xbf16>
    %108 = vector.shape_cast %107 : vector<8x16x384xbf16> to vector<128x384xbf16>
    %c1_79 = arith.constant 1 : index
    %c0_80 = arith.constant 0 : index
    %c0_81 = arith.constant 0 : index
    %109 = vector.load %arg4[%c1_79, %c0_80, %c0_81] : memref<3x384x128xbf16, #tpu.memory_space<vmem>>, vector<1x384x128xbf16>
    %110 = vector.shape_cast %109 : vector<1x384x128xbf16> to vector<384x128xbf16>
    %cst_82 = arith.constant dense<0.000000e+00> : vector<128x128xf32>
    %111 = tpu.matmul %108, %110, %cst_82 {dimension_numbers = #tpu.dot_dimension_numbers<[1], [0], [0], [1], [0, 0, 1, 1], [], []>} : vector<128x384xbf16>, vector<384x128xbf16>, vector<128x128xf32> -> vector<128x128xf32>
    %112 = arith.addf %102, %111 : vector<128x128xf32>
    %c0_83 = arith.constant 0 : index
    %c17_84 = arith.constant 17 : index
    %c0_85 = arith.constant 0 : index
    %113 = vector.load %arg7[%c0_83, %c17_84, %c0_85] : memref<18x48x128xbf16, #tpu.memory_space<vmem>>, vector<10x16x128xbf16>
    %114 = vector.extract_strided_slice %113 {offsets = [0, 0, 0], sizes = [8, 16, 128], strides = [1, 1, 1]} : vector<10x16x128xbf16> to vector<8x16x128xbf16>
    %115 = vector.extract_strided_slice %113 {offsets = [1, 0, 0], sizes = [8, 16, 128], strides = [1, 1, 1]} : vector<10x16x128xbf16> to vector<8x16x128xbf16>
    %116 = vector.extract_strided_slice %113 {offsets = [2, 0, 0], sizes = [8, 16, 128], strides = [1, 1, 1]} : vector<10x16x128xbf16> to vector<8x16x128xbf16>
    %117 = tpu.concatenate %114, %115, %116 in 2 : vector<8x16x128xbf16>, vector<8x16x128xbf16>, vector<8x16x128xbf16> -> vector<8x16x384xbf16>
    %118 = vector.shape_cast %117 : vector<8x16x384xbf16> to vector<128x384xbf16>
    %c2_86 = arith.constant 2 : index
    %c0_87 = arith.constant 0 : index
    %c0_88 = arith.constant 0 : index
    %119 = vector.load %arg4[%c2_86, %c0_87, %c0_88] : memref<3x384x128xbf16, #tpu.memory_space<vmem>>, vector<1x384x128xbf16>
    %120 = vector.shape_cast %119 : vector<1x384x128xbf16> to vector<384x128xbf16>
    %cst_89 = arith.constant dense<0.000000e+00> : vector<128x128xf32>
    %121 = tpu.matmul %118, %120, %cst_89 {dimension_numbers = #tpu.dot_dimension_numbers<[1], [0], [0], [1], [0, 0, 1, 1], [], []>} : vector<128x384xbf16>, vector<384x128xbf16>, vector<128x128xf32> -> vector<128x128xf32>
    %122 = arith.addf %112, %121 : vector<128x128xf32>
    %c0_90 = arith.constant 0 : index
    %c0_91 = arith.constant 0 : index
    %123 = vector.load %arg5[%c0_90, %c0_91] : memref<1x128xf32, #tpu.memory_space<vmem>>, vector<1x128xf32>
    %124 = vector.broadcast %123 : vector<1x128xf32> to vector<128x128xf32>
    %125 = arith.addf %122, %124 : vector<128x128xf32>
    %c0_92 = arith.constant 0 : index
    %c1_93 = arith.constant 1 : index
    %c1_94 = arith.constant 1 : index
    %c0_95 = arith.constant 0 : index
    %126 = vector.load %arg1[%c0_92, %c1_93, %c1_94, %c0_95] : memref<1x18x18x128xbf16, #tpu.memory_space<vmem>>, vector<1x8x16x128xbf16>
    %127 = vector.shape_cast %126 : vector<1x8x16x128xbf16> to vector<8x16x128xbf16>
    %128 = arith.extf %127 : vector<8x16x128xbf16> to vector<8x16x128xf32>
    %129 = vector.shape_cast %128 : vector<8x16x128xf32> to vector<128x128xf32>
    %130 = arith.addf %125, %129 : vector<128x128xf32>
    %cst_96 = arith.constant 0.000000e+00 : f32
    %131 = vector.broadcast %cst_96 : f32 to vector<128x128xf32>
    %132 = arith.maximumf %130, %131 : vector<128x128xf32>
    %133 = vector.shape_cast %132 : vector<128x128xf32> to vector<8x16x128xf32>
    %c0_97 = arith.constant 0 : index
    %c0_98 = arith.constant 0 : index
    %c0_99 = arith.constant 0 : index
    %c0_100 = arith.constant 0 : index
    %134 = vector.load %arg6[%c0_97, %c0_98, %c0_99, %c0_100] : memref<1x16x16x128xf32, #tpu.memory_space<vmem>>, vector<1x8x16x128xf32>
    %135 = vector.shape_cast %134 : vector<1x8x16x128xf32> to vector<8x16x128xf32>
    %136 = vector.shape_cast %133 : vector<8x16x128xf32> to vector<1x8x16x128xf32>
    tpu.vector_store %arg6[%c0_97, %c0_98, %c0_99, %c0_100], %136 {strides = array<i32>} : memref<1x16x16x128xf32, #tpu.memory_space<vmem>>, vector<1x8x16x128xf32>,
    %cst_101 = arith.constant 0.000000e+00 : f32
    %137 = vector.broadcast %cst_101 : f32 to vector<128x128xf32>
    %c8_102 = arith.constant 8 : index
    %c15_103 = arith.constant 15 : index
    %c0_104 = arith.constant 0 : index
    %138 = vector.load %arg7[%c8_102, %c15_103, %c0_104] : memref<18x48x128xbf16, #tpu.memory_space<vmem>>, vector<10x16x128xbf16>
    %139 = vector.extract_strided_slice %138 {offsets = [0, 0, 0], sizes = [8, 16, 128], strides = [1, 1, 1]} : vector<10x16x128xbf16> to vector<8x16x128xbf16>
    %140 = vector.extract_strided_slice %138 {offsets = [1, 0, 0], sizes = [8, 16, 128], strides = [1, 1, 1]} : vector<10x16x128xbf16> to vector<8x16x128xbf16>
    %141 = vector.extract_strided_slice %138 {offsets = [2, 0, 0], sizes = [8, 16, 128], strides = [1, 1, 1]} : vector<10x16x128xbf16> to vector<8x16x128xbf16>
    %142 = tpu.concatenate %139, %140, %141 in 2 : vector<8x16x128xbf16>, vector<8x16x128xbf16>, vector<8x16x128xbf16> -> vector<8x16x384xbf16>
    %143 = vector.shape_cast %142 : vector<8x16x384xbf16> to vector<128x384xbf16>
    %c0_105 = arith.constant 0 : index
    %c0_106 = arith.constant 0 : index
    %c0_107 = arith.constant 0 : index
    %144 = vector.load %arg4[%c0_105, %c0_106, %c0_107] : memref<3x384x128xbf16, #tpu.memory_space<vmem>>, vector<1x384x128xbf16>
    %145 = vector.shape_cast %144 : vector<1x384x128xbf16> to vector<384x128xbf16>
    %cst_108 = arith.constant dense<0.000000e+00> : vector<128x128xf32>
    %146 = tpu.matmul %143, %145, %cst_108 {dimension_numbers = #tpu.dot_dimension_numbers<[1], [0], [0], [1], [0, 0, 1, 1], [], []>} : vector<128x384xbf16>, vector<384x128xbf16>, vector<128x128xf32> -> vector<128x128xf32>
    %147 = arith.addf %137, %146 : vector<128x128xf32>
    %c8_109 = arith.constant 8 : index
    %c16_110 = arith.constant 16 : index
    %c0_111 = arith.constant 0 : index
    %148 = vector.load %arg7[%c8_109, %c16_110, %c0_111] : memref<18x48x128xbf16, #tpu.memory_space<vmem>>, vector<10x16x128xbf16>
    %149 = vector.extract_strided_slice %148 {offsets = [0, 0, 0], sizes = [8, 16, 128], strides = [1, 1, 1]} : vector<10x16x128xbf16> to vector<8x16x128xbf16>
    %150 = vector.extract_strided_slice %148 {offsets = [1, 0, 0], sizes = [8, 16, 128], strides = [1, 1, 1]} : vector<10x16x128xbf16> to vector<8x16x128xbf16>
    %151 = vector.extract_strided_slice %148 {offsets = [2, 0, 0], sizes = [8, 16, 128], strides = [1, 1, 1]} : vector<10x16x128xbf16> to vector<8x16x128xbf16>
    %152 = tpu.concatenate %149, %150, %151 in 2 : vector<8x16x128xbf16>, vector<8x16x128xbf16>, vector<8x16x128xbf16> -> vector<8x16x384xbf16>
    %153 = vector.shape_cast %152 : vector<8x16x384xbf16> to vector<128x384xbf16>
    %c1_112 = arith.constant 1 : index
    %c0_113 = arith.constant 0 : index
    %c0_114 = arith.constant 0 : index
    %154 = vector.load %arg4[%c1_112, %c0_113, %c0_114] : memref<3x384x128xbf16, #tpu.memory_space<vmem>>, vector<1x384x128xbf16>
    %155 = vector.shape_cast %154 : vector<1x384x128xbf16> to vector<384x128xbf16>
    %cst_115 = arith.constant dense<0.000000e+00> : vector<128x128xf32>
    %156 = tpu.matmul %153, %155, %cst_115 {dimension_numbers = #tpu.dot_dimension_numbers<[1], [0], [0], [1], [0, 0, 1, 1], [], []>} : vector<128x384xbf16>, vector<384x128xbf16>, vector<128x128xf32> -> vector<128x128xf32>
    %157 = arith.addf %147, %156 : vector<128x128xf32>
    %c8_116 = arith.constant 8 : index
    %c17_117 = arith.constant 17 : index
    %c0_118 = arith.constant 0 : index
    %158 = vector.load %arg7[%c8_116, %c17_117, %c0_118] : memref<18x48x128xbf16, #tpu.memory_space<vmem>>, vector<10x16x128xbf16>
    %159 = vector.extract_strided_slice %158 {offsets = [0, 0, 0], sizes = [8, 16, 128], strides = [1, 1, 1]} : vector<10x16x128xbf16> to vector<8x16x128xbf16>
    %160 = vector.extract_strided_slice %158 {offsets = [1, 0, 0], sizes = [8, 16, 128], strides = [1, 1, 1]} : vector<10x16x128xbf16> to vector<8x16x128xbf16>
    %161 = vector.extract_strided_slice %158 {offsets = [2, 0, 0], sizes = [8, 16, 128], strides = [1, 1, 1]} : vector<10x16x128xbf16> to vector<8x16x128xbf16>
    %162 = tpu.concatenate %159, %160, %161 in 2 : vector<8x16x128xbf16>, vector<8x16x128xbf16>, vector<8x16x128xbf16> -> vector<8x16x384xbf16>
    %163 = vector.shape_cast %162 : vector<8x16x384xbf16> to vector<128x384xbf16>
    %c2_119 = arith.constant 2 : index
    %c0_120 = arith.constant 0 : index
    %c0_121 = arith.constant 0 : index
    %164 = vector.load %arg4[%c2_119, %c0_120, %c0_121] : memref<3x384x128xbf16, #tpu.memory_space<vmem>>, vector<1x384x128xbf16>
    %165 = vector.shape_cast %164 : vector<1x384x128xbf16> to vector<384x128xbf16>
    %cst_122 = arith.constant dense<0.000000e+00> : vector<128x128xf32>
    %166 = tpu.matmul %163, %165, %cst_122 {dimension_numbers = #tpu.dot_dimension_numbers<[1], [0], [0], [1], [0, 0, 1, 1], [], []>} : vector<128x384xbf16>, vector<384x128xbf16>, vector<128x128xf32> -> vector<128x128xf32>
    %167 = arith.addf %157, %166 : vector<128x128xf32>
    %c0_123 = arith.constant 0 : index
    %c0_124 = arith.constant 0 : index
    %168 = vector.load %arg5[%c0_123, %c0_124] : memref<1x128xf32, #tpu.memory_space<vmem>>, vector<1x128xf32>
    %169 = vector.broadcast %168 : vector<1x128xf32> to vector<128x128xf32>
    %170 = arith.addf %167, %169 : vector<128x128xf32>
    %c0_125 = arith.constant 0 : index
    %c9_126 = arith.constant 9 : index
    %c1_127 = arith.constant 1 : index
    %c0_128 = arith.constant 0 : index
    %171 = vector.load %arg1[%c0_125, %c9_126, %c1_127, %c0_128] : memref<1x18x18x128xbf16, #tpu.memory_space<vmem>>, vector<1x8x16x128xbf16>
    %172 = vector.shape_cast %171 : vector<1x8x16x128xbf16> to vector<8x16x128xbf16>
    %173 = arith.extf %172 : vector<8x16x128xbf16> to vector<8x16x128xf32>
    %174 = vector.shape_cast %173 : vector<8x16x128xf32> to vector<128x128xf32>
    %175 = arith.addf %170, %174 : vector<128x128xf32>
    %cst_129 = arith.constant 0.000000e+00 : f32
    %176 = vector.broadcast %cst_129 : f32 to vector<128x128xf32>
    %177 = arith.maximumf %175, %176 : vector<128x128xf32>
    %178 = vector.shape_cast %177 : vector<128x128xf32> to vector<8x16x128xf32>
    %c0_130 = arith.constant 0 : index
    %c8_131 = arith.constant 8 : index
    %c0_132 = arith.constant 0 : index
    %c0_133 = arith.constant 0 : index
    %179 = vector.load %arg6[%c0_130, %c8_131, %c0_132, %c0_133] : memref<1x16x16x128xf32, #tpu.memory_space<vmem>>, vector<1x8x16x128xf32>
    %180 = vector.shape_cast %179 : vector<1x8x16x128xf32> to vector<8x16x128xf32>
    %181 = vector.shape_cast %178 : vector<8x16x128xf32> to vector<1x8x16x128xf32>
    tpu.vector_store %arg6[%c0_130, %c8_131, %c0_132, %c0_133], %181 {strides = array<i32>} : memref<1x16x16x128xf32, #tpu.memory_space<vmem>>, vector<1x8x16x128xf32>,
    return
  }
  func.func @transform_0(%arg0: i32) -> (i32, i32, i32, i32) {
    %c0_i32 = arith.constant 0 : i32
    %c0_i32_0 = arith.constant 0 : i32
    %c0_i32_1 = arith.constant 0 : i32
    %c0_i32_2 = arith.constant 0 : i32
    return %arg0, %c0_i32, %c0_i32_0, %c0_i32_1 : i32, i32, i32, i32
  }
  func.func @transform_1(%arg0: i32) -> (i32, i32, i32) {
    %c0_i32 = arith.constant 0 : i32
    %c0_i32_0 = arith.constant 0 : i32
    %c0_i32_1 = arith.constant 0 : i32
    %c0_i32_2 = arith.constant 0 : i32
    return %c0_i32, %c0_i32_0, %c0_i32_1 : i32, i32, i32
  }
  func.func @transform_2(%arg0: i32) -> (i32, i32) {
    %c0_i32 = arith.constant 0 : i32
    %c0_i32_0 = arith.constant 0 : i32
    %c0_i32_1 = arith.constant 0 : i32
    return %c0_i32, %c0_i32_0 : i32, i32
  }
  func.func @transform_3(%arg0: i32) -> (i32, i32, i32) {
    %c0_i32 = arith.constant 0 : i32
    %c0_i32_0 = arith.constant 0 : i32
    %c0_i32_1 = arith.constant 0 : i32
    %c0_i32_2 = arith.constant 0 : i32
    return %c0_i32, %c0_i32_0, %c0_i32_1 : i32, i32, i32
  }
  func.func @transform_4(%arg0: i32) -> (i32, i32) {
    %c0_i32 = arith.constant 0 : i32
    %c0_i32_0 = arith.constant 0 : i32
    %c0_i32_1 = arith.constant 0 : i32
    return %c0_i32, %c0_i32_0 : i32, i32
  }
  func.func @transform_5(%arg0: i32) -> (i32, i32, i32, i32) {
    %c0_i32 = arith.constant 0 : i32
    %c0_i32_0 = arith.constant 0 : i32
    %c0_i32_1 = arith.constant 0 : i32
    %c0_i32_2 = arith.constant 0 : i32
    return %arg0, %c0_i32, %c0_i32_0, %c0_i32_1 : i32, i32, i32, i32
  }
}

</mosaic_0001>

<llo_original>
// kernel: tpu_custom_call.1
$region0: #{tpu_custom_call.1}
  #allocation0 [shape = 'u32[]', space=smem, size = 0x4, offset = 0x4, fixed_abs, tag = 'smem constant byte address 0x4 - core index']
  #allocation1 [shape = 'u32[144,128]{1,0:T(1,128)}', space=vmem, size = 0x12000, scoped, tag = 'internal scratch']
  #allocation2 [shape = 'bf16[18,48,128]{2,1,0:T(16,128)(2,1)}', space=vmem, size = 0x36000, scoped, tag = 'scratch operand']
  %s0 = inlined_call_operand.hbm [shape: bf16[2,18,18,128], index: 0, kind: input, shape index: {}]
  %s1 = inlined_call_operand.hbm [shape: bf16[3,384,128], index: 1, kind: input, shape index: {}]
  %s2 = inlined_call_operand.hbm [shape: f32[1,128], index: 2, kind: input, shape index: {}]
  %s3 = inlined_call_operand.hbm [shape: bf16[3,384,128], index: 3, kind: input, shape index: {}]
  %s4 = inlined_call_operand.hbm [shape: f32[1,128], index: 4, kind: input, shape index: {}]
  %s5 = inlined_call_operand.hbm [shape: f32[2,16,16,128], index: 5, kind: output, shape index: {}]
  %s6 = sld [smem:[#allocation0]]
  $region73: #{tpu_custom_call.1} parent=0
    _
  %s8 = ssub.s32 1, %s6
  %s9 = scalar_select 0, %s8, %s6
  $region1: #{tpu_custom_call.1} parent=0
    #allocation3 [shape = 'u8[221184]{0}', space=vmem, size = 0x36000, scoped, tag = 'input window, operand 0']
    #allocation4 [shape = 's32[2]{0}', space=sflag, size = 0x8, scoped, tag = 'scoped memory for tpu_custom_call.1']
    #allocation5 [shape = 's32[2]{0}', space=sflag, size = 0x8, scoped, tag = 'scoped memory for tpu_custom_call.1']
    #allocation6 [shape = 'u8[294912]{0}', space=vmem, size = 0x48000, scoped, tag = 'input window, operand 1, single buffered']
    #allocation7 [shape = 's32[1]{0}', space=sflag, size = 0x4, scoped, tag = 'scoped memory for tpu_custom_call.1']
    #allocation8 [shape = 'u8[512]{0}', space=vmem, size = 0x400, scoped, tag = 'input window, operand 2, single buffered']
    #allocation9 [shape = 'u8[294912]{0}', space=vmem, size = 0x48000, scoped, tag = 'input window, operand 3, single buffered']
    #allocation10 [shape = 's32[1]{0}', space=sflag, size = 0x4, scoped, tag = 'scoped memory for tpu_custom_call.1']
    #allocation11 [shape = 'u8[512]{0}', space=vmem, size = 0x400, scoped, tag = 'input window, operand 4, single buffered']
    #allocation12 [shape = 'u8[262144]{0}', space=vmem, size = 0x40000, scoped, tag = 'output window, operand 0']
    %10 = vsyncpa [#allocation4], 0
    %s11 = scalar_lea.sflag [#allocation4], 1
    %12 = vsyncpa %s11, 0
    %13 = vsyncpa [#allocation7], 0
    %14 = vsyncpa [#allocation10], 0
    %15 = vsyncpa [#allocation5], 0
    %s16 = scalar_lea.sflag [#allocation5], 1
    %17 = vsyncpa %s16, 0
    loop: start=0, step=1, limit=4
    $region2: #{tpu_custom_call.1} parent=1 // loop_pre_header
      _
    $region3: #{tpu_custom_call.1} parent=1 // loop_header
      %s19 = sphi 0, %s23
      %p20 = scmp.ge.s32.totalorder %s19, 4
      %s29 = sphi 0, %s31
      %s32 = sphi 0, %s29
      %s33 = sphi 0, %s32
      %s49 = sphi 0, %s33
      %s53 = sphi 0, %s53
      %s55 = sphi 0, %s53
      %s56 = sphi 0, %s55
      %s70 = sphi 0, %s56
      %s74 = sphi 0, %s74
      %s76 = sphi 0, %s74
      %s77 = sphi 0, %s76
      %s91 = sphi 0, %s77
      %s95 = sphi 0, %s95
      %s97 = sphi 0, %s95
      %s98 = sphi 0, %s97
      %s112 = sphi 0, %s98
      %s116 = sphi 0, %s116
      %s118 = sphi 0, %s116
      %s119 = sphi 0, %s118
      %s133 = sphi 0, %s119
      %s139 = sphi 0, %s141
      %s142 = sphi 0, %s139
      %s143 = sphi 0, %s142
      %s159 = sphi 0, %s143
    $region4: #{tpu_custom_call.1} parent=1 // loop_header_branch
      %22 = sbr.rel (%p20) target = $region8
    $region5: #{tpu_custom_call.1} parent=1 // loop_body
      %s24 = ssub.s32 %s19, 1
      %s25 = ssub.s32 %s19, 2
      %s26 = sadd.s32 %s19, 1
      %s27 = ssub.s32 %s19, %s26
      %p28 = scmp.eq.s32.totalorder %s27, 0
      %s30 = sadd.s32 %s29, 1
      %s31 = scalar_select %p28, %s29, %s30
      %p34 = pneg %p28
      %p35 = scmp.eq.s32.totalorder %s19, 1
      %p36 = por %p34, %p35
      %p37 = scmp.ne.s32.totalorder %s29, %s32
      %p38 = scmp.eq.s32.totalorder %s19, 0
      %p39 = por %p37, %p38
      %p40 = scmp.ne.s32.totalorder %s29, %s32
      %p41 = scmp.eq.s32.totalorder %s24, 1
      %p42 = por %p40, %p41
      %p43 = scmp.ne.s32.totalorder %s32, %s33
      %p44 = scmp.eq.s32.totalorder %s24, 0
      %p45 = por %p43, %p44
      %p46 = scmp.ne.s32.totalorder %s32, %s33
      %p47 = scmp.eq.s32.totalorder %s25, 1
      %p48 = por %p46, %p47
      %p50 = scmp.ne.s32.totalorder %s33, %s49
      %p51 = scmp.eq.s32.totalorder %s25, 0
      %p52 = por %p50, %p51
      %s54 = sadd.s32 %s53, 1
      %p57 = scmp.eq.s32.totalorder %s19, 1
      %p58 = scmp.ne.s32.totalorder %s53, %s55
      %p59 = scmp.eq.s32.totalorder %s19, 0
      %p60 = por %p58, %p59
      %p61 = scmp.ne.s32.totalorder %s53, %s55
      %p62 = scmp.eq.s32.totalorder %s24, 1
      %p63 = por %p61, %p62
      %p64 = scmp.ne.s32.totalorder %s55, %s56
      %p65 = scmp.eq.s32.totalorder %s24, 0
      %p66 = por %p64, %p65
      %p67 = scmp.ne.s32.totalorder %s55, %s56
      %p68 = scmp.eq.s32.totalorder %s25, 1
      %p69 = por %p67, %p68
      %p71 = scmp.ne.s32.totalorder %s56, %s70
      %p72 = scmp.eq.s32.totalorder %s25, 0
      %p73 = por %p71, %p72
      %s75 = sadd.s32 %s74, 1
      %p78 = scmp.eq.s32.totalorder %s19, 1
      %p79 = scmp.ne.s32.totalorder %s74, %s76
      %p80 = scmp.eq.s32.totalorder %s19, 0
      %p81 = por %p79, %p80
      %p82 = scmp.ne.s32.totalorder %s74, %s76
      %p83 = scmp.eq.s32.totalorder %s24, 1
      %p84 = por %p82, %p83
      %p85 = scmp.ne.s32.totalorder %s76, %s77
      %p86 = scmp.eq.s32.totalorder %s24, 0
      %p87 = por %p85, %p86
      %p88 = scmp.ne.s32.totalorder %s76, %s77
      %p89 = scmp.eq.s32.totalorder %s25, 1
      %p90 = por %p88, %p89
      %p92 = scmp.ne.s32.totalorder %s77, %s91
      %p93 = scmp.eq.s32.totalorder %s25, 0
      %p94 = por %p92, %p93
      %s96 = sadd.s32 %s95, 1
      %p99 = scmp.eq.s32.totalorder %s19, 1
      %p100 = scmp.ne.s32.totalorder %s95, %s97
      %p101 = scmp.eq.s32.totalorder %s19, 0
      %p102 = por %p100, %p101
      %p103 = scmp.ne.s32.totalorder %s95, %s97
      %p104 = scmp.eq.s32.totalorder %s24, 1
      %p105 = por %p103, %p104
      %p106 = scmp.ne.s32.totalorder %s97, %s98
      %p107 = scmp.eq.s32.totalorder %s24, 0
      %p108 = por %p106, %p107
      %p109 = scmp.ne.s32.totalorder %s97, %s98
      %p110 = scmp.eq.s32.totalorder %s25, 1
      %p111 = por %p109, %p110
      %p113 = scmp.ne.s32.totalorder %s98, %s112
      %p114 = scmp.eq.s32.totalorder %s25, 0
      %p115 = por %p113, %p114
      %s117 = sadd.s32 %s116, 1
      %p120 = scmp.eq.s32.totalorder %s19, 1
      %p121 = scmp.ne.s32.totalorder %s116, %s118
      %p122 = scmp.eq.s32.totalorder %s19, 0
      %p123 = por %p121, %p122
      %p124 = scmp.ne.s32.totalorder %s116, %s118
      %p125 = scmp.eq.s32.totalorder %s24, 1
      %p126 = por %p124, %p125
      %p127 = scmp.ne.s32.totalorder %s118, %s119
      %p128 = scmp.eq.s32.totalorder %s24, 0
      %p129 = por %p127, %p128
      %p130 = scmp.ne.s32.totalorder %s118, %s119
      %p131 = scmp.eq.s32.totalorder %s25, 1
      %p132 = por %p130, %p131
      %p134 = scmp.ne.s32.totalorder %s119, %s133
      %p135 = scmp.eq.s32.totalorder %s25, 0
      %p136 = por %p134, %p135
      %s137 = ssub.s32 %s19, %s26
      %p138 = scmp.eq.s32.totalorder %s137, 0
      %s140 = sadd.s32 %s139, 1
      %s141 = scalar_select %p138, %s139, %s140
      %p144 = pneg %p138
      %p145 = scmp.eq.s32.totalorder %s19, 1
      %p146 = por %p144, %p145
      %p147 = scmp.ne.s32.totalorder %s139, %s142
      %p148 = scmp.eq.s32.totalorder %s19, 0
      %p149 = por %p147, %p148
      %p150 = scmp.ne.s32.totalorder %s139, %s142
      %p151 = scmp.eq.s32.totalorder %s24, 1
      %p152 = por %p150, %p151
      %p153 = scmp.ne.s32.totalorder %s142, %s143
      %p154 = scmp.eq.s32.totalorder %s24, 0
      %p155 = por %p153, %p154
      %p156 = scmp.ne.s32.totalorder %s142, %s143
      %p157 = scmp.eq.s32.totalorder %s25, 1
      %p158 = por %p156, %p157
      %p160 = scmp.ne.s32.totalorder %s143, %s159
      %p161 = scmp.eq.s32.totalorder %s25, 0
      %p162 = por %p160, %p161
      %p163 = scmp.le.s32.totalorder 1, %s19
      %p164 = scmp.lt.s32.totalorder %s19, 3
      %p165 = pnand %p163, %p164
      %p166 = pneg %p165
      // Predicated region
      $region9: #{tpu_custom_call.1} parent=5 // pred_check
        _
      $region10: #{tpu_custom_call.1} parent=5 // pred_check_branch
        %168 = sbr.rel (%p165) target = $region12
      $region11: #{tpu_custom_call.1} parent=5 // pred_region
        %s169 = ssub.s32 %s19, 1
        // Predicated region
        $region13: #{tpu_custom_call.1} parent=11 // pred_check
          %p170 = pneg %p66
        $region14: #{tpu_custom_call.1} parent=11 // pred_check_branch
          %172 = sbr.rel (%p170) target = $region16
        $region15: #{tpu_custom_call.1} parent=11 // pred_region
          %s174 = ssub.s32 9216, 9216
          %175 = vsyncadd [#allocation7], %s174
          %s176 = sshll.u32 [#allocation6], 4
          %s177 = int_to_ptr.vmem [resolvable:$true] %s176
          %182 = dma.hbm_to_vmem [thread:$0]  %s1, 9216, %s177, [#allocation7], 64, 64, 4
        $region16: #{tpu_custom_call.1} parent=11 // pred_fallthru
          _
        // Predicated region
        $region17: #{tpu_custom_call.1} parent=11 // pred_check
          %p183 = pneg %p87
        $region18: #{tpu_custom_call.1} parent=11 // pred_check_branch
          %185 = sbr.rel (%p183) target = $region20
        $region19: #{tpu_custom_call.1} parent=11 // pred_region
          %s187 = ssub.s32 16, 16
          %188 = vsyncadd [#allocation7], %s187
          %s190 = sshll.u32 [#allocation8], 4
          %s191 = int_to_ptr.vmem [resolvable:$true] %s190
          %193 = dma.hbm_to_vmem [thread:$0]  %s2, 16, %s191, [#allocation7]
        $region20: #{tpu_custom_call.1} parent=11 // pred_fallthru
          _
        // Predicated region
        $region21: #{tpu_custom_call.1} parent=11 // pred_check
          %p194 = pneg %p108
        $region22: #{tpu_custom_call.1} parent=11 // pred_check_branch
          %196 = sbr.rel (%p194) target = $region24
        $region23: #{tpu_custom_call.1} parent=11 // pred_region
          %s198 = ssub.s32 9216, 9216
          %199 = vsyncadd [#allocation10], %s198
          %s200 = sshll.u32 [#allocation9], 4
          %s201 = int_to_ptr.vmem [resolvable:$true] %s200
          %206 = dma.hbm_to_vmem [thread:$0]  %s3, 9216, %s201, [#allocation10], 64, 64, 4
        $region24: #{tpu_custom_call.1} parent=11 // pred_fallthru
          _
        // Predicated region
        $region25: #{tpu_custom_call.1} parent=11 // pred_check
          %p207 = pneg %p129
        $region26: #{tpu_custom_call.1} parent=11 // pred_check_branch
          %209 = sbr.rel (%p207) target = $region28
        $region27: #{tpu_custom_call.1} parent=11 // pred_region
          %s211 = ssub.s32 16, 16
          %212 = vsyncadd [#allocation10], %s211
          %s214 = sshll.u32 [#allocation11], 4
          %s215 = int_to_ptr.vmem [resolvable:$true] %s214
          %217 = dma.hbm_to_vmem [thread:$0]  %s4, 16, %s215, [#allocation10]
        $region28: #{tpu_custom_call.1} parent=11 // pred_fallthru
          _
      $region12: #{tpu_custom_call.1} parent=5 // pred_fallthru
        _
      %p218 = scmp.lt.s32.totalorder %s19, 2
      // Predicated region
      $region29: #{tpu_custom_call.1} parent=5 // pred_check
        %p219 = pneg %p218
      $region30: #{tpu_custom_call.1} parent=5 // pred_check_branch
        %221 = sbr.rel (%p219) target = $region32
      $region31: #{tpu_custom_call.1} parent=5 // pred_region
        // Predicated region
        $region33: #{tpu_custom_call.1} parent=31 // pred_check
          %p222 = pneg %p39
        $region34: #{tpu_custom_call.1} parent=31 // pred_check_branch
          %224 = sbr.rel (%p222) target = $region36
        $region35: #{tpu_custom_call.1} parent=31 // pred_region
          %s225 = sand.u32 %s29, 1
          %s226 = scalar_lea.sflag [#allocation4], %s225
          %s227 = sand.u32 %s29, 1
          %s228 = smul.addr %s227, 216
          %s229 = scalar_lea.vmem [#allocation3], %s228
          %s231 = ssub.s32 3456, 3456
          %232 = vsyncadd %s226, %s231
          %s233 = smul.addr %s19, 54
          %s234 = smul.addr %s233, 64
          %s235 = scalar_lea.hbm %s0, %s234
          %s236 = sshll.u32 %s229, 4
          %s237 = int_to_ptr.vmem [resolvable:$true] %s236
          %242 = dma.hbm_to_vmem [thread:$0]  %s235, 3456, %s237, %s226, 64, 64, 4
        $region36: #{tpu_custom_call.1} parent=31 // pred_fallthru
          _
      $region32: #{tpu_custom_call.1} parent=5 // pred_fallthru
        _
      %p243 = scmp.le.s32.totalorder 1, %s19
      %p244 = scmp.lt.s32.totalorder %s19, 3
      %p245 = pnand %p243, %p244
      %p246 = pneg %p245
      // Predicated region
      $region37: #{tpu_custom_call.1} parent=5 // pred_check
        _
      $region38: #{tpu_custom_call.1} parent=5 // pred_check_branch
        %248 = sbr.rel (%p245) target = $region40
      $region39: #{tpu_custom_call.1} parent=5 // pred_region
        %s249 = ssub.s32 %s19, 1
        %s250 = sand.u32 %s32, 1
        %s251 = scalar_lea.sflag [#allocation4], %s250
        %s252 = sand.u32 %s32, 1
        %s253 = smul.addr %s252, 216
        %s254 = scalar_lea.vmem [#allocation3], %s253
        // Predicated region
        $region41: #{tpu_custom_call.1} parent=39 // pred_check
          %p255 = pneg %p45
        $region42: #{tpu_custom_call.1} parent=39 // pred_check_branch
          %257 = sbr.rel (%p255) target = $region44
        $region43: #{tpu_custom_call.1} parent=39 // pred_region
          %258 = dma.done %s251, 3456
        $region44: #{tpu_custom_call.1} parent=39 // pred_fallthru
          _
        // Predicated region
        $region45: #{tpu_custom_call.1} parent=39 // pred_check
          %p259 = pneg %p66
        $region46: #{tpu_custom_call.1} parent=39 // pred_check_branch
          %261 = sbr.rel (%p259) target = $region48
        $region47: #{tpu_custom_call.1} parent=39 // pred_region
          %262 = dma.done [#allocation7], 9216
        $region48: #{tpu_custom_call.1} parent=39 // pred_fallthru
          _
        // Predicated region
        $region49: #{tpu_custom_call.1} parent=39 // pred_check
          %p263 = pneg %p87
        $region50: #{tpu_custom_call.1} parent=39 // pred_check_branch
          %265 = sbr.rel (%p263) target = $region52
        $region51: #{tpu_custom_call.1} parent=39 // pred_region
          %266 = dma.done [#allocation7], 16
        $region52: #{tpu_custom_call.1} parent=39 // pred_fallthru
          _
        // Predicated region
        $region53: #{tpu_custom_call.1} parent=39 // pred_check
          %p267 = pneg %p108
        $region54: #{tpu_custom_call.1} parent=39 // pred_check_branch
          %269 = sbr.rel (%p267) target = $region56
        $region55: #{tpu_custom_call.1} parent=39 // pred_region
          %270 = dma.done [#allocation10], 9216
        $region56: #{tpu_custom_call.1} parent=39 // pred_fallthru
          _
        // Predicated region
        $region57: #{tpu_custom_call.1} parent=39 // pred_check
          %p271 = pneg %p129
        $region58: #{tpu_custom_call.1} parent=39 // pred_check_branch
          %273 = sbr.rel (%p271) target = $region60
        $region59: #{tpu_custom_call.1} parent=39 // pred_region
          %274 = dma.done [#allocation10], 16
        $region60: #{tpu_custom_call.1} parent=39 // pred_fallthru
          _
        %s275 = sand.u32 %s32, 1
        %s276 = scalar_lea.sflag [#allocation4], %s275
        %s277 = sand.u32 %s32, 1
        %s278 = smul.addr %s277, 216
        %s279 = scalar_lea.vmem [#allocation3], %s278
        %p280 = pneg %p45
        %p281 = pneg %p42
        %p282 = pneg %p66
        %p283 = pneg %p63
        %p284 = pneg %p87
        %p285 = pneg %p84
        %p286 = pneg %p108
        %p287 = pneg %p105
        %p288 = pneg %p129
        %p289 = pneg %p126
        %p290 = pneg %p155
        %p291 = pneg %p152
        %s292 = sand.u32 %s142, 1
        %s293 = scalar_lea.sflag [#allocation5], %s292
        %s294 = sand.u32 %s142, 1
        %s295 = smul.addr %s294, 256
        %s296 = scalar_lea.vmem [#allocation12], %s295
        %298 = vst [vmem:[#allocation2] sm:$0xff] 0
        %299 = vst [vmem:[#allocation2 + $0x18] sm:$0xff] 0
        %300 = vst [vmem:[#allocation2 + $0x30] sm:$0xff] 0
        %301 = vst [vmem:[#allocation2 + $0x48] sm:$0xff] 0
        %302 = vst [vmem:[#allocation2 + $0x60] sm:$0xff] 0
        %303 = vst [vmem:[#allocation2 + $0x78] sm:$0xff] 0
        %304 = vst [vmem:[#allocation2 + $0x90] sm:$0xff] 0
        %305 = vst [vmem:[#allocation2 + $0xa8] sm:$0xff] 0
        %306 = vst [vmem:[#allocation2 + $0xc0] sm:$0xff] 0
        %307 = vst [vmem:[#allocation2 + $0xd8] sm:$0xff] 0
        %308 = vst [vmem:[#allocation2 + $0xf0] sm:$0xff] 0
        %309 = vst [vmem:[#allocation2 + $0x108] sm:$0xff] 0
        %310 = vst [vmem:[#allocation2 + $0x120] sm:$0xff] 0
        %311 = vst [vmem:[#allocation2 + $0x138] sm:$0xff] 0
        %312 = vst [vmem:[#allocation2 + $0x150] sm:$0xff] 0
        %313 = vst [vmem:[#allocation2 + $0x168] sm:$0xff] 0
        %314 = vst [vmem:[#allocation2 + $0x180] sm:$0xff] 0
        %315 = vst [vmem:[#allocation2 + $0x198] sm:$0xff] 0
        %316 = vst [vmem:[#allocation2 + $0x10] sm:$0xff] 0
        %317 = vst [vmem:[#allocation2 + $0x28] sm:$0xff] 0
        %318 = vst [vmem:[#allocation2 + $0x40] sm:$0xff] 0
        %319 = vst [vmem:[#allocation2 + $0x58] sm:$0xff] 0
        %320 = vst [vmem:[#allocation2 + $0x70] sm:$0xff] 0
        %321 = vst [vmem:[#allocation2 + $0x88] sm:$0xff] 0
        %322 = vst [vmem:[#allocation2 + $0xa0] sm:$0xff] 0
        %323 = vst [vmem:[#allocation2 + $0xb8] sm:$0xff] 0
        %324 = vst [vmem:[#allocation2 + $0xd0] sm:$0xff] 0
        %325 = vst [vmem:[#allocation2 + $0xe8] sm:$0xff] 0
        %326 = vst [vmem:[#allocation2 + $0x100] sm:$0xff] 0
        %327 = vst [vmem:[#allocation2 + $0x118] sm:$0xff] 0
        %328 = vst [vmem:[#allocation2 + $0x130] sm:$0xff] 0
        %329 = vst [vmem:[#allocation2 + $0x148] sm:$0xff] 0
        %330 = vst [vmem:[#allocation2 + $0x160] sm:$0xff] 0
        %331 = vst [vmem:[#allocation2 + $0x178] sm:$0xff] 0
        %332 = vst [vmem:[#allocation2 + $0x190] sm:$0xff] 0
        %333 = vst [vmem:[#allocation2 + $0x1a8] sm:$0xff] 0
        %334 = vst [vmem:[#allocation2] sm:$0xff] 0
        %335 = vst [vmem:[#allocation2 + $0x8] sm:$0xff] 0
        %336 = vst [vmem:[#allocation2 + $0x10] sm:$0xff] 0
        %s337 = scalar_lea.vmem [#allocation2], 408
        %338 = vst [vmem:[%s337] sm:$0xff] 0
        %339 = vst [vmem:[%s337 + $0x8] sm:$0xff] 0
        %340 = vst [vmem:[%s337 + $0x10] sm:$0xff] 0
        %v341 = vld [vmem:[%s254] sm:$0xf]
        %v342 = vld [vmem:[%s254 + $0x4] sm:$0xf]
        %v343 = vld [vmem:[%s254 + $0xc] sm:$0xf]
        %v344 = vld [vmem:[%s254 + $0x10] sm:$0xf]
        %v345 = vld [vmem:[%s254 + $0x18] sm:$0xf]
        %v346 = vld [vmem:[%s254 + $0x1c] sm:$0xf]
        %v347 = vld [vmem:[%s254 + $0x24] sm:$0xf]
        %v348 = vld [vmem:[%s254 + $0x28] sm:$0xf]
        %v349 = vld [vmem:[%s254 + $0x30] sm:$0xf]
        %v350 = vld [vmem:[%s254 + $0x34] sm:$0xf]
        %v351 = vld [vmem:[%s254 + $0x3c] sm:$0xf]
        %v352 = vld [vmem:[%s254 + $0x40] sm:$0xf]
        %v353 = vld [vmem:[%s254 + $0x48] sm:$0xf]
        %v354 = vld [vmem:[%s254 + $0x4c] sm:$0xf]
        %v355 = vld [vmem:[%s254 + $0x54] sm:$0xf]
        %v356 = vld [vmem:[%s254 + $0x58] sm:$0xf]
        %v357 = vld [vmem:[%s254 + $0x60] sm:$0xf]
        %v358 = vld [vmem:[%s254 + $0x64] sm:$0xf]
        %v359 = vld [vmem:[%s254 + $0x6c] sm:$0xf]
        %v360 = vld [vmem:[%s254 + $0x70] sm:$0xf]
        %v377 = vunpack.c.l.b16 %v341
        %v378 = vunpack.c.l.b16 %v342
        %v379 = vunpack.c.l.b16 %v343
        %v380 = vunpack.c.l.b16 %v344
        %v381 = vunpack.c.l.b16 %v345
        %v382 = vunpack.c.l.b16 %v346
        %v383 = vunpack.c.l.b16 %v347
        %v384 = vunpack.c.l.b16 %v348
        %v385 = vunpack.c.l.b16 %v349
        %v386 = vunpack.c.l.b16 %v350
        %v387 = vunpack.c.l.b16 %v351
        %v388 = vunpack.c.l.b16 %v352
        %v389 = vunpack.c.l.b16 %v353
        %v390 = vunpack.c.l.b16 %v354
        %v391 = vunpack.c.l.b16 %v355
        %v392 = vunpack.c.l.b16 %v356
        %v393 = vpack.c.b16 %v378, %v377
        %v394 = vpack.c.b16 %v380, %v379
        %v395 = vpack.c.b16 %v382, %v381
        %v396 = vpack.c.b16 %v384, %v383
        %v397 = vpack.c.b16 %v386, %v385
        %v398 = vpack.c.b16 %v388, %v387
        %v399 = vpack.c.b16 %v390, %v389
        %v400 = vpack.c.b16 %v392, %v391
        %v411 = vunpack.c.l.b16 %v357
        %v412 = vunpack.c.l.b16 %v358
        %v413 = vpack.c.b16 %v412, %v411
        %v417 = vunpack.c.l.b16 %v359
        %v418 = vunpack.c.l.b16 %v360
        %v419 = vpack.c.b16 %v418, %v417
        %v421 = vld [vmem:[#allocation6] sm:$0xf]
        %v422 = vld [vmem:[#allocation6 + $0x4] sm:$0xf]
        %v423 = vld [vmem:[#allocation6 + $0x8] sm:$0xf]
        %v424 = vld [vmem:[#allocation6 + $0xc] sm:$0xf]
        %v425 = vld [vmem:[#allocation6 + $0x10] sm:$0xf]
        %v426 = vld [vmem:[#allocation6 + $0x14] sm:$0xf]
        %v427 = vld [vmem:[#allocation6 + $0x18] sm:$0xf]
        %v428 = vld [vmem:[#allocation6 + $0x1c] sm:$0xf]
        %v429 = vld [vmem:[#allocation6 + $0x20] sm:$0xf]
        %v430 = vld [vmem:[#allocation6 + $0x24] sm:$0xf]
        %v431 = vld [vmem:[#allocation6 + $0x28] sm:$0xf]
        %v432 = vld [vmem:[#allocation6 + $0x2c] sm:$0xf]
        %v433 = vld [vmem:[#allocation6 + $0x30] sm:$0xf]
        %v434 = vld [vmem:[#allocation6 + $0x34] sm:$0xf]
        %v435 = vld [vmem:[#allocation6 + $0x38] sm:$0xf]
        %v436 = vld [vmem:[#allocation6 + $0x3c] sm:$0xf]
        %v437 = vld [vmem:[#allocation6 + $0x40] sm:$0xf]
        %v438 = vld [vmem:[#allocation6 + $0x44] sm:$0xf]
        %v439 = vld [vmem:[#allocation6 + $0x48] sm:$0xf]
        %v440 = vld [vmem:[#allocation6 + $0x4c] sm:$0xf]
        %v441 = vld [vmem:[#allocation6 + $0x50] sm:$0xf]
        %v442 = vld [vmem:[#allocation6 + $0x54] sm:$0xf]
        %v443 = vld [vmem:[#allocation6 + $0x58] sm:$0xf]
        %v444 = vld [vmem:[#allocation6 + $0x5c] sm:$0xf]
        %v445 = vld [vmem:[#allocation6 + $0x60] sm:$0xf]
        %v446 = vld [vmem:[#allocation6 + $0x64] sm:$0xf]
        %v447 = vld [vmem:[#allocation6 + $0x68] sm:$0xf]
        %v448 = vld [vmem:[#allocation6 + $0x6c] sm:$0xf]
        %v449 = vld [vmem:[#allocation6 + $0x70] sm:$0xf]
        %v450 = vld [vmem:[#allocation6 + $0x74] sm:$0xf]
        %v451 = vld [vmem:[#allocation6 + $0x78] sm:$0xf]
        %v452 = vld [vmem:[#allocation6 + $0x7c] sm:$0xf]
        %v453 = vld [vmem:[#allocation6 + $0x80] sm:$0xf]
        %v454 = vld [vmem:[#allocation6 + $0x84] sm:$0xf]
        %v455 = vld [vmem:[#allocation6 + $0x88] sm:$0xf]
        %v456 = vld [vmem:[#allocation6 + $0x8c] sm:$0xf]
        %v457 = vld [vmem:[#allocation6 + $0x90] sm:$0xf]
        %v458 = vld [vmem:[#allocation6 + $0x94] sm:$0xf]
        %v459 = vld [vmem:[#allocation6 + $0x98] sm:$0xf]
        %v460 = vld [vmem:[#allocation6 + $0x9c] sm:$0xf]
        %v461 = vld [vmem:[#allocation6 + $0xa0] sm:$0xf]
        %v462 = vld [vmem:[#allocation6 + $0xa4] sm:$0xf]
        %v463 = vld [vmem:[#allocation6 + $0xa8] sm:$0xf]
        %v464 = vld [vmem:[#allocation6 + $0xac] sm:$0xf]
        %v465 = vld [vmem:[#allocation6 + $0xb0] sm:$0xf]
        %v466 = vld [vmem:[#allocation6 + $0xb4] sm:$0xf]
        %v467 = vld [vmem:[#allocation6 + $0xb8] sm:$0xf]
        %v468 = vld [vmem:[#allocation6 + $0xbc] sm:$0xf]
        %v469 = vld [vmem:[%s254 + $0x8] sm:$0x1]
        %v470 = vld [vmem:[%s254 + $0x14] sm:$0x1]
        %v471 = vld [vmem:[%s254 + $0x20] sm:$0x1]
        %v472 = vld [vmem:[%s254 + $0x2c] sm:$0x1]
        %v473 = vld [vmem:[%s254 + $0x38] sm:$0x1]
        %v474 = vld [vmem:[%s254 + $0x44] sm:$0x1]
        %v475 = vld [vmem:[%s254 + $0x50] sm:$0x1]
        %v476 = vld [vmem:[%s254 + $0x5c] sm:$0x1]
        %v477 = vld [vmem:[%s254 + $0x68] sm:$0x1]
        %v478 = vld [vmem:[%s254 + $0x74] sm:$0x1]
        %v487 = vunpack.c.l.b16 %v469
        %v488 = vunpack.c.l.b16 %v470
        %v489 = vunpack.c.l.b16 %v471
        %v490 = vunpack.c.l.b16 %v472
        %v491 = vunpack.c.l.b16 %v473
        %v492 = vunpack.c.l.b16 %v474
        %v493 = vunpack.c.l.b16 %v475
        %v494 = vunpack.c.l.b16 %v476
        %v495 = vpack.c.b16 %v487, %v487
        %v496 = vpack.c.b16 %v488, %v488
        %v497 = vpack.c.b16 %v489, %v489
        %v498 = vpack.c.b16 %v490, %v490
        %v499 = vpack.c.b16 %v491, %v491
        %v500 = vpack.c.b16 %v492, %v492
        %v501 = vpack.c.b16 %v493, %v493
        %v502 = vpack.c.b16 %v494, %v494
        %v504 = vunpack.c.l.b16 %v477
        %v505 = vpack.c.b16 %v504, %v504
        %v507 = vunpack.c.l.b16 %v478
        %v508 = vpack.c.b16 %v507, %v507
        %vm509 = vsmask.f32 7424
        %v511 = vshrl.u32 %v393, 16
        %v513 = vshll.u32 %v393, 16
        %v515 = vrot.slane %v513, 1
        %v516 = vor.u32 %v511, %v515
        %v518 = vshll.u32 %v495, 16
        %v520 = vrot.slane %v518, 1
        %v521 = vsel %vm509, %v516, %v520
        %v523 = vshrl.u32 %v394, 16
        %v525 = vshll.u32 %v394, 16
        %v527 = vrot.slane %v525, 1
        %v528 = vor.u32 %v523, %v527
        %v530 = vshll.u32 %v496, 16
        %v532 = vrot.slane %v530, 1
        %v533 = vsel %vm509, %v528, %v532
        %v535 = vshrl.u32 %v395, 16
        %v537 = vshll.u32 %v395, 16
        %v539 = vrot.slane %v537, 1
        %v540 = vor.u32 %v535, %v539
        %v542 = vshll.u32 %v497, 16
        %v544 = vrot.slane %v542, 1
        %v545 = vsel %vm509, %v540, %v544
        %v547 = vshrl.u32 %v396, 16
        %v549 = vshll.u32 %v396, 16
        %v551 = vrot.slane %v549, 1
        %v552 = vor.u32 %v547, %v551
        %v554 = vshll.u32 %v498, 16
        %v556 = vrot.slane %v554, 1
        %v557 = vsel %vm509, %v552, %v556
        %v559 = vshrl.u32 %v397, 16
        %v561 = vshll.u32 %v397, 16
        %v563 = vrot.slane %v561, 1
        %v564 = vor.u32 %v559, %v563
        %v566 = vshll.u32 %v499, 16
        %v568 = vrot.slane %v566, 1
        %v569 = vsel %vm509, %v564, %v568
        %v571 = vshrl.u32 %v398, 16
        %v573 = vshll.u32 %v398, 16
        %v575 = vrot.slane %v573, 1
        %v576 = vor.u32 %v571, %v575
        %v578 = vshll.u32 %v500, 16
        %v580 = vrot.slane %v578, 1
        %v581 = vsel %vm509, %v576, %v580
        %v583 = vshrl.u32 %v399, 16
        %v585 = vshll.u32 %v399, 16
        %v587 = vrot.slane %v585, 1
        %v588 = vor.u32 %v583, %v587
        %v590 = vshll.u32 %v501, 16
        %v592 = vrot.slane %v590, 1
        %v593 = vsel %vm509, %v588, %v592
        %v595 = vshrl.u32 %v400, 16
        %v597 = vshll.u32 %v400, 16
        %v599 = vrot.slane %v597, 1
        %v600 = vor.u32 %v595, %v599
        %v602 = vshll.u32 %v502, 16
        %v604 = vrot.slane %v602, 1
        %v605 = vsel %vm509, %v600, %v604
        %v607 = vshrl.u32 %v413, 16
        %v609 = vshll.u32 %v413, 16
        %v611 = vrot.slane %v609, 1
        %v612 = vor.u32 %v607, %v611
        %v614 = vshll.u32 %v505, 16
        %v616 = vrot.slane %v614, 1
        %v617 = vsel %vm509, %v612, %v616
        %v619 = vshrl.u32 %v419, 16
        %v621 = vshll.u32 %v419, 16
        %v623 = vrot.slane %v621, 1
        %v624 = vor.u32 %v619, %v623
        %v626 = vshll.u32 %v508, 16
        %v628 = vrot.slane %v626, 1
        %v629 = vsel %vm509, %v624, %v628
        %s640 = scalar_lea.vmem [#allocation6], 192
        %v641 = vld [vmem:[%s640] sm:$0xf]
        %v642 = vld [vmem:[%s640 + $0x4] sm:$0xf]
        %v643 = vld [vmem:[%s640 + $0x8] sm:$0xf]
        %v644 = vld [vmem:[%s640 + $0xc] sm:$0xf]
        %v645 = vld [vmem:[%s640 + $0x10] sm:$0xf]
        %v646 = vld [vmem:[%s640 + $0x14] sm:$0xf]
        %v647 = vld [vmem:[%s640 + $0x18] sm:$0xf]
        %v648 = vld [vmem:[%s640 + $0x1c] sm:$0xf]
        %v649 = vld [vmem:[%s640 + $0x20] sm:$0xf]
        %v650 = vld [vmem:[%s640 + $0x24] sm:$0xf]
        %v651 = vld [vmem:[%s640 + $0x28] sm:$0xf]
        %v652 = vld [vmem:[%s640 + $0x2c] sm:$0xf]
        %v653 = vld [vmem:[%s640 + $0x30] sm:$0xf]
        %v654 = vld [vmem:[%s640 + $0x34] sm:$0xf]
        %v655 = vld [vmem:[%s640 + $0x38] sm:$0xf]
        %v656 = vld [vmem:[%s640 + $0x3c] sm:$0xf]
        %v657 = vld [vmem:[%s640 + $0x40] sm:$0xf]
        %v658 = vld [vmem:[%s640 + $0x44] sm:$0xf]
        %v659 = vld [vmem:[%s640 + $0x48] sm:$0xf]
        %v660 = vld [vmem:[%s640 + $0x4c] sm:$0xf]
        %v661 = vld [vmem:[%s640 + $0x50] sm:$0xf]
        %v662 = vld [vmem:[%s640 + $0x54] sm:$0xf]
        %v663 = vld [vmem:[%s640 + $0x58] sm:$0xf]
        %v664 = vld [vmem:[%s640 + $0x5c] sm:$0xf]
        %v665 = vld [vmem:[%s640 + $0x60] sm:$0xf]
        %v666 = vld [vmem:[%s640 + $0x64] sm:$0xf]
        %v667 = vld [vmem:[%s640 + $0x68] sm:$0xf]
        %v668 = vld [vmem:[%s640 + $0x6c] sm:$0xf]
        %v669 = vld [vmem:[%s640 + $0x70] sm:$0xf]
        %v670 = vld [vmem:[%s640 + $0x74] sm:$0xf]
        %v671 = vld [vmem:[%s640 + $0x78] sm:$0xf]
        %v672 = vld [vmem:[%s640 + $0x7c] sm:$0xf]
        %v673 = vld [vmem:[%s640 + $0x80] sm:$0xf]
        %v674 = vld [vmem:[%s640 + $0x84] sm:$0xf]
        %v675 = vld [vmem:[%s640 + $0x88] sm:$0xf]
        %v676 = vld [vmem:[%s640 + $0x8c] sm:$0xf]
        %v677 = vld [vmem:[%s640 + $0x90] sm:$0xf]
        %v678 = vld [vmem:[%s640 + $0x94] sm:$0xf]
        %v679 = vld [vmem:[%s640 + $0x98] sm:$0xf]
        %v680 = vld [vmem:[%s640 + $0x9c] sm:$0xf]
        %v681 = vld [vmem:[%s640 + $0xa0] sm:$0xf]
        %v682 = vld [vmem:[%s640 + $0xa4] sm:$0xf]
        %v683 = vld [vmem:[%s640 + $0xa8] sm:$0xf]
        %v684 = vld [vmem:[%s640 + $0xac] sm:$0xf]
        %v685 = vld [vmem:[%s640 + $0xb0] sm:$0xf]
        %v686 = vld [vmem:[%s640 + $0xb4] sm:$0xf]
        %v687 = vld [vmem:[%s640 + $0xb8] sm:$0xf]
        %v688 = vld [vmem:[%s640 + $0xbc] sm:$0xf]
        %v737 = vunpack.c.l.b16 %v641
        %v738 = vunpack.c.l.b16 %v642
        %v739 = vunpack.c.l.b16 %v643
        %v740 = vunpack.c.l.b16 %v644
        %v741 = vunpack.c.l.b16 %v645
        %v742 = vunpack.c.l.b16 %v646
        %v743 = vunpack.c.l.b16 %v647
        %v744 = vunpack.c.l.b16 %v648
        %v745 = vunpack.c.l.b16 %v649
        %v746 = vunpack.c.l.b16 %v650
        %v747 = vunpack.c.l.b16 %v651
        %v748 = vunpack.c.l.b16 %v652
        %v749 = vunpack.c.l.b16 %v653
        %v750 = vunpack.c.l.b16 %v654
        %v751 = vunpack.c.l.b16 %v655
        %v752 = vunpack.c.l.b16 %v656
        %v753 = vunpack.c.l.b16 %v657
        %v754 = vunpack.c.l.b16 %v658
        %v755 = vunpack.c.l.b16 %v659
        %v756 = vunpack.c.l.b16 %v660
        %v757 = vunpack.c.l.b16 %v661
        %v758 = vunpack.c.l.b16 %v662
        %v759 = vunpack.c.l.b16 %v663
        %v760 = vunpack.c.l.b16 %v664
        %v761 = vunpack.c.l.b16 %v665
        %v762 = vunpack.c.l.b16 %v666
        %v763 = vunpack.c.l.b16 %v667
        %v764 = vunpack.c.l.b16 %v668
        %v765 = vunpack.c.l.b16 %v669
        %v766 = vunpack.c.l.b16 %v670
        %v767 = vunpack.c.l.b16 %v671
        %v768 = vunpack.c.l.b16 %v672
        %v769 = vunpack.c.l.b16 %v673
        %v770 = vunpack.c.l.b16 %v674
        %v771 = vunpack.c.l.b16 %v675
        %v772 = vunpack.c.l.b16 %v676
        %v773 = vunpack.c.l.b16 %v677
        %v774 = vunpack.c.l.b16 %v678
        %v775 = vunpack.c.l.b16 %v679
        %v776 = vunpack.c.l.b16 %v680
        %v777 = vunpack.c.l.b16 %v681
        %v778 = vunpack.c.l.b16 %v682
        %v779 = vunpack.c.l.b16 %v683
        %v780 = vunpack.c.l.b16 %v684
        %v781 = vunpack.c.l.b16 %v685
        %v782 = vunpack.c.l.b16 %v686
        %v783 = vunpack.c.l.b16 %v687
        %v784 = vunpack.c.l.b16 %v688
        %v785 = vpack.c.b16 %v738, %v737
        %v786 = vpack.c.b16 %v740, %v739
        %v787 = vpack.c.b16 %v742, %v741
        %v788 = vpack.c.b16 %v744, %v743
        %v789 = vpack.c.b16 %v746, %v745
        %v790 = vpack.c.b16 %v748, %v747
        %v791 = vpack.c.b16 %v750, %v749
        %v792 = vpack.c.b16 %v752, %v751
        %v793 = vpack.c.b16 %v754, %v753
        %v794 = vpack.c.b16 %v756, %v755
        %v795 = vpack.c.b16 %v758, %v757
        %v796 = vpack.c.b16 %v760, %v759
        %v797 = vpack.c.b16 %v762, %v761
        %v798 = vpack.c.b16 %v764, %v763
        %v799 = vpack.c.b16 %v766, %v765
        %v800 = vpack.c.b16 %v768, %v767
        %v801 = vpack.c.b16 %v770, %v769
        %v802 = vpack.c.b16 %v772, %v771
        %v803 = vpack.c.b16 %v774, %v773
        %v804 = vpack.c.b16 %v776, %v775
        %v805 = vpack.c.b16 %v778, %v777
        %v806 = vpack.c.b16 %v780, %v779
        %v807 = vpack.c.b16 %v782, %v781
        %v808 = vpack.c.b16 %v784, %v783
        %833 = vmatprep.subr.bf16.mxu0 0
        %834 = vmatpush1.bf16.msra.mxu0 %v785
        %835 = vmatprep.subr.bf16.mxu0 0
        %836 = vmatpush1.bf16.msra.mxu0 %v786
        %837 = vmatprep.subr.bf16.mxu0 0
        %838 = vmatpush1.bf16.msra.mxu0 %v787
        %839 = vmatprep.subr.bf16.mxu0 0
        %840 = vmatpush1.bf16.msra.mxu0 %v788
        %841 = vmatprep.subr.bf16.mxu0 0
        %842 = vmatpush1.bf16.msra.mxu0 %v789
        %843 = vmatprep.subr.bf16.mxu0 0
        %844 = vmatpush1.bf16.msra.mxu0 %v790
        %845 = vmatprep.subr.bf16.mxu0 0
        %846 = vmatpush1.bf16.msra.mxu0 %v791
        %847 = vmatprep.subr.bf16.mxu0 0
        %848 = vmatpush1.bf16.msra.mxu0 %v792
        %849 = vmatprep.subr.bf16.mxu0 0
        %850 = vmatpush1.bf16.msra.mxu0 %v793
        %851 = vmatprep.subr.bf16.mxu0 0
        %852 = vmatpush1.bf16.msra.mxu0 %v794
        %853 = vmatprep.subr.bf16.mxu0 0
        %854 = vmatpush1.bf16.msra.mxu0 %v795
        %855 = vmatprep.subr.bf16.mxu0 0
        %856 = vmatpush1.bf16.msra.mxu0 %v796
        %857 = vmatprep.subr.bf16.mxu0 0
        %858 = vmatpush1.bf16.msra.mxu0 %v797
        %859 = vmatprep.subr.bf16.mxu0 0
        %860 = vmatpush1.bf16.msra.mxu0 %v798
        %861 = vmatprep.subr.bf16.mxu0 0
        %862 = vmatpush1.bf16.msra.mxu0 %v799
        %863 = vmatprep.subr.bf16.mxu0 0
        %864 = vmatpush1.bf16.msra.mxu0 %v800
        %865 = vmatprep.mubr.bf16.mxu0 %v533
        %866 = vmatmul.mubr.bf16.gmra.mrb[0].mxu0 %v521
        %v867 = vpop.f32.mrb[0].mxu0
        %v868 = vadd.f32 0.0, %v867
        %v869 = vpop.f32.mrb[0].mxu0
        %v870 = vpop.f32.mrb[0].mxu0
        %v871 = vadd.f32 0.0, %v870
        %v872 = vpop.f32.mrb[0].mxu0
        %873 = vmatprep.mubr.bf16.mxu0 %v545
        %874 = vmatmul.mubr.bf16.gmra.mrb[0].mxu0 %v533
        %v875 = vpop.f32.mrb[0].mxu0
        %v876 = vadd.f32 0.0, %v875
        %v877 = vpop.f32.mrb[0].mxu0
        %v878 = vpop.f32.mrb[0].mxu0
        %v879 = vadd.f32 0.0, %v878
        %v880 = vpop.f32.mrb[0].mxu0
        %881 = vmatprep.mubr.bf16.mxu0 %v557
        %882 = vmatmul.mubr.bf16.gmra.mrb[0].mxu0 %v545
        %v883 = vpop.f32.mrb[0].mxu0
        %v884 = vadd.f32 0.0, %v883
        %v885 = vpop.f32.mrb[0].mxu0
        %v886 = vpop.f32.mrb[0].mxu0
        %v887 = vadd.f32 0.0, %v886
        %v888 = vpop.f32.mrb[0].mxu0
        %889 = vmatprep.mubr.bf16.mxu0 %v569
        %890 = vmatmul.mubr.bf16.gmra.mrb[0].mxu0 %v557
        %v891 = vpop.f32.mrb[0].mxu0
        %v892 = vadd.f32 0.0, %v891
        %v893 = vpop.f32.mrb[0].mxu0
        %v894 = vpop.f32.mrb[0].mxu0
        %v895 = vadd.f32 0.0, %v894
        %v896 = vpop.f32.mrb[0].mxu0
        %897 = vmatprep.mubr.bf16.mxu0 %v581
        %898 = vmatmul.mubr.bf16.gmra.mrb[0].mxu0 %v569
        %v899 = vpop.f32.mrb[0].mxu0
        %v900 = vadd.f32 0.0, %v899
        %v901 = vpop.f32.mrb[0].mxu0
        %v902 = vpop.f32.mrb[0].mxu0
        %v903 = vadd.f32 0.0, %v902
        %v904 = vpop.f32.mrb[0].mxu0
        %905 = vmatprep.mubr.bf16.mxu0 %v593
        %906 = vmatmul.mubr.bf16.gmra.mrb[0].mxu0 %v581
        %v907 = vpop.f32.mrb[0].mxu0
        %v908 = vadd.f32 0.0, %v907
        %v909 = vpop.f32.mrb[0].mxu0
        %v910 = vpop.f32.mrb[0].mxu0
        %v911 = vadd.f32 0.0, %v910
        %v912 = vpop.f32.mrb[0].mxu0
        %913 = vmatprep.mubr.bf16.mxu0 %v605
        %914 = vmatmul.mubr.bf16.gmra.mrb[0].mxu0 %v593
        %v915 = vpop.f32.mrb[0].mxu0
        %v916 = vadd.f32 0.0, %v915
        %v917 = vpop.f32.mrb[0].mxu0
        %v918 = vpop.f32.mrb[0].mxu0
        %v919 = vadd.f32 0.0, %v918
        %v920 = vpop.f32.mrb[0].mxu0
        %921 = vmatprep.mubr.bf16.mxu0 %v617
        %922 = vmatmul.mubr.bf16.gmra.mrb[0].mxu0 %v605
        %v923 = vpop.f32.mrb[0].mxu0
        %v924 = vadd.f32 0.0, %v923
        %v925 = vpop.f32.mrb[0].mxu0
        %v926 = vpop.f32.mrb[0].mxu0
        %v927 = vadd.f32 0.0, %v926
        %v928 = vpop.f32.mrb[0].mxu0
        %929 = vdwg.mxu0
        %930 = vmatprep.subr.bf16.mxu0 0
        %931 = vmatpush1.bf16.msra.mxu0 %v801
        %932 = vmatprep.subr.bf16.mxu0 0
        %933 = vmatpush1.bf16.msra.mxu0 %v802
        %934 = vmatprep.subr.bf16.mxu0 0
        %935 = vmatpush1.bf16.msra.mxu0 %v803
        %936 = vmatprep.subr.bf16.mxu0 0
        %937 = vmatpush1.bf16.msra.mxu0 %v804
        %938 = vmatprep.subr.bf16.mxu0 0
        %939 = vmatpush1.bf16.msra.mxu0 %v805
        %940 = vmatprep.subr.bf16.mxu0 0
        %941 = vmatpush1.bf16.msra.mxu0 %v806
        %942 = vmatprep.subr.bf16.mxu0 0
        %943 = vmatpush1.bf16.msra.mxu0 %v807
        %944 = vmatprep.subr.bf16.mxu0 0
        %945 = vmatpush1.bf16.msra.mxu0 %v808
        %946 = vmatprep.subr.bf16.mxu0 0
        %947 = vmatpush1.bf16.msra.mxu0 0
        %948 = vmatprep.subr.bf16.mxu0 0
        %949 = vmatpush1.bf16.msra.mxu0 0
        %950 = vmatprep.subr.bf16.mxu0 0
        %951 = vmatpush1.bf16.msra.mxu0 0
        %952 = vmatprep.subr.bf16.mxu0 0
        %953 = vmatpush1.bf16.msra.mxu0 0
        %954 = vmatprep.subr.bf16.mxu0 0
        %955 = vmatpush1.bf16.msra.mxu0 0
        %956 = vmatprep.subr.bf16.mxu0 0
        %957 = vmatpush1.bf16.msra.mxu0 0
        %958 = vmatprep.subr.bf16.mxu0 0
        %959 = vmatpush1.bf16.msra.mxu0 0
        %960 = vmatprep.subr.bf16.mxu0 0
        %961 = vmatpush1.bf16.msra.mxu0 0
        %962 = vmatprep.mubr.bf16.mxu0 0
        %963 = vmatmul.mubr.bf16.gmra.mrb[0].mxu0 %v545
        %v964 = vpop.f32.mrb[0].mxu0
        %v965 = vadd.f32 %v868, %v964
        %v966 = vpop.f32.mrb[0].mxu0
        %v967 = vpop.f32.mrb[0].mxu0
        %v968 = vadd.f32 %v871, %v967
        %v969 = vpop.f32.mrb[0].mxu0
        %970 = vmatprep.mubr.bf16.mxu0 0
        %971 = vmatmul.mubr.bf16.gmra.mrb[0].mxu0 %v557
        %v972 = vpop.f32.mrb[0].mxu0
        %v973 = vadd.f32 %v876, %v972
        %v974 = vpop.f32.mrb[0].mxu0
        %v975 = vpop.f32.mrb[0].mxu0
        %v976 = vadd.f32 %v879, %v975
        %v977 = vpop.f32.mrb[0].mxu0
        %978 = vmatprep.mubr.bf16.mxu0 0
        %979 = vmatmul.mubr.bf16.gmra.mrb[0].mxu0 %v569
        %v980 = vpop.f32.mrb[0].mxu0
        %v981 = vadd.f32 %v884, %v980
        %v982 = vpop.f32.mrb[0].mxu0
        %v983 = vpop.f32.mrb[0].mxu0
        %v984 = vadd.f32 %v887, %v983
        %v985 = vpop.f32.mrb[0].mxu0
        %986 = vmatprep.mubr.bf16.mxu0 0
        %987 = vmatmul.mubr.bf16.gmra.mrb[0].mxu0 %v581
        %v988 = vpop.f32.mrb[0].mxu0
        %v989 = vadd.f32 %v892, %v988
        %v990 = vpop.f32.mrb[0].mxu0
        %v991 = vpop.f32.mrb[0].mxu0
        %v992 = vadd.f32 %v895, %v991
        %v993 = vpop.f32.mrb[0].mxu0
        %994 = vmatprep.mubr.bf16.mxu0 0
        %995 = vmatmul.mubr.bf16.gmra.mrb[0].mxu0 %v593
        %v996 = vpop.f32.mrb[0].mxu0
        %v997 = vadd.f32 %v900, %v996
        %v998 = vpop.f32.mrb[0].mxu0
        %v999 = vpop.f32.mrb[0].mxu0
        %v1000 = vadd.f32 %v903, %v999
        %v1001 = vpop.f32.mrb[0].mxu0
        %1002 = vmatprep.mubr.bf16.mxu0 0
        %1003 = vmatmul.mubr.bf16.gmra.mrb[0].mxu0 %v605
        %v1004 = vpop.f32.mrb[0].mxu0
        %v1005 = vadd.f32 %v908, %v1004
        %v1006 = vpop.f32.mrb[0].mxu0
        %v1007 = vpop.f32.mrb[0].mxu0
        %v1008 = vadd.f32 %v911, %v1007
        %v1009 = vpop.f32.mrb[0].mxu0
        %1010 = vmatprep.mubr.bf16.mxu0 0
        %1011 = vmatmul.mubr.bf16.gmra.mrb[0].mxu0 %v617
        %v1012 = vpop.f32.mrb[0].mxu0
        %v1013 = vadd.f32 %v916, %v1012
        %v1014 = vpop.f32.mrb[0].mxu0
        %v1015 = vpop.f32.mrb[0].mxu0
        %v1016 = vadd.f32 %v919, %v1015
        %v1017 = vpop.f32.mrb[0].mxu0
        %1018 = vmatprep.mubr.bf16.mxu0 0
        %1019 = vmatmul.mubr.bf16.gmra.mrb[0].mxu0 %v629
        %v1020 = vpop.f32.mrb[0].mxu0
        %v1021 = vadd.f32 %v924, %v1020
        %v1022 = vpop.f32.mrb[0].mxu0
        %v1023 = vpop.f32.mrb[0].mxu0
        %v1024 = vadd.f32 %v927, %v1023
        %v1025 = vpop.f32.mrb[0].mxu0
        %1026 = vdwg.mxu0
        %v1075 = vunpack.c.l.b16 %v421
        %v1076 = vunpack.c.l.b16 %v422
        %v1077 = vunpack.c.l.b16 %v423
        %v1078 = vunpack.c.l.b16 %v424
        %v1079 = vunpack.c.l.b16 %v425
        %v1080 = vunpack.c.l.b16 %v426
        %v1081 = vunpack.c.l.b16 %v427
        %v1082 = vunpack.c.l.b16 %v428
        %v1083 = vunpack.c.l.b16 %v429
        %v1084 = vunpack.c.l.b16 %v430
        %v1085 = vunpack.c.l.b16 %v431
        %v1086 = vunpack.c.l.b16 %v432
        %v1087 = vunpack.c.l.b16 %v433
        %v1088 = vunpack.c.l.b16 %v434
        %v1089 = vunpack.c.l.b16 %v435
        %v1090 = vunpack.c.l.b16 %v436
        %v1091 = vunpack.c.l.b16 %v437
        %v1092 = vunpack.c.l.b16 %v438
        %v1093 = vunpack.c.l.b16 %v439
        %v1094 = vunpack.c.l.b16 %v440
        %v1095 = vunpack.c.l.b16 %v441
        %v1096 = vunpack.c.l.b16 %v442
        %v1097 = vunpack.c.l.b16 %v443
        %v1098 = vunpack.c.l.b16 %v444
        %v1099 = vunpack.c.l.b16 %v445
        %v1100 = vunpack.c.l.b16 %v446
        %v1101 = vunpack.c.l.b16 %v447
        %v1102 = vunpack.c.l.b16 %v448
        %v1103 = vunpack.c.l.b16 %v449
        %v1104 = vunpack.c.l.b16 %v450
        %v1105 = vunpack.c.l.b16 %v451
        %v1106 = vunpack.c.l.b16 %v452
        %v1107 = vunpack.c.l.b16 %v453
        %v1108 = vunpack.c.l.b16 %v454
        %v1109 = vunpack.c.l.b16 %v455
        %v1110 = vunpack.c.l.b16 %v456
        %v1111 = vunpack.c.l.b16 %v457
        %v1112 = vunpack.c.l.b16 %v458
        %v1113 = vunpack.c.l.b16 %v459
        %v1114 = vunpack.c.l.b16 %v460
        %v1115 = vunpack.c.l.b16 %v461
        %v1116 = vunpack.c.l.b16 %v462
        %v1117 = vunpack.c.l.b16 %v463
        %v1118 = vunpack.c.l.b16 %v464
        %v1119 = vunpack.c.l.b16 %v465
        %v1120 = vunpack.c.l.b16 %v466
        %v1121 = vunpack.c.l.b16 %v467
        %v1122 = vunpack.c.l.b16 %v468
        %v1123 = vpack.c.b16 %v1076, %v1075
        %v1124 = vpack.c.b16 %v1078, %v1077
        %v1125 = vpack.c.b16 %v1080, %v1079
        %v1126 = vpack.c.b16 %v1082, %v1081
        %v1127 = vpack.c.b16 %v1084, %v1083
        %v1128 = vpack.c.b16 %v1086, %v1085
        %v1129 = vpack.c.b16 %v1088, %v1087
        %v1130 = vpack.c.b16 %v1090, %v1089
        %v1131 = vpack.c.b16 %v1092, %v1091
        %v1132 = vpack.c.b16 %v1094, %v1093
        %v1133 = vpack.c.b16 %v1096, %v1095
        %v1134 = vpack.c.b16 %v1098, %v1097
        %v1135 = vpack.c.b16 %v1100, %v1099
        %v1136 = vpack.c.b16 %v1102, %v1101
        %v1137 = vpack.c.b16 %v1104, %v1103
        %v1138 = vpack.c.b16 %v1106, %v1105
        %v1139 = vpack.c.b16 %v1108, %v1107
        %v1140 = vpack.c.b16 %v1110, %v1109
        %v1141 = vpack.c.b16 %v1112, %v1111
        %v1142 = vpack.c.b16 %v1114, %v1113
        %v1143 = vpack.c.b16 %v1116, %v1115
        %v1144 = vpack.c.b16 %v1118, %v1117
        %v1145 = vpack.c.b16 %v1120, %v1119
        %v1146 = vpack.c.b16 %v1122, %v1121
        %1171 = vmatprep.subr.bf16.mxu0 0
        %1172 = vmatpush1.bf16.msra.mxu0 %v1123
        %1173 = vmatprep.subr.bf16.mxu0 0
        %1174 = vmatpush1.bf16.msra.mxu0 %v1124
        %1175 = vmatprep.subr.bf16.mxu0 0
        %1176 = vmatpush1.bf16.msra.mxu0 %v1125
        %1177 = vmatprep.subr.bf16.mxu0 0
        %1178 = vmatpush1.bf16.msra.mxu0 %v1126
        %1179 = vmatprep.subr.bf16.mxu0 0
        %1180 = vmatpush1.bf16.msra.mxu0 %v1127
        %1181 = vmatprep.subr.bf16.mxu0 0
        %1182 = vmatpush1.bf16.msra.mxu0 %v1128
        %1183 = vmatprep.subr.bf16.mxu0 0
        %1184 = vmatpush1.bf16.msra.mxu0 %v1129
        %1185 = vmatprep.subr.bf16.mxu0 0
        %1186 = vmatpush1.bf16.msra.mxu0 %v1130
        %1187 = vmatprep.subr.bf16.mxu0 0
        %1188 = vmatpush1.bf16.msra.mxu0 %v1131
        %1189 = vmatprep.subr.bf16.mxu0 0
        %1190 = vmatpush1.bf16.msra.mxu0 %v1132
        %1191 = vmatprep.subr.bf16.mxu0 0
        %1192 = vmatpush1.bf16.msra.mxu0 %v1133
        %1193 = vmatprep.subr.bf16.mxu0 0
        %1194 = vmatpush1.bf16.msra.mxu0 %v1134
        %1195 = vmatprep.subr.bf16.mxu0 0
        %1196 = vmatpush1.bf16.msra.mxu0 %v1135
        %1197 = vmatprep.subr.bf16.mxu0 0
        %1198 = vmatpush1.bf16.msra.mxu0 %v1136
        %1199 = vmatprep.subr.bf16.mxu0 0
        %1200 = vmatpush1.bf16.msra.mxu0 %v1137
        %1201 = vmatprep.subr.bf16.mxu0 0
        %1202 = vmatpush1.bf16.msra.mxu0 %v1138
        %1203 = vmatprep.mubr.bf16.mxu0 %v394
        %1204 = vmatmul.mubr.bf16.gmra.mrb[0].mxu0 %v393
        %v1205 = vpop.f32.mrb[0].mxu0
        %v1206 = vadd.f32 %v965, %v1205
        %v1207 = vpop.f32.mrb[0].mxu0
        %v1208 = vpop.f32.mrb[0].mxu0
        %v1209 = vadd.f32 %v968, %v1208
        %v1210 = vpop.f32.mrb[0].mxu0
        %1211 = vmatprep.mubr.bf16.mxu0 %v395
        %1212 = vmatmul.mubr.bf16.gmra.mrb[0].mxu0 %v394
        %v1213 = vpop.f32.mrb[0].mxu0
        %v1214 = vadd.f32 %v973, %v1213
        %v1215 = vpop.f32.mrb[0].mxu0
        %v1216 = vpop.f32.mrb[0].mxu0
        %v1217 = vadd.f32 %v976, %v1216
        %v1218 = vpop.f32.mrb[0].mxu0
        %1219 = vmatprep.mubr.bf16.mxu0 %v396
        %1220 = vmatmul.mubr.bf16.gmra.mrb[0].mxu0 %v395
        %v1221 = vpop.f32.mrb[0].mxu0
        %v1222 = vadd.f32 %v981, %v1221
        %v1223 = vpop.f32.mrb[0].mxu0
        %v1224 = vpop.f32.mrb[0].mxu0
        %v1225 = vadd.f32 %v984, %v1224
        %v1226 = vpop.f32.mrb[0].mxu0
        %1227 = vmatprep.mubr.bf16.mxu0 %v397
        %1228 = vmatmul.mubr.bf16.gmra.mrb[0].mxu0 %v396
        %v1229 = vpop.f32.mrb[0].mxu0
        %v1230 = vadd.f32 %v989, %v1229
        %v1231 = vpop.f32.mrb[0].mxu0
        %v1232 = vpop.f32.mrb[0].mxu0
        %v1233 = vadd.f32 %v992, %v1232
        %v1234 = vpop.f32.mrb[0].mxu0
        %1235 = vmatprep.mubr.bf16.mxu0 %v398
        %1236 = vmatmul.mubr.bf16.gmra.mrb[0].mxu0 %v397
        %v1237 = vpop.f32.mrb[0].mxu0
        %v1238 = vadd.f32 %v997, %v1237
        %v1239 = vpop.f32.mrb[0].mxu0
        %v1240 = vpop.f32.mrb[0].mxu0
        %v1241 = vadd.f32 %v1000, %v1240
        %v1242 = vpop.f32.mrb[0].mxu0
        %1243 = vmatprep.mubr.bf16.mxu0 %v399
        %1244 = vmatmul.mubr.bf16.gmra.mrb[0].mxu0 %v398
        %v1245 = vpop.f32.mrb[0].mxu0
        %v1246 = vadd.f32 %v1005, %v1245
        %v1247 = vpop.f32.mrb[0].mxu0
        %v1248 = vpop.f32.mrb[0].mxu0
        %v1249 = vadd.f32 %v1008, %v1248
        %v1250 = vpop.f32.mrb[0].mxu0
        %1251 = vmatprep.mubr.bf16.mxu0 %v400
        %1252 = vmatmul.mubr.bf16.gmra.mrb[0].mxu0 %v399
        %v1253 = vpop.f32.mrb[0].mxu0
        %v1254 = vadd.f32 %v1013, %v1253
        %v1255 = vpop.f32.mrb[0].mxu0
        %v1256 = vpop.f32.mrb[0].mxu0
        %v1257 = vadd.f32 %v1016, %v1256
        %v1258 = vpop.f32.mrb[0].mxu0
        %1259 = vmatprep.mubr.bf16.mxu0 %v413
        %1260 = vmatmul.mubr.bf16.gmra.mrb[0].mxu0 %v400
        %v1261 = vpop.f32.mrb[0].mxu0
        %v1262 = vadd.f32 %v1021, %v1261
        %v1263 = vpop.f32.mrb[0].mxu0
        %v1264 = vpop.f32.mrb[0].mxu0
        %v1265 = vadd.f32 %v1024, %v1264
        %v1266 = vpop.f32.mrb[0].mxu0
        %1267 = vdwg.mxu0
        %1268 = vmatprep.subr.bf16.mxu0 0
        %1269 = vmatpush1.bf16.msra.mxu0 %v1139
        %1270 = vmatprep.subr.bf16.mxu0 0
        %1271 = vmatpush1.bf16.msra.mxu0 %v1140
        %1272 = vmatprep.subr.bf16.mxu0 0
        %1273 = vmatpush1.bf16.msra.mxu0 %v1141
        %1274 = vmatprep.subr.bf16.mxu0 0
        %1275 = vmatpush1.bf16.msra.mxu0 %v1142
        %1276 = vmatprep.subr.bf16.mxu0 0
        %1277 = vmatpush1.bf16.msra.mxu0 %v1143
        %1278 = vmatprep.subr.bf16.mxu0 0
        %1279 = vmatpush1.bf16.msra.mxu0 %v1144
        %1280 = vmatprep.subr.bf16.mxu0 0
        %1281 = vmatpush1.bf16.msra.mxu0 %v1145
        %1282 = vmatprep.subr.bf16.mxu0 0
        %1283 = vmatpush1.bf16.msra.mxu0 %v1146
        %1284 = vmatprep.subr.bf16.mxu0 0
        %1285 = vmatpush1.bf16.msra.mxu0 0
        %1286 = vmatprep.subr.bf16.mxu0 0
        %1287 = vmatpush1.bf16.msra.mxu0 0
        %1288 = vmatprep.subr.bf16.mxu0 0
        %1289 = vmatpush1.bf16.msra.mxu0 0
        %1290 = vmatprep.subr.bf16.mxu0 0
        %1291 = vmatpush1.bf16.msra.mxu0 0
        %1292 = vmatprep.subr.bf16.mxu0 0
        %1293 = vmatpush1.bf16.msra.mxu0 0
        %1294 = vmatprep.subr.bf16.mxu0 0
        %1295 = vmatpush1.bf16.msra.mxu0 0
        %1296 = vmatprep.subr.bf16.mxu0 0
        %1297 = vmatpush1.bf16.msra.mxu0 0
        %1298 = vmatprep.subr.bf16.mxu0 0
        %1299 = vmatpush1.bf16.msra.mxu0 0
        %1300 = vmatprep.mubr.bf16.mxu0 0
        %1301 = vmatmul.mubr.bf16.gmra.mrb[0].mxu0 %v395
        %v1302 = vpop.f32.mrb[0].mxu0
        %v1303 = vadd.f32 %v1206, %v1302
        %v1304 = vpop.f32.mrb[0].mxu0
        %v1305 = vpop.f32.mrb[0].mxu0
        %v1306 = vadd.f32 %v1209, %v1305
        %v1307 = vpop.f32.mrb[0].mxu0
        %1308 = vmatprep.mubr.bf16.mxu0 0
        %1309 = vmatmul.mubr.bf16.gmra.mrb[0].mxu0 %v396
        %v1310 = vpop.f32.mrb[0].mxu0
        %v1311 = vadd.f32 %v1214, %v1310
        %v1312 = vpop.f32.mrb[0].mxu0
        %v1313 = vpop.f32.mrb[0].mxu0
        %v1314 = vadd.f32 %v1217, %v1313
        %v1315 = vpop.f32.mrb[0].mxu0
        %1316 = vmatprep.mubr.bf16.mxu0 0
        %1317 = vmatmul.mubr.bf16.gmra.mrb[0].mxu0 %v397
        %v1318 = vpop.f32.mrb[0].mxu0
        %v1319 = vadd.f32 %v1222, %v1318
        %v1320 = vpop.f32.mrb[0].mxu0
        %v1321 = vpop.f32.mrb[0].mxu0
        %v1322 = vadd.f32 %v1225, %v1321
        %v1323 = vpop.f32.mrb[0].mxu0
        %1324 = vmatprep.mubr.bf16.mxu0 0
        %1325 = vmatmul.mubr.bf16.gmra.mrb[0].mxu0 %v398
        %v1326 = vpop.f32.mrb[0].mxu0
        %v1327 = vadd.f32 %v1230, %v1326
        %v1328 = vpop.f32.mrb[0].mxu0
        %v1329 = vpop.f32.mrb[0].mxu0
        %v1330 = vadd.f32 %v1233, %v1329
        %v1331 = vpop.f32.mrb[0].mxu0
        %1332 = vmatprep.mubr.bf16.mxu0 0
        %1333 = vmatmul.mubr.bf16.gmra.mrb[0].mxu0 %v399
        %v1334 = vpop.f32.mrb[0].mxu0
        %v1335 = vadd.f32 %v1238, %v1334
        %v1336 = vpop.f32.mrb[0].mxu0
        %v1337 = vpop.f32.mrb[0].mxu0
        %v1338 = vadd.f32 %v1241, %v1337
        %v1339 = vpop.f32.mrb[0].mxu0
        %1340 = vmatprep.mubr.bf16.mxu0 0
        %1341 = vmatmul.mubr.bf16.gmra.mrb[0].mxu0 %v400
        %v1342 = vpop.f32.mrb[0].mxu0
        %v1343 = vadd.f32 %v1246, %v1342
        %v1344 = vpop.f32.mrb[0].mxu0
        %v1345 = vpop.f32.mrb[0].mxu0
        %v1346 = vadd.f32 %v1249, %v1345
        %v1347 = vpop.f32.mrb[0].mxu0
        %1348 = vmatprep.mubr.bf16.mxu0 0
        %1349 = vmatmul.mubr.bf16.gmra.mrb[0].mxu0 %v413
        %v1350 = vpop.f32.mrb[0].mxu0
        %v1351 = vadd.f32 %v1254, %v1350
        %v1352 = vpop.f32.mrb[0].mxu0
        %v1353 = vpop.f32.mrb[0].mxu0
        %v1354 = vadd.f32 %v1257, %v1353
        %v1355 = vpop.f32.mrb[0].mxu0
        %1356 = vmatprep.mubr.bf16.mxu0 0
        %1357 = vmatmul.mubr.bf16.gmra.mrb[0].mxu0 %v419
        %v1358 = vpop.f32.mrb[0].mxu0
        %v1359 = vadd.f32 %v1262, %v1358
        %v1360 = vpop.f32.mrb[0].mxu0
        %v1361 = vpop.f32.mrb[0].mxu0
        %v1362 = vadd.f32 %v1265, %v1361
        %v1363 = vpop.f32.mrb[0].mxu0
        %1364 = vdwg.mxu0
        %v1365 = vld [vmem:[%s254] sm:$0xe]
        %v1366 = vld [vmem:[%s254 + $0xc] sm:$0xe]
        %v1367 = vld [vmem:[%s254 + $0x18] sm:$0xe]
        %v1368 = vld [vmem:[%s254 + $0x24] sm:$0xe]
        %v1369 = vld [vmem:[%s254 + $0x30] sm:$0xe]
        %v1370 = vld [vmem:[%s254 + $0x3c] sm:$0xe]
        %v1371 = vld [vmem:[%s254 + $0x48] sm:$0xe]
        %v1372 = vld [vmem:[%s254 + $0x54] sm:$0xe]
        %v1373 = vld [vmem:[%s254 + $0x60] sm:$0xe]
        %v1374 = vld [vmem:[%s254 + $0x6c] sm:$0xe]
        %v1383 = vunpack.c.l.b16 %v1365
        %v1384 = vunpack.c.l.b16 %v1366
        %v1385 = vunpack.c.l.b16 %v1367
        %v1386 = vunpack.c.l.b16 %v1368
        %v1387 = vunpack.c.l.b16 %v1369
        %v1388 = vunpack.c.l.b16 %v1370
        %v1389 = vunpack.c.l.b16 %v1371
        %v1390 = vunpack.c.l.b16 %v1372
        %v1391 = vpack.c.b16 %v378, %v1383
        %v1392 = vpack.c.b16 %v380, %v1384
        %v1393 = vpack.c.b16 %v382, %v1385
        %v1394 = vpack.c.b16 %v384, %v1386
        %v1395 = vpack.c.b16 %v386, %v1387
        %v1396 = vpack.c.b16 %v388, %v1388
        %v1397 = vpack.c.b16 %v390, %v1389
        %v1398 = vpack.c.b16 %v392, %v1390
        %v1400 = vunpack.c.l.b16 %v1373
        %v1401 = vpack.c.b16 %v412, %v1400
        %v1403 = vunpack.c.l.b16 %v1374
        %v1404 = vpack.c.b16 %v418, %v1403
        %vm1405 = vcmask 1046528
        %v1406 = vrot.slane %v1391, 1
        %v1407 = vrot.slane %v495, 1
        %v1408 = vsel %vm1405, %v1406, %v1407
        %v1409 = vrot.slane %v1392, 1
        %v1410 = vrot.slane %v496, 1
        %v1411 = vsel %vm1405, %v1409, %v1410
        %v1412 = vrot.slane %v1393, 1
        %v1413 = vrot.slane %v497, 1
        %v1414 = vsel %vm1405, %v1412, %v1413
        %v1415 = vrot.slane %v1394, 1
        %v1416 = vrot.slane %v498, 1
        %v1417 = vsel %vm1405, %v1415, %v1416
        %v1418 = vrot.slane %v1395, 1
        %v1419 = vrot.slane %v499, 1
        %v1420 = vsel %vm1405, %v1418, %v1419
        %v1421 = vrot.slane %v1396, 1
        %v1422 = vrot.slane %v500, 1
        %v1423 = vsel %vm1405, %v1421, %v1422
        %v1424 = vrot.slane %v1397, 1
        %v1425 = vrot.slane %v501, 1
        %v1426 = vsel %vm1405, %v1424, %v1425
        %v1427 = vrot.slane %v1398, 1
        %v1428 = vrot.slane %v502, 1
        %v1429 = vsel %vm1405, %v1427, %v1428
        %v1430 = vrot.slane %v1401, 1
        %v1431 = vrot.slane %v505, 1
        %v1432 = vsel %vm1405, %v1430, %v1431
        %v1433 = vrot.slane %v1404, 1
        %v1434 = vrot.slane %v508, 1
        %v1435 = vsel %vm1405, %v1433, %v1434
        %s1446 = scalar_lea.vmem [#allocation6], 384
        %v1447 = vld [vmem:[%s1446] sm:$0xf]
        %v1448 = vld [vmem:[%s1446 + $0x4] sm:$0xf]
        %v1449 = vld [vmem:[%s1446 + $0x8] sm:$0xf]
        %v1450 = vld [vmem:[%s1446 + $0xc] sm:$0xf]
        %v1451 = vld [vmem:[%s1446 + $0x10] sm:$0xf]
        %v1452 = vld [vmem:[%s1446 + $0x14] sm:$0xf]
        %v1453 = vld [vmem:[%s1446 + $0x18] sm:$0xf]
        %v1454 = vld [vmem:[%s1446 + $0x1c] sm:$0xf]
        %v1455 = vld [vmem:[%s1446 + $0x20] sm:$0xf]
        %v1456 = vld [vmem:[%s1446 + $0x24] sm:$0xf]
        %v1457 = vld [vmem:[%s1446 + $0x28] sm:$0xf]
        %v1458 = vld [vmem:[%s1446 + $0x2c] sm:$0xf]
        %v1459 = vld [vmem:[%s1446 + $0x30] sm:$0xf]
        %v1460 = vld [vmem:[%s1446 + $0x34] sm:$0xf]
        %v1461 = vld [vmem:[%s1446 + $0x38] sm:$0xf]
        %v1462 = vld [vmem:[%s1446 + $0x3c] sm:$0xf]
        %v1463 = vld [vmem:[%s1446 + $0x40] sm:$0xf]
        %v1464 = vld [vmem:[%s1446 + $0x44] sm:$0xf]
        %v1465 = vld [vmem:[%s1446 + $0x48] sm:$0xf]
        %v1466 = vld [vmem:[%s1446 + $0x4c] sm:$0xf]
        %v1467 = vld [vmem:[%s1446 + $0x50] sm:$0xf]
        %v1468 = vld [vmem:[%s1446 + $0x54] sm:$0xf]
        %v1469 = vld [vmem:[%s1446 + $0x58] sm:$0xf]
        %v1470 = vld [vmem:[%s1446 + $0x5c] sm:$0xf]
        %v1471 = vld [vmem:[%s1446 + $0x60] sm:$0xf]
        %v1472 = vld [vmem:[%s1446 + $0x64] sm:$0xf]
        %v1473 = vld [vmem:[%s1446 + $0x68] sm:$0xf]
        %v1474 = vld [vmem:[%s1446 + $0x6c] sm:$0xf]
        %v1475 = vld [vmem:[%s1446 + $0x70] sm:$0xf]
        %v1476 = vld [vmem:[%s1446 + $0x74] sm:$0xf]
        %v1477 = vld [vmem:[%s1446 + $0x78] sm:$0xf]
        %v1478 = vld [vmem:[%s1446 + $0x7c] sm:$0xf]
        %v1479 = vld [vmem:[%s1446 + $0x80] sm:$0xf]
        %v1480 = vld [vmem:[%s1446 + $0x84] sm:$0xf]
        %v1481 = vld [vmem:[%s1446 + $0x88] sm:$0xf]
        %v1482 = vld [vmem:[%s1446 + $0x8c] sm:$0xf]
        %v1483 = vld [vmem:[%s1446 + $0x90] sm:$0xf]
        %v1484 = vld [vmem:[%s1446 + $0x94] sm:$0xf]
        %v1485 = vld [vmem:[%s1446 + $0x98] sm:$0xf]
        %v1486 = vld [vmem:[%s1446 + $0x9c] sm:$0xf]
        %v1487 = vld [vmem:[%s1446 + $0xa0] sm:$0xf]
        %v1488 = vld [vmem:[%s1446 + $0xa4] sm:$0xf]
        %v1489 = vld [vmem:[%s1446 + $0xa8] sm:$0xf]
        %v1490 = vld [vmem:[%s1446 + $0xac] sm:$0xf]
        %v1491 = vld [vmem:[%s1446 + $0xb0] sm:$0xf]
        %v1492 = vld [vmem:[%s1446 + $0xb4] sm:$0xf]
        %v1493 = vld [vmem:[%s1446 + $0xb8] sm:$0xf]
        %v1494 = vld [vmem:[%s1446 + $0xbc] sm:$0xf]
        %v1543 = vunpack.c.l.b16 %v1447
        %v1544 = vunpack.c.l.b16 %v1448
        %v1545 = vunpack.c.l.b16 %v1449
        %v1546 = vunpack.c.l.b16 %v1450
        %v1547 = vunpack.c.l.b16 %v1451
        %v1548 = vunpack.c.l.b16 %v1452
        %v1549 = vunpack.c.l.b16 %v1453
        %v1550 = vunpack.c.l.b16 %v1454
        %v1551 = vunpack.c.l.b16 %v1455
        %v1552 = vunpack.c.l.b16 %v1456
        %v1553 = vunpack.c.l.b16 %v1457
        %v1554 = vunpack.c.l.b16 %v1458
        %v1555 = vunpack.c.l.b16 %v1459
        %v1556 = vunpack.c.l.b16 %v1460
        %v1557 = vunpack.c.l.b16 %v1461
        %v1558 = vunpack.c.l.b16 %v1462
        %v1559 = vunpack.c.l.b16 %v1463
        %v1560 = vunpack.c.l.b16 %v1464
        %v1561 = vunpack.c.l.b16 %v1465
        %v1562 = vunpack.c.l.b16 %v1466
        %v1563 = vunpack.c.l.b16 %v1467
        %v1564 = vunpack.c.l.b16 %v1468
        %v1565 = vunpack.c.l.b16 %v1469
        %v1566 = vunpack.c.l.b16 %v1470
        %v1567 = vunpack.c.l.b16 %v1471
        %v1568 = vunpack.c.l.b16 %v1472
        %v1569 = vunpack.c.l.b16 %v1473
        %v1570 = vunpack.c.l.b16 %v1474
        %v1571 = vunpack.c.l.b16 %v1475
        %v1572 = vunpack.c.l.b16 %v1476
        %v1573 = vunpack.c.l.b16 %v1477
        %v1574 = vunpack.c.l.b16 %v1478
        %v1575 = vunpack.c.l.b16 %v1479
        %v1576 = vunpack.c.l.b16 %v1480
        %v1577 = vunpack.c.l.b16 %v1481
        %v1578 = vunpack.c.l.b16 %v1482
        %v1579 = vunpack.c.l.b16 %v1483
        %v1580 = vunpack.c.l.b16 %v1484
        %v1581 = vunpack.c.l.b16 %v1485
        %v1582 = vunpack.c.l.b16 %v1486
        %v1583 = vunpack.c.l.b16 %v1487
        %v1584 = vunpack.c.l.b16 %v1488
        %v1585 = vunpack.c.l.b16 %v1489
        %v1586 = vunpack.c.l.b16 %v1490
        %v1587 = vunpack.c.l.b16 %v1491
        %v1588 = vunpack.c.l.b16 %v1492
        %v1589 = vunpack.c.l.b16 %v1493
        %v1590 = vunpack.c.l.b16 %v1494
        %v1591 = vpack.c.b16 %v1544, %v1543
        %v1592 = vpack.c.b16 %v1546, %v1545
        %v1593 = vpack.c.b16 %v1548, %v1547
        %v1594 = vpack.c.b16 %v1550, %v1549
        %v1595 = vpack.c.b16 %v1552, %v1551
        %v1596 = vpack.c.b16 %v1554, %v1553
        %v1597 = vpack.c.b16 %v1556, %v1555
        %v1598 = vpack.c.b16 %v1558, %v1557
        %v1599 = vpack.c.b16 %v1560, %v1559
        %v1600 = vpack.c.b16 %v1562, %v1561
        %v1601 = vpack.c.b16 %v1564, %v1563
        %v1602 = vpack.c.b16 %v1566, %v1565
        %v1603 = vpack.c.b16 %v1568, %v1567
        %v1604 = vpack.c.b16 %v1570, %v1569
        %v1605 = vpack.c.b16 %v1572, %v1571
        %v1606 = vpack.c.b16 %v1574, %v1573
        %v1607 = vpack.c.b16 %v1576, %v1575
        %v1608 = vpack.c.b16 %v1578, %v1577
        %v1609 = vpack.c.b16 %v1580, %v1579
        %v1610 = vpack.c.b16 %v1582, %v1581
        %v1611 = vpack.c.b16 %v1584, %v1583
        %v1612 = vpack.c.b16 %v1586, %v1585
        %v1613 = vpack.c.b16 %v1588, %v1587
        %v1614 = vpack.c.b16 %v1590, %v1589
        %1639 = vmatprep.subr.bf16.mxu0 0
        %1640 = vmatpush1.bf16.msra.mxu0 %v1591
        %1641 = vmatprep.subr.bf16.mxu0 0
        %1642 = vmatpush1.bf16.msra.mxu0 %v1592
        %1643 = vmatprep.subr.bf16.mxu0 0
        %1644 = vmatpush1.bf16.msra.mxu0 %v1593
        %1645 = vmatprep.subr.bf16.mxu0 0
        %1646 = vmatpush1.bf16.msra.mxu0 %v1594
        %1647 = vmatprep.subr.bf16.mxu0 0
        %1648 = vmatpush1.bf16.msra.mxu0 %v1595
        %1649 = vmatprep.subr.bf16.mxu0 0
        %1650 = vmatpush1.bf16.msra.mxu0 %v1596
        %1651 = vmatprep.subr.bf16.mxu0 0
        %1652 = vmatpush1.bf16.msra.mxu0 %v1597
        %1653 = vmatprep.subr.bf16.mxu0 0
        %1654 = vmatpush1.bf16.msra.mxu0 %v1598
        %1655 = vmatprep.subr.bf16.mxu0 0
        %1656 = vmatpush1.bf16.msra.mxu0 %v1599
        %1657 = vmatprep.subr.bf16.mxu0 0
        %1658 = vmatpush1.bf16.msra.mxu0 %v1600
        %1659 = vmatprep.subr.bf16.mxu0 0
        %1660 = vmatpush1.bf16.msra.mxu0 %v1601
        %1661 = vmatprep.subr.bf16.mxu0 0
        %1662 = vmatpush1.bf16.msra.mxu0 %v1602
        %1663 = vmatprep.subr.bf16.mxu0 0
        %1664 = vmatpush1.bf16.msra.mxu0 %v1603
        %1665 = vmatprep.subr.bf16.mxu0 0
        %1666 = vmatpush1.bf16.msra.mxu0 %v1604
        %1667 = vmatprep.subr.bf16.mxu0 0
        %1668 = vmatpush1.bf16.msra.mxu0 %v1605
        %1669 = vmatprep.subr.bf16.mxu0 0
        %1670 = vmatpush1.bf16.msra.mxu0 %v1606
        %1671 = vmatprep.mubr.bf16.mxu0 %v1411
        %1672 = vmatmul.mubr.bf16.gmra.mrb[0].mxu0 %v1408
        %v1673 = vpop.f32.mrb[0].mxu0
        %v1674 = vadd.f32 0.0, %v1673
        %v1675 = vpop.f32.mrb[0].mxu0
        %v1676 = vpop.f32.mrb[0].mxu0
        %v1677 = vadd.f32 0.0, %v1676
        %v1678 = vpop.f32.mrb[0].mxu0
        %1679 = vmatprep.mubr.bf16.mxu0 %v1414
        %1680 = vmatmul.mubr.bf16.gmra.mrb[0].mxu0 %v1411
        %v1681 = vpop.f32.mrb[0].mxu0
        %v1682 = vadd.f32 0.0, %v1681
        %v1683 = vpop.f32.mrb[0].mxu0
        %v1684 = vpop.f32.mrb[0].mxu0
        %v1685 = vadd.f32 0.0, %v1684
        %v1686 = vpop.f32.mrb[0].mxu0
        %1687 = vmatprep.mubr.bf16.mxu0 %v1417
        %1688 = vmatmul.mubr.bf16.gmra.mrb[0].mxu0 %v1414
        %v1689 = vpop.f32.mrb[0].mxu0
        %v1690 = vadd.f32 0.0, %v1689
        %v1691 = vpop.f32.mrb[0].mxu0
        %v1692 = vpop.f32.mrb[0].mxu0
        %v1693 = vadd.f32 0.0, %v1692
        %v1694 = vpop.f32.mrb[0].mxu0
        %1695 = vmatprep.mubr.bf16.mxu0 %v1420
        %1696 = vmatmul.mubr.bf16.gmra.mrb[0].mxu0 %v1417
        %v1697 = vpop.f32.mrb[0].mxu0
        %v1698 = vadd.f32 0.0, %v1697
        %v1699 = vpop.f32.mrb[0].mxu0
        %v1700 = vpop.f32.mrb[0].mxu0
        %v1701 = vadd.f32 0.0, %v1700
        %v1702 = vpop.f32.mrb[0].mxu0
        %1703 = vmatprep.mubr.bf16.mxu0 %v1423
        %1704 = vmatmul.mubr.bf16.gmra.mrb[0].mxu0 %v1420
        %v1705 = vpop.f32.mrb[0].mxu0
        %v1706 = vadd.f32 0.0, %v1705
        %v1707 = vpop.f32.mrb[0].mxu0
        %v1708 = vpop.f32.mrb[0].mxu0
        %v1709 = vadd.f32 0.0, %v1708
        %v1710 = vpop.f32.mrb[0].mxu0
        %1711 = vmatprep.mubr.bf16.mxu0 %v1426
        %1712 = vmatmul.mubr.bf16.gmra.mrb[0].mxu0 %v1423
        %v1713 = vpop.f32.mrb[0].mxu0
        %v1714 = vadd.f32 0.0, %v1713
        %v1715 = vpop.f32.mrb[0].mxu0
        %v1716 = vpop.f32.mrb[0].mxu0
        %v1717 = vadd.f32 0.0, %v1716
        %v1718 = vpop.f32.mrb[0].mxu0
        %1719 = vmatprep.mubr.bf16.mxu0 %v1429
        %1720 = vmatmul.mubr.bf16.gmra.mrb[0].mxu0 %v1426
        %v1721 = vpop.f32.mrb[0].mxu0
        %v1722 = vadd.f32 0.0, %v1721
        %v1723 = vpop.f32.mrb[0].mxu0
        %v1724 = vpop.f32.mrb[0].mxu0
        %v1725 = vadd.f32 0.0, %v1724
        %v1726 = vpop.f32.mrb[0].mxu0
        %1727 = vmatprep.mubr.bf16.mxu0 %v1432
        %1728 = vmatmul.mubr.bf16.gmra.mrb[0].mxu0 %v1429
        %v1729 = vpop.f32.mrb[0].mxu0
        %v1730 = vadd.f32 0.0, %v1729
        %v1731 = vpop.f32.mrb[0].mxu0
        %v1732 = vpop.f32.mrb[0].mxu0
        %v1733 = vadd.f32 0.0, %v1732
        %v1734 = vpop.f32.mrb[0].mxu0
        %1735 = vdwg.mxu0
        %1736 = vmatprep.subr.bf16.mxu0 0
        %1737 = vmatpush1.bf16.msra.mxu0 %v1607
        %1738 = vmatprep.subr.bf16.mxu0 0
        %1739 = vmatpush1.bf16.msra.mxu0 %v1608
        %1740 = vmatprep.subr.bf16.mxu0 0
        %1741 = vmatpush1.bf16.msra.mxu0 %v1609
        %1742 = vmatprep.subr.bf16.mxu0 0
        %1743 = vmatpush1.bf16.msra.mxu0 %v1610
        %1744 = vmatprep.subr.bf16.mxu0 0
        %1745 = vmatpush1.bf16.msra.mxu0 %v1611
        %1746 = vmatprep.subr.bf16.mxu0 0
        %1747 = vmatpush1.bf16.msra.mxu0 %v1612
        %1748 = vmatprep.subr.bf16.mxu0 0
        %1749 = vmatpush1.bf16.msra.mxu0 %v1613
        %1750 = vmatprep.subr.bf16.mxu0 0
        %1751 = vmatpush1.bf16.msra.mxu0 %v1614
        %1752 = vmatprep.subr.bf16.mxu0 0
        %1753 = vmatpush1.bf16.msra.mxu0 0
        %1754 = vmatprep.subr.bf16.mxu0 0
        %1755 = vmatpush1.bf16.msra.mxu0 0
        %1756 = vmatprep.subr.bf16.mxu0 0
        %1757 = vmatpush1.bf16.msra.mxu0 0
        %1758 = vmatprep.subr.bf16.mxu0 0
        %1759 = vmatpush1.bf16.msra.mxu0 0
        %1760 = vmatprep.subr.bf16.mxu0 0
        %1761 = vmatpush1.bf16.msra.mxu0 0
        %1762 = vmatprep.subr.bf16.mxu0 0
        %1763 = vmatpush1.bf16.msra.mxu0 0
        %1764 = vmatprep.subr.bf16.mxu0 0
        %1765 = vmatpush1.bf16.msra.mxu0 0
        %1766 = vmatprep.subr.bf16.mxu0 0
        %1767 = vmatpush1.bf16.msra.mxu0 0
        %1768 = vmatprep.mubr.bf16.mxu0 0
        %1769 = vmatmul.mubr.bf16.gmra.mrb[0].mxu0 %v1414
        %v1770 = vpop.f32.mrb[0].mxu0
        %v1771 = vadd.f32 %v1674, %v1770
        %v1772 = vpop.f32.mrb[0].mxu0
        %v1773 = vpop.f32.mrb[0].mxu0
        %v1774 = vadd.f32 %v1677, %v1773
        %v1775 = vpop.f32.mrb[0].mxu0
        %1776 = vmatprep.mubr.bf16.mxu0 0
        %1777 = vmatmul.mubr.bf16.gmra.mrb[0].mxu0 %v1417
        %v1778 = vpop.f32.mrb[0].mxu0
        %v1779 = vadd.f32 %v1682, %v1778
        %v1780 = vpop.f32.mrb[0].mxu0
        %v1781 = vpop.f32.mrb[0].mxu0
        %v1782 = vadd.f32 %v1685, %v1781
        %v1783 = vpop.f32.mrb[0].mxu0
        %1784 = vmatprep.mubr.bf16.mxu0 0
        %1785 = vmatmul.mubr.bf16.gmra.mrb[0].mxu0 %v1420
        %v1786 = vpop.f32.mrb[0].mxu0
        %v1787 = vadd.f32 %v1690, %v1786
        %v1788 = vpop.f32.mrb[0].mxu0
        %v1789 = vpop.f32.mrb[0].mxu0
        %v1790 = vadd.f32 %v1693, %v1789
        %v1791 = vpop.f32.mrb[0].mxu0
        %1792 = vmatprep.mubr.bf16.mxu0 0
        %1793 = vmatmul.mubr.bf16.gmra.mrb[0].mxu0 %v1423
        %v1794 = vpop.f32.mrb[0].mxu0
        %v1795 = vadd.f32 %v1698, %v1794
        %v1796 = vpop.f32.mrb[0].mxu0
        %v1797 = vpop.f32.mrb[0].mxu0
        %v1798 = vadd.f32 %v1701, %v1797
        %v1799 = vpop.f32.mrb[0].mxu0
        %1800 = vmatprep.mubr.bf16.mxu0 0
        %1801 = vmatmul.mubr.bf16.gmra.mrb[0].mxu0 %v1426
        %v1802 = vpop.f32.mrb[0].mxu0
        %v1803 = vadd.f32 %v1706, %v1802
        %v1804 = vpop.f32.mrb[0].mxu0
        %v1805 = vpop.f32.mrb[0].mxu0
        %v1806 = vadd.f32 %v1709, %v1805
        %v1807 = vpop.f32.mrb[0].mxu0
        %1808 = vmatprep.mubr.bf16.mxu0 0
        %1809 = vmatmul.mubr.bf16.gmra.mrb[0].mxu0 %v1429
        %v1810 = vpop.f32.mrb[0].mxu0
        %v1811 = vadd.f32 %v1714, %v1810
        %v1812 = vpop.f32.mrb[0].mxu0
        %v1813 = vpop.f32.mrb[0].mxu0
        %v1814 = vadd.f32 %v1717, %v1813
        %v1815 = vpop.f32.mrb[0].mxu0
        %1816 = vmatprep.mubr.bf16.mxu0 0
        %1817 = vmatmul.mubr.bf16.gmra.mrb[0].mxu0 %v1432
        %v1818 = vpop.f32.mrb[0].mxu0
        %v1819 = vadd.f32 %v1722, %v1818
        %v1820 = vpop.f32.mrb[0].mxu0
        %v1821 = vpop.f32.mrb[0].mxu0
        %v1822 = vadd.f32 %v1725, %v1821
        %v1823 = vpop.f32.mrb[0].mxu0
        %1824 = vmatprep.mubr.bf16.mxu0 0
        %1825 = vmatmul.mubr.bf16.gmra.mrb[0].mxu0 %v1435
        %v1826 = vpop.f32.mrb[0].mxu0
        %v1827 = vadd.f32 %v1730, %v1826
        %v1828 = vpop.f32.mrb[0].mxu0
        %v1829 = vpop.f32.mrb[0].mxu0
        %v1830 = vadd.f32 %v1733, %v1829
        %v1831 = vpop.f32.mrb[0].mxu0
        %1832 = vdwg.mxu0
        %v1833 = vadd.f32 %v1303, %v1771
        %v1834 = vadd.f32 %v1306, %v1774
        %v1835 = vadd.f32 %v1311, %v1779
        %v1836 = vadd.f32 %v1314, %v1782
        %v1837 = vadd.f32 %v1319, %v1787
        %v1838 = vadd.f32 %v1322, %v1790
        %v1839 = vadd.f32 %v1327, %v1795
        %v1840 = vadd.f32 %v1330, %v1798
        %v1841 = vadd.f32 %v1335, %v1803
        %v1842 = vadd.f32 %v1338, %v1806
        %v1843 = vadd.f32 %v1343, %v1811
        %v1844 = vadd.f32 %v1346, %v1814
        %v1845 = vadd.f32 %v1351, %v1819
        %v1846 = vadd.f32 %v1354, %v1822
        %v1847 = vadd.f32 %v1359, %v1827
        %v1848 = vadd.f32 %v1362, %v1830
        %v1849 = vld [vmem:[#allocation8] sm:$0x1]
        %v1851 = vlaneseq
        %v1852 = vshrl.u32 %v1851, 7
        %v1853 = vsub.s32 0, %v1852
        %v1854 = vrot.slane %v1849, %v1853
        %v1856 = vadd.f32 %v1833, %v1854
        %v1857 = vadd.f32 %v1834, %v1854
        %v1858 = vadd.f32 %v1835, %v1854
        %v1859 = vadd.f32 %v1836, %v1854
        %v1860 = vadd.f32 %v1837, %v1854
        %v1861 = vadd.f32 %v1838, %v1854
        %v1862 = vadd.f32 %v1839, %v1854
        %v1863 = vadd.f32 %v1840, %v1854
        %v1864 = vadd.f32 %v1841, %v1854
        %v1865 = vadd.f32 %v1842, %v1854
        %v1866 = vadd.f32 %v1843, %v1854
        %v1867 = vadd.f32 %v1844, %v1854
        %v1868 = vadd.f32 %v1845, %v1854
        %v1869 = vadd.f32 %v1846, %v1854
        %v1870 = vadd.f32 %v1847, %v1854
        %v1871 = vadd.f32 %v1848, %v1854
        %v1872 = vmax.f32 %v1856, 0.0
        %v1873 = vmax.f32 %v1857, 0.0
        %v1874 = vmax.f32 %v1858, 0.0
        %v1875 = vmax.f32 %v1859, 0.0
        %v1876 = vmax.f32 %v1860, 0.0
        %v1877 = vmax.f32 %v1861, 0.0
        %v1878 = vmax.f32 %v1862, 0.0
        %v1879 = vmax.f32 %v1863, 0.0
        %v1880 = vmax.f32 %v1864, 0.0
        %v1881 = vmax.f32 %v1865, 0.0
        %v1882 = vmax.f32 %v1866, 0.0
        %v1883 = vmax.f32 %v1867, 0.0
        %v1884 = vmax.f32 %v1868, 0.0
        %v1885 = vmax.f32 %v1869, 0.0
        %v1886 = vmax.f32 %v1870, 0.0
        %v1887 = vmax.f32 %v1871, 0.0
        %v1888 = vpack.c.bf16 %v1873, %v1872
        %v1889 = vpack.c.bf16 %v1875, %v1874
        %v1890 = vpack.c.bf16 %v1877, %v1876
        %v1891 = vpack.c.bf16 %v1879, %v1878
        %v1892 = vpack.c.bf16 %v1881, %v1880
        %v1893 = vpack.c.bf16 %v1883, %v1882
        %v1894 = vpack.c.bf16 %v1885, %v1884
        %v1895 = vpack.c.bf16 %v1887, %v1886
        %s1896 = scalar_lea.vmem [#allocation2], 24
        %1897 = vst [vmem:[%s1896 + $0x8] sm:$0xff] %v1888
        %1898 = vst [vmem:[%s1896 + $0x20] sm:$0xff] %v1889
        %1899 = vst [vmem:[%s1896 + $0x38] sm:$0xff] %v1890
        %1900 = vst [vmem:[%s1896 + $0x50] sm:$0xff] %v1891
        %1901 = vst [vmem:[%s1896 + $0x68] sm:$0xff] %v1892
        %1902 = vst [vmem:[%s1896 + $0x80] sm:$0xff] %v1893
        %1903 = vst [vmem:[%s1896 + $0x98] sm:$0xff] %v1894
        %1904 = vst [vmem:[%s1896 + $0xb0] sm:$0xff] %v1895
        %s1905 = scalar_lea.vmem %s254, 96 [#allocation3]
        %v1906 = vld [vmem:[%s1905] sm:$0xf]
        %v1907 = vld [vmem:[%s1905 + $0x4] sm:$0xf]
        %v1908 = vld [vmem:[%s1905 + $0xc] sm:$0xf]
        %v1909 = vld [vmem:[%s1905 + $0x10] sm:$0xf]
        %v1910 = vld [vmem:[%s1905 + $0x18] sm:$0xf]
        %v1911 = vld [vmem:[%s1905 + $0x1c] sm:$0xf]
        %v1912 = vld [vmem:[%s1905 + $0x24] sm:$0xf]
        %v1913 = vld [vmem:[%s1905 + $0x28] sm:$0xf]
        %v1914 = vld [vmem:[%s1905 + $0x30] sm:$0xf]
        %v1915 = vld [vmem:[%s1905 + $0x34] sm:$0xf]
        %v1916 = vld [vmem:[%s1905 + $0x3c] sm:$0xf]
        %v1917 = vld [vmem:[%s1905 + $0x40] sm:$0xf]
        %v1918 = vld [vmem:[%s1905 + $0x48] sm:$0xf]
        %v1919 = vld [vmem:[%s1905 + $0x4c] sm:$0xf]
        %v1920 = vld [vmem:[%s1905 + $0x54] sm:$0xf]
        %v1921 = vld [vmem:[%s1905 + $0x58] sm:$0xf]
        %v1922 = vld [vmem:[%s1905 + $0x60] sm:$0xf]
        %v1923 = vld [vmem:[%s1905 + $0x64] sm:$0xf]
        %v1924 = vld [vmem:[%s1905 + $0x6c] sm:$0xf]
        %v1925 = vld [vmem:[%s1905 + $0x70] sm:$0xf]
        %v1942 = vunpack.c.l.b16 %v1906
        %v1943 = vunpack.c.l.b16 %v1907
        %v1944 = vunpack.c.l.b16 %v1908
        %v1945 = vunpack.c.l.b16 %v1909
        %v1946 = vunpack.c.l.b16 %v1910
        %v1947 = vunpack.c.l.b16 %v1911
        %v1948 = vunpack.c.l.b16 %v1912
        %v1949 = vunpack.c.l.b16 %v1913
        %v1950 = vunpack.c.l.b16 %v1914
        %v1951 = vunpack.c.l.b16 %v1915
        %v1952 = vunpack.c.l.b16 %v1916
        %v1953 = vunpack.c.l.b16 %v1917
        %v1954 = vunpack.c.l.b16 %v1918
        %v1955 = vunpack.c.l.b16 %v1919
        %v1956 = vunpack.c.l.b16 %v1920
        %v1957 = vunpack.c.l.b16 %v1921
        %v1958 = vpack.c.b16 %v1943, %v1942
        %v1959 = vpack.c.b16 %v1945, %v1944
        %v1960 = vpack.c.b16 %v1947, %v1946
        %v1961 = vpack.c.b16 %v1949, %v1948
        %v1962 = vpack.c.b16 %v1951, %v1950
        %v1963 = vpack.c.b16 %v1953, %v1952
        %v1964 = vpack.c.b16 %v1955, %v1954
        %v1965 = vpack.c.b16 %v1957, %v1956
        %v1976 = vunpack.c.l.b16 %v1922
        %v1977 = vunpack.c.l.b16 %v1923
        %v1978 = vpack.c.b16 %v1977, %v1976
        %v1982 = vunpack.c.l.b16 %v1924
        %v1983 = vunpack.c.l.b16 %v1925
        %v1984 = vpack.c.b16 %v1983, %v1982
        %v1986 = vld [vmem:[#allocation6] sm:$0xf]
        %v1987 = vld [vmem:[#allocation6 + $0x4] sm:$0xf]
        %v1988 = vld [vmem:[#allocation6 + $0x8] sm:$0xf]
        %v1989 = vld [vmem:[#allocation6 + $0xc] sm:$0xf]
        %v1990 = vld [vmem:[#allocation6 + $0x10] sm:$0xf]
        %v1991 = vld [vmem:[#allocation6 + $0x14] sm:$0xf]
        %v1992 = vld [vmem:[#allocation6 + $0x18] sm:$0xf]
        %v1993 = vld [vmem:[#allocation6 + $0x1c] sm:$0xf]
        %v1994 = vld [vmem:[#allocation6 + $0x20] sm:$0xf]
        %v1995 = vld [vmem:[#allocation6 + $0x24] sm:$0xf]
        %v1996 = vld [vmem:[#allocation6 + $0x28] sm:$0xf]
        %v1997 = vld [vmem:[#allocation6 + $0x2c] sm:$0xf]
        %v1998 = vld [vmem:[#allocation6 + $0x30] sm:$0xf]
        %v1999 = vld [vmem:[#allocation6 + $0x34] sm:$0xf]
        %v2000 = vld [vmem:[#allocation6 + $0x38] sm:$0xf]
        %v2001 = vld [vmem:[#allocation6 + $0x3c] sm:$0xf]
        %v2002 = vld [vmem:[#allocation6 + $0x40] sm:$0xf]
        %v2003 = vld [vmem:[#allocation6 + $0x44] sm:$0xf]
        %v2004 = vld [vmem:[#allocation6 + $0x48] sm:$0xf]
        %v2005 = vld [vmem:[#allocation6 + $0x4c] sm:$0xf]
        %v2006 = vld [vmem:[#allocation6 + $0x50] sm:$0xf]
        %v2007 = vld [vmem:[#allocation6 + $0x54] sm:$0xf]
        %v2008 = vld [vmem:[#allocation6 + $0x58] sm:$0xf]
        %v2009 = vld [vmem:[#allocation6 + $0x5c] sm:$0xf]
        %v2010 = vld [vmem:[#allocation6 + $0x60] sm:$0xf]
        %v2011 = vld [vmem:[#allocation6 + $0x64] sm:$0xf]
        %v2012 = vld [vmem:[#allocation6 + $0x68] sm:$0xf]
        %v2013 = vld [vmem:[#allocation6 + $0x6c] sm:$0xf]
        %v2014 = vld [vmem:[#allocation6 + $0x70] sm:$0xf]
        %v2015 = vld [vmem:[#allocation6 + $0x74] sm:$0xf]
        %v2016 = vld [vmem:[#allocation6 + $0x78] sm:$0xf]
        %v2017 = vld [vmem:[#allocation6 + $0x7c] sm:$0xf]
        %v2018 = vld [vmem:[#allocation6 + $0x80] sm:$0xf]
        %v2019 = vld [vmem:[#allocation6 + $0x84] sm:$0xf]
        %v2020 = vld [vmem:[#allocation6 + $0x88] sm:$0xf]
        %v2021 = vld [vmem:[#allocation6 + $0x8c] sm:$0xf]
        %v2022 = vld [vmem:[#allocation6 + $0x90] sm:$0xf]
        %v2023 = vld [vmem:[#allocation6 + $0x94] sm:$0xf]
        %v2024 = vld [vmem:[#allocation6 + $0x98] sm:$0xf]
        %v2025 = vld [vmem:[#allocation6 + $0x9c] sm:$0xf]
        %v2026 = vld [vmem:[#allocation6 + $0xa0] sm:$0xf]
        %v2027 = vld [vmem:[#allocation6 + $0xa4] sm:$0xf]
        %v2028 = vld [vmem:[#allocation6 + $0xa8] sm:$0xf]
        %v2029 = vld [vmem:[#allocation6 + $0xac] sm:$0xf]
        %v2030 = vld [vmem:[#allocation6 + $0xb0] sm:$0xf]
        %v2031 = vld [vmem:[#allocation6 + $0xb4] sm:$0xf]
        %v2032 = vld [vmem:[#allocation6 + $0xb8] sm:$0xf]
        %v2033 = vld [vmem:[#allocation6 + $0xbc] sm:$0xf]
        %v2034 = vld [vmem:[%s1905 + $0x8] sm:$0x1]
        %v2035 = vld [vmem:[%s1905 + $0x14] sm:$0x1]
        %v2036 = vld [vmem:[%s1905 + $0x20] sm:$0x1]
        %v2037 = vld [vmem:[%s1905 + $0x2c] sm:$0x1]
        %v2038 = vld [vmem:[%s1905 + $0x38] sm:$0x1]
        %v2039 = vld [vmem:[%s1905 + $0x44] sm:$0x1]
        %v2040 = vld [vmem:[%s1905 + $0x50] sm:$0x1]
        %v2041 = vld [vmem:[%s1905 + $0x5c] sm:$0x1]
        %v2042 = vld [vmem:[%s1905 + $0x68] sm:$0x1]
        %v2043 = vld [vmem:[%s1905 + $0x74] sm:$0x1]
        %v2052 = vunpack.c.l.b16 %v2034
        %v2053 = vunpack.c.l.b16 %v2035
        %v2054 = vunpack.c.l.b16 %v2036
        %v2055 = vunpack.c.l.b16 %v2037
        %v2056 = vunpack.c.l.b16 %v2038
        %v2057 = vunpack.c.l.b16 %v2039
        %v2058 = vunpack.c.l.b16 %v2040
        %v2059 = vunpack.c.l.b16 %v2041
        %v2060 = vpack.c.b16 %v2052, %v2052
        %v2061 = vpack.c.b16 %v2053, %v2053
        %v2062 = vpack.c.b16 %v2054, %v2054
        %v2063 = vpack.c.b16 %v2055, %v2055
        %v2064 = vpack.c.b16 %v2056, %v2056
        %v2065 = vpack.c.b16 %v2057, %v2057
        %v2066 = vpack.c.b16 %v2058, %v2058
        %v2067 = vpack.c.b16 %v2059, %v2059
        %v2069 = vunpack.c.l.b16 %v2042
        %v2070 = vpack.c.b16 %v2069, %v2069
        %v2072 = vunpack.c.l.b16 %v2043
        %v2073 = vpack.c.b16 %v2072, %v2072
        %v2075 = vshrl.u32 %v1958, 16
        %v2077 = vshll.u32 %v1958, 16
        %v2079 = vrot.slane %v2077, 1
        %v2080 = vor.u32 %v2075, %v2079
        %v2082 = vshll.u32 %v2060, 16
        %v2084 = vrot.slane %v2082, 1
        %v2085 = vsel %vm509, %v2080, %v2084
        %v2087 = vshrl.u32 %v1959, 16
        %v2089 = vshll.u32 %v1959, 16
        %v2091 = vrot.slane %v2089, 1
        %v2092 = vor.u32 %v2087, %v2091
        %v2094 = vshll.u32 %v2061, 16
        %v2096 = vrot.slane %v2094, 1
        %v2097 = vsel %vm509, %v2092, %v2096
        %v2099 = vshrl.u32 %v1960, 16
        %v2101 = vshll.u32 %v1960, 16
        %v2103 = vrot.slane %v2101, 1
        %v2104 = vor.u32 %v2099, %v2103
        %v2106 = vshll.u32 %v2062, 16
        %v2108 = vrot.slane %v2106, 1
        %v2109 = vsel %vm509, %v2104, %v2108
        %v2111 = vshrl.u32 %v1961, 16
        %v2113 = vshll.u32 %v1961, 16
        %v2115 = vrot.slane %v2113, 1
        %v2116 = vor.u32 %v2111, %v2115
        %v2118 = vshll.u32 %v2063, 16
        %v2120 = vrot.slane %v2118, 1
        %v2121 = vsel %vm509, %v2116, %v2120
        %v2123 = vshrl.u32 %v1962, 16
        %v2125 = vshll.u32 %v1962, 16
        %v2127 = vrot.slane %v2125, 1
        %v2128 = vor.u32 %v2123, %v2127
        %v2130 = vshll.u32 %v2064, 16
        %v2132 = vrot.slane %v2130, 1
        %v2133 = vsel %vm509, %v2128, %v2132
        %v2135 = vshrl.u32 %v1963, 16
        %v2137 = vshll.u32 %v1963, 16
        %v2139 = vrot.slane %v2137, 1
        %v2140 = vor.u32 %v2135, %v2139
        %v2142 = vshll.u32 %v2065, 16
        %v2144 = vrot.slane %v2142, 1
        %v2145 = vsel %vm509, %v2140, %v2144
        %v2147 = vshrl.u32 %v1964, 16
        %v2149 = vshll.u32 %v1964, 16
        %v2151 = vrot.slane %v2149, 1
        %v2152 = vor.u32 %v2147, %v2151
        %v2154 = vshll.u32 %v2066, 16
        %v2156 = vrot.slane %v2154, 1
        %v2157 = vsel %vm509, %v2152, %v2156
        %v2159 = vshrl.u32 %v1965, 16
        %v2161 = vshll.u32 %v1965, 16
        %v2163 = vrot.slane %v2161, 1
        %v2164 = vor.u32 %v2159, %v2163
        %v2166 = vshll.u32 %v2067, 16
        %v2168 = vrot.slane %v2166, 1
        %v2169 = vsel %vm509, %v2164, %v2168
        %v2171 = vshrl.u32 %v1978, 16
        %v2173 = vshll.u32 %v1978, 16
        %v2175 = vrot.slane %v2173, 1
        %v2176 = vor.u32 %v2171, %v2175
        %v2178 = vshll.u32 %v2070, 16
        %v2180 = vrot.slane %v2178, 1
        %v2181 = vsel %vm509, %v2176, %v2180
        %v2183 = vshrl.u32 %v1984, 16
        %v2185 = vshll.u32 %v1984, 16
        %v2187 = vrot.slane %v2185, 1
        %v2188 = vor.u32 %v2183, %v2187
        %v2190 = vshll.u32 %v2073, 16
        %v2192 = vrot.slane %v2190, 1
        %v2193 = vsel %vm509, %v2188, %v2192
        %v2204 = vld [vmem:[%s640] sm:$0xf]
        %v2205 = vld [vmem:[%s640 + $0x4] sm:$0xf]
        %v2206 = vld [vmem:[%s640 + $0x8] sm:$0xf]
        %v2207 = vld [vmem:[%s640 + $0xc] sm:$0xf]
        %v2208 = vld [vmem:[%s640 + $0x10] sm:$0xf]
        %v2209 = vld [vmem:[%s640 + $0x14] sm:$0xf]
        %v2210 = vld [vmem:[%s640 + $0x18] sm:$0xf]
        %v2211 = vld [vmem:[%s640 + $0x1c] sm:$0xf]
        %v2212 = vld [vmem:[%s640 + $0x20] sm:$0xf]
        %v2213 = vld [vmem:[%s640 + $0x24] sm:$0xf]
        %v2214 = vld [vmem:[%s640 + $0x28] sm:$0xf]
        %v2215 = vld [vmem:[%s640 + $0x2c] sm:$0xf]
        %v2216 = vld [vmem:[%s640 + $0x30] sm:$0xf]
        %v2217 = vld [vmem:[%s640 + $0x34] sm:$0xf]
        %v2218 = vld [vmem:[%s640 + $0x38] sm:$0xf]
        %v2219 = vld [vmem:[%s640 + $0x3c] sm:$0xf]
        %v2220 = vld [vmem:[%s640 + $0x40] sm:$0xf]
        %v2221 = vld [vmem:[%s640 + $0x44] sm:$0xf]
        %v2222 = vld [vmem:[%s640 + $0x48] sm:$0xf]
        %v2223 = vld [vmem:[%s640 + $0x4c] sm:$0xf]
        %v2224 = vld [vmem:[%s640 + $0x50] sm:$0xf]
        %v2225 = vld [vmem:[%s640 + $0x54] sm:$0xf]
        %v2226 = vld [vmem:[%s640 + $0x58] sm:$0xf]
        %v2227 = vld [vmem:[%s640 + $0x5c] sm:$0xf]
        %v2228 = vld [vmem:[%s640 + $0x60] sm:$0xf]
        %v2229 = vld [vmem:[%s640 + $0x64] sm:$0xf]
        %v2230 = vld [vmem:[%s640 + $0x68] sm:$0xf]
        %v2231 = vld [vmem:[%s640 + $0x6c] sm:$0xf]
        %v2232 = vld [vmem:[%s640 + $0x70] sm:$0xf]
        %v2233 = vld [vmem:[%s640 + $0x74] sm:$0xf]
        %v2234 = vld [vmem:[%s640 + $0x78] sm:$0xf]
        %v2235 = vld [vmem:[%s640 + $0x7c] sm:$0xf]
        %v2236 = vld [vmem:[%s640 + $0x80] sm:$0xf]
        %v2237 = vld [vmem:[%s640 + $0x84] sm:$0xf]
        %v2238 = vld [vmem:[%s640 + $0x88] sm:$0xf]
        %v2239 = vld [vmem:[%s640 + $0x8c] sm:$0xf]
        %v2240 = vld [vmem:[%s640 + $0x90] sm:$0xf]
        %v2241 = vld [vmem:[%s640 + $0x94] sm:$0xf]
        %v2242 = vld [vmem:[%s640 + $0x98] sm:$0xf]
        %v2243 = vld [vmem:[%s640 + $0x9c] sm:$0xf]
        %v2244 = vld [vmem:[%s640 + $0xa0] sm:$0xf]
        %v2245 = vld [vmem:[%s640 + $0xa4] sm:$0xf]
        %v2246 = vld [vmem:[%s640 + $0xa8] sm:$0xf]
        %v2247 = vld [vmem:[%s640 + $0xac] sm:$0xf]
        %v2248 = vld [vmem:[%s640 + $0xb0] sm:$0xf]
        %v2249 = vld [vmem:[%s640 + $0xb4] sm:$0xf]
        %v2250 = vld [vmem:[%s640 + $0xb8] sm:$0xf]
        %v2251 = vld [vmem:[%s640 + $0xbc] sm:$0xf]
        %v2300 = vunpack.c.l.b16 %v2204
        %v2301 = vunpack.c.l.b16 %v2205
        %v2302 = vunpack.c.l.b16 %v2206
        %v2303 = vunpack.c.l.b16 %v2207
        %v2304 = vunpack.c.l.b16 %v2208
        %v2305 = vunpack.c.l.b16 %v2209
        %v2306 = vunpack.c.l.b16 %v2210
        %v2307 = vunpack.c.l.b16 %v2211
        %v2308 = vunpack.c.l.b16 %v2212
        %v2309 = vunpack.c.l.b16 %v2213
        %v2310 = vunpack.c.l.b16 %v2214
        %v2311 = vunpack.c.l.b16 %v2215
        %v2312 = vunpack.c.l.b16 %v2216
        %v2313 = vunpack.c.l.b16 %v2217
        %v2314 = vunpack.c.l.b16 %v2218
        %v2315 = vunpack.c.l.b16 %v2219
        %v2316 = vunpack.c.l.b16 %v2220
        %v2317 = vunpack.c.l.b16 %v2221
        %v2318 = vunpack.c.l.b16 %v2222
        %v2319 = vunpack.c.l.b16 %v2223
        %v2320 = vunpack.c.l.b16 %v2224
        %v2321 = vunpack.c.l.b16 %v2225
        %v2322 = vunpack.c.l.b16 %v2226
        %v2323 = vunpack.c.l.b16 %v2227
        %v2324 = vunpack.c.l.b16 %v2228
        %v2325 = vunpack.c.l.b16 %v2229
        %v2326 = vunpack.c.l.b16 %v2230
        %v2327 = vunpack.c.l.b16 %v2231
        %v2328 = vunpack.c.l.b16 %v2232
        %v2329 = vunpack.c.l.b16 %v2233
        %v2330 = vunpack.c.l.b16 %v2234
        %v2331 = vunpack.c.l.b16 %v2235
        %v2332 = vunpack.c.l.b16 %v2236
        %v2333 = vunpack.c.l.b16 %v2237
        %v2334 = vunpack.c.l.b16 %v2238
        %v2335 = vunpack.c.l.b16 %v2239
        %v2336 = vunpack.c.l.b16 %v2240
        %v2337 = vunpack.c.l.b16 %v2241
        %v2338 = vunpack.c.l.b16 %v2242
        %v2339 = vunpack.c.l.b16 %v2243
        %v2340 = vunpack.c.l.b16 %v2244
        %v2341 = vunpack.c.l.b16 %v2245
        %v2342 = vunpack.c.l.b16 %v2246
        %v2343 = vunpack.c.l.b16 %v2247
        %v2344 = vunpack.c.l.b16 %v2248
        %v2345 = vunpack.c.l.b16 %v2249
        %v2346 = vunpack.c.l.b16 %v2250
        %v2347 = vunpack.c.l.b16 %v2251
        %v2348 = vpack.c.b16 %v2301, %v2300
        %v2349 = vpack.c.b16 %v2303, %v2302
        %v2350 = vpack.c.b16 %v2305, %v2304
        %v2351 = vpack.c.b16 %v2307, %v2306
        %v2352 = vpack.c.b16 %v2309, %v2308
        %v2353 = vpack.c.b16 %v2311, %v2310
        %v2354 = vpack.c.b16 %v2313, %v2312
        %v2355 = vpack.c.b16 %v2315, %v2314
        %v2356 = vpack.c.b16 %v2317, %v2316
        %v2357 = vpack.c.b16 %v2319, %v2318
        %v2358 = vpack.c.b16 %v2321, %v2320
        %v2359 = vpack.c.b16 %v2323, %v2322
        %v2360 = vpack.c.b16 %v2325, %v2324
        %v2361 = vpack.c.b16 %v2327, %v2326
        %v2362 = vpack.c.b16 %v2329, %v2328
        %v2363 = vpack.c.b16 %v2331, %v2330
        %v2364 = vpack.c.b16 %v2333, %v2332
        %v2365 = vpack.c.b16 %v2335, %v2334
        %v2366 = vpack.c.b16 %v2337, %v2336
        %v2367 = vpack.c.b16 %v2339, %v2338
        %v2368 = vpack.c.b16 %v2341, %v2340
        %v2369 = vpack.c.b16 %v2343, %v2342
        %v2370 = vpack.c.b16 %v2345, %v2344
        %v2371 = vpack.c.b16 %v2347, %v2346
        %2396 = vmatprep.subr.bf16.mxu0 0
        %2397 = vmatpush1.bf16.msra.mxu0 %v2348
        %2398 = vmatprep.subr.bf16.mxu0 0
        %2399 = vmatpush1.bf16.msra.mxu0 %v2349
        %2400 = vmatprep.subr.bf16.mxu0 0
        %2401 = vmatpush1.bf16.msra.mxu0 %v2350
        %2402 = vmatprep.subr.bf16.mxu0 0
        %2403 = vmatpush1.bf16.msra.mxu0 %v2351
        %2404 = vmatprep.subr.bf16.mxu0 0
        %2405 = vmatpush1.bf16.msra.mxu0 %v2352
        %2406 = vmatprep.subr.bf16.mxu0 0
        %2407 = vmatpush1.bf16.msra.mxu0 %v2353
        %2408 = vmatprep.subr.bf16.mxu0 0
        %2409 = vmatpush1.bf16.msra.mxu0 %v2354
        %2410 = vmatprep.subr.bf16.mxu0 0
        %2411 = vmatpush1.bf16.msra.mxu0 %v2355
        %2412 = vmatprep.subr.bf16.mxu0 0
        %2413 = vmatpush1.bf16.msra.mxu0 %v2356
        %2414 = vmatprep.subr.bf16.mxu0 0
        %2415 = vmatpush1.bf16.msra.mxu0 %v2357
        %2416 = vmatprep.subr.bf16.mxu0 0
        %2417 = vmatpush1.bf16.msra.mxu0 %v2358
        %2418 = vmatprep.subr.bf16.mxu0 0
        %2419 = vmatpush1.bf16.msra.mxu0 %v2359
        %2420 = vmatprep.subr.bf16.mxu0 0
        %2421 = vmatpush1.bf16.msra.mxu0 %v2360
        %2422 = vmatprep.subr.bf16.mxu0 0
        %2423 = vmatpush1.bf16.msra.mxu0 %v2361
        %2424 = vmatprep.subr.bf16.mxu0 0
        %2425 = vmatpush1.bf16.msra.mxu0 %v2362
        %2426 = vmatprep.subr.bf16.mxu0 0
        %2427 = vmatpush1.bf16.msra.mxu0 %v2363
        %2428 = vmatprep.mubr.bf16.mxu0 %v2097
        %2429 = vmatmul.mubr.bf16.gmra.mrb[0].mxu0 %v2085
        %v2430 = vpop.f32.mrb[0].mxu0
        %v2431 = vadd.f32 0.0, %v2430
        %v2432 = vpop.f32.mrb[0].mxu0
        %v2433 = vpop.f32.mrb[0].mxu0
        %v2434 = vadd.f32 0.0, %v2433
        %v2435 = vpop.f32.mrb[0].mxu0
        %2436 = vmatprep.mubr.bf16.mxu0 %v2109
        %2437 = vmatmul.mubr.bf16.gmra.mrb[0].mxu0 %v2097
        %v2438 = vpop.f32.mrb[0].mxu0
        %v2439 = vadd.f32 0.0, %v2438
        %v2440 = vpop.f32.mrb[0].mxu0
        %v2441 = vpop.f32.mrb[0].mxu0
        %v2442 = vadd.f32 0.0, %v2441
        %v2443 = vpop.f32.mrb[0].mxu0
        %2444 = vmatprep.mubr.bf16.mxu0 %v2121
        %2445 = vmatmul.mubr.bf16.gmra.mrb[0].mxu0 %v2109
        %v2446 = vpop.f32.mrb[0].mxu0
        %v2447 = vadd.f32 0.0, %v2446
        %v2448 = vpop.f32.mrb[0].mxu0
        %v2449 = vpop.f32.mrb[0].mxu0
        %v2450 = vadd.f32 0.0, %v2449
        %v2451 = vpop.f32.mrb[0].mxu0
        %2452 = vmatprep.mubr.bf16.mxu0 %v2133
        %2453 = vmatmul.mubr.bf16.gmra.mrb[0].mxu0 %v2121
        %v2454 = vpop.f32.mrb[0].mxu0
        %v2455 = vadd.f32 0.0, %v2454
        %v2456 = vpop.f32.mrb[0].mxu0
        %v2457 = vpop.f32.mrb[0].mxu0
        %v2458 = vadd.f32 0.0, %v2457
        %v2459 = vpop.f32.mrb[0].mxu0
        %2460 = vmatprep.mubr.bf16.mxu0 %v2145
        %2461 = vmatmul.mubr.bf16.gmra.mrb[0].mxu0 %v2133
        %v2462 = vpop.f32.mrb[0].mxu0
        %v2463 = vadd.f32 0.0, %v2462
        %v2464 = vpop.f32.mrb[0].mxu0
        %v2465 = vpop.f32.mrb[0].mxu0
        %v2466 = vadd.f32 0.0, %v2465
        %v2467 = vpop.f32.mrb[0].mxu0
        %2468 = vmatprep.mubr.bf16.mxu0 %v2157
        %2469 = vmatmul.mubr.bf16.gmra.mrb[0].mxu0 %v2145
        %v2470 = vpop.f32.mrb[0].mxu0
        %v2471 = vadd.f32 0.0, %v2470
        %v2472 = vpop.f32.mrb[0].mxu0
        %v2473 = vpop.f32.mrb[0].mxu0
        %v2474 = vadd.f32 0.0, %v2473
        %v2475 = vpop.f32.mrb[0].mxu0
        %2476 = vmatprep.mubr.bf16.mxu0 %v2169
        %2477 = vmatmul.mubr.bf16.gmra.mrb[0].mxu0 %v2157
        %v2478 = vpop.f32.mrb[0].mxu0
        %v2479 = vadd.f32 0.0, %v2478
        %v2480 = vpop.f32.mrb[0].mxu0
        %v2481 = vpop.f32.mrb[0].mxu0
        %v2482 = vadd.f32 0.0, %v2481
        %v2483 = vpop.f32.mrb[0].mxu0
        %2484 = vmatprep.mubr.bf16.mxu0 %v2181
        %2485 = vmatmul.mubr.bf16.gmra.mrb[0].mxu0 %v2169
        %v2486 = vpop.f32.mrb[0].mxu0
        %v2487 = vadd.f32 0.0, %v2486
        %v2488 = vpop.f32.mrb[0].mxu0
        %v2489 = vpop.f32.mrb[0].mxu0
        %v2490 = vadd.f32 0.0, %v2489
        %v2491 = vpop.f32.mrb[0].mxu0
        %2492 = vdwg.mxu0
        %2493 = vmatprep.subr.bf16.mxu0 0
        %2494 = vmatpush1.bf16.msra.mxu0 %v2364
        %2495 = vmatprep.subr.bf16.mxu0 0
        %2496 = vmatpush1.bf16.msra.mxu0 %v2365
        %2497 = vmatprep.subr.bf16.mxu0 0
        %2498 = vmatpush1.bf16.msra.mxu0 %v2366
        %2499 = vmatprep.subr.bf16.mxu0 0
        %2500 = vmatpush1.bf16.msra.mxu0 %v2367
        %2501 = vmatprep.subr.bf16.mxu0 0
        %2502 = vmatpush1.bf16.msra.mxu0 %v2368
        %2503 = vmatprep.subr.bf16.mxu0 0
        %2504 = vmatpush1.bf16.msra.mxu0 %v2369
        %2505 = vmatprep.subr.bf16.mxu0 0
        %2506 = vmatpush1.bf16.msra.mxu0 %v2370
        %2507 = vmatprep.subr.bf16.mxu0 0
        %2508 = vmatpush1.bf16.msra.mxu0 %v2371
        %2509 = vmatprep.subr.bf16.mxu0 0
        %2510 = vmatpush1.bf16.msra.mxu0 0
        %2511 = vmatprep.subr.bf16.mxu0 0
        %2512 = vmatpush1.bf16.msra.mxu0 0
        %2513 = vmatprep.subr.bf16.mxu0 0
        %2514 = vmatpush1.bf16.msra.mxu0 0
        %2515 = vmatprep.subr.bf16.mxu0 0
        %2516 = vmatpush1.bf16.msra.mxu0 0
        %2517 = vmatprep.subr.bf16.mxu0 0
        %2518 = vmatpush1.bf16.msra.mxu0 0
        %2519 = vmatprep.subr.bf16.mxu0 0
        %2520 = vmatpush1.bf16.msra.mxu0 0
        %2521 = vmatprep.subr.bf16.mxu0 0
        %2522 = vmatpush1.bf16.msra.mxu0 0
        %2523 = vmatprep.subr.bf16.mxu0 0
        %2524 = vmatpush1.bf16.msra.mxu0 0
        %2525 = vmatprep.mubr.bf16.mxu0 0
        %2526 = vmatmul.mubr.bf16.gmra.mrb[0].mxu0 %v2109
        %v2527 = vpop.f32.mrb[0].mxu0
        %v2528 = vadd.f32 %v2431, %v2527
        %v2529 = vpop.f32.mrb[0].mxu0
        %v2530 = vpop.f32.mrb[0].mxu0
        %v2531 = vadd.f32 %v2434, %v2530
        %v2532 = vpop.f32.mrb[0].mxu0
        %2533 = vmatprep.mubr.bf16.mxu0 0
        %2534 = vmatmul.mubr.bf16.gmra.mrb[0].mxu0 %v2121
        %v2535 = vpop.f32.mrb[0].mxu0
        %v2536 = vadd.f32 %v2439, %v2535
        %v2537 = vpop.f32.mrb[0].mxu0
        %v2538 = vpop.f32.mrb[0].mxu0
        %v2539 = vadd.f32 %v2442, %v2538
        %v2540 = vpop.f32.mrb[0].mxu0
        %2541 = vmatprep.mubr.bf16.mxu0 0
        %2542 = vmatmul.mubr.bf16.gmra.mrb[0].mxu0 %v2133
        %v2543 = vpop.f32.mrb[0].mxu0
        %v2544 = vadd.f32 %v2447, %v2543
        %v2545 = vpop.f32.mrb[0].mxu0
        %v2546 = vpop.f32.mrb[0].mxu0
        %v2547 = vadd.f32 %v2450, %v2546
        %v2548 = vpop.f32.mrb[0].mxu0
        %2549 = vmatprep.mubr.bf16.mxu0 0
        %2550 = vmatmul.mubr.bf16.gmra.mrb[0].mxu0 %v2145
        %v2551 = vpop.f32.mrb[0].mxu0
        %v2552 = vadd.f32 %v2455, %v2551
        %v2553 = vpop.f32.mrb[0].mxu0
        %v2554 = vpop.f32.mrb[0].mxu0
        %v2555 = vadd.f32 %v2458, %v2554
        %v2556 = vpop.f32.mrb[0].mxu0
        %2557 = vmatprep.mubr.bf16.mxu0 0
        %2558 = vmatmul.mubr.bf16.gmra.mrb[0].mxu0 %v2157
        %v2559 = vpop.f32.mrb[0].mxu0
        %v2560 = vadd.f32 %v2463, %v2559
        %v2561 = vpop.f32.mrb[0].mxu0
        %v2562 = vpop.f32.mrb[0].mxu0
        %v2563 = vadd.f32 %v2466, %v2562
        %v2564 = vpop.f32.mrb[0].mxu0
        %2565 = vmatprep.mubr.bf16.mxu0 0
        %2566 = vmatmul.mubr.bf16.gmra.mrb[0].mxu0 %v2169
        %v2567 = vpop.f32.mrb[0].mxu0
        %v2568 = vadd.f32 %v2471, %v2567
        %v2569 = vpop.f32.mrb[0].mxu0
        %v2570 = vpop.f32.mrb[0].mxu0
        %v2571 = vadd.f32 %v2474, %v2570
        %v2572 = vpop.f32.mrb[0].mxu0
        %2573 = vmatprep.mubr.bf16.mxu0 0
        %2574 = vmatmul.mubr.bf16.gmra.mrb[0].mxu0 %v2181
        %v2575 = vpop.f32.mrb[0].mxu0
        %v2576 = vadd.f32 %v2479, %v2575
        %v2577 = vpop.f32.mrb[0].mxu0
        %v2578 = vpop.f32.mrb[0].mxu0
        %v2579 = vadd.f32 %v2482, %v2578
        %v2580 = vpop.f32.mrb[0].mxu0
        %2581 = vmatprep.mubr.bf16.mxu0 0
        %2582 = vmatmul.mubr.bf16.gmra.mrb[0].mxu0 %v2193
        %v2583 = vpop.f32.mrb[0].mxu0
        %v2584 = vadd.f32 %v2487, %v2583
        %v2585 = vpop.f32.mrb[0].mxu0
        %v2586 = vpop.f32.mrb[0].mxu0
        %v2587 = vadd.f32 %v2490, %v2586
        %v2588 = vpop.f32.mrb[0].mxu0
        %2589 = vdwg.mxu0
        %v2638 = vunpack.c.l.b16 %v1986
        %v2639 = vunpack.c.l.b16 %v1987
        %v2640 = vunpack.c.l.b16 %v1988
        %v2641 = vunpack.c.l.b16 %v1989
        %v2642 = vunpack.c.l.b16 %v1990
        %v2643 = vunpack.c.l.b16 %v1991
        %v2644 = vunpack.c.l.b16 %v1992
        %v2645 = vunpack.c.l.b16 %v1993
        %v2646 = vunpack.c.l.b16 %v1994
        %v2647 = vunpack.c.l.b16 %v1995
        %v2648 = vunpack.c.l.b16 %v1996
        %v2649 = vunpack.c.l.b16 %v1997
        %v2650 = vunpack.c.l.b16 %v1998
        %v2651 = vunpack.c.l.b16 %v1999
        %v2652 = vunpack.c.l.b16 %v2000
        %v2653 = vunpack.c.l.b16 %v2001
        %v2654 = vunpack.c.l.b16 %v2002
        %v2655 = vunpack.c.l.b16 %v2003
        %v2656 = vunpack.c.l.b16 %v2004
        %v2657 = vunpack.c.l.b16 %v2005
        %v2658 = vunpack.c.l.b16 %v2006
        %v2659 = vunpack.c.l.b16 %v2007
        %v2660 = vunpack.c.l.b16 %v2008
        %v2661 = vunpack.c.l.b16 %v2009
        %v2662 = vunpack.c.l.b16 %v2010
        %v2663 = vunpack.c.l.b16 %v2011
        %v2664 = vunpack.c.l.b16 %v2012
        %v2665 = vunpack.c.l.b16 %v2013
        %v2666 = vunpack.c.l.b16 %v2014
        %v2667 = vunpack.c.l.b16 %v2015
        %v2668 = vunpack.c.l.b16 %v2016
        %v2669 = vunpack.c.l.b16 %v2017
        %v2670 = vunpack.c.l.b16 %v2018
        %v2671 = vunpack.c.l.b16 %v2019
        %v2672 = vunpack.c.l.b16 %v2020
        %v2673 = vunpack.c.l.b16 %v2021
        %v2674 = vunpack.c.l.b16 %v2022
        %v2675 = vunpack.c.l.b16 %v2023
        %v2676 = vunpack.c.l.b16 %v2024
        %v2677 = vunpack.c.l.b16 %v2025
        %v2678 = vunpack.c.l.b16 %v2026
        %v2679 = vunpack.c.l.b16 %v2027
        %v2680 = vunpack.c.l.b16 %v2028
        %v2681 = vunpack.c.l.b16 %v2029
        %v2682 = vunpack.c.l.b16 %v2030
        %v2683 = vunpack.c.l.b16 %v2031
        %v2684 = vunpack.c.l.b16 %v2032
        %v2685 = vunpack.c.l.b16 %v2033
        %v2686 = vpack.c.b16 %v2639, %v2638
        %v2687 = vpack.c.b16 %v2641, %v2640
        %v2688 = vpack.c.b16 %v2643, %v2642
        %v2689 = vpack.c.b16 %v2645, %v2644
        %v2690 = vpack.c.b16 %v2647, %v2646
        %v2691 = vpack.c.b16 %v2649, %v2648
        %v2692 = vpack.c.b16 %v2651, %v2650
        %v2693 = vpack.c.b16 %v2653, %v2652
        %v2694 = vpack.c.b16 %v2655, %v2654
        %v2695 = vpack.c.b16 %v2657, %v2656
        %v2696 = vpack.c.b16 %v2659, %v2658
        %v2697 = vpack.c.b16 %v2661, %v2660
        %v2698 = vpack.c.b16 %v2663, %v2662
        %v2699 = vpack.c.b16 %v2665, %v2664
        %v2700 = vpack.c.b16 %v2667, %v2666
        %v2701 = vpack.c.b16 %v2669, %v2668
        %v2702 = vpack.c.b16 %v2671, %v2670
        %v2703 = vpack.c.b16 %v2673, %v2672
        %v2704 = vpack.c.b16 %v2675, %v2674
        %v2705 = vpack.c.b16 %v2677, %v2676
        %v2706 = vpack.c.b16 %v2679, %v2678
        %v2707 = vpack.c.b16 %v2681, %v2680
        %v2708 = vpack.c.b16 %v2683, %v2682
        %v2709 = vpack.c.b16 %v2685, %v2684
        %2734 = vmatprep.subr.bf16.mxu0 0
        %2735 = vmatpush1.bf16.msra.mxu0 %v2686
        %2736 = vmatprep.subr.bf16.mxu0 0
        %2737 = vmatpush1.bf16.msra.mxu0 %v2687
        %2738 = vmatprep.subr.bf16.mxu0 0
        %2739 = vmatpush1.bf16.msra.mxu0 %v2688
        %2740 = vmatprep.subr.bf16.mxu0 0
        %2741 = vmatpush1.bf16.msra.mxu0 %v2689
        %2742 = vmatprep.subr.bf16.mxu0 0
        %2743 = vmatpush1.bf16.msra.mxu0 %v2690
        %2744 = vmatprep.subr.bf16.mxu0 0
        %2745 = vmatpush1.bf16.msra.mxu0 %v2691
        %2746 = vmatprep.subr.bf16.mxu0 0
        %2747 = vmatpush1.bf16.msra.mxu0 %v2692
        %2748 = vmatprep.subr.bf16.mxu0 0
        %2749 = vmatpush1.bf16.msra.mxu0 %v2693
        %2750 = vmatprep.subr.bf16.mxu0 0
        %2751 = vmatpush1.bf16.msra.mxu0 %v2694
        %2752 = vmatprep.subr.bf16.mxu0 0
        %2753 = vmatpush1.bf16.msra.mxu0 %v2695
        %2754 = vmatprep.subr.bf16.mxu0 0
        %2755 = vmatpush1.bf16.msra.mxu0 %v2696
        %2756 = vmatprep.subr.bf16.mxu0 0
        %2757 = vmatpush1.bf16.msra.mxu0 %v2697
        %2758 = vmatprep.subr.bf16.mxu0 0
        %2759 = vmatpush1.bf16.msra.mxu0 %v2698
        %2760 = vmatprep.subr.bf16.mxu0 0
        %2761 = vmatpush1.bf16.msra.mxu0 %v2699
        %2762 = vmatprep.subr.bf16.mxu0 0
        %2763 = vmatpush1.bf16.msra.mxu0 %v2700
        %2764 = vmatprep.subr.bf16.mxu0 0
        %2765 = vmatpush1.bf16.msra.mxu0 %v2701
        %2766 = vmatprep.mubr.bf16.mxu0 %v1959
        %2767 = vmatmul.mubr.bf16.gmra.mrb[0].mxu0 %v1958
        %v2768 = vpop.f32.mrb[0].mxu0
        %v2769 = vadd.f32 %v2528, %v2768
        %v2770 = vpop.f32.mrb[0].mxu0
        %v2771 = vpop.f32.mrb[0].mxu0
        %v2772 = vadd.f32 %v2531, %v2771
        %v2773 = vpop.f32.mrb[0].mxu0
        %2774 = vmatprep.mubr.bf16.mxu0 %v1960
        %2775 = vmatmul.mubr.bf16.gmra.mrb[0].mxu0 %v1959
        %v2776 = vpop.f32.mrb[0].mxu0
        %v2777 = vadd.f32 %v2536, %v2776
        %v2778 = vpop.f32.mrb[0].mxu0
        %v2779 = vpop.f32.mrb[0].mxu0
        %v2780 = vadd.f32 %v2539, %v2779
        %v2781 = vpop.f32.mrb[0].mxu0
        %2782 = vmatprep.mubr.bf16.mxu0 %v1961
        %2783 = vmatmul.mubr.bf16.gmra.mrb[0].mxu0 %v1960
        %v2784 = vpop.f32.mrb[0].mxu0
        %v2785 = vadd.f32 %v2544, %v2784
        %v2786 = vpop.f32.mrb[0].mxu0
        %v2787 = vpop.f32.mrb[0].mxu0
        %v2788 = vadd.f32 %v2547, %v2787
        %v2789 = vpop.f32.mrb[0].mxu0
        %2790 = vmatprep.mubr.bf16.mxu0 %v1962
        %2791 = vmatmul.mubr.bf16.gmra.mrb[0].mxu0 %v1961
        %v2792 = vpop.f32.mrb[0].mxu0
        %v2793 = vadd.f32 %v2552, %v2792
        %v2794 = vpop.f32.mrb[0].mxu0
        %v2795 = vpop.f32.mrb[0].mxu0
        %v2796 = vadd.f32 %v2555, %v2795
        %v2797 = vpop.f32.mrb[0].mxu0
        %2798 = vmatprep.mubr.bf16.mxu0 %v1963
        %2799 = vmatmul.mubr.bf16.gmra.mrb[0].mxu0 %v1962
        %v2800 = vpop.f32.mrb[0].mxu0
        %v2801 = vadd.f32 %v2560, %v2800
        %v2802 = vpop.f32.mrb[0].mxu0
        %v2803 = vpop.f32.mrb[0].mxu0
        %v2804 = vadd.f32 %v2563, %v2803
        %v2805 = vpop.f32.mrb[0].mxu0
        %2806 = vmatprep.mubr.bf16.mxu0 %v1964
        %2807 = vmatmul.mubr.bf16.gmra.mrb[0].mxu0 %v1963
        %v2808 = vpop.f32.mrb[0].mxu0
        %v2809 = vadd.f32 %v2568, %v2808
        %v2810 = vpop.f32.mrb[0].mxu0
        %v2811 = vpop.f32.mrb[0].mxu0
        %v2812 = vadd.f32 %v2571, %v2811
        %v2813 = vpop.f32.mrb[0].mxu0
        %2814 = vmatprep.mubr.bf16.mxu0 %v1965
        %2815 = vmatmul.mubr.bf16.gmra.mrb[0].mxu0 %v1964
        %v2816 = vpop.f32.mrb[0].mxu0
        %v2817 = vadd.f32 %v2576, %v2816
        %v2818 = vpop.f32.mrb[0].mxu0
        %v2819 = vpop.f32.mrb[0].mxu0
        %v2820 = vadd.f32 %v2579, %v2819
        %v2821 = vpop.f32.mrb[0].mxu0
        %2822 = vmatprep.mubr.bf16.mxu0 %v1978
        %2823 = vmatmul.mubr.bf16.gmra.mrb[0].mxu0 %v1965
        %v2824 = vpop.f32.mrb[0].mxu0
        %v2825 = vadd.f32 %v2584, %v2824
        %v2826 = vpop.f32.mrb[0].mxu0
        %v2827 = vpop.f32.mrb[0].mxu0
        %v2828 = vadd.f32 %v2587, %v2827
        %v2829 = vpop.f32.mrb[0].mxu0
        %2830 = vdwg.mxu0
        %2831 = vmatprep.subr.bf16.mxu0 0
        %2832 = vmatpush1.bf16.msra.mxu0 %v2702
        %2833 = vmatprep.subr.bf16.mxu0 0
        %2834 = vmatpush1.bf16.msra.mxu0 %v2703
        %2835 = vmatprep.subr.bf16.mxu0 0
        %2836 = vmatpush1.bf16.msra.mxu0 %v2704
        %2837 = vmatprep.subr.bf16.mxu0 0
        %2838 = vmatpush1.bf16.msra.mxu0 %v2705
        %2839 = vmatprep.subr.bf16.mxu0 0
        %2840 = vmatpush1.bf16.msra.mxu0 %v2706
        %2841 = vmatprep.subr.bf16.mxu0 0
        %2842 = vmatpush1.bf16.msra.mxu0 %v2707
        %2843 = vmatprep.subr.bf16.mxu0 0
        %2844 = vmatpush1.bf16.msra.mxu0 %v2708
        %2845 = vmatprep.subr.bf16.mxu0 0
        %2846 = vmatpush1.bf16.msra.mxu0 %v2709
        %2847 = vmatprep.subr.bf16.mxu0 0
        %2848 = vmatpush1.bf16.msra.mxu0 0
        %2849 = vmatprep.subr.bf16.mxu0 0
        %2850 = vmatpush1.bf16.msra.mxu0 0
        %2851 = vmatprep.subr.bf16.mxu0 0
        %2852 = vmatpush1.bf16.msra.mxu0 0
        %2853 = vmatprep.subr.bf16.mxu0 0
        %2854 = vmatpush1.bf16.msra.mxu0 0
        %2855 = vmatprep.subr.bf16.mxu0 0
        %2856 = vmatpush1.bf16.msra.mxu0 0
        %2857 = vmatprep.subr.bf16.mxu0 0
        %2858 = vmatpush1.bf16.msra.mxu0 0
        %2859 = vmatprep.subr.bf16.mxu0 0
        %2860 = vmatpush1.bf16.msra.mxu0 0
        %2861 = vmatprep.subr.bf16.mxu0 0
        %2862 = vmatpush1.bf16.msra.mxu0 0
        %2863 = vmatprep.mubr.bf16.mxu0 0
        %2864 = vmatmul.mubr.bf16.gmra.mrb[0].mxu0 %v1960
        %v2865 = vpop.f32.mrb[0].mxu0
        %v2866 = vadd.f32 %v2769, %v2865
        %v2867 = vpop.f32.mrb[0].mxu0
        %v2868 = vpop.f32.mrb[0].mxu0
        %v2869 = vadd.f32 %v2772, %v2868
        %v2870 = vpop.f32.mrb[0].mxu0
        %2871 = vmatprep.mubr.bf16.mxu0 0
        %2872 = vmatmul.mubr.bf16.gmra.mrb[0].mxu0 %v1961
        %v2873 = vpop.f32.mrb[0].mxu0
        %v2874 = vadd.f32 %v2777, %v2873
        %v2875 = vpop.f32.mrb[0].mxu0
        %v2876 = vpop.f32.mrb[0].mxu0
        %v2877 = vadd.f32 %v2780, %v2876
        %v2878 = vpop.f32.mrb[0].mxu0
        %2879 = vmatprep.mubr.bf16.mxu0 0
        %2880 = vmatmul.mubr.bf16.gmra.mrb[0].mxu0 %v1962
        %v2881 = vpop.f32.mrb[0].mxu0
        %v2882 = vadd.f32 %v2785, %v2881
        %v2883 = vpop.f32.mrb[0].mxu0
        %v2884 = vpop.f32.mrb[0].mxu0
        %v2885 = vadd.f32 %v2788, %v2884
        %v2886 = vpop.f32.mrb[0].mxu0
        %2887 = vmatprep.mubr.bf16.mxu0 0
        %2888 = vmatmul.mubr.bf16.gmra.mrb[0].mxu0 %v1963
        %v2889 = vpop.f32.mrb[0].mxu0
        %v2890 = vadd.f32 %v2793, %v2889
        %v2891 = vpop.f32.mrb[0].mxu0
        %v2892 = vpop.f32.mrb[0].mxu0
        %v2893 = vadd.f32 %v2796, %v2892
        %v2894 = vpop.f32.mrb[0].mxu0
        %2895 = vmatprep.mubr.bf16.mxu0 0
        %2896 = vmatmul.mubr.bf16.gmra.mrb[0].mxu0 %v1964
        %v2897 = vpop.f32.mrb[0].mxu0
        %v2898 = vadd.f32 %v2801, %v2897
        %v2899 = vpop.f32.mrb[0].mxu0
        %v2900 = vpop.f32.mrb[0].mxu0
        %v2901 = vadd.f32 %v2804, %v2900
        %v2902 = vpop.f32.mrb[0].mxu0
        %2903 = vmatprep.mubr.bf16.mxu0 0
        %2904 = vmatmul.mubr.bf16.gmra.mrb[0].mxu0 %v1965
        %v2905 = vpop.f32.mrb[0].mxu0
        %v2906 = vadd.f32 %v2809, %v2905
        %v2907 = vpop.f32.mrb[0].mxu0
        %v2908 = vpop.f32.mrb[0].mxu0
        %v2909 = vadd.f32 %v2812, %v2908
        %v2910 = vpop.f32.mrb[0].mxu0
        %2911 = vmatprep.mubr.bf16.mxu0 0
        %2912 = vmatmul.mubr.bf16.gmra.mrb[0].mxu0 %v1978
        %v2913 = vpop.f32.mrb[0].mxu0
        %v2914 = vadd.f32 %v2817, %v2913
        %v2915 = vpop.f32.mrb[0].mxu0
        %v2916 = vpop.f32.mrb[0].mxu0
        %v2917 = vadd.f32 %v2820, %v2916
        %v2918 = vpop.f32.mrb[0].mxu0
        %2919 = vmatprep.mubr.bf16.mxu0 0
        %2920 = vmatmul.mubr.bf16.gmra.mrb[0].mxu0 %v1984
        %v2921 = vpop.f32.mrb[0].mxu0
        %v2922 = vadd.f32 %v2825, %v2921
        %v2923 = vpop.f32.mrb[0].mxu0
        %v2924 = vpop.f32.mrb[0].mxu0
        %v2925 = vadd.f32 %v2828, %v2924
        %v2926 = vpop.f32.mrb[0].mxu0
        %2927 = vdwg.mxu0
        %v2928 = vld [vmem:[%s1905] sm:$0xe]
        %v2929 = vld [vmem:[%s1905 + $0xc] sm:$0xe]
        %v2930 = vld [vmem:[%s1905 + $0x18] sm:$0xe]
        %v2931 = vld [vmem:[%s1905 + $0x24] sm:$0xe]
        %v2932 = vld [vmem:[%s1905 + $0x30] sm:$0xe]
        %v2933 = vld [vmem:[%s1905 + $0x3c] sm:$0xe]
        %v2934 = vld [vmem:[%s1905 + $0x48] sm:$0xe]
        %v2935 = vld [vmem:[%s1905 + $0x54] sm:$0xe]
        %v2936 = vld [vmem:[%s1905 + $0x60] sm:$0xe]
        %v2937 = vld [vmem:[%s1905 + $0x6c] sm:$0xe]
        %v2946 = vunpack.c.l.b16 %v2928
        %v2947 = vunpack.c.l.b16 %v2929
        %v2948 = vunpack.c.l.b16 %v2930
        %v2949 = vunpack.c.l.b16 %v2931
        %v2950 = vunpack.c.l.b16 %v2932
        %v2951 = vunpack.c.l.b16 %v2933
        %v2952 = vunpack.c.l.b16 %v2934
        %v2953 = vunpack.c.l.b16 %v2935
        %v2954 = vpack.c.b16 %v1943, %v2946
        %v2955 = vpack.c.b16 %v1945, %v2947
        %v2956 = vpack.c.b16 %v1947, %v2948
        %v2957 = vpack.c.b16 %v1949, %v2949
        %v2958 = vpack.c.b16 %v1951, %v2950
        %v2959 = vpack.c.b16 %v1953, %v2951
        %v2960 = vpack.c.b16 %v1955, %v2952
        %v2961 = vpack.c.b16 %v1957, %v2953
        %v2963 = vunpack.c.l.b16 %v2936
        %v2964 = vpack.c.b16 %v1977, %v2963
        %v2966 = vunpack.c.l.b16 %v2937
        %v2967 = vpack.c.b16 %v1983, %v2966
        %v2968 = vrot.slane %v2954, 1
        %v2969 = vrot.slane %v2060, 1
        %v2970 = vsel %vm1405, %v2968, %v2969
        %v2971 = vrot.slane %v2955, 1
        %v2972 = vrot.slane %v2061, 1
        %v2973 = vsel %vm1405, %v2971, %v2972
        %v2974 = vrot.slane %v2956, 1
        %v2975 = vrot.slane %v2062, 1
        %v2976 = vsel %vm1405, %v2974, %v2975
        %v2977 = vrot.slane %v2957, 1
        %v2978 = vrot.slane %v2063, 1
        %v2979 = vsel %vm1405, %v2977, %v2978
        %v2980 = vrot.slane %v2958, 1
        %v2981 = vrot.slane %v2064, 1
        %v2982 = vsel %vm1405, %v2980, %v2981
        %v2983 = vrot.slane %v2959, 1
        %v2984 = vrot.slane %v2065, 1
        %v2985 = vsel %vm1405, %v2983, %v2984
        %v2986 = vrot.slane %v2960, 1
        %v2987 = vrot.slane %v2066, 1
        %v2988 = vsel %vm1405, %v2986, %v2987
        %v2989 = vrot.slane %v2961, 1
        %v2990 = vrot.slane %v2067, 1
        %v2991 = vsel %vm1405, %v2989, %v2990
        %v2992 = vrot.slane %v2964, 1
        %v2993 = vrot.slane %v2070, 1
        %v2994 = vsel %vm1405, %v2992, %v2993
        %v2995 = vrot.slane %v2967, 1
        %v2996 = vrot.slane %v2073, 1
        %v2997 = vsel %vm1405, %v2995, %v2996
        %v3008 = vld [vmem:[%s1446] sm:$0xf]
        %v3009 = vld [vmem:[%s1446 + $0x4] sm:$0xf]
        %v3010 = vld [vmem:[%s1446 + $0x8] sm:$0xf]
        %v3011 = vld [vmem:[%s1446 + $0xc] sm:$0xf]
        %v3012 = vld [vmem:[%s1446 + $0x10] sm:$0xf]
        %v3013 = vld [vmem:[%s1446 + $0x14] sm:$0xf]
        %v3014 = vld [vmem:[%s1446 + $0x18] sm:$0xf]
        %v3015 = vld [vmem:[%s1446 + $0x1c] sm:$0xf]
        %v3016 = vld [vmem:[%s1446 + $0x20] sm:$0xf]
        %v3017 = vld [vmem:[%s1446 + $0x24] sm:$0xf]
        %v3018 = vld [vmem:[%s1446 + $0x28] sm:$0xf]
        %v3019 = vld [vmem:[%s1446 + $0x2c] sm:$0xf]
        %v3020 = vld [vmem:[%s1446 + $0x30] sm:$0xf]
        %v3021 = vld [vmem:[%s1446 + $0x34] sm:$0xf]
        %v3022 = vld [vmem:[%s1446 + $0x38] sm:$0xf]
        %v3023 = vld [vmem:[%s1446 + $0x3c] sm:$0xf]
        %v3024 = vld [vmem:[%s1446 + $0x40] sm:$0xf]
        %v3025 = vld [vmem:[%s1446 + $0x44] sm:$0xf]
        %v3026 = vld [vmem:[%s1446 + $0x48] sm:$0xf]
        %v3027 = vld [vmem:[%s1446 + $0x4c] sm:$0xf]
        %v3028 = vld [vmem:[%s1446 + $0x50] sm:$0xf]
        %v3029 = vld [vmem:[%s1446 + $0x54] sm:$0xf]
        %v3030 = vld [vmem:[%s1446 + $0x58] sm:$0xf]
        %v3031 = vld [vmem:[%s1446 + $0x5c] sm:$0xf]
        %v3032 = vld [vmem:[%s1446 + $0x60] sm:$0xf]
        %v3033 = vld [vmem:[%s1446 + $0x64] sm:$0xf]
        %v3034 = vld [vmem:[%s1446 + $0x68] sm:$0xf]
        %v3035 = vld [vmem:[%s1446 + $0x6c] sm:$0xf]
        %v3036 = vld [vmem:[%s1446 + $0x70] sm:$0xf]
        %v3037 = vld [vmem:[%s1446 + $0x74] sm:$0xf]
        %v3038 = vld [vmem:[%s1446 + $0x78] sm:$0xf]
        %v3039 = vld [vmem:[%s1446 + $0x7c] sm:$0xf]
        %v3040 = vld [vmem:[%s1446 + $0x80] sm:$0xf]
        %v3041 = vld [vmem:[%s1446 + $0x84] sm:$0xf]
        %v3042 = vld [vmem:[%s1446 + $0x88] sm:$0xf]
        %v3043 = vld [vmem:[%s1446 + $0x8c] sm:$0xf]
        %v3044 = vld [vmem:[%s1446 + $0x90] sm:$0xf]
        %v3045 = vld [vmem:[%s1446 + $0x94] sm:$0xf]
        %v3046 = vld [vmem:[%s1446 + $0x98] sm:$0xf]
        %v3047 = vld [vmem:[%s1446 + $0x9c] sm:$0xf]
        %v3048 = vld [vmem:[%s1446 + $0xa0] sm:$0xf]
        %v3049 = vld [vmem:[%s1446 + $0xa4] sm:$0xf]
        %v3050 = vld [vmem:[%s1446 + $0xa8] sm:$0xf]
        %v3051 = vld [vmem:[%s1446 + $0xac] sm:$0xf]
        %v3052 = vld [vmem:[%s1446 + $0xb0] sm:$0xf]
        %v3053 = vld [vmem:[%s1446 + $0xb4] sm:$0xf]
        %v3054 = vld [vmem:[%s1446 + $0xb8] sm:$0xf]
        %v3055 = vld [vmem:[%s1446 + $0xbc] sm:$0xf]
        %v3104 = vunpack.c.l.b16 %v3008
        %v3105 = vunpack.c.l.b16 %v3009
        %v3106 = vunpack.c.l.b16 %v3010
        %v3107 = vunpack.c.l.b16 %v3011
        %v3108 = vunpack.c.l.b16 %v3012
        %v3109 = vunpack.c.l.b16 %v3013
        %v3110 = vunpack.c.l.b16 %v3014
        %v3111 = vunpack.c.l.b16 %v3015
        %v3112 = vunpack.c.l.b16 %v3016
        %v3113 = vunpack.c.l.b16 %v3017
        %v3114 = vunpack.c.l.b16 %v3018
        %v3115 = vunpack.c.l.b16 %v3019
        %v3116 = vunpack.c.l.b16 %v3020
        %v3117 = vunpack.c.l.b16 %v3021
        %v3118 = vunpack.c.l.b16 %v3022
        %v3119 = vunpack.c.l.b16 %v3023
        %v3120 = vunpack.c.l.b16 %v3024
        %v3121 = vunpack.c.l.b16 %v3025
        %v3122 = vunpack.c.l.b16 %v3026
        %v3123 = vunpack.c.l.b16 %v3027
        %v3124 = vunpack.c.l.b16 %v3028
        %v3125 = vunpack.c.l.b16 %v3029
        %v3126 = vunpack.c.l.b16 %v3030
        %v3127 = vunpack.c.l.b16 %v3031
        %v3128 = vunpack.c.l.b16 %v3032
        %v3129 = vunpack.c.l.b16 %v3033
        %v3130 = vunpack.c.l.b16 %v3034
        %v3131 = vunpack.c.l.b16 %v3035
        %v3132 = vunpack.c.l.b16 %v3036
        %v3133 = vunpack.c.l.b16 %v3037
        %v3134 = vunpack.c.l.b16 %v3038
        %v3135 = vunpack.c.l.b16 %v3039
        %v3136 = vunpack.c.l.b16 %v3040
        %v3137 = vunpack.c.l.b16 %v3041
        %v3138 = vunpack.c.l.b16 %v3042
        %v3139 = vunpack.c.l.b16 %v3043
        %v3140 = vunpack.c.l.b16 %v3044
        %v3141 = vunpack.c.l.b16 %v3045
        %v3142 = vunpack.c.l.b16 %v3046
        %v3143 = vunpack.c.l.b16 %v3047
        %v3144 = vunpack.c.l.b16 %v3048
        %v3145 = vunpack.c.l.b16 %v3049
        %v3146 = vunpack.c.l.b16 %v3050
        %v3147 = vunpack.c.l.b16 %v3051
        %v3148 = vunpack.c.l.b16 %v3052
        %v3149 = vunpack.c.l.b16 %v3053
        %v3150 = vunpack.c.l.b16 %v3054
        %v3151 = vunpack.c.l.b16 %v3055
        %v3152 = vpack.c.b16 %v3105, %v3104
        %v3153 = vpack.c.b16 %v3107, %v3106
        %v3154 = vpack.c.b16 %v3109, %v3108
        %v3155 = vpack.c.b16 %v3111, %v3110
        %v3156 = vpack.c.b16 %v3113, %v3112
        %v3157 = vpack.c.b16 %v3115, %v3114
        %v3158 = vpack.c.b16 %v3117, %v3116
        %v3159 = vpack.c.b16 %v3119, %v3118
        %v3160 = vpack.c.b16 %v3121, %v3120
        %v3161 = vpack.c.b16 %v3123, %v3122
        %v3162 = vpack.c.b16 %v3125, %v3124
        %v3163 = vpack.c.b16 %v3127, %v3126
        %v3164 = vpack.c.b16 %v3129, %v3128
        %v3165 = vpack.c.b16 %v3131, %v3130
        %v3166 = vpack.c.b16 %v3133, %v3132
        %v3167 = vpack.c.b16 %v3135, %v3134
        %v3168 = vpack.c.b16 %v3137, %v3136
        %v3169 = vpack.c.b16 %v3139, %v3138
        %v3170 = vpack.c.b16 %v3141, %v3140
        %v3171 = vpack.c.b16 %v3143, %v3142
        %v3172 = vpack.c.b16 %v3145, %v3144
        %v3173 = vpack.c.b16 %v3147, %v3146
        %v3174 = vpack.c.b16 %v3149, %v3148
        %v3175 = vpack.c.b16 %v3151, %v3150
        %3200 = vmatprep.subr.bf16.mxu0 0
        %3201 = vmatpush1.bf16.msra.mxu0 %v3152
        %3202 = vmatprep.subr.bf16.mxu0 0
        %3203 = vmatpush1.bf16.msra.mxu0 %v3153
        %3204 = vmatprep.subr.bf16.mxu0 0
        %3205 = vmatpush1.bf16.msra.mxu0 %v3154
        %3206 = vmatprep.subr.bf16.mxu0 0
        %3207 = vmatpush1.bf16.msra.mxu0 %v3155
        %3208 = vmatprep.subr.bf16.mxu0 0
        %3209 = vmatpush1.bf16.msra.mxu0 %v3156
        %3210 = vmatprep.subr.bf16.mxu0 0
        %3211 = vmatpush1.bf16.msra.mxu0 %v3157
        %3212 = vmatprep.subr.bf16.mxu0 0
        %3213 = vmatpush1.bf16.msra.mxu0 %v3158
        %3214 = vmatprep.subr.bf16.mxu0 0
        %3215 = vmatpush1.bf16.msra.mxu0 %v3159
        %3216 = vmatprep.subr.bf16.mxu0 0
        %3217 = vmatpush1.bf16.msra.mxu0 %v3160
        %3218 = vmatprep.subr.bf16.mxu0 0
        %3219 = vmatpush1.bf16.msra.mxu0 %v3161
        %3220 = vmatprep.subr.bf16.mxu0 0
        %3221 = vmatpush1.bf16.msra.mxu0 %v3162
        %3222 = vmatprep.subr.bf16.mxu0 0
        %3223 = vmatpush1.bf16.msra.mxu0 %v3163
        %3224 = vmatprep.subr.bf16.mxu0 0
        %3225 = vmatpush1.bf16.msra.mxu0 %v3164
        %3226 = vmatprep.subr.bf16.mxu0 0
        %3227 = vmatpush1.bf16.msra.mxu0 %v3165
        %3228 = vmatprep.subr.bf16.mxu0 0
        %3229 = vmatpush1.bf16.msra.mxu0 %v3166
        %3230 = vmatprep.subr.bf16.mxu0 0
        %3231 = vmatpush1.bf16.msra.mxu0 %v3167
        %3232 = vmatprep.mubr.bf16.mxu0 %v2973
        %3233 = vmatmul.mubr.bf16.gmra.mrb[0].mxu0 %v2970
        %v3234 = vpop.f32.mrb[0].mxu0
        %v3235 = vadd.f32 0.0, %v3234
        %v3236 = vpop.f32.mrb[0].mxu0
        %v3237 = vpop.f32.mrb[0].mxu0
        %v3238 = vadd.f32 0.0, %v3237
        %v3239 = vpop.f32.mrb[0].mxu0
        %3240 = vmatprep.mubr.bf16.mxu0 %v2976
        %3241 = vmatmul.mubr.bf16.gmra.mrb[0].mxu0 %v2973
        %v3242 = vpop.f32.mrb[0].mxu0
        %v3243 = vadd.f32 0.0, %v3242
        %v3244 = vpop.f32.mrb[0].mxu0
        %v3245 = vpop.f32.mrb[0].mxu0
        %v3246 = vadd.f32 0.0, %v3245
        %v3247 = vpop.f32.mrb[0].mxu0
        %3248 = vmatprep.mubr.bf16.mxu0 %v2979
        %3249 = vmatmul.mubr.bf16.gmra.mrb[0].mxu0 %v2976
        %v3250 = vpop.f32.mrb[0].mxu0
        %v3251 = vadd.f32 0.0, %v3250
        %v3252 = vpop.f32.mrb[0].mxu0
        %v3253 = vpop.f32.mrb[0].mxu0
        %v3254 = vadd.f32 0.0, %v3253
        %v3255 = vpop.f32.mrb[0].mxu0
        %3256 = vmatprep.mubr.bf16.mxu0 %v2982
        %3257 = vmatmul.mubr.bf16.gmra.mrb[0].mxu0 %v2979
        %v3258 = vpop.f32.mrb[0].mxu0
        %v3259 = vadd.f32 0.0, %v3258
        %v3260 = vpop.f32.mrb[0].mxu0
        %v3261 = vpop.f32.mrb[0].mxu0
        %v3262 = vadd.f32 0.0, %v3261
        %v3263 = vpop.f32.mrb[0].mxu0
        %3264 = vmatprep.mubr.bf16.mxu0 %v2985
        %3265 = vmatmul.mubr.bf16.gmra.mrb[0].mxu0 %v2982
        %v3266 = vpop.f32.mrb[0].mxu0
        %v3267 = vadd.f32 0.0, %v3266
        %v3268 = vpop.f32.mrb[0].mxu0
        %v3269 = vpop.f32.mrb[0].mxu0
        %v3270 = vadd.f32 0.0, %v3269
        %v3271 = vpop.f32.mrb[0].mxu0
        %3272 = vmatprep.mubr.bf16.mxu0 %v2988
        %3273 = vmatmul.mubr.bf16.gmra.mrb[0].mxu0 %v2985
        %v3274 = vpop.f32.mrb[0].mxu0
        %v3275 = vadd.f32 0.0, %v3274
        %v3276 = vpop.f32.mrb[0].mxu0
        %v3277 = vpop.f32.mrb[0].mxu0
        %v3278 = vadd.f32 0.0, %v3277
        %v3279 = vpop.f32.mrb[0].mxu0
        %3280 = vmatprep.mubr.bf16.mxu0 %v2991
        %3281 = vmatmul.mubr.bf16.gmra.mrb[0].mxu0 %v2988
        %v3282 = vpop.f32.mrb[0].mxu0
        %v3283 = vadd.f32 0.0, %v3282
        %v3284 = vpop.f32.mrb[0].mxu0
        %v3285 = vpop.f32.mrb[0].mxu0
        %v3286 = vadd.f32 0.0, %v3285
        %v3287 = vpop.f32.mrb[0].mxu0
        %3288 = vmatprep.mubr.bf16.mxu0 %v2994
        %3289 = vmatmul.mubr.bf16.gmra.mrb[0].mxu0 %v2991
        %v3290 = vpop.f32.mrb[0].mxu0
        %v3291 = vadd.f32 0.0, %v3290
        %v3292 = vpop.f32.mrb[0].mxu0
        %v3293 = vpop.f32.mrb[0].mxu0
        %v3294 = vadd.f32 0.0, %v3293
        %v3295 = vpop.f32.mrb[0].mxu0
        %3296 = vdwg.mxu0
        %3297 = vmatprep.subr.bf16.mxu0 0
        %3298 = vmatpush1.bf16.msra.mxu0 %v3168
        %3299 = vmatprep.subr.bf16.mxu0 0
        %3300 = vmatpush1.bf16.msra.mxu0 %v3169
        %3301 = vmatprep.subr.bf16.mxu0 0
        %3302 = vmatpush1.bf16.msra.mxu0 %v3170
        %3303 = vmatprep.subr.bf16.mxu0 0
        %3304 = vmatpush1.bf16.msra.mxu0 %v3171
        %3305 = vmatprep.subr.bf16.mxu0 0
        %3306 = vmatpush1.bf16.msra.mxu0 %v3172
        %3307 = vmatprep.subr.bf16.mxu0 0
        %3308 = vmatpush1.bf16.msra.mxu0 %v3173
        %3309 = vmatprep.subr.bf16.mxu0 0
        %3310 = vmatpush1.bf16.msra.mxu0 %v3174
        %3311 = vmatprep.subr.bf16.mxu0 0
        %3312 = vmatpush1.bf16.msra.mxu0 %v3175
        %3313 = vmatprep.subr.bf16.mxu0 0
        %3314 = vmatpush1.bf16.msra.mxu0 0
        %3315 = vmatprep.subr.bf16.mxu0 0
        %3316 = vmatpush1.bf16.msra.mxu0 0
        %3317 = vmatprep.subr.bf16.mxu0 0
        %3318 = vmatpush1.bf16.msra.mxu0 0
        %3319 = vmatprep.subr.bf16.mxu0 0
        %3320 = vmatpush1.bf16.msra.mxu0 0
        %3321 = vmatprep.subr.bf16.mxu0 0
        %3322 = vmatpush1.bf16.msra.mxu0 0
        %3323 = vmatprep.subr.bf16.mxu0 0
        %3324 = vmatpush1.bf16.msra.mxu0 0
        %3325 = vmatprep.subr.bf16.mxu0 0
        %3326 = vmatpush1.bf16.msra.mxu0 0
        %3327 = vmatprep.subr.bf16.mxu0 0
        %3328 = vmatpush1.bf16.msra.mxu0 0
        %3329 = vmatprep.mubr.bf16.mxu0 0
        %3330 = vmatmul.mubr.bf16.gmra.mrb[0].mxu0 %v2976
        %v3331 = vpop.f32.mrb[0].mxu0
        %v3332 = vadd.f32 %v3235, %v3331
        %v3333 = vpop.f32.mrb[0].mxu0
        %v3334 = vpop.f32.mrb[0].mxu0
        %v3335 = vadd.f32 %v3238, %v3334
        %v3336 = vpop.f32.mrb[0].mxu0
        %3337 = vmatprep.mubr.bf16.mxu0 0
        %3338 = vmatmul.mubr.bf16.gmra.mrb[0].mxu0 %v2979
        %v3339 = vpop.f32.mrb[0].mxu0
        %v3340 = vadd.f32 %v3243, %v3339
        %v3341 = vpop.f32.mrb[0].mxu0
        %v3342 = vpop.f32.mrb[0].mxu0
        %v3343 = vadd.f32 %v3246, %v3342
        %v3344 = vpop.f32.mrb[0].mxu0
        %3345 = vmatprep.mubr.bf16.mxu0 0
        %3346 = vmatmul.mubr.bf16.gmra.mrb[0].mxu0 %v2982
        %v3347 = vpop.f32.mrb[0].mxu0
        %v3348 = vadd.f32 %v3251, %v3347
        %v3349 = vpop.f32.mrb[0].mxu0
        %v3350 = vpop.f32.mrb[0].mxu0
        %v3351 = vadd.f32 %v3254, %v3350
        %v3352 = vpop.f32.mrb[0].mxu0
        %3353 = vmatprep.mubr.bf16.mxu0 0
        %3354 = vmatmul.mubr.bf16.gmra.mrb[0].mxu0 %v2985
        %v3355 = vpop.f32.mrb[0].mxu0
        %v3356 = vadd.f32 %v3259, %v3355
        %v3357 = vpop.f32.mrb[0].mxu0
        %v3358 = vpop.f32.mrb[0].mxu0
        %v3359 = vadd.f32 %v3262, %v3358
        %v3360 = vpop.f32.mrb[0].mxu0
        %3361 = vmatprep.mubr.bf16.mxu0 0
        %3362 = vmatmul.mubr.bf16.gmra.mrb[0].mxu0 %v2988
        %v3363 = vpop.f32.mrb[0].mxu0
        %v3364 = vadd.f32 %v3267, %v3363
        %v3365 = vpop.f32.mrb[0].mxu0
        %v3366 = vpop.f32.mrb[0].mxu0
        %v3367 = vadd.f32 %v3270, %v3366
        %v3368 = vpop.f32.mrb[0].mxu0
        %3369 = vmatprep.mubr.bf16.mxu0 0
        %3370 = vmatmul.mubr.bf16.gmra.mrb[0].mxu0 %v2991
        %v3371 = vpop.f32.mrb[0].mxu0
        %v3372 = vadd.f32 %v3275, %v3371
        %v3373 = vpop.f32.mrb[0].mxu0
        %v3374 = vpop.f32.mrb[0].mxu0
        %v3375 = vadd.f32 %v3278, %v3374
        %v3376 = vpop.f32.mrb[0].mxu0
        %3377 = vmatprep.mubr.bf16.mxu0 0
        %3378 = vmatmul.mubr.bf16.gmra.mrb[0].mxu0 %v2994
        %v3379 = vpop.f32.mrb[0].mxu0
        %v3380 = vadd.f32 %v3283, %v3379
        %v3381 = vpop.f32.mrb[0].mxu0
        %v3382 = vpop.f32.mrb[0].mxu0
        %v3383 = vadd.f32 %v3286, %v3382
        %v3384 = vpop.f32.mrb[0].mxu0
        %3385 = vmatprep.mubr.bf16.mxu0 0
        %3386 = vmatmul.mubr.bf16.gmra.mrb[0].mxu0 %v2997
        %v3387 = vpop.f32.mrb[0].mxu0
        %v3388 = vadd.f32 %v3291, %v3387
        %v3389 = vpop.f32.mrb[0].mxu0
        %v3390 = vpop.f32.mrb[0].mxu0
        %v3391 = vadd.f32 %v3294, %v3390
        %v3392 = vpop.f32.mrb[0].mxu0
        %3393 = vdwg.mxu0
        %v3394 = vadd.f32 %v2866, %v3332
        %v3395 = vadd.f32 %v2869, %v3335
        %v3396 = vadd.f32 %v2874, %v3340
        %v3397 = vadd.f32 %v2877, %v3343
        %v3398 = vadd.f32 %v2882, %v3348
        %v3399 = vadd.f32 %v2885, %v3351
        %v3400 = vadd.f32 %v2890, %v3356
        %v3401 = vadd.f32 %v2893, %v3359
        %v3402 = vadd.f32 %v2898, %v3364
        %v3403 = vadd.f32 %v2901, %v3367
        %v3404 = vadd.f32 %v2906, %v3372
        %v3405 = vadd.f32 %v2909, %v3375
        %v3406 = vadd.f32 %v2914, %v3380
        %v3407 = vadd.f32 %v2917, %v3383
        %v3408 = vadd.f32 %v2922, %v3388
        %v3409 = vadd.f32 %v2925, %v3391
        %v3410 = vld [vmem:[#allocation8] sm:$0x1]
        %v3412 = vlaneseq
        %v3413 = vshrl.u32 %v3412, 7
        %v3414 = vsub.s32 0, %v3413
        %v3415 = vrot.slane %v3410, %v3414
        %v3417 = vadd.f32 %v3394, %v3415
        %v3418 = vadd.f32 %v3395, %v3415
        %v3419 = vadd.f32 %v3396, %v3415
        %v3420 = vadd.f32 %v3397, %v3415
        %v3421 = vadd.f32 %v3398, %v3415
        %v3422 = vadd.f32 %v3399, %v3415
        %v3423 = vadd.f32 %v3400, %v3415
        %v3424 = vadd.f32 %v3401, %v3415
        %v3425 = vadd.f32 %v3402, %v3415
        %v3426 = vadd.f32 %v3403, %v3415
        %v3427 = vadd.f32 %v3404, %v3415
        %v3428 = vadd.f32 %v3405, %v3415
        %v3429 = vadd.f32 %v3406, %v3415
        %v3430 = vadd.f32 %v3407, %v3415
        %v3431 = vadd.f32 %v3408, %v3415
        %v3432 = vadd.f32 %v3409, %v3415
        %v3433 = vmax.f32 %v3417, 0.0
        %v3434 = vmax.f32 %v3418, 0.0
        %v3435 = vmax.f32 %v3419, 0.0
        %v3436 = vmax.f32 %v3420, 0.0
        %v3437 = vmax.f32 %v3421, 0.0
        %v3438 = vmax.f32 %v3422, 0.0
        %v3439 = vmax.f32 %v3423, 0.0
        %v3440 = vmax.f32 %v3424, 0.0
        %v3441 = vmax.f32 %v3425, 0.0
        %v3442 = vmax.f32 %v3426, 0.0
        %v3443 = vmax.f32 %v3427, 0.0
        %v3444 = vmax.f32 %v3428, 0.0
        %v3445 = vmax.f32 %v3429, 0.0
        %v3446 = vmax.f32 %v3430, 0.0
        %v3447 = vmax.f32 %v3431, 0.0
        %v3448 = vmax.f32 %v3432, 0.0
        %v3449 = vpack.c.bf16 %v3434, %v3433
        %v3450 = vpack.c.bf16 %v3436, %v3435
        %v3451 = vpack.c.bf16 %v3438, %v3437
        %v3452 = vpack.c.bf16 %v3440, %v3439
        %v3453 = vpack.c.bf16 %v3442, %v3441
        %v3454 = vpack.c.bf16 %v3444, %v3443
        %v3455 = vpack.c.bf16 %v3446, %v3445
        %v3456 = vpack.c.bf16 %v3448, %v3447
        %s3457 = scalar_lea.vmem [#allocation2], 216
        %3458 = vst [vmem:[%s3457 + $0x8] sm:$0xff] %v3449
        %3459 = vst [vmem:[%s3457 + $0x20] sm:$0xff] %v3450
        %3460 = vst [vmem:[%s3457 + $0x38] sm:$0xff] %v3451
        %3461 = vst [vmem:[%s3457 + $0x50] sm:$0xff] %v3452
        %3462 = vst [vmem:[%s3457 + $0x68] sm:$0xff] %v3453
        %3463 = vst [vmem:[%s3457 + $0x80] sm:$0xff] %v3454
        %3464 = vst [vmem:[%s3457 + $0x98] sm:$0xff] %v3455
        %3465 = vst [vmem:[%s3457 + $0xb0] sm:$0xff] %v3456
        %v3466 = vld [vmem:[#allocation2] sm:$0x80]
        %v3467 = vld [vmem:[#allocation2 + $0x8] sm:$0xff]
        %v3468 = vld [vmem:[#allocation2 + $0x18] sm:$0x80]
        %v3469 = vld [vmem:[#allocation2 + $0x20] sm:$0xff]
        %v3470 = vld [vmem:[#allocation2 + $0x30] sm:$0x80]
        %v3471 = vld [vmem:[#allocation2 + $0x38] sm:$0xff]
        %v3472 = vld [vmem:[#allocation2 + $0x48] sm:$0x80]
        %v3473 = vld [vmem:[#allocation2 + $0x50] sm:$0xff]
        %v3474 = vld [vmem:[#allocation2 + $0x60] sm:$0x80]
        %v3475 = vld [vmem:[#allocation2 + $0x68] sm:$0xff]
        %v3476 = vld [vmem:[#allocation2 + $0x78] sm:$0x80]
        %v3477 = vld [vmem:[#allocation2 + $0x80] sm:$0xff]
        %v3478 = vld [vmem:[#allocation2 + $0x90] sm:$0x80]
        %v3479 = vld [vmem:[#allocation2 + $0x98] sm:$0xff]
        %v3480 = vld [vmem:[#allocation2 + $0xa8] sm:$0x80]
        %v3481 = vld [vmem:[#allocation2 + $0xb0] sm:$0xff]
        %v3482 = vld [vmem:[#allocation2 + $0xc0] sm:$0x80]
        %v3483 = vld [vmem:[#allocation2 + $0xc8] sm:$0xff]
        %v3484 = vld [vmem:[#allocation2 + $0xd8] sm:$0x80]
        %v3485 = vld [vmem:[#allocation2 + $0xe0] sm:$0xff]
        %vm3486 = vsmask.f32 256
        %v3488 = vshrl.u32 %v3466, 16
        %v3490 = vrot.slane %v3488, 7
        %v3492 = vshrl.u32 %v3467, 16
        %v3494 = vrot.slane %v3492, 7
        %v3495 = vshll.u32 %v3467, 16
        %v3497 = vor.u32 %v3494, %v3495
        %v3498 = vsel %vm3486, %v3490, %v3497
        %v3500 = vshrl.u32 %v3468, 16
        %v3502 = vrot.slane %v3500, 7
        %v3504 = vshrl.u32 %v3469, 16
        %v3506 = vrot.slane %v3504, 7
        %v3507 = vshll.u32 %v3469, 16
        %v3509 = vor.u32 %v3506, %v3507
        %v3510 = vsel %vm3486, %v3502, %v3509
        %v3512 = vshrl.u32 %v3470, 16
        %v3514 = vrot.slane %v3512, 7
        %v3516 = vshrl.u32 %v3471, 16
        %v3518 = vrot.slane %v3516, 7
        %v3519 = vshll.u32 %v3471, 16
        %v3521 = vor.u32 %v3518, %v3519
        %v3522 = vsel %vm3486, %v3514, %v3521
        %v3524 = vshrl.u32 %v3472, 16
        %v3526 = vrot.slane %v3524, 7
        %v3528 = vshrl.u32 %v3473, 16
        %v3530 = vrot.slane %v3528, 7
        %v3531 = vshll.u32 %v3473, 16
        %v3533 = vor.u32 %v3530, %v3531
        %v3534 = vsel %vm3486, %v3526, %v3533
        %v3536 = vshrl.u32 %v3474, 16
        %v3538 = vrot.slane %v3536, 7
        %v3540 = vshrl.u32 %v3475, 16
        %v3542 = vrot.slane %v3540, 7
        %v3543 = vshll.u32 %v3475, 16
        %v3545 = vor.u32 %v3542, %v3543
        %v3546 = vsel %vm3486, %v3538, %v3545
        %v3548 = vshrl.u32 %v3476, 16
        %v3550 = vrot.slane %v3548, 7
        %v3552 = vshrl.u32 %v3477, 16
        %v3554 = vrot.slane %v3552, 7
        %v3555 = vshll.u32 %v3477, 16
        %v3557 = vor.u32 %v3554, %v3555
        %v3558 = vsel %vm3486, %v3550, %v3557
        %v3560 = vshrl.u32 %v3478, 16
        %v3562 = vrot.slane %v3560, 7
        %v3564 = vshrl.u32 %v3479, 16
        %v3566 = vrot.slane %v3564, 7
        %v3567 = vshll.u32 %v3479, 16
        %v3569 = vor.u32 %v3566, %v3567
        %v3570 = vsel %vm3486, %v3562, %v3569
        %v3572 = vshrl.u32 %v3480, 16
        %v3574 = vrot.slane %v3572, 7
        %v3576 = vshrl.u32 %v3481, 16
        %v3578 = vrot.slane %v3576, 7
        %v3579 = vshll.u32 %v3481, 16
        %v3581 = vor.u32 %v3578, %v3579
        %v3582 = vsel %vm3486, %v3574, %v3581
        %v3584 = vshrl.u32 %v3482, 16
        %v3586 = vrot.slane %v3584, 7
        %v3588 = vshrl.u32 %v3483, 16
        %v3590 = vrot.slane %v3588, 7
        %v3591 = vshll.u32 %v3483, 16
        %v3593 = vor.u32 %v3590, %v3591
        %v3594 = vsel %vm3486, %v3586, %v3593
        %v3596 = vshrl.u32 %v3484, 16
        %v3598 = vrot.slane %v3596, 7
        %v3600 = vshrl.u32 %v3485, 16
        %v3602 = vrot.slane %v3600, 7
        %v3603 = vshll.u32 %v3485, 16
        %v3605 = vor.u32 %v3602, %v3603
        %v3606 = vsel %vm3486, %v3598, %v3605
        %v3617 = vld [vmem:[#allocation9] sm:$0xf]
        %v3618 = vld [vmem:[#allocation9 + $0x4] sm:$0xf]
        %v3619 = vld [vmem:[#allocation9 + $0x8] sm:$0xf]
        %v3620 = vld [vmem:[#allocation9 + $0xc] sm:$0xf]
        %v3621 = vld [vmem:[#allocation9 + $0x10] sm:$0xf]
        %v3622 = vld [vmem:[#allocation9 + $0x14] sm:$0xf]
        %v3623 = vld [vmem:[#allocation9 + $0x18] sm:$0xf]
        %v3624 = vld [vmem:[#allocation9 + $0x1c] sm:$0xf]
        %v3625 = vld [vmem:[#allocation9 + $0x20] sm:$0xf]
        %v3626 = vld [vmem:[#allocation9 + $0x24] sm:$0xf]
        %v3627 = vld [vmem:[#allocation9 + $0x28] sm:$0xf]
        %v3628 = vld [vmem:[#allocation9 + $0x2c] sm:$0xf]
        %v3629 = vld [vmem:[#allocation9 + $0x30] sm:$0xf]
        %v3630 = vld [vmem:[#allocation9 + $0x34] sm:$0xf]
        %v3631 = vld [vmem:[#allocation9 + $0x38] sm:$0xf]
        %v3632 = vld [vmem:[#allocation9 + $0x3c] sm:$0xf]
        %v3633 = vld [vmem:[#allocation9 + $0x40] sm:$0xf]
        %v3634 = vld [vmem:[#allocation9 + $0x44] sm:$0xf]
        %v3635 = vld [vmem:[#allocation9 + $0x48] sm:$0xf]
        %v3636 = vld [vmem:[#allocation9 + $0x4c] sm:$0xf]
        %v3637 = vld [vmem:[#allocation9 + $0x50] sm:$0xf]
        %v3638 = vld [vmem:[#allocation9 + $0x54] sm:$0xf]
        %v3639 = vld [vmem:[#allocation9 + $0x58] sm:$0xf]
        %v3640 = vld [vmem:[#allocation9 + $0x5c] sm:$0xf]
        %v3641 = vld [vmem:[#allocation9 + $0x60] sm:$0xf]
        %v3642 = vld [vmem:[#allocation9 + $0x64] sm:$0xf]
        %v3643 = vld [vmem:[#allocation9 + $0x68] sm:$0xf]
        %v3644 = vld [vmem:[#allocation9 + $0x6c] sm:$0xf]
        %v3645 = vld [vmem:[#allocation9 + $0x70] sm:$0xf]
        %v3646 = vld [vmem:[#allocation9 + $0x74] sm:$0xf]
        %v3647 = vld [vmem:[#allocation9 + $0x78] sm:$0xf]
        %v3648 = vld [vmem:[#allocation9 + $0x7c] sm:$0xf]
        %v3649 = vld [vmem:[#allocation9 + $0x80] sm:$0xf]
        %v3650 = vld [vmem:[#allocation9 + $0x84] sm:$0xf]
        %v3651 = vld [vmem:[#allocation9 + $0x88] sm:$0xf]
        %v3652 = vld [vmem:[#allocation9 + $0x8c] sm:$0xf]
        %v3653 = vld [vmem:[#allocation9 + $0x90] sm:$0xf]
        %v3654 = vld [vmem:[#allocation9 + $0x94] sm:$0xf]
        %v3655 = vld [vmem:[#allocation9 + $0x98] sm:$0xf]
        %v3656 = vld [vmem:[#allocation9 + $0x9c] sm:$0xf]
        %v3657 = vld [vmem:[#allocation9 + $0xa0] sm:$0xf]
        %v3658 = vld [vmem:[#allocation9 + $0xa4] sm:$0xf]
        %v3659 = vld [vmem:[#allocation9 + $0xa8] sm:$0xf]
        %v3660 = vld [vmem:[#allocation9 + $0xac] sm:$0xf]
        %v3661 = vld [vmem:[#allocation9 + $0xb0] sm:$0xf]
        %v3662 = vld [vmem:[#allocation9 + $0xb4] sm:$0xf]
        %v3663 = vld [vmem:[#allocation9 + $0xb8] sm:$0xf]
        %v3664 = vld [vmem:[#allocation9 + $0xbc] sm:$0xf]
        %s3665 = scalar_lea.vmem [#allocation9], 192
        %v3666 = vld [vmem:[%s3665] sm:$0xf]
        %v3667 = vld [vmem:[%s3665 + $0x4] sm:$0xf]
        %v3668 = vld [vmem:[%s3665 + $0x8] sm:$0xf]
        %v3669 = vld [vmem:[%s3665 + $0xc] sm:$0xf]
        %v3670 = vld [vmem:[%s3665 + $0x10] sm:$0xf]
        %v3671 = vld [vmem:[%s3665 + $0x14] sm:$0xf]
        %v3672 = vld [vmem:[%s3665 + $0x18] sm:$0xf]
        %v3673 = vld [vmem:[%s3665 + $0x1c] sm:$0xf]
        %v3674 = vld [vmem:[%s3665 + $0x20] sm:$0xf]
        %v3675 = vld [vmem:[%s3665 + $0x24] sm:$0xf]
        %v3676 = vld [vmem:[%s3665 + $0x28] sm:$0xf]
        %v3677 = vld [vmem:[%s3665 + $0x2c] sm:$0xf]
        %v3678 = vld [vmem:[%s3665 + $0x30] sm:$0xf]
        %v3679 = vld [vmem:[%s3665 + $0x34] sm:$0xf]
        %v3680 = vld [vmem:[%s3665 + $0x38] sm:$0xf]
        %v3681 = vld [vmem:[%s3665 + $0x3c] sm:$0xf]
        %v3682 = vld [vmem:[%s3665 + $0x40] sm:$0xf]
        %v3683 = vld [vmem:[%s3665 + $0x44] sm:$0xf]
        %v3684 = vld [vmem:[%s3665 + $0x48] sm:$0xf]
        %v3685 = vld [vmem:[%s3665 + $0x4c] sm:$0xf]
        %v3686 = vld [vmem:[%s3665 + $0x50] sm:$0xf]
        %v3687 = vld [vmem:[%s3665 + $0x54] sm:$0xf]
        %v3688 = vld [vmem:[%s3665 + $0x58] sm:$0xf]
        %v3689 = vld [vmem:[%s3665 + $0x5c] sm:$0xf]
        %v3690 = vld [vmem:[%s3665 + $0x60] sm:$0xf]
        %v3691 = vld [vmem:[%s3665 + $0x64] sm:$0xf]
        %v3692 = vld [vmem:[%s3665 + $0x68] sm:$0xf]
        %v3693 = vld [vmem:[%s3665 + $0x6c] sm:$0xf]
        %v3694 = vld [vmem:[%s3665 + $0x70] sm:$0xf]
        %v3695 = vld [vmem:[%s3665 + $0x74] sm:$0xf]
        %v3696 = vld [vmem:[%s3665 + $0x78] sm:$0xf]
        %v3697 = vld [vmem:[%s3665 + $0x7c] sm:$0xf]
        %v3698 = vld [vmem:[%s3665 + $0x80] sm:$0xf]
        %v3699 = vld [vmem:[%s3665 + $0x84] sm:$0xf]
        %v3700 = vld [vmem:[%s3665 + $0x88] sm:$0xf]
        %v3701 = vld [vmem:[%s3665 + $0x8c] sm:$0xf]
        %v3702 = vld [vmem:[%s3665 + $0x90] sm:$0xf]
        %v3703 = vld [vmem:[%s3665 + $0x94] sm:$0xf]
        %v3704 = vld [vmem:[%s3665 + $0x98] sm:$0xf]
        %v3705 = vld [vmem:[%s3665 + $0x9c] sm:$0xf]
        %v3706 = vld [vmem:[%s3665 + $0xa0] sm:$0xf]
        %v3707 = vld [vmem:[%s3665 + $0xa4] sm:$0xf]
        %v3708 = vld [vmem:[%s3665 + $0xa8] sm:$0xf]
        %v3709 = vld [vmem:[%s3665 + $0xac] sm:$0xf]
        %v3710 = vld [vmem:[%s3665 + $0xb0] sm:$0xf]
        %v3711 = vld [vmem:[%s3665 + $0xb4] sm:$0xf]
        %v3712 = vld [vmem:[%s3665 + $0xb8] sm:$0xf]
        %v3713 = vld [vmem:[%s3665 + $0xbc] sm:$0xf]
        %v3762 = vunpack.c.l.b16 %v3666
        %v3763 = vunpack.c.l.b16 %v3667
        %v3764 = vunpack.c.l.b16 %v3668
        %v3765 = vunpack.c.l.b16 %v3669
        %v3766 = vunpack.c.l.b16 %v3670
        %v3767 = vunpack.c.l.b16 %v3671
        %v3768 = vunpack.c.l.b16 %v3672
        %v3769 = vunpack.c.l.b16 %v3673
        %v3770 = vunpack.c.l.b16 %v3674
        %v3771 = vunpack.c.l.b16 %v3675
        %v3772 = vunpack.c.l.b16 %v3676
        %v3773 = vunpack.c.l.b16 %v3677
        %v3774 = vunpack.c.l.b16 %v3678
        %v3775 = vunpack.c.l.b16 %v3679
        %v3776 = vunpack.c.l.b16 %v3680
        %v3777 = vunpack.c.l.b16 %v3681
        %v3778 = vunpack.c.l.b16 %v3682
        %v3779 = vunpack.c.l.b16 %v3683
        %v3780 = vunpack.c.l.b16 %v3684
        %v3781 = vunpack.c.l.b16 %v3685
        %v3782 = vunpack.c.l.b16 %v3686
        %v3783 = vunpack.c.l.b16 %v3687
        %v3784 = vunpack.c.l.b16 %v3688
        %v3785 = vunpack.c.l.b16 %v3689
        %v3786 = vunpack.c.l.b16 %v3690
        %v3787 = vunpack.c.l.b16 %v3691
        %v3788 = vunpack.c.l.b16 %v3692
        %v3789 = vunpack.c.l.b16 %v3693
        %v3790 = vunpack.c.l.b16 %v3694
        %v3791 = vunpack.c.l.b16 %v3695
        %v3792 = vunpack.c.l.b16 %v3696
        %v3793 = vunpack.c.l.b16 %v3697
        %v3794 = vunpack.c.l.b16 %v3698
        %v3795 = vunpack.c.l.b16 %v3699
        %v3796 = vunpack.c.l.b16 %v3700
        %v3797 = vunpack.c.l.b16 %v3701
        %v3798 = vunpack.c.l.b16 %v3702
        %v3799 = vunpack.c.l.b16 %v3703
        %v3800 = vunpack.c.l.b16 %v3704
        %v3801 = vunpack.c.l.b16 %v3705
        %v3802 = vunpack.c.l.b16 %v3706
        %v3803 = vunpack.c.l.b16 %v3707
        %v3804 = vunpack.c.l.b16 %v3708
        %v3805 = vunpack.c.l.b16 %v3709
        %v3806 = vunpack.c.l.b16 %v3710
        %v3807 = vunpack.c.l.b16 %v3711
        %v3808 = vunpack.c.l.b16 %v3712
        %v3809 = vunpack.c.l.b16 %v3713
        %v3810 = vpack.c.b16 %v3763, %v3762
        %v3811 = vpack.c.b16 %v3765, %v3764
        %v3812 = vpack.c.b16 %v3767, %v3766
        %v3813 = vpack.c.b16 %v3769, %v3768
        %v3814 = vpack.c.b16 %v3771, %v3770
        %v3815 = vpack.c.b16 %v3773, %v3772
        %v3816 = vpack.c.b16 %v3775, %v3774
        %v3817 = vpack.c.b16 %v3777, %v3776
        %v3818 = vpack.c.b16 %v3779, %v3778
        %v3819 = vpack.c.b16 %v3781, %v3780
        %v3820 = vpack.c.b16 %v3783, %v3782
        %v3821 = vpack.c.b16 %v3785, %v3784
        %v3822 = vpack.c.b16 %v3787, %v3786
        %v3823 = vpack.c.b16 %v3789, %v3788
        %v3824 = vpack.c.b16 %v3791, %v3790
        %v3825 = vpack.c.b16 %v3793, %v3792
        %v3826 = vpack.c.b16 %v3795, %v3794
        %v3827 = vpack.c.b16 %v3797, %v3796
        %v3828 = vpack.c.b16 %v3799, %v3798
        %v3829 = vpack.c.b16 %v3801, %v3800
        %v3830 = vpack.c.b16 %v3803, %v3802
        %v3831 = vpack.c.b16 %v3805, %v3804
        %v3832 = vpack.c.b16 %v3807, %v3806
        %v3833 = vpack.c.b16 %v3809, %v3808
        %3858 = vmatprep.subr.bf16.mxu0 0
        %3859 = vmatpush1.bf16.msra.mxu0 %v3810
        %3860 = vmatprep.subr.bf16.mxu0 0
        %3861 = vmatpush1.bf16.msra.mxu0 %v3811
        %3862 = vmatprep.subr.bf16.mxu0 0
        %3863 = vmatpush1.bf16.msra.mxu0 %v3812
        %3864 = vmatprep.subr.bf16.mxu0 0
        %3865 = vmatpush1.bf16.msra.mxu0 %v3813
        %3866 = vmatprep.subr.bf16.mxu0 0
        %3867 = vmatpush1.bf16.msra.mxu0 %v3814
        %3868 = vmatprep.subr.bf16.mxu0 0
        %3869 = vmatpush1.bf16.msra.mxu0 %v3815
        %3870 = vmatprep.subr.bf16.mxu0 0
        %3871 = vmatpush1.bf16.msra.mxu0 %v3816
        %3872 = vmatprep.subr.bf16.mxu0 0
        %3873 = vmatpush1.bf16.msra.mxu0 %v3817
        %3874 = vmatprep.subr.bf16.mxu0 0
        %3875 = vmatpush1.bf16.msra.mxu0 %v3818
        %3876 = vmatprep.subr.bf16.mxu0 0
        %3877 = vmatpush1.bf16.msra.mxu0 %v3819
        %3878 = vmatprep.subr.bf16.mxu0 0
        %3879 = vmatpush1.bf16.msra.mxu0 %v3820
        %3880 = vmatprep.subr.bf16.mxu0 0
        %3881 = vmatpush1.bf16.msra.mxu0 %v3821
        %3882 = vmatprep.subr.bf16.mxu0 0
        %3883 = vmatpush1.bf16.msra.mxu0 %v3822
        %3884 = vmatprep.subr.bf16.mxu0 0
        %3885 = vmatpush1.bf16.msra.mxu0 %v3823
        %3886 = vmatprep.subr.bf16.mxu0 0
        %3887 = vmatpush1.bf16.msra.mxu0 %v3824
        %3888 = vmatprep.subr.bf16.mxu0 0
        %3889 = vmatpush1.bf16.msra.mxu0 %v3825
        %3890 = vmatprep.mubr.bf16.mxu0 %v3469
        %3891 = vmatmul.mubr.bf16.gmra.mrb[0].mxu0 %v3467
        %v3892 = vpop.f32.mrb[0].mxu0
        %v3893 = vadd.f32 0.0, %v3892
        %v3894 = vpop.f32.mrb[0].mxu0
        %v3895 = vpop.f32.mrb[0].mxu0
        %v3896 = vadd.f32 0.0, %v3895
        %v3897 = vpop.f32.mrb[0].mxu0
        %3898 = vmatprep.mubr.bf16.mxu0 %v3471
        %3899 = vmatmul.mubr.bf16.gmra.mrb[0].mxu0 %v3469
        %v3900 = vpop.f32.mrb[0].mxu0
        %v3901 = vadd.f32 0.0, %v3900
        %v3902 = vpop.f32.mrb[0].mxu0
        %v3903 = vpop.f32.mrb[0].mxu0
        %v3904 = vadd.f32 0.0, %v3903
        %v3905 = vpop.f32.mrb[0].mxu0
        %3906 = vmatprep.mubr.bf16.mxu0 %v3473
        %3907 = vmatmul.mubr.bf16.gmra.mrb[0].mxu0 %v3471
        %v3908 = vpop.f32.mrb[0].mxu0
        %v3909 = vadd.f32 0.0, %v3908
        %v3910 = vpop.f32.mrb[0].mxu0
        %v3911 = vpop.f32.mrb[0].mxu0
        %v3912 = vadd.f32 0.0, %v3911
        %v3913 = vpop.f32.mrb[0].mxu0
        %3914 = vmatprep.mubr.bf16.mxu0 %v3475
        %3915 = vmatmul.mubr.bf16.gmra.mrb[0].mxu0 %v3473
        %v3916 = vpop.f32.mrb[0].mxu0
        %v3917 = vadd.f32 0.0, %v3916
        %v3918 = vpop.f32.mrb[0].mxu0
        %v3919 = vpop.f32.mrb[0].mxu0
        %v3920 = vadd.f32 0.0, %v3919
        %v3921 = vpop.f32.mrb[0].mxu0
        %3922 = vmatprep.mubr.bf16.mxu0 %v3477
        %3923 = vmatmul.mubr.bf16.gmra.mrb[0].mxu0 %v3475
        %v3924 = vpop.f32.mrb[0].mxu0
        %v3925 = vadd.f32 0.0, %v3924
        %v3926 = vpop.f32.mrb[0].mxu0
        %v3927 = vpop.f32.mrb[0].mxu0
        %v3928 = vadd.f32 0.0, %v3927
        %v3929 = vpop.f32.mrb[0].mxu0
        %3930 = vmatprep.mubr.bf16.mxu0 %v3479
        %3931 = vmatmul.mubr.bf16.gmra.mrb[0].mxu0 %v3477
        %v3932 = vpop.f32.mrb[0].mxu0
        %v3933 = vadd.f32 0.0, %v3932
        %v3934 = vpop.f32.mrb[0].mxu0
        %v3935 = vpop.f32.mrb[0].mxu0
        %v3936 = vadd.f32 0.0, %v3935
        %v3937 = vpop.f32.mrb[0].mxu0
        %3938 = vmatprep.mubr.bf16.mxu0 %v3481
        %3939 = vmatmul.mubr.bf16.gmra.mrb[0].mxu0 %v3479
        %v3940 = vpop.f32.mrb[0].mxu0
        %v3941 = vadd.f32 0.0, %v3940
        %v3942 = vpop.f32.mrb[0].mxu0
        %v3943 = vpop.f32.mrb[0].mxu0
        %v3944 = vadd.f32 0.0, %v3943
        %v3945 = vpop.f32.mrb[0].mxu0
        %3946 = vmatprep.mubr.bf16.mxu0 %v3483
        %3947 = vmatmul.mubr.bf16.gmra.mrb[0].mxu0 %v3481
        %v3948 = vpop.f32.mrb[0].mxu0
        %v3949 = vadd.f32 0.0, %v3948
        %v3950 = vpop.f32.mrb[0].mxu0
        %v3951 = vpop.f32.mrb[0].mxu0
        %v3952 = vadd.f32 0.0, %v3951
        %v3953 = vpop.f32.mrb[0].mxu0
        %3954 = vdwg.mxu0
        %3955 = vmatprep.subr.bf16.mxu0 0
        %3956 = vmatpush1.bf16.msra.mxu0 %v3826
        %3957 = vmatprep.subr.bf16.mxu0 0
        %3958 = vmatpush1.bf16.msra.mxu0 %v3827
        %3959 = vmatprep.subr.bf16.mxu0 0
        %3960 = vmatpush1.bf16.msra.mxu0 %v3828
        %3961 = vmatprep.subr.bf16.mxu0 0
        %3962 = vmatpush1.bf16.msra.mxu0 %v3829
        %3963 = vmatprep.subr.bf16.mxu0 0
        %3964 = vmatpush1.bf16.msra.mxu0 %v3830
        %3965 = vmatprep.subr.bf16.mxu0 0
        %3966 = vmatpush1.bf16.msra.mxu0 %v3831
        %3967 = vmatprep.subr.bf16.mxu0 0
        %3968 = vmatpush1.bf16.msra.mxu0 %v3832
        %3969 = vmatprep.subr.bf16.mxu0 0
        %3970 = vmatpush1.bf16.msra.mxu0 %v3833
        %3971 = vmatprep.subr.bf16.mxu0 0
        %3972 = vmatpush1.bf16.msra.mxu0 0
        %3973 = vmatprep.subr.bf16.mxu0 0
        %3974 = vmatpush1.bf16.msra.mxu0 0
        %3975 = vmatprep.subr.bf16.mxu0 0
        %3976 = vmatpush1.bf16.msra.mxu0 0
        %3977 = vmatprep.subr.bf16.mxu0 0
        %3978 = vmatpush1.bf16.msra.mxu0 0
        %3979 = vmatprep.subr.bf16.mxu0 0
        %3980 = vmatpush1.bf16.msra.mxu0 0
        %3981 = vmatprep.subr.bf16.mxu0 0
        %3982 = vmatpush1.bf16.msra.mxu0 0
        %3983 = vmatprep.subr.bf16.mxu0 0
        %3984 = vmatpush1.bf16.msra.mxu0 0
        %3985 = vmatprep.subr.bf16.mxu0 0
        %3986 = vmatpush1.bf16.msra.mxu0 0
        %3987 = vmatprep.mubr.bf16.mxu0 0
        %3988 = vmatmul.mubr.bf16.gmra.mrb[0].mxu0 %v3471
        %v3989 = vpop.f32.mrb[0].mxu0
        %v3990 = vadd.f32 %v3893, %v3989
        %v3991 = vpop.f32.mrb[0].mxu0
        %v3992 = vpop.f32.mrb[0].mxu0
        %v3993 = vadd.f32 %v3896, %v3992
        %v3994 = vpop.f32.mrb[0].mxu0
        %3995 = vmatprep.mubr.bf16.mxu0 0
        %3996 = vmatmul.mubr.bf16.gmra.mrb[0].mxu0 %v3473
        %v3997 = vpop.f32.mrb[0].mxu0
        %v3998 = vadd.f32 %v3901, %v3997
        %v3999 = vpop.f32.mrb[0].mxu0
        %v4000 = vpop.f32.mrb[0].mxu0
        %v4001 = vadd.f32 %v3904, %v4000
        %v4002 = vpop.f32.mrb[0].mxu0
        %4003 = vmatprep.mubr.bf16.mxu0 0
        %4004 = vmatmul.mubr.bf16.gmra.mrb[0].mxu0 %v3475
        %v4005 = vpop.f32.mrb[0].mxu0
        %v4006 = vadd.f32 %v3909, %v4005
        %v4007 = vpop.f32.mrb[0].mxu0
        %v4008 = vpop.f32.mrb[0].mxu0
        %v4009 = vadd.f32 %v3912, %v4008
        %v4010 = vpop.f32.mrb[0].mxu0
        %4011 = vmatprep.mubr.bf16.mxu0 0
        %4012 = vmatmul.mubr.bf16.gmra.mrb[0].mxu0 %v3477
        %v4013 = vpop.f32.mrb[0].mxu0
        %v4014 = vadd.f32 %v3917, %v4013
        %v4015 = vpop.f32.mrb[0].mxu0
        %v4016 = vpop.f32.mrb[0].mxu0
        %v4017 = vadd.f32 %v3920, %v4016
        %v4018 = vpop.f32.mrb[0].mxu0
        %4019 = vmatprep.mubr.bf16.mxu0 0
        %4020 = vmatmul.mubr.bf16.gmra.mrb[0].mxu0 %v3479
        %v4021 = vpop.f32.mrb[0].mxu0
        %v4022 = vadd.f32 %v3925, %v4021
        %v4023 = vpop.f32.mrb[0].mxu0
        %v4024 = vpop.f32.mrb[0].mxu0
        %v4025 = vadd.f32 %v3928, %v4024
        %v4026 = vpop.f32.mrb[0].mxu0
        %4027 = vmatprep.mubr.bf16.mxu0 0
        %4028 = vmatmul.mubr.bf16.gmra.mrb[0].mxu0 %v3481
        %v4029 = vpop.f32.mrb[0].mxu0
        %v4030 = vadd.f32 %v3933, %v4029
        %v4031 = vpop.f32.mrb[0].mxu0
        %v4032 = vpop.f32.mrb[0].mxu0
        %v4033 = vadd.f32 %v3936, %v4032
        %v4034 = vpop.f32.mrb[0].mxu0
        %4035 = vmatprep.mubr.bf16.mxu0 0
        %4036 = vmatmul.mubr.bf16.gmra.mrb[0].mxu0 %v3483
        %v4037 = vpop.f32.mrb[0].mxu0
        %v4038 = vadd.f32 %v3941, %v4037
        %v4039 = vpop.f32.mrb[0].mxu0
        %v4040 = vpop.f32.mrb[0].mxu0
        %v4041 = vadd.f32 %v3944, %v4040
        %v4042 = vpop.f32.mrb[0].mxu0
        %4043 = vmatprep.mubr.bf16.mxu0 0
        %4044 = vmatmul.mubr.bf16.gmra.mrb[0].mxu0 %v3485
        %v4045 = vpop.f32.mrb[0].mxu0
        %v4046 = vadd.f32 %v3949, %v4045
        %v4047 = vpop.f32.mrb[0].mxu0
        %v4048 = vpop.f32.mrb[0].mxu0
        %v4049 = vadd.f32 %v3952, %v4048
        %v4050 = vpop.f32.mrb[0].mxu0
        %4051 = vdwg.mxu0
        %v4100 = vunpack.c.l.b16 %v3617
        %v4101 = vunpack.c.l.b16 %v3618
        %v4102 = vunpack.c.l.b16 %v3619
        %v4103 = vunpack.c.l.b16 %v3620
        %v4104 = vunpack.c.l.b16 %v3621
        %v4105 = vunpack.c.l.b16 %v3622
        %v4106 = vunpack.c.l.b16 %v3623
        %v4107 = vunpack.c.l.b16 %v3624
        %v4108 = vunpack.c.l.b16 %v3625
        %v4109 = vunpack.c.l.b16 %v3626
        %v4110 = vunpack.c.l.b16 %v3627
        %v4111 = vunpack.c.l.b16 %v3628
        %v4112 = vunpack.c.l.b16 %v3629
        %v4113 = vunpack.c.l.b16 %v3630
        %v4114 = vunpack.c.l.b16 %v3631
        %v4115 = vunpack.c.l.b16 %v3632
        %v4116 = vunpack.c.l.b16 %v3633
        %v4117 = vunpack.c.l.b16 %v3634
        %v4118 = vunpack.c.l.b16 %v3635
        %v4119 = vunpack.c.l.b16 %v3636
        %v4120 = vunpack.c.l.b16 %v3637
        %v4121 = vunpack.c.l.b16 %v3638
        %v4122 = vunpack.c.l.b16 %v3639
        %v4123 = vunpack.c.l.b16 %v3640
        %v4124 = vunpack.c.l.b16 %v3641
        %v4125 = vunpack.c.l.b16 %v3642
        %v4126 = vunpack.c.l.b16 %v3643
        %v4127 = vunpack.c.l.b16 %v3644
        %v4128 = vunpack.c.l.b16 %v3645
        %v4129 = vunpack.c.l.b16 %v3646
        %v4130 = vunpack.c.l.b16 %v3647
        %v4131 = vunpack.c.l.b16 %v3648
        %v4132 = vunpack.c.l.b16 %v3649
        %v4133 = vunpack.c.l.b16 %v3650
        %v4134 = vunpack.c.l.b16 %v3651
        %v4135 = vunpack.c.l.b16 %v3652
        %v4136 = vunpack.c.l.b16 %v3653
        %v4137 = vunpack.c.l.b16 %v3654
        %v4138 = vunpack.c.l.b16 %v3655
        %v4139 = vunpack.c.l.b16 %v3656
        %v4140 = vunpack.c.l.b16 %v3657
        %v4141 = vunpack.c.l.b16 %v3658
        %v4142 = vunpack.c.l.b16 %v3659
        %v4143 = vunpack.c.l.b16 %v3660
        %v4144 = vunpack.c.l.b16 %v3661
        %v4145 = vunpack.c.l.b16 %v3662
        %v4146 = vunpack.c.l.b16 %v3663
        %v4147 = vunpack.c.l.b16 %v3664
        %v4148 = vpack.c.b16 %v4101, %v4100
        %v4149 = vpack.c.b16 %v4103, %v4102
        %v4150 = vpack.c.b16 %v4105, %v4104
        %v4151 = vpack.c.b16 %v4107, %v4106
        %v4152 = vpack.c.b16 %v4109, %v4108
        %v4153 = vpack.c.b16 %v4111, %v4110
        %v4154 = vpack.c.b16 %v4113, %v4112
        %v4155 = vpack.c.b16 %v4115, %v4114
        %v4156 = vpack.c.b16 %v4117, %v4116
        %v4157 = vpack.c.b16 %v4119, %v4118
        %v4158 = vpack.c.b16 %v4121, %v4120
        %v4159 = vpack.c.b16 %v4123, %v4122
        %v4160 = vpack.c.b16 %v4125, %v4124
        %v4161 = vpack.c.b16 %v4127, %v4126
        %v4162 = vpack.c.b16 %v4129, %v4128
        %v4163 = vpack.c.b16 %v4131, %v4130
        %v4164 = vpack.c.b16 %v4133, %v4132
        %v4165 = vpack.c.b16 %v4135, %v4134
        %v4166 = vpack.c.b16 %v4137, %v4136
        %v4167 = vpack.c.b16 %v4139, %v4138
        %v4168 = vpack.c.b16 %v4141, %v4140
        %v4169 = vpack.c.b16 %v4143, %v4142
        %v4170 = vpack.c.b16 %v4145, %v4144
        %v4171 = vpack.c.b16 %v4147, %v4146
        %4196 = vmatprep.subr.bf16.mxu0 0
        %4197 = vmatpush1.bf16.msra.mxu0 %v4148
        %4198 = vmatprep.subr.bf16.mxu0 0
        %4199 = vmatpush1.bf16.msra.mxu0 %v4149
        %4200 = vmatprep.subr.bf16.mxu0 0
        %4201 = vmatpush1.bf16.msra.mxu0 %v4150
        %4202 = vmatprep.subr.bf16.mxu0 0
        %4203 = vmatpush1.bf16.msra.mxu0 %v4151
        %4204 = vmatprep.subr.bf16.mxu0 0
        %4205 = vmatpush1.bf16.msra.mxu0 %v4152
        %4206 = vmatprep.subr.bf16.mxu0 0
        %4207 = vmatpush1.bf16.msra.mxu0 %v4153
        %4208 = vmatprep.subr.bf16.mxu0 0
        %4209 = vmatpush1.bf16.msra.mxu0 %v4154
        %4210 = vmatprep.subr.bf16.mxu0 0
        %4211 = vmatpush1.bf16.msra.mxu0 %v4155
        %4212 = vmatprep.subr.bf16.mxu0 0
        %4213 = vmatpush1.bf16.msra.mxu0 %v4156
        %4214 = vmatprep.subr.bf16.mxu0 0
        %4215 = vmatpush1.bf16.msra.mxu0 %v4157
        %4216 = vmatprep.subr.bf16.mxu0 0
        %4217 = vmatpush1.bf16.msra.mxu0 %v4158
        %4218 = vmatprep.subr.bf16.mxu0 0
        %4219 = vmatpush1.bf16.msra.mxu0 %v4159
        %4220 = vmatprep.subr.bf16.mxu0 0
        %4221 = vmatpush1.bf16.msra.mxu0 %v4160
        %4222 = vmatprep.subr.bf16.mxu0 0
        %4223 = vmatpush1.bf16.msra.mxu0 %v4161
        %4224 = vmatprep.subr.bf16.mxu0 0
        %4225 = vmatpush1.bf16.msra.mxu0 %v4162
        %4226 = vmatprep.subr.bf16.mxu0 0
        %4227 = vmatpush1.bf16.msra.mxu0 %v4163
        %4228 = vmatprep.mubr.bf16.mxu0 %v3510
        %4229 = vmatmul.mubr.bf16.gmra.mrb[0].mxu0 %v3498
        %v4230 = vpop.f32.mrb[0].mxu0
        %v4231 = vadd.f32 %v3990, %v4230
        %v4232 = vpop.f32.mrb[0].mxu0
        %v4233 = vpop.f32.mrb[0].mxu0
        %v4234 = vadd.f32 %v3993, %v4233
        %v4235 = vpop.f32.mrb[0].mxu0
        %4236 = vmatprep.mubr.bf16.mxu0 %v3522
        %4237 = vmatmul.mubr.bf16.gmra.mrb[0].mxu0 %v3510
        %v4238 = vpop.f32.mrb[0].mxu0
        %v4239 = vadd.f32 %v3998, %v4238
        %v4240 = vpop.f32.mrb[0].mxu0
        %v4241 = vpop.f32.mrb[0].mxu0
        %v4242 = vadd.f32 %v4001, %v4241
        %v4243 = vpop.f32.mrb[0].mxu0
        %4244 = vmatprep.mubr.bf16.mxu0 %v3534
        %4245 = vmatmul.mubr.bf16.gmra.mrb[0].mxu0 %v3522
        %v4246 = vpop.f32.mrb[0].mxu0
        %v4247 = vadd.f32 %v4006, %v4246
        %v4248 = vpop.f32.mrb[0].mxu0
        %v4249 = vpop.f32.mrb[0].mxu0
        %v4250 = vadd.f32 %v4009, %v4249
        %v4251 = vpop.f32.mrb[0].mxu0
        %4252 = vmatprep.mubr.bf16.mxu0 %v3546
        %4253 = vmatmul.mubr.bf16.gmra.mrb[0].mxu0 %v3534
        %v4254 = vpop.f32.mrb[0].mxu0
        %v4255 = vadd.f32 %v4014, %v4254
        %v4256 = vpop.f32.mrb[0].mxu0
        %v4257 = vpop.f32.mrb[0].mxu0
        %v4258 = vadd.f32 %v4017, %v4257
        %v4259 = vpop.f32.mrb[0].mxu0
        %4260 = vmatprep.mubr.bf16.mxu0 %v3558
        %4261 = vmatmul.mubr.bf16.gmra.mrb[0].mxu0 %v3546
        %v4262 = vpop.f32.mrb[0].mxu0
        %v4263 = vadd.f32 %v4022, %v4262
        %v4264 = vpop.f32.mrb[0].mxu0
        %v4265 = vpop.f32.mrb[0].mxu0
        %v4266 = vadd.f32 %v4025, %v4265
        %v4267 = vpop.f32.mrb[0].mxu0
        %4268 = vmatprep.mubr.bf16.mxu0 %v3570
        %4269 = vmatmul.mubr.bf16.gmra.mrb[0].mxu0 %v3558
        %v4270 = vpop.f32.mrb[0].mxu0
        %v4271 = vadd.f32 %v4030, %v4270
        %v4272 = vpop.f32.mrb[0].mxu0
        %v4273 = vpop.f32.mrb[0].mxu0
        %v4274 = vadd.f32 %v4033, %v4273
        %v4275 = vpop.f32.mrb[0].mxu0
        %4276 = vmatprep.mubr.bf16.mxu0 %v3582
        %4277 = vmatmul.mubr.bf16.gmra.mrb[0].mxu0 %v3570
        %v4278 = vpop.f32.mrb[0].mxu0
        %v4279 = vadd.f32 %v4038, %v4278
        %v4280 = vpop.f32.mrb[0].mxu0
        %v4281 = vpop.f32.mrb[0].mxu0
        %v4282 = vadd.f32 %v4041, %v4281
        %v4283 = vpop.f32.mrb[0].mxu0
        %4284 = vmatprep.mubr.bf16.mxu0 %v3594
        %4285 = vmatmul.mubr.bf16.gmra.mrb[0].mxu0 %v3582
        %v4286 = vpop.f32.mrb[0].mxu0
        %v4287 = vadd.f32 %v4046, %v4286
        %v4288 = vpop.f32.mrb[0].mxu0
        %v4289 = vpop.f32.mrb[0].mxu0
        %v4290 = vadd.f32 %v4049, %v4289
        %v4291 = vpop.f32.mrb[0].mxu0
        %4292 = vdwg.mxu0
        %4293 = vmatprep.subr.bf16.mxu0 0
        %4294 = vmatpush1.bf16.msra.mxu0 %v4164
        %4295 = vmatprep.subr.bf16.mxu0 0
        %4296 = vmatpush1.bf16.msra.mxu0 %v4165
        %4297 = vmatprep.subr.bf16.mxu0 0
        %4298 = vmatpush1.bf16.msra.mxu0 %v4166
        %4299 = vmatprep.subr.bf16.mxu0 0
        %4300 = vmatpush1.bf16.msra.mxu0 %v4167
        %4301 = vmatprep.subr.bf16.mxu0 0
        %4302 = vmatpush1.bf16.msra.mxu0 %v4168
        %4303 = vmatprep.subr.bf16.mxu0 0
        %4304 = vmatpush1.bf16.msra.mxu0 %v4169
        %4305 = vmatprep.subr.bf16.mxu0 0
        %4306 = vmatpush1.bf16.msra.mxu0 %v4170
        %4307 = vmatprep.subr.bf16.mxu0 0
        %4308 = vmatpush1.bf16.msra.mxu0 %v4171
        %4309 = vmatprep.subr.bf16.mxu0 0
        %4310 = vmatpush1.bf16.msra.mxu0 0
        %4311 = vmatprep.subr.bf16.mxu0 0
        %4312 = vmatpush1.bf16.msra.mxu0 0
        %4313 = vmatprep.subr.bf16.mxu0 0
        %4314 = vmatpush1.bf16.msra.mxu0 0
        %4315 = vmatprep.subr.bf16.mxu0 0
        %4316 = vmatpush1.bf16.msra.mxu0 0
        %4317 = vmatprep.subr.bf16.mxu0 0
        %4318 = vmatpush1.bf16.msra.mxu0 0
        %4319 = vmatprep.subr.bf16.mxu0 0
        %4320 = vmatpush1.bf16.msra.mxu0 0
        %4321 = vmatprep.subr.bf16.mxu0 0
        %4322 = vmatpush1.bf16.msra.mxu0 0
        %4323 = vmatprep.subr.bf16.mxu0 0
        %4324 = vmatpush1.bf16.msra.mxu0 0
        %4325 = vmatprep.mubr.bf16.mxu0 0
        %4326 = vmatmul.mubr.bf16.gmra.mrb[0].mxu0 %v3522
        %v4327 = vpop.f32.mrb[0].mxu0
        %v4328 = vadd.f32 %v4231, %v4327
        %v4329 = vpop.f32.mrb[0].mxu0
        %v4330 = vpop.f32.mrb[0].mxu0
        %v4331 = vadd.f32 %v4234, %v4330
        %v4332 = vpop.f32.mrb[0].mxu0
        %4333 = vmatprep.mubr.bf16.mxu0 0
        %4334 = vmatmul.mubr.bf16.gmra.mrb[0].mxu0 %v3534
        %v4335 = vpop.f32.mrb[0].mxu0
        %v4336 = vadd.f32 %v4239, %v4335
        %v4337 = vpop.f32.mrb[0].mxu0
        %v4338 = vpop.f32.mrb[0].mxu0
        %v4339 = vadd.f32 %v4242, %v4338
        %v4340 = vpop.f32.mrb[0].mxu0
        %4341 = vmatprep.mubr.bf16.mxu0 0
        %4342 = vmatmul.mubr.bf16.gmra.mrb[0].mxu0 %v3546
        %v4343 = vpop.f32.mrb[0].mxu0
        %v4344 = vadd.f32 %v4247, %v4343
        %v4345 = vpop.f32.mrb[0].mxu0
        %v4346 = vpop.f32.mrb[0].mxu0
        %v4347 = vadd.f32 %v4250, %v4346
        %v4348 = vpop.f32.mrb[0].mxu0
        %4349 = vmatprep.mubr.bf16.mxu0 0
        %4350 = vmatmul.mubr.bf16.gmra.mrb[0].mxu0 %v3558
        %v4351 = vpop.f32.mrb[0].mxu0
        %v4352 = vadd.f32 %v4255, %v4351
        %v4353 = vpop.f32.mrb[0].mxu0
        %v4354 = vpop.f32.mrb[0].mxu0
        %v4355 = vadd.f32 %v4258, %v4354
        %v4356 = vpop.f32.mrb[0].mxu0
        %4357 = vmatprep.mubr.bf16.mxu0 0
        %4358 = vmatmul.mubr.bf16.gmra.mrb[0].mxu0 %v3570
        %v4359 = vpop.f32.mrb[0].mxu0
        %v4360 = vadd.f32 %v4263, %v4359
        %v4361 = vpop.f32.mrb[0].mxu0
        %v4362 = vpop.f32.mrb[0].mxu0
        %v4363 = vadd.f32 %v4266, %v4362
        %v4364 = vpop.f32.mrb[0].mxu0
        %4365 = vmatprep.mubr.bf16.mxu0 0
        %4366 = vmatmul.mubr.bf16.gmra.mrb[0].mxu0 %v3582
        %v4367 = vpop.f32.mrb[0].mxu0
        %v4368 = vadd.f32 %v4271, %v4367
        %v4369 = vpop.f32.mrb[0].mxu0
        %v4370 = vpop.f32.mrb[0].mxu0
        %v4371 = vadd.f32 %v4274, %v4370
        %v4372 = vpop.f32.mrb[0].mxu0
        %4373 = vmatprep.mubr.bf16.mxu0 0
        %4374 = vmatmul.mubr.bf16.gmra.mrb[0].mxu0 %v3594
        %v4375 = vpop.f32.mrb[0].mxu0
        %v4376 = vadd.f32 %v4279, %v4375
        %v4377 = vpop.f32.mrb[0].mxu0
        %v4378 = vpop.f32.mrb[0].mxu0
        %v4379 = vadd.f32 %v4282, %v4378
        %v4380 = vpop.f32.mrb[0].mxu0
        %4381 = vmatprep.mubr.bf16.mxu0 0
        %4382 = vmatmul.mubr.bf16.gmra.mrb[0].mxu0 %v3606
        %v4383 = vpop.f32.mrb[0].mxu0
        %v4384 = vadd.f32 %v4287, %v4383
        %v4385 = vpop.f32.mrb[0].mxu0
        %v4386 = vpop.f32.mrb[0].mxu0
        %v4387 = vadd.f32 %v4290, %v4386
        %v4388 = vpop.f32.mrb[0].mxu0
        %4389 = vdwg.mxu0
        %v4390 = vld [vmem:[#allocation2 + $0x8] sm:$0xff]
        %v4391 = vld [vmem:[#allocation2 + $0x10] sm:$0x1]
        %v4392 = vld [vmem:[#allocation2 + $0x20] sm:$0xff]
        %v4393 = vld [vmem:[#allocation2 + $0x28] sm:$0x1]
        %v4394 = vld [vmem:[#allocation2 + $0x38] sm:$0xff]
        %v4395 = vld [vmem:[#allocation2 + $0x40] sm:$0x1]
        %v4396 = vld [vmem:[#allocation2 + $0x50] sm:$0xff]
        %v4397 = vld [vmem:[#allocation2 + $0x58] sm:$0x1]
        %v4398 = vld [vmem:[#allocation2 + $0x68] sm:$0xff]
        %v4399 = vld [vmem:[#allocation2 + $0x70] sm:$0x1]
        %v4400 = vld [vmem:[#allocation2 + $0x80] sm:$0xff]
        %v4401 = vld [vmem:[#allocation2 + $0x88] sm:$0x1]
        %v4402 = vld [vmem:[#allocation2 + $0x98] sm:$0xff]
        %v4403 = vld [vmem:[#allocation2 + $0xa0] sm:$0x1]
        %v4404 = vld [vmem:[#allocation2 + $0xb0] sm:$0xff]
        %v4405 = vld [vmem:[#allocation2 + $0xb8] sm:$0x1]
        %v4406 = vld [vmem:[#allocation2 + $0xc8] sm:$0xff]
        %v4407 = vld [vmem:[#allocation2 + $0xd0] sm:$0x1]
        %v4408 = vld [vmem:[#allocation2 + $0xe0] sm:$0xff]
        %v4409 = vld [vmem:[#allocation2 + $0xe8] sm:$0x1]
        %v4411 = vshrl.u32 %v4390, 16
        %v4413 = vshll.u32 %v4390, 16
        %v4415 = vrot.slane %v4413, 1
        %v4416 = vor.u32 %v4411, %v4415
        %v4418 = vshll.u32 %v4391, 16
        %v4420 = vrot.slane %v4418, 1
        %v4421 = vsel %vm509, %v4416, %v4420
        %v4423 = vshrl.u32 %v4392, 16
        %v4425 = vshll.u32 %v4392, 16
        %v4427 = vrot.slane %v4425, 1
        %v4428 = vor.u32 %v4423, %v4427
        %v4430 = vshll.u32 %v4393, 16
        %v4432 = vrot.slane %v4430, 1
        %v4433 = vsel %vm509, %v4428, %v4432
        %v4435 = vshrl.u32 %v4394, 16
        %v4437 = vshll.u32 %v4394, 16
        %v4439 = vrot.slane %v4437, 1
        %v4440 = vor.u32 %v4435, %v4439
        %v4442 = vshll.u32 %v4395, 16
        %v4444 = vrot.slane %v4442, 1
        %v4445 = vsel %vm509, %v4440, %v4444
        %v4447 = vshrl.u32 %v4396, 16
        %v4449 = vshll.u32 %v4396, 16
        %v4451 = vrot.slane %v4449, 1
        %v4452 = vor.u32 %v4447, %v4451
        %v4454 = vshll.u32 %v4397, 16
        %v4456 = vrot.slane %v4454, 1
        %v4457 = vsel %vm509, %v4452, %v4456
        %v4459 = vshrl.u32 %v4398, 16
        %v4461 = vshll.u32 %v4398, 16
        %v4463 = vrot.slane %v4461, 1
        %v4464 = vor.u32 %v4459, %v4463
        %v4466 = vshll.u32 %v4399, 16
        %v4468 = vrot.slane %v4466, 1
        %v4469 = vsel %vm509, %v4464, %v4468
        %v4471 = vshrl.u32 %v4400, 16
        %v4473 = vshll.u32 %v4400, 16
        %v4475 = vrot.slane %v4473, 1
        %v4476 = vor.u32 %v4471, %v4475
        %v4478 = vshll.u32 %v4401, 16
        %v4480 = vrot.slane %v4478, 1
        %v4481 = vsel %vm509, %v4476, %v4480
        %v4483 = vshrl.u32 %v4402, 16
        %v4485 = vshll.u32 %v4402, 16
        %v4487 = vrot.slane %v4485, 1
        %v4488 = vor.u32 %v4483, %v4487
        %v4490 = vshll.u32 %v4403, 16
        %v4492 = vrot.slane %v4490, 1
        %v4493 = vsel %vm509, %v4488, %v4492
        %v4495 = vshrl.u32 %v4404, 16
        %v4497 = vshll.u32 %v4404, 16
        %v4499 = vrot.slane %v4497, 1
        %v4500 = vor.u32 %v4495, %v4499
        %v4502 = vshll.u32 %v4405, 16
        %v4504 = vrot.slane %v4502, 1
        %v4505 = vsel %vm509, %v4500, %v4504
        %v4507 = vshrl.u32 %v4406, 16
        %v4509 = vshll.u32 %v4406, 16
        %v4511 = vrot.slane %v4509, 1
        %v4512 = vor.u32 %v4507, %v4511
        %v4514 = vshll.u32 %v4407, 16
        %v4516 = vrot.slane %v4514, 1
        %v4517 = vsel %vm509, %v4512, %v4516
        %v4519 = vshrl.u32 %v4408, 16
        %v4521 = vshll.u32 %v4408, 16
        %v4523 = vrot.slane %v4521, 1
        %v4524 = vor.u32 %v4519, %v4523
        %v4526 = vshll.u32 %v4409, 16
        %v4528 = vrot.slane %v4526, 1
        %v4529 = vsel %vm509, %v4524, %v4528
        %s4540 = scalar_lea.vmem [#allocation9], 384
        %v4541 = vld [vmem:[%s4540] sm:$0xf]
        %v4542 = vld [vmem:[%s4540 + $0x4] sm:$0xf]
        %v4543 = vld [vmem:[%s4540 + $0x8] sm:$0xf]
        %v4544 = vld [vmem:[%s4540 + $0xc] sm:$0xf]
        %v4545 = vld [vmem:[%s4540 + $0x10] sm:$0xf]
        %v4546 = vld [vmem:[%s4540 + $0x14] sm:$0xf]
        %v4547 = vld [vmem:[%s4540 + $0x18] sm:$0xf]
        %v4548 = vld [vmem:[%s4540 + $0x1c] sm:$0xf]
        %v4549 = vld [vmem:[%s4540 + $0x20] sm:$0xf]
        %v4550 = vld [vmem:[%s4540 + $0x24] sm:$0xf]
        %v4551 = vld [vmem:[%s4540 + $0x28] sm:$0xf]
        %v4552 = vld [vmem:[%s4540 + $0x2c] sm:$0xf]
        %v4553 = vld [vmem:[%s4540 + $0x30] sm:$0xf]
        %v4554 = vld [vmem:[%s4540 + $0x34] sm:$0xf]
        %v4555 = vld [vmem:[%s4540 + $0x38] sm:$0xf]
        %v4556 = vld [vmem:[%s4540 + $0x3c] sm:$0xf]
        %v4557 = vld [vmem:[%s4540 + $0x40] sm:$0xf]
        %v4558 = vld [vmem:[%s4540 + $0x44] sm:$0xf]
        %v4559 = vld [vmem:[%s4540 + $0x48] sm:$0xf]
        %v4560 = vld [vmem:[%s4540 + $0x4c] sm:$0xf]
        %v4561 = vld [vmem:[%s4540 + $0x50] sm:$0xf]
        %v4562 = vld [vmem:[%s4540 + $0x54] sm:$0xf]
        %v4563 = vld [vmem:[%s4540 + $0x58] sm:$0xf]
        %v4564 = vld [vmem:[%s4540 + $0x5c] sm:$0xf]
        %v4565 = vld [vmem:[%s4540 + $0x60] sm:$0xf]
        %v4566 = vld [vmem:[%s4540 + $0x64] sm:$0xf]
        %v4567 = vld [vmem:[%s4540 + $0x68] sm:$0xf]
        %v4568 = vld [vmem:[%s4540 + $0x6c] sm:$0xf]
        %v4569 = vld [vmem:[%s4540 + $0x70] sm:$0xf]
        %v4570 = vld [vmem:[%s4540 + $0x74] sm:$0xf]
        %v4571 = vld [vmem:[%s4540 + $0x78] sm:$0xf]
        %v4572 = vld [vmem:[%s4540 + $0x7c] sm:$0xf]
        %v4573 = vld [vmem:[%s4540 + $0x80] sm:$0xf]
        %v4574 = vld [vmem:[%s4540 + $0x84] sm:$0xf]
        %v4575 = vld [vmem:[%s4540 + $0x88] sm:$0xf]
        %v4576 = vld [vmem:[%s4540 + $0x8c] sm:$0xf]
        %v4577 = vld [vmem:[%s4540 + $0x90] sm:$0xf]
        %v4578 = vld [vmem:[%s4540 + $0x94] sm:$0xf]
        %v4579 = vld [vmem:[%s4540 + $0x98] sm:$0xf]
        %v4580 = vld [vmem:[%s4540 + $0x9c] sm:$0xf]
        %v4581 = vld [vmem:[%s4540 + $0xa0] sm:$0xf]
        %v4582 = vld [vmem:[%s4540 + $0xa4] sm:$0xf]
        %v4583 = vld [vmem:[%s4540 + $0xa8] sm:$0xf]
        %v4584 = vld [vmem:[%s4540 + $0xac] sm:$0xf]
        %v4585 = vld [vmem:[%s4540 + $0xb0] sm:$0xf]
        %v4586 = vld [vmem:[%s4540 + $0xb4] sm:$0xf]
        %v4587 = vld [vmem:[%s4540 + $0xb8] sm:$0xf]
        %v4588 = vld [vmem:[%s4540 + $0xbc] sm:$0xf]
        %v4637 = vunpack.c.l.b16 %v4541
        %v4638 = vunpack.c.l.b16 %v4542
        %v4639 = vunpack.c.l.b16 %v4543
        %v4640 = vunpack.c.l.b16 %v4544
        %v4641 = vunpack.c.l.b16 %v4545
        %v4642 = vunpack.c.l.b16 %v4546
        %v4643 = vunpack.c.l.b16 %v4547
        %v4644 = vunpack.c.l.b16 %v4548
        %v4645 = vunpack.c.l.b16 %v4549
        %v4646 = vunpack.c.l.b16 %v4550
        %v4647 = vunpack.c.l.b16 %v4551
        %v4648 = vunpack.c.l.b16 %v4552
        %v4649 = vunpack.c.l.b16 %v4553
        %v4650 = vunpack.c.l.b16 %v4554
        %v4651 = vunpack.c.l.b16 %v4555
        %v4652 = vunpack.c.l.b16 %v4556
        %v4653 = vunpack.c.l.b16 %v4557
        %v4654 = vunpack.c.l.b16 %v4558
        %v4655 = vunpack.c.l.b16 %v4559
        %v4656 = vunpack.c.l.b16 %v4560
        %v4657 = vunpack.c.l.b16 %v4561
        %v4658 = vunpack.c.l.b16 %v4562
        %v4659 = vunpack.c.l.b16 %v4563
        %v4660 = vunpack.c.l.b16 %v4564
        %v4661 = vunpack.c.l.b16 %v4565
        %v4662 = vunpack.c.l.b16 %v4566
        %v4663 = vunpack.c.l.b16 %v4567
        %v4664 = vunpack.c.l.b16 %v4568
        %v4665 = vunpack.c.l.b16 %v4569
        %v4666 = vunpack.c.l.b16 %v4570
        %v4667 = vunpack.c.l.b16 %v4571
        %v4668 = vunpack.c.l.b16 %v4572
        %v4669 = vunpack.c.l.b16 %v4573
        %v4670 = vunpack.c.l.b16 %v4574
        %v4671 = vunpack.c.l.b16 %v4575
        %v4672 = vunpack.c.l.b16 %v4576
        %v4673 = vunpack.c.l.b16 %v4577
        %v4674 = vunpack.c.l.b16 %v4578
        %v4675 = vunpack.c.l.b16 %v4579
        %v4676 = vunpack.c.l.b16 %v4580
        %v4677 = vunpack.c.l.b16 %v4581
        %v4678 = vunpack.c.l.b16 %v4582
        %v4679 = vunpack.c.l.b16 %v4583
        %v4680 = vunpack.c.l.b16 %v4584
        %v4681 = vunpack.c.l.b16 %v4585
        %v4682 = vunpack.c.l.b16 %v4586
        %v4683 = vunpack.c.l.b16 %v4587
        %v4684 = vunpack.c.l.b16 %v4588
        %v4685 = vpack.c.b16 %v4638, %v4637
        %v4686 = vpack.c.b16 %v4640, %v4639
        %v4687 = vpack.c.b16 %v4642, %v4641
        %v4688 = vpack.c.b16 %v4644, %v4643
        %v4689 = vpack.c.b16 %v4646, %v4645
        %v4690 = vpack.c.b16 %v4648, %v4647
        %v4691 = vpack.c.b16 %v4650, %v4649
        %v4692 = vpack.c.b16 %v4652, %v4651
        %v4693 = vpack.c.b16 %v4654, %v4653
        %v4694 = vpack.c.b16 %v4656, %v4655
        %v4695 = vpack.c.b16 %v4658, %v4657
        %v4696 = vpack.c.b16 %v4660, %v4659
        %v4697 = vpack.c.b16 %v4662, %v4661
        %v4698 = vpack.c.b16 %v4664, %v4663
        %v4699 = vpack.c.b16 %v4666, %v4665
        %v4700 = vpack.c.b16 %v4668, %v4667
        %v4701 = vpack.c.b16 %v4670, %v4669
        %v4702 = vpack.c.b16 %v4672, %v4671
        %v4703 = vpack.c.b16 %v4674, %v4673
        %v4704 = vpack.c.b16 %v4676, %v4675
        %v4705 = vpack.c.b16 %v4678, %v4677
        %v4706 = vpack.c.b16 %v4680, %v4679
        %v4707 = vpack.c.b16 %v4682, %v4681
        %v4708 = vpack.c.b16 %v4684, %v4683
        %4733 = vmatprep.subr.bf16.mxu0 0
        %4734 = vmatpush1.bf16.msra.mxu0 %v4685
        %4735 = vmatprep.subr.bf16.mxu0 0
        %4736 = vmatpush1.bf16.msra.mxu0 %v4686
        %4737 = vmatprep.subr.bf16.mxu0 0
        %4738 = vmatpush1.bf16.msra.mxu0 %v4687
        %4739 = vmatprep.subr.bf16.mxu0 0
        %4740 = vmatpush1.bf16.msra.mxu0 %v4688
        %4741 = vmatprep.subr.bf16.mxu0 0
        %4742 = vmatpush1.bf16.msra.mxu0 %v4689
        %4743 = vmatprep.subr.bf16.mxu0 0
        %4744 = vmatpush1.bf16.msra.mxu0 %v4690
        %4745 = vmatprep.subr.bf16.mxu0 0
        %4746 = vmatpush1.bf16.msra.mxu0 %v4691
        %4747 = vmatprep.subr.bf16.mxu0 0
        %4748 = vmatpush1.bf16.msra.mxu0 %v4692
        %4749 = vmatprep.subr.bf16.mxu0 0
        %4750 = vmatpush1.bf16.msra.mxu0 %v4693
        %4751 = vmatprep.subr.bf16.mxu0 0
        %4752 = vmatpush1.bf16.msra.mxu0 %v4694
        %4753 = vmatprep.subr.bf16.mxu0 0
        %4754 = vmatpush1.bf16.msra.mxu0 %v4695
        %4755 = vmatprep.subr.bf16.mxu0 0
        %4756 = vmatpush1.bf16.msra.mxu0 %v4696
        %4757 = vmatprep.subr.bf16.mxu0 0
        %4758 = vmatpush1.bf16.msra.mxu0 %v4697
        %4759 = vmatprep.subr.bf16.mxu0 0
        %4760 = vmatpush1.bf16.msra.mxu0 %v4698
        %4761 = vmatprep.subr.bf16.mxu0 0
        %4762 = vmatpush1.bf16.msra.mxu0 %v4699
        %4763 = vmatprep.subr.bf16.mxu0 0
        %4764 = vmatpush1.bf16.msra.mxu0 %v4700
        %4765 = vmatprep.mubr.bf16.mxu0 %v4433
        %4766 = vmatmul.mubr.bf16.gmra.mrb[0].mxu0 %v4421
        %v4767 = vpop.f32.mrb[0].mxu0
        %v4768 = vadd.f32 0.0, %v4767
        %v4769 = vpop.f32.mrb[0].mxu0
        %v4770 = vpop.f32.mrb[0].mxu0
        %v4771 = vadd.f32 0.0, %v4770
        %v4772 = vpop.f32.mrb[0].mxu0
        %4773 = vmatprep.mubr.bf16.mxu0 %v4445
        %4774 = vmatmul.mubr.bf16.gmra.mrb[0].mxu0 %v4433
        %v4775 = vpop.f32.mrb[0].mxu0
        %v4776 = vadd.f32 0.0, %v4775
        %v4777 = vpop.f32.mrb[0].mxu0
        %v4778 = vpop.f32.mrb[0].mxu0
        %v4779 = vadd.f32 0.0, %v4778
        %v4780 = vpop.f32.mrb[0].mxu0
        %4781 = vmatprep.mubr.bf16.mxu0 %v4457
        %4782 = vmatmul.mubr.bf16.gmra.mrb[0].mxu0 %v4445
        %v4783 = vpop.f32.mrb[0].mxu0
        %v4784 = vadd.f32 0.0, %v4783
        %v4785 = vpop.f32.mrb[0].mxu0
        %v4786 = vpop.f32.mrb[0].mxu0
        %v4787 = vadd.f32 0.0, %v4786
        %v4788 = vpop.f32.mrb[0].mxu0
        %4789 = vmatprep.mubr.bf16.mxu0 %v4469
        %4790 = vmatmul.mubr.bf16.gmra.mrb[0].mxu0 %v4457
        %v4791 = vpop.f32.mrb[0].mxu0
        %v4792 = vadd.f32 0.0, %v4791
        %v4793 = vpop.f32.mrb[0].mxu0
        %v4794 = vpop.f32.mrb[0].mxu0
        %v4795 = vadd.f32 0.0, %v4794
        %v4796 = vpop.f32.mrb[0].mxu0
        %4797 = vmatprep.mubr.bf16.mxu0 %v4481
        %4798 = vmatmul.mubr.bf16.gmra.mrb[0].mxu0 %v4469
        %v4799 = vpop.f32.mrb[0].mxu0
        %v4800 = vadd.f32 0.0, %v4799
        %v4801 = vpop.f32.mrb[0].mxu0
        %v4802 = vpop.f32.mrb[0].mxu0
        %v4803 = vadd.f32 0.0, %v4802
        %v4804 = vpop.f32.mrb[0].mxu0
        %4805 = vmatprep.mubr.bf16.mxu0 %v4493
        %4806 = vmatmul.mubr.bf16.gmra.mrb[0].mxu0 %v4481
        %v4807 = vpop.f32.mrb[0].mxu0
        %v4808 = vadd.f32 0.0, %v4807
        %v4809 = vpop.f32.mrb[0].mxu0
        %v4810 = vpop.f32.mrb[0].mxu0
        %v4811 = vadd.f32 0.0, %v4810
        %v4812 = vpop.f32.mrb[0].mxu0
        %4813 = vmatprep.mubr.bf16.mxu0 %v4505
        %4814 = vmatmul.mubr.bf16.gmra.mrb[0].mxu0 %v4493
        %v4815 = vpop.f32.mrb[0].mxu0
        %v4816 = vadd.f32 0.0, %v4815
        %v4817 = vpop.f32.mrb[0].mxu0
        %v4818 = vpop.f32.mrb[0].mxu0
        %v4819 = vadd.f32 0.0, %v4818
        %v4820 = vpop.f32.mrb[0].mxu0
        %4821 = vmatprep.mubr.bf16.mxu0 %v4517
        %4822 = vmatmul.mubr.bf16.gmra.mrb[0].mxu0 %v4505
        %v4823 = vpop.f32.mrb[0].mxu0
        %v4824 = vadd.f32 0.0, %v4823
        %v4825 = vpop.f32.mrb[0].mxu0
        %v4826 = vpop.f32.mrb[0].mxu0
        %v4827 = vadd.f32 0.0, %v4826
        %v4828 = vpop.f32.mrb[0].mxu0
        %4829 = vdwg.mxu0
        %4830 = vmatprep.subr.bf16.mxu0 0
        %4831 = vmatpush1.bf16.msra.mxu0 %v4701
        %4832 = vmatprep.subr.bf16.mxu0 0
        %4833 = vmatpush1.bf16.msra.mxu0 %v4702
        %4834 = vmatprep.subr.bf16.mxu0 0
        %4835 = vmatpush1.bf16.msra.mxu0 %v4703
        %4836 = vmatprep.subr.bf16.mxu0 0
        %4837 = vmatpush1.bf16.msra.mxu0 %v4704
        %4838 = vmatprep.subr.bf16.mxu0 0
        %4839 = vmatpush1.bf16.msra.mxu0 %v4705
        %4840 = vmatprep.subr.bf16.mxu0 0
        %4841 = vmatpush1.bf16.msra.mxu0 %v4706
        %4842 = vmatprep.subr.bf16.mxu0 0
        %4843 = vmatpush1.bf16.msra.mxu0 %v4707
        %4844 = vmatprep.subr.bf16.mxu0 0
        %4845 = vmatpush1.bf16.msra.mxu0 %v4708
        %4846 = vmatprep.subr.bf16.mxu0 0
        %4847 = vmatpush1.bf16.msra.mxu0 0
        %4848 = vmatprep.subr.bf16.mxu0 0
        %4849 = vmatpush1.bf16.msra.mxu0 0
        %4850 = vmatprep.subr.bf16.mxu0 0
        %4851 = vmatpush1.bf16.msra.mxu0 0
        %4852 = vmatprep.subr.bf16.mxu0 0
        %4853 = vmatpush1.bf16.msra.mxu0 0
        %4854 = vmatprep.subr.bf16.mxu0 0
        %4855 = vmatpush1.bf16.msra.mxu0 0
        %4856 = vmatprep.subr.bf16.mxu0 0
        %4857 = vmatpush1.bf16.msra.mxu0 0
        %4858 = vmatprep.subr.bf16.mxu0 0
        %4859 = vmatpush1.bf16.msra.mxu0 0
        %4860 = vmatprep.subr.bf16.mxu0 0
        %4861 = vmatpush1.bf16.msra.mxu0 0
        %4862 = vmatprep.mubr.bf16.mxu0 0
        %4863 = vmatmul.mubr.bf16.gmra.mrb[0].mxu0 %v4445
        %v4864 = vpop.f32.mrb[0].mxu0
        %v4865 = vadd.f32 %v4768, %v4864
        %v4866 = vpop.f32.mrb[0].mxu0
        %v4867 = vpop.f32.mrb[0].mxu0
        %v4868 = vadd.f32 %v4771, %v4867
        %v4869 = vpop.f32.mrb[0].mxu0
        %4870 = vmatprep.mubr.bf16.mxu0 0
        %4871 = vmatmul.mubr.bf16.gmra.mrb[0].mxu0 %v4457
        %v4872 = vpop.f32.mrb[0].mxu0
        %v4873 = vadd.f32 %v4776, %v4872
        %v4874 = vpop.f32.mrb[0].mxu0
        %v4875 = vpop.f32.mrb[0].mxu0
        %v4876 = vadd.f32 %v4779, %v4875
        %v4877 = vpop.f32.mrb[0].mxu0
        %4878 = vmatprep.mubr.bf16.mxu0 0
        %4879 = vmatmul.mubr.bf16.gmra.mrb[0].mxu0 %v4469
        %v4880 = vpop.f32.mrb[0].mxu0
        %v4881 = vadd.f32 %v4784, %v4880
        %v4882 = vpop.f32.mrb[0].mxu0
        %v4883 = vpop.f32.mrb[0].mxu0
        %v4884 = vadd.f32 %v4787, %v4883
        %v4885 = vpop.f32.mrb[0].mxu0
        %4886 = vmatprep.mubr.bf16.mxu0 0
        %4887 = vmatmul.mubr.bf16.gmra.mrb[0].mxu0 %v4481
        %v4888 = vpop.f32.mrb[0].mxu0
        %v4889 = vadd.f32 %v4792, %v4888
        %v4890 = vpop.f32.mrb[0].mxu0
        %v4891 = vpop.f32.mrb[0].mxu0
        %v4892 = vadd.f32 %v4795, %v4891
        %v4893 = vpop.f32.mrb[0].mxu0
        %4894 = vmatprep.mubr.bf16.mxu0 0
        %4895 = vmatmul.mubr.bf16.gmra.mrb[0].mxu0 %v4493
        %v4896 = vpop.f32.mrb[0].mxu0
        %v4897 = vadd.f32 %v4800, %v4896
        %v4898 = vpop.f32.mrb[0].mxu0
        %v4899 = vpop.f32.mrb[0].mxu0
        %v4900 = vadd.f32 %v4803, %v4899
        %v4901 = vpop.f32.mrb[0].mxu0
        %4902 = vmatprep.mubr.bf16.mxu0 0
        %4903 = vmatmul.mubr.bf16.gmra.mrb[0].mxu0 %v4505
        %v4904 = vpop.f32.mrb[0].mxu0
        %v4905 = vadd.f32 %v4808, %v4904
        %v4906 = vpop.f32.mrb[0].mxu0
        %v4907 = vpop.f32.mrb[0].mxu0
        %v4908 = vadd.f32 %v4811, %v4907
        %v4909 = vpop.f32.mrb[0].mxu0
        %4910 = vmatprep.mubr.bf16.mxu0 0
        %4911 = vmatmul.mubr.bf16.gmra.mrb[0].mxu0 %v4517
        %v4912 = vpop.f32.mrb[0].mxu0
        %v4913 = vadd.f32 %v4816, %v4912
        %v4914 = vpop.f32.mrb[0].mxu0
        %v4915 = vpop.f32.mrb[0].mxu0
        %v4916 = vadd.f32 %v4819, %v4915
        %v4917 = vpop.f32.mrb[0].mxu0
        %4918 = vmatprep.mubr.bf16.mxu0 0
        %4919 = vmatmul.mubr.bf16.gmra.mrb[0].mxu0 %v4529
        %v4920 = vpop.f32.mrb[0].mxu0
        %v4921 = vadd.f32 %v4824, %v4920
        %v4922 = vpop.f32.mrb[0].mxu0
        %v4923 = vpop.f32.mrb[0].mxu0
        %v4924 = vadd.f32 %v4827, %v4923
        %v4925 = vpop.f32.mrb[0].mxu0
        %4926 = vdwg.mxu0
        %v4927 = vadd.f32 %v4328, %v4865
        %v4928 = vadd.f32 %v4331, %v4868
        %v4929 = vadd.f32 %v4336, %v4873
        %v4930 = vadd.f32 %v4339, %v4876
        %v4931 = vadd.f32 %v4344, %v4881
        %v4932 = vadd.f32 %v4347, %v4884
        %v4933 = vadd.f32 %v4352, %v4889
        %v4934 = vadd.f32 %v4355, %v4892
        %v4935 = vadd.f32 %v4360, %v4897
        %v4936 = vadd.f32 %v4363, %v4900
        %v4937 = vadd.f32 %v4368, %v4905
        %v4938 = vadd.f32 %v4371, %v4908
        %v4939 = vadd.f32 %v4376, %v4913
        %v4940 = vadd.f32 %v4379, %v4916
        %v4941 = vadd.f32 %v4384, %v4921
        %v4942 = vadd.f32 %v4387, %v4924
        %v4943 = vld [vmem:[#allocation11] sm:$0x1]
        %v4945 = vlaneseq
        %v4946 = vshrl.u32 %v4945, 7
        %v4947 = vsub.s32 0, %v4946
        %v4948 = vrot.slane %v4943, %v4947
        %v4950 = vadd.f32 %v4927, %v4948
        %v4951 = vadd.f32 %v4928, %v4948
        %v4952 = vadd.f32 %v4929, %v4948
        %v4953 = vadd.f32 %v4930, %v4948
        %v4954 = vadd.f32 %v4931, %v4948
        %v4955 = vadd.f32 %v4932, %v4948
        %v4956 = vadd.f32 %v4933, %v4948
        %v4957 = vadd.f32 %v4934, %v4948
        %v4958 = vadd.f32 %v4935, %v4948
        %v4959 = vadd.f32 %v4936, %v4948
        %v4960 = vadd.f32 %v4937, %v4948
        %v4961 = vadd.f32 %v4938, %v4948
        %v4962 = vadd.f32 %v4939, %v4948
        %v4963 = vadd.f32 %v4940, %v4948
        %v4964 = vadd.f32 %v4941, %v4948
        %v4965 = vadd.f32 %v4942, %v4948
        %s4966 = scalar_lea.vmem %s254, 12 [#allocation3]
        %v4967 = vld [vmem:[%s4966] sm:$0xf]
        %v4968 = vld [vmem:[%s4966 + $0x4] sm:$0xf]
        %v4969 = vld [vmem:[%s4966 + $0x8] sm:$0x1]
        %v4970 = vld [vmem:[%s4966 + $0xc] sm:$0xf]
        %v4971 = vld [vmem:[%s4966 + $0x10] sm:$0xf]
        %v4972 = vld [vmem:[%s4966 + $0x14] sm:$0x1]
        %v4973 = vld [vmem:[%s4966 + $0x18] sm:$0xf]
        %v4974 = vld [vmem:[%s4966 + $0x1c] sm:$0xf]
        %v4975 = vld [vmem:[%s4966 + $0x20] sm:$0x1]
        %v4976 = vld [vmem:[%s4966 + $0x24] sm:$0xf]
        %v4977 = vld [vmem:[%s4966 + $0x28] sm:$0xf]
        %v4978 = vld [vmem:[%s4966 + $0x2c] sm:$0x1]
        %v4979 = vld [vmem:[%s4966 + $0x30] sm:$0xf]
        %v4980 = vld [vmem:[%s4966 + $0x34] sm:$0xf]
        %v4981 = vld [vmem:[%s4966 + $0x38] sm:$0x1]
        %v4982 = vld [vmem:[%s4966 + $0x3c] sm:$0xf]
        %v4983 = vld [vmem:[%s4966 + $0x40] sm:$0xf]
        %v4984 = vld [vmem:[%s4966 + $0x44] sm:$0x1]
        %v4985 = vld [vmem:[%s4966 + $0x48] sm:$0xf]
        %v4986 = vld [vmem:[%s4966 + $0x4c] sm:$0xf]
        %v4987 = vld [vmem:[%s4966 + $0x50] sm:$0x1]
        %v4988 = vld [vmem:[%s4966 + $0x54] sm:$0xf]
        %v4989 = vld [vmem:[%s4966 + $0x58] sm:$0xf]
        %v4990 = vld [vmem:[%s4966 + $0x5c] sm:$0x1]
        %v4991 = vunpack.c.l.bf16 %v4967
        %v4992 = vunpack.c.l.bf16 %v4968
        %v4993 = vunpack.c.l.bf16 %v4969
        %v4994 = vunpack.c.l.bf16 %v4970
        %v4995 = vunpack.c.l.bf16 %v4971
        %v4996 = vunpack.c.l.bf16 %v4972
        %v4997 = vunpack.c.l.bf16 %v4973
        %v4998 = vunpack.c.l.bf16 %v4974
        %v4999 = vunpack.c.l.bf16 %v4975
        %v5000 = vunpack.c.l.bf16 %v4976
        %v5001 = vunpack.c.l.bf16 %v4977
        %v5002 = vunpack.c.l.bf16 %v4978
        %v5003 = vunpack.c.l.bf16 %v4979
        %v5004 = vunpack.c.l.bf16 %v4980
        %v5005 = vunpack.c.l.bf16 %v4981
        %v5006 = vunpack.c.l.bf16 %v4982
        %v5007 = vunpack.c.l.bf16 %v4983
        %v5008 = vunpack.c.l.bf16 %v4984
        %v5009 = vunpack.c.l.bf16 %v4985
        %v5010 = vunpack.c.l.bf16 %v4986
        %v5011 = vunpack.c.l.bf16 %v4987
        %v5012 = vunpack.c.l.bf16 %v4988
        %v5013 = vunpack.c.l.bf16 %v4989
        %v5014 = vunpack.c.l.bf16 %v4990
        %vm5039 = vcmask 1046528
        %v5040 = vrot.slane %v4991, 1
        %v5041 = vrot.slane %v4992, 1
        %v5042 = vsel %vm5039, %v5040, %v5041
        %v5043 = vrot.slane %v4993, 1
        %v5044 = vsel %vm5039, %v5041, %v5043
        %v5045 = vrot.slane %v4994, 1
        %v5046 = vrot.slane %v4995, 1
        %v5047 = vsel %vm5039, %v5045, %v5046
        %v5048 = vrot.slane %v4996, 1
        %v5049 = vsel %vm5039, %v5046, %v5048
        %v5050 = vrot.slane %v4997, 1
        %v5051 = vrot.slane %v4998, 1
        %v5052 = vsel %vm5039, %v5050, %v5051
        %v5053 = vrot.slane %v4999, 1
        %v5054 = vsel %vm5039, %v5051, %v5053
        %v5055 = vrot.slane %v5000, 1
        %v5056 = vrot.slane %v5001, 1
        %v5057 = vsel %vm5039, %v5055, %v5056
        %v5058 = vrot.slane %v5002, 1
        %v5059 = vsel %vm5039, %v5056, %v5058
        %v5060 = vrot.slane %v5003, 1
        %v5061 = vrot.slane %v5004, 1
        %v5062 = vsel %vm5039, %v5060, %v5061
        %v5063 = vrot.slane %v5005, 1
        %v5064 = vsel %vm5039, %v5061, %v5063
        %v5065 = vrot.slane %v5006, 1
        %v5066 = vrot.slane %v5007, 1
        %v5067 = vsel %vm5039, %v5065, %v5066
        %v5068 = vrot.slane %v5008, 1
        %v5069 = vsel %vm5039, %v5066, %v5068
        %v5070 = vrot.slane %v5009, 1
        %v5071 = vrot.slane %v5010, 1
        %v5072 = vsel %vm5039, %v5070, %v5071
        %v5073 = vrot.slane %v5011, 1
        %v5074 = vsel %vm5039, %v5071, %v5073
        %v5075 = vrot.slane %v5012, 1
        %v5076 = vrot.slane %v5013, 1
        %v5077 = vsel %vm5039, %v5075, %v5076
        %v5078 = vrot.slane %v5014, 1
        %v5079 = vsel %vm5039, %v5076, %v5078
        %v5096 = vadd.f32 %v4950, %v5042
        %v5097 = vadd.f32 %v4951, %v5044
        %v5098 = vadd.f32 %v4952, %v5047
        %v5099 = vadd.f32 %v4953, %v5049
        %v5100 = vadd.f32 %v4954, %v5052
        %v5101 = vadd.f32 %v4955, %v5054
        %v5102 = vadd.f32 %v4956, %v5057
        %v5103 = vadd.f32 %v4957, %v5059
        %v5104 = vadd.f32 %v4958, %v5062
        %v5105 = vadd.f32 %v4959, %v5064
        %v5106 = vadd.f32 %v4960, %v5067
        %v5107 = vadd.f32 %v4961, %v5069
        %v5108 = vadd.f32 %v4962, %v5072
        %v5109 = vadd.f32 %v4963, %v5074
        %v5110 = vadd.f32 %v4964, %v5077
        %v5111 = vadd.f32 %v4965, %v5079
        %v5112 = vmax.f32 %v5096, 0.0
        %v5113 = vmax.f32 %v5097, 0.0
        %v5114 = vmax.f32 %v5098, 0.0
        %v5115 = vmax.f32 %v5099, 0.0
        %v5116 = vmax.f32 %v5100, 0.0
        %v5117 = vmax.f32 %v5101, 0.0
        %v5118 = vmax.f32 %v5102, 0.0
        %v5119 = vmax.f32 %v5103, 0.0
        %v5120 = vmax.f32 %v5104, 0.0
        %v5121 = vmax.f32 %v5105, 0.0
        %v5122 = vmax.f32 %v5106, 0.0
        %v5123 = vmax.f32 %v5107, 0.0
        %v5124 = vmax.f32 %v5108, 0.0
        %v5125 = vmax.f32 %v5109, 0.0
        %v5126 = vmax.f32 %v5110, 0.0
        %v5127 = vmax.f32 %v5111, 0.0
        %5128 = vst [vmem:[%s296] sm:$0xff] %v5112
        %5129 = vst [vmem:[%s296 + $0x8] sm:$0xff] %v5113
        %5130 = vst [vmem:[%s296 + $0x10] sm:$0xff] %v5114
        %5131 = vst [vmem:[%s296 + $0x18] sm:$0xff] %v5115
        %5132 = vst [vmem:[%s296 + $0x20] sm:$0xff] %v5116
        %5133 = vst [vmem:[%s296 + $0x28] sm:$0xff] %v5117
        %5134 = vst [vmem:[%s296 + $0x30] sm:$0xff] %v5118
        %5135 = vst [vmem:[%s296 + $0x38] sm:$0xff] %v5119
        %5136 = vst [vmem:[%s296 + $0x40] sm:$0xff] %v5120
        %5137 = vst [vmem:[%s296 + $0x48] sm:$0xff] %v5121
        %5138 = vst [vmem:[%s296 + $0x50] sm:$0xff] %v5122
        %5139 = vst [vmem:[%s296 + $0x58] sm:$0xff] %v5123
        %5140 = vst [vmem:[%s296 + $0x60] sm:$0xff] %v5124
        %5141 = vst [vmem:[%s296 + $0x68] sm:$0xff] %v5125
        %5142 = vst [vmem:[%s296 + $0x70] sm:$0xff] %v5126
        %5143 = vst [vmem:[%s296 + $0x78] sm:$0xff] %v5127
        %s5144 = scalar_lea.vmem [#allocation2], 192
        %v5145 = vld [vmem:[%s5144] sm:$0x80]
        %v5146 = vld [vmem:[%s5144 + $0x8] sm:$0xff]
        %v5147 = vld [vmem:[%s5144 + $0x18] sm:$0x80]
        %v5148 = vld [vmem:[%s5144 + $0x20] sm:$0xff]
        %v5149 = vld [vmem:[%s5144 + $0x30] sm:$0x80]
        %v5150 = vld [vmem:[%s5144 + $0x38] sm:$0xff]
        %v5151 = vld [vmem:[%s5144 + $0x48] sm:$0x80]
        %v5152 = vld [vmem:[%s5144 + $0x50] sm:$0xff]
        %v5153 = vld [vmem:[%s5144 + $0x60] sm:$0x80]
        %v5154 = vld [vmem:[%s5144 + $0x68] sm:$0xff]
        %v5155 = vld [vmem:[%s5144 + $0x78] sm:$0x80]
        %v5156 = vld [vmem:[%s5144 + $0x80] sm:$0xff]
        %v5157 = vld [vmem:[%s5144 + $0x90] sm:$0x80]
        %v5158 = vld [vmem:[%s5144 + $0x98] sm:$0xff]
        %v5159 = vld [vmem:[%s5144 + $0xa8] sm:$0x80]
        %v5160 = vld [vmem:[%s5144 + $0xb0] sm:$0xff]
        %v5161 = vld [vmem:[%s5144 + $0xc0] sm:$0x80]
        %v5162 = vld [vmem:[%s5144 + $0xc8] sm:$0xff]
        %v5163 = vld [vmem:[%s5144 + $0xd8] sm:$0x80]
        %v5164 = vld [vmem:[%s5144 + $0xe0] sm:$0xff]
        %v5166 = vshrl.u32 %v5145, 16
        %v5168 = vrot.slane %v5166, 7
        %v5170 = vshrl.u32 %v5146, 16
        %v5172 = vrot.slane %v5170, 7
        %v5173 = vshll.u32 %v5146, 16
        %v5175 = vor.u32 %v5172, %v5173
        %v5176 = vsel %vm3486, %v5168, %v5175
        %v5178 = vshrl.u32 %v5147, 16
        %v5180 = vrot.slane %v5178, 7
        %v5182 = vshrl.u32 %v5148, 16
        %v5184 = vrot.slane %v5182, 7
        %v5185 = vshll.u32 %v5148, 16
        %v5187 = vor.u32 %v5184, %v5185
        %v5188 = vsel %vm3486, %v5180, %v5187
        %v5190 = vshrl.u32 %v5149, 16
        %v5192 = vrot.slane %v5190, 7
        %v5194 = vshrl.u32 %v5150, 16
        %v5196 = vrot.slane %v5194, 7
        %v5197 = vshll.u32 %v5150, 16
        %v5199 = vor.u32 %v5196, %v5197
        %v5200 = vsel %vm3486, %v5192, %v5199
        %v5202 = vshrl.u32 %v5151, 16
        %v5204 = vrot.slane %v5202, 7
        %v5206 = vshrl.u32 %v5152, 16
        %v5208 = vrot.slane %v5206, 7
        %v5209 = vshll.u32 %v5152, 16
        %v5211 = vor.u32 %v5208, %v5209
        %v5212 = vsel %vm3486, %v5204, %v5211
        %v5214 = vshrl.u32 %v5153, 16
        %v5216 = vrot.slane %v5214, 7
        %v5218 = vshrl.u32 %v5154, 16
        %v5220 = vrot.slane %v5218, 7
        %v5221 = vshll.u32 %v5154, 16
        %v5223 = vor.u32 %v5220, %v5221
        %v5224 = vsel %vm3486, %v5216, %v5223
        %v5226 = vshrl.u32 %v5155, 16
        %v5228 = vrot.slane %v5226, 7
        %v5230 = vshrl.u32 %v5156, 16
        %v5232 = vrot.slane %v5230, 7
        %v5233 = vshll.u32 %v5156, 16
        %v5235 = vor.u32 %v5232, %v5233
        %v5236 = vsel %vm3486, %v5228, %v5235
        %v5238 = vshrl.u32 %v5157, 16
        %v5240 = vrot.slane %v5238, 7
        %v5242 = vshrl.u32 %v5158, 16
        %v5244 = vrot.slane %v5242, 7
        %v5245 = vshll.u32 %v5158, 16
        %v5247 = vor.u32 %v5244, %v5245
        %v5248 = vsel %vm3486, %v5240, %v5247
        %v5250 = vshrl.u32 %v5159, 16
        %v5252 = vrot.slane %v5250, 7
        %v5254 = vshrl.u32 %v5160, 16
        %v5256 = vrot.slane %v5254, 7
        %v5257 = vshll.u32 %v5160, 16
        %v5259 = vor.u32 %v5256, %v5257
        %v5260 = vsel %vm3486, %v5252, %v5259
        %v5262 = vshrl.u32 %v5161, 16
        %v5264 = vrot.slane %v5262, 7
        %v5266 = vshrl.u32 %v5162, 16
        %v5268 = vrot.slane %v5266, 7
        %v5269 = vshll.u32 %v5162, 16
        %v5271 = vor.u32 %v5268, %v5269
        %v5272 = vsel %vm3486, %v5264, %v5271
        %v5274 = vshrl.u32 %v5163, 16
        %v5276 = vrot.slane %v5274, 7
        %v5278 = vshrl.u32 %v5164, 16
        %v5280 = vrot.slane %v5278, 7
        %v5281 = vshll.u32 %v5164, 16
        %v5283 = vor.u32 %v5280, %v5281
        %v5284 = vsel %vm3486, %v5276, %v5283
        %v5295 = vld [vmem:[#allocation9] sm:$0xf]
        %v5296 = vld [vmem:[#allocation9 + $0x4] sm:$0xf]
        %v5297 = vld [vmem:[#allocation9 + $0x8] sm:$0xf]
        %v5298 = vld [vmem:[#allocation9 + $0xc] sm:$0xf]
        %v5299 = vld [vmem:[#allocation9 + $0x10] sm:$0xf]
        %v5300 = vld [vmem:[#allocation9 + $0x14] sm:$0xf]
        %v5301 = vld [vmem:[#allocation9 + $0x18] sm:$0xf]
        %v5302 = vld [vmem:[#allocation9 + $0x1c] sm:$0xf]
        %v5303 = vld [vmem:[#allocation9 + $0x20] sm:$0xf]
        %v5304 = vld [vmem:[#allocation9 + $0x24] sm:$0xf]
        %v5305 = vld [vmem:[#allocation9 + $0x28] sm:$0xf]
        %v5306 = vld [vmem:[#allocation9 + $0x2c] sm:$0xf]
        %v5307 = vld [vmem:[#allocation9 + $0x30] sm:$0xf]
        %v5308 = vld [vmem:[#allocation9 + $0x34] sm:$0xf]
        %v5309 = vld [vmem:[#allocation9 + $0x38] sm:$0xf]
        %v5310 = vld [vmem:[#allocation9 + $0x3c] sm:$0xf]
        %v5311 = vld [vmem:[#allocation9 + $0x40] sm:$0xf]
        %v5312 = vld [vmem:[#allocation9 + $0x44] sm:$0xf]
        %v5313 = vld [vmem:[#allocation9 + $0x48] sm:$0xf]
        %v5314 = vld [vmem:[#allocation9 + $0x4c] sm:$0xf]
        %v5315 = vld [vmem:[#allocation9 + $0x50] sm:$0xf]
        %v5316 = vld [vmem:[#allocation9 + $0x54] sm:$0xf]
        %v5317 = vld [vmem:[#allocation9 + $0x58] sm:$0xf]
        %v5318 = vld [vmem:[#allocation9 + $0x5c] sm:$0xf]
        %v5319 = vld [vmem:[#allocation9 + $0x60] sm:$0xf]
        %v5320 = vld [vmem:[#allocation9 + $0x64] sm:$0xf]
        %v5321 = vld [vmem:[#allocation9 + $0x68] sm:$0xf]
        %v5322 = vld [vmem:[#allocation9 + $0x6c] sm:$0xf]
        %v5323 = vld [vmem:[#allocation9 + $0x70] sm:$0xf]
        %v5324 = vld [vmem:[#allocation9 + $0x74] sm:$0xf]
        %v5325 = vld [vmem:[#allocation9 + $0x78] sm:$0xf]
        %v5326 = vld [vmem:[#allocation9 + $0x7c] sm:$0xf]
        %v5327 = vld [vmem:[#allocation9 + $0x80] sm:$0xf]
        %v5328 = vld [vmem:[#allocation9 + $0x84] sm:$0xf]
        %v5329 = vld [vmem:[#allocation9 + $0x88] sm:$0xf]
        %v5330 = vld [vmem:[#allocation9 + $0x8c] sm:$0xf]
        %v5331 = vld [vmem:[#allocation9 + $0x90] sm:$0xf]
        %v5332 = vld [vmem:[#allocation9 + $0x94] sm:$0xf]
        %v5333 = vld [vmem:[#allocation9 + $0x98] sm:$0xf]
        %v5334 = vld [vmem:[#allocation9 + $0x9c] sm:$0xf]
        %v5335 = vld [vmem:[#allocation9 + $0xa0] sm:$0xf]
        %v5336 = vld [vmem:[#allocation9 + $0xa4] sm:$0xf]
        %v5337 = vld [vmem:[#allocation9 + $0xa8] sm:$0xf]
        %v5338 = vld [vmem:[#allocation9 + $0xac] sm:$0xf]
        %v5339 = vld [vmem:[#allocation9 + $0xb0] sm:$0xf]
        %v5340 = vld [vmem:[#allocation9 + $0xb4] sm:$0xf]
        %v5341 = vld [vmem:[#allocation9 + $0xb8] sm:$0xf]
        %v5342 = vld [vmem:[#allocation9 + $0xbc] sm:$0xf]
        %v5343 = vld [vmem:[%s3665] sm:$0xf]
        %v5344 = vld [vmem:[%s3665 + $0x4] sm:$0xf]
        %v5345 = vld [vmem:[%s3665 + $0x8] sm:$0xf]
        %v5346 = vld [vmem:[%s3665 + $0xc] sm:$0xf]
        %v5347 = vld [vmem:[%s3665 + $0x10] sm:$0xf]
        %v5348 = vld [vmem:[%s3665 + $0x14] sm:$0xf]
        %v5349 = vld [vmem:[%s3665 + $0x18] sm:$0xf]
        %v5350 = vld [vmem:[%s3665 + $0x1c] sm:$0xf]
        %v5351 = vld [vmem:[%s3665 + $0x20] sm:$0xf]
        %v5352 = vld [vmem:[%s3665 + $0x24] sm:$0xf]
        %v5353 = vld [vmem:[%s3665 + $0x28] sm:$0xf]
        %v5354 = vld [vmem:[%s3665 + $0x2c] sm:$0xf]
        %v5355 = vld [vmem:[%s3665 + $0x30] sm:$0xf]
        %v5356 = vld [vmem:[%s3665 + $0x34] sm:$0xf]
        %v5357 = vld [vmem:[%s3665 + $0x38] sm:$0xf]
        %v5358 = vld [vmem:[%s3665 + $0x3c] sm:$0xf]
        %v5359 = vld [vmem:[%s3665 + $0x40] sm:$0xf]
        %v5360 = vld [vmem:[%s3665 + $0x44] sm:$0xf]
        %v5361 = vld [vmem:[%s3665 + $0x48] sm:$0xf]
        %v5362 = vld [vmem:[%s3665 + $0x4c] sm:$0xf]
        %v5363 = vld [vmem:[%s3665 + $0x50] sm:$0xf]
        %v5364 = vld [vmem:[%s3665 + $0x54] sm:$0xf]
        %v5365 = vld [vmem:[%s3665 + $0x58] sm:$0xf]
        %v5366 = vld [vmem:[%s3665 + $0x5c] sm:$0xf]
        %v5367 = vld [vmem:[%s3665 + $0x60] sm:$0xf]
        %v5368 = vld [vmem:[%s3665 + $0x64] sm:$0xf]
        %v5369 = vld [vmem:[%s3665 + $0x68] sm:$0xf]
        %v5370 = vld [vmem:[%s3665 + $0x6c] sm:$0xf]
        %v5371 = vld [vmem:[%s3665 + $0x70] sm:$0xf]
        %v5372 = vld [vmem:[%s3665 + $0x74] sm:$0xf]
        %v5373 = vld [vmem:[%s3665 + $0x78] sm:$0xf]
        %v5374 = vld [vmem:[%s3665 + $0x7c] sm:$0xf]
        %v5375 = vld [vmem:[%s3665 + $0x80] sm:$0xf]
        %v5376 = vld [vmem:[%s3665 + $0x84] sm:$0xf]
        %v5377 = vld [vmem:[%s3665 + $0x88] sm:$0xf]
        %v5378 = vld [vmem:[%s3665 + $0x8c] sm:$0xf]
        %v5379 = vld [vmem:[%s3665 + $0x90] sm:$0xf]
        %v5380 = vld [vmem:[%s3665 + $0x94] sm:$0xf]
        %v5381 = vld [vmem:[%s3665 + $0x98] sm:$0xf]
        %v5382 = vld [vmem:[%s3665 + $0x9c] sm:$0xf]
        %v5383 = vld [vmem:[%s3665 + $0xa0] sm:$0xf]
        %v5384 = vld [vmem:[%s3665 + $0xa4] sm:$0xf]
        %v5385 = vld [vmem:[%s3665 + $0xa8] sm:$0xf]
        %v5386 = vld [vmem:[%s3665 + $0xac] sm:$0xf]
        %v5387 = vld [vmem:[%s3665 + $0xb0] sm:$0xf]
        %v5388 = vld [vmem:[%s3665 + $0xb4] sm:$0xf]
        %v5389 = vld [vmem:[%s3665 + $0xb8] sm:$0xf]
        %v5390 = vld [vmem:[%s3665 + $0xbc] sm:$0xf]
        %v5439 = vunpack.c.l.b16 %v5343
        %v5440 = vunpack.c.l.b16 %v5344
        %v5441 = vunpack.c.l.b16 %v5345
        %v5442 = vunpack.c.l.b16 %v5346
        %v5443 = vunpack.c.l.b16 %v5347
        %v5444 = vunpack.c.l.b16 %v5348
        %v5445 = vunpack.c.l.b16 %v5349
        %v5446 = vunpack.c.l.b16 %v5350
        %v5447 = vunpack.c.l.b16 %v5351
        %v5448 = vunpack.c.l.b16 %v5352
        %v5449 = vunpack.c.l.b16 %v5353
        %v5450 = vunpack.c.l.b16 %v5354
        %v5451 = vunpack.c.l.b16 %v5355
        %v5452 = vunpack.c.l.b16 %v5356
        %v5453 = vunpack.c.l.b16 %v5357
        %v5454 = vunpack.c.l.b16 %v5358
        %v5455 = vunpack.c.l.b16 %v5359
        %v5456 = vunpack.c.l.b16 %v5360
        %v5457 = vunpack.c.l.b16 %v5361
        %v5458 = vunpack.c.l.b16 %v5362
        %v5459 = vunpack.c.l.b16 %v5363
        %v5460 = vunpack.c.l.b16 %v5364
        %v5461 = vunpack.c.l.b16 %v5365
        %v5462 = vunpack.c.l.b16 %v5366
        %v5463 = vunpack.c.l.b16 %v5367
        %v5464 = vunpack.c.l.b16 %v5368
        %v5465 = vunpack.c.l.b16 %v5369
        %v5466 = vunpack.c.l.b16 %v5370
        %v5467 = vunpack.c.l.b16 %v5371
        %v5468 = vunpack.c.l.b16 %v5372
        %v5469 = vunpack.c.l.b16 %v5373
        %v5470 = vunpack.c.l.b16 %v5374
        %v5471 = vunpack.c.l.b16 %v5375
        %v5472 = vunpack.c.l.b16 %v5376
        %v5473 = vunpack.c.l.b16 %v5377
        %v5474 = vunpack.c.l.b16 %v5378
        %v5475 = vunpack.c.l.b16 %v5379
        %v5476 = vunpack.c.l.b16 %v5380
        %v5477 = vunpack.c.l.b16 %v5381
        %v5478 = vunpack.c.l.b16 %v5382
        %v5479 = vunpack.c.l.b16 %v5383
        %v5480 = vunpack.c.l.b16 %v5384
        %v5481 = vunpack.c.l.b16 %v5385
        %v5482 = vunpack.c.l.b16 %v5386
        %v5483 = vunpack.c.l.b16 %v5387
        %v5484 = vunpack.c.l.b16 %v5388
        %v5485 = vunpack.c.l.b16 %v5389
        %v5486 = vunpack.c.l.b16 %v5390
        %v5487 = vpack.c.b16 %v5440, %v5439
        %v5488 = vpack.c.b16 %v5442, %v5441
        %v5489 = vpack.c.b16 %v5444, %v5443
        %v5490 = vpack.c.b16 %v5446, %v5445
        %v5491 = vpack.c.b16 %v5448, %v5447
        %v5492 = vpack.c.b16 %v5450, %v5449
        %v5493 = vpack.c.b16 %v5452, %v5451
        %v5494 = vpack.c.b16 %v5454, %v5453
        %v5495 = vpack.c.b16 %v5456, %v5455
        %v5496 = vpack.c.b16 %v5458, %v5457
        %v5497 = vpack.c.b16 %v5460, %v5459
        %v5498 = vpack.c.b16 %v5462, %v5461
        %v5499 = vpack.c.b16 %v5464, %v5463
        %v5500 = vpack.c.b16 %v5466, %v5465
        %v5501 = vpack.c.b16 %v5468, %v5467
        %v5502 = vpack.c.b16 %v5470, %v5469
        %v5503 = vpack.c.b16 %v5472, %v5471
        %v5504 = vpack.c.b16 %v5474, %v5473
        %v5505 = vpack.c.b16 %v5476, %v5475
        %v5506 = vpack.c.b16 %v5478, %v5477
        %v5507 = vpack.c.b16 %v5480, %v5479
        %v5508 = vpack.c.b16 %v5482, %v5481
        %v5509 = vpack.c.b16 %v5484, %v5483
        %v5510 = vpack.c.b16 %v5486, %v5485
        %5535 = vmatprep.subr.bf16.mxu0 0
        %5536 = vmatpush1.bf16.msra.mxu0 %v5487
        %5537 = vmatprep.subr.bf16.mxu0 0
        %5538 = vmatpush1.bf16.msra.mxu0 %v5488
        %5539 = vmatprep.subr.bf16.mxu0 0
        %5540 = vmatpush1.bf16.msra.mxu0 %v5489
        %5541 = vmatprep.subr.bf16.mxu0 0
        %5542 = vmatpush1.bf16.msra.mxu0 %v5490
        %5543 = vmatprep.subr.bf16.mxu0 0
        %5544 = vmatpush1.bf16.msra.mxu0 %v5491
        %5545 = vmatprep.subr.bf16.mxu0 0
        %5546 = vmatpush1.bf16.msra.mxu0 %v5492
        %5547 = vmatprep.subr.bf16.mxu0 0
        %5548 = vmatpush1.bf16.msra.mxu0 %v5493
        %5549 = vmatprep.subr.bf16.mxu0 0
        %5550 = vmatpush1.bf16.msra.mxu0 %v5494
        %5551 = vmatprep.subr.bf16.mxu0 0
        %5552 = vmatpush1.bf16.msra.mxu0 %v5495
        %5553 = vmatprep.subr.bf16.mxu0 0
        %5554 = vmatpush1.bf16.msra.mxu0 %v5496
        %5555 = vmatprep.subr.bf16.mxu0 0
        %5556 = vmatpush1.bf16.msra.mxu0 %v5497
        %5557 = vmatprep.subr.bf16.mxu0 0
        %5558 = vmatpush1.bf16.msra.mxu0 %v5498
        %5559 = vmatprep.subr.bf16.mxu0 0
        %5560 = vmatpush1.bf16.msra.mxu0 %v5499
        %5561 = vmatprep.subr.bf16.mxu0 0
        %5562 = vmatpush1.bf16.msra.mxu0 %v5500
        %5563 = vmatprep.subr.bf16.mxu0 0
        %5564 = vmatpush1.bf16.msra.mxu0 %v5501
        %5565 = vmatprep.subr.bf16.mxu0 0
        %5566 = vmatpush1.bf16.msra.mxu0 %v5502
        %5567 = vmatprep.mubr.bf16.mxu0 %v5148
        %5568 = vmatmul.mubr.bf16.gmra.mrb[0].mxu0 %v5146
        %v5569 = vpop.f32.mrb[0].mxu0
        %v5570 = vadd.f32 0.0, %v5569
        %v5571 = vpop.f32.mrb[0].mxu0
        %v5572 = vpop.f32.mrb[0].mxu0
        %v5573 = vadd.f32 0.0, %v5572
        %v5574 = vpop.f32.mrb[0].mxu0
        %5575 = vmatprep.mubr.bf16.mxu0 %v5150
        %5576 = vmatmul.mubr.bf16.gmra.mrb[0].mxu0 %v5148
        %v5577 = vpop.f32.mrb[0].mxu0
        %v5578 = vadd.f32 0.0, %v5577
        %v5579 = vpop.f32.mrb[0].mxu0
        %v5580 = vpop.f32.mrb[0].mxu0
        %v5581 = vadd.f32 0.0, %v5580
        %v5582 = vpop.f32.mrb[0].mxu0
        %5583 = vmatprep.mubr.bf16.mxu0 %v5152
        %5584 = vmatmul.mubr.bf16.gmra.mrb[0].mxu0 %v5150
        %v5585 = vpop.f32.mrb[0].mxu0
        %v5586 = vadd.f32 0.0, %v5585
        %v5587 = vpop.f32.mrb[0].mxu0
        %v5588 = vpop.f32.mrb[0].mxu0
        %v5589 = vadd.f32 0.0, %v5588
        %v5590 = vpop.f32.mrb[0].mxu0
        %5591 = vmatprep.mubr.bf16.mxu0 %v5154
        %5592 = vmatmul.mubr.bf16.gmra.mrb[0].mxu0 %v5152
        %v5593 = vpop.f32.mrb[0].mxu0
        %v5594 = vadd.f32 0.0, %v5593
        %v5595 = vpop.f32.mrb[0].mxu0
        %v5596 = vpop.f32.mrb[0].mxu0
        %v5597 = vadd.f32 0.0, %v5596
        %v5598 = vpop.f32.mrb[0].mxu0
        %5599 = vmatprep.mubr.bf16.mxu0 %v5156
        %5600 = vmatmul.mubr.bf16.gmra.mrb[0].mxu0 %v5154
        %v5601 = vpop.f32.mrb[0].mxu0
        %v5602 = vadd.f32 0.0, %v5601
        %v5603 = vpop.f32.mrb[0].mxu0
        %v5604 = vpop.f32.mrb[0].mxu0
        %v5605 = vadd.f32 0.0, %v5604
        %v5606 = vpop.f32.mrb[0].mxu0
        %5607 = vmatprep.mubr.bf16.mxu0 %v5158
        %5608 = vmatmul.mubr.bf16.gmra.mrb[0].mxu0 %v5156
        %v5609 = vpop.f32.mrb[0].mxu0
        %v5610 = vadd.f32 0.0, %v5609
        %v5611 = vpop.f32.mrb[0].mxu0
        %v5612 = vpop.f32.mrb[0].mxu0
        %v5613 = vadd.f32 0.0, %v5612
        %v5614 = vpop.f32.mrb[0].mxu0
        %5615 = vmatprep.mubr.bf16.mxu0 %v5160
        %5616 = vmatmul.mubr.bf16.gmra.mrb[0].mxu0 %v5158
        %v5617 = vpop.f32.mrb[0].mxu0
        %v5618 = vadd.f32 0.0, %v5617
        %v5619 = vpop.f32.mrb[0].mxu0
        %v5620 = vpop.f32.mrb[0].mxu0
        %v5621 = vadd.f32 0.0, %v5620
        %v5622 = vpop.f32.mrb[0].mxu0
        %5623 = vmatprep.mubr.bf16.mxu0 %v5162
        %5624 = vmatmul.mubr.bf16.gmra.mrb[0].mxu0 %v5160
        %v5625 = vpop.f32.mrb[0].mxu0
        %v5626 = vadd.f32 0.0, %v5625
        %v5627 = vpop.f32.mrb[0].mxu0
        %v5628 = vpop.f32.mrb[0].mxu0
        %v5629 = vadd.f32 0.0, %v5628
        %v5630 = vpop.f32.mrb[0].mxu0
        %5631 = vdwg.mxu0
        %5632 = vmatprep.subr.bf16.mxu0 0
        %5633 = vmatpush1.bf16.msra.mxu0 %v5503
        %5634 = vmatprep.subr.bf16.mxu0 0
        %5635 = vmatpush1.bf16.msra.mxu0 %v5504
        %5636 = vmatprep.subr.bf16.mxu0 0
        %5637 = vmatpush1.bf16.msra.mxu0 %v5505
        %5638 = vmatprep.subr.bf16.mxu0 0
        %5639 = vmatpush1.bf16.msra.mxu0 %v5506
        %5640 = vmatprep.subr.bf16.mxu0 0
        %5641 = vmatpush1.bf16.msra.mxu0 %v5507
        %5642 = vmatprep.subr.bf16.mxu0 0
        %5643 = vmatpush1.bf16.msra.mxu0 %v5508
        %5644 = vmatprep.subr.bf16.mxu0 0
        %5645 = vmatpush1.bf16.msra.mxu0 %v5509
        %5646 = vmatprep.subr.bf16.mxu0 0
        %5647 = vmatpush1.bf16.msra.mxu0 %v5510
        %5648 = vmatprep.subr.bf16.mxu0 0
        %5649 = vmatpush1.bf16.msra.mxu0 0
        %5650 = vmatprep.subr.bf16.mxu0 0
        %5651 = vmatpush1.bf16.msra.mxu0 0
        %5652 = vmatprep.subr.bf16.mxu0 0
        %5653 = vmatpush1.bf16.msra.mxu0 0
        %5654 = vmatprep.subr.bf16.mxu0 0
        %5655 = vmatpush1.bf16.msra.mxu0 0
        %5656 = vmatprep.subr.bf16.mxu0 0
        %5657 = vmatpush1.bf16.msra.mxu0 0
        %5658 = vmatprep.subr.bf16.mxu0 0
        %5659 = vmatpush1.bf16.msra.mxu0 0
        %5660 = vmatprep.subr.bf16.mxu0 0
        %5661 = vmatpush1.bf16.msra.mxu0 0
        %5662 = vmatprep.subr.bf16.mxu0 0
        %5663 = vmatpush1.bf16.msra.mxu0 0
        %5664 = vmatprep.mubr.bf16.mxu0 0
        %5665 = vmatmul.mubr.bf16.gmra.mrb[0].mxu0 %v5150
        %v5666 = vpop.f32.mrb[0].mxu0
        %v5667 = vadd.f32 %v5570, %v5666
        %v5668 = vpop.f32.mrb[0].mxu0
        %v5669 = vpop.f32.mrb[0].mxu0
        %v5670 = vadd.f32 %v5573, %v5669
        %v5671 = vpop.f32.mrb[0].mxu0
        %5672 = vmatprep.mubr.bf16.mxu0 0
        %5673 = vmatmul.mubr.bf16.gmra.mrb[0].mxu0 %v5152
        %v5674 = vpop.f32.mrb[0].mxu0
        %v5675 = vadd.f32 %v5578, %v5674
        %v5676 = vpop.f32.mrb[0].mxu0
        %v5677 = vpop.f32.mrb[0].mxu0
        %v5678 = vadd.f32 %v5581, %v5677
        %v5679 = vpop.f32.mrb[0].mxu0
        %5680 = vmatprep.mubr.bf16.mxu0 0
        %5681 = vmatmul.mubr.bf16.gmra.mrb[0].mxu0 %v5154
        %v5682 = vpop.f32.mrb[0].mxu0
        %v5683 = vadd.f32 %v5586, %v5682
        %v5684 = vpop.f32.mrb[0].mxu0
        %v5685 = vpop.f32.mrb[0].mxu0
        %v5686 = vadd.f32 %v5589, %v5685
        %v5687 = vpop.f32.mrb[0].mxu0
        %5688 = vmatprep.mubr.bf16.mxu0 0
        %5689 = vmatmul.mubr.bf16.gmra.mrb[0].mxu0 %v5156
        %v5690 = vpop.f32.mrb[0].mxu0
        %v5691 = vadd.f32 %v5594, %v5690
        %v5692 = vpop.f32.mrb[0].mxu0
        %v5693 = vpop.f32.mrb[0].mxu0
        %v5694 = vadd.f32 %v5597, %v5693
        %v5695 = vpop.f32.mrb[0].mxu0
        %5696 = vmatprep.mubr.bf16.mxu0 0
        %5697 = vmatmul.mubr.bf16.gmra.mrb[0].mxu0 %v5158
        %v5698 = vpop.f32.mrb[0].mxu0
        %v5699 = vadd.f32 %v5602, %v5698
        %v5700 = vpop.f32.mrb[0].mxu0
        %v5701 = vpop.f32.mrb[0].mxu0
        %v5702 = vadd.f32 %v5605, %v5701
        %v5703 = vpop.f32.mrb[0].mxu0
        %5704 = vmatprep.mubr.bf16.mxu0 0
        %5705 = vmatmul.mubr.bf16.gmra.mrb[0].mxu0 %v5160
        %v5706 = vpop.f32.mrb[0].mxu0
        %v5707 = vadd.f32 %v5610, %v5706
        %v5708 = vpop.f32.mrb[0].mxu0
        %v5709 = vpop.f32.mrb[0].mxu0
        %v5710 = vadd.f32 %v5613, %v5709
        %v5711 = vpop.f32.mrb[0].mxu0
        %5712 = vmatprep.mubr.bf16.mxu0 0
        %5713 = vmatmul.mubr.bf16.gmra.mrb[0].mxu0 %v5162
        %v5714 = vpop.f32.mrb[0].mxu0
        %v5715 = vadd.f32 %v5618, %v5714
        %v5716 = vpop.f32.mrb[0].mxu0
        %v5717 = vpop.f32.mrb[0].mxu0
        %v5718 = vadd.f32 %v5621, %v5717
        %v5719 = vpop.f32.mrb[0].mxu0
        %5720 = vmatprep.mubr.bf16.mxu0 0
        %5721 = vmatmul.mubr.bf16.gmra.mrb[0].mxu0 %v5164
        %v5722 = vpop.f32.mrb[0].mxu0
        %v5723 = vadd.f32 %v5626, %v5722
        %v5724 = vpop.f32.mrb[0].mxu0
        %v5725 = vpop.f32.mrb[0].mxu0
        %v5726 = vadd.f32 %v5629, %v5725
        %v5727 = vpop.f32.mrb[0].mxu0
        %5728 = vdwg.mxu0
        %v5777 = vunpack.c.l.b16 %v5295
        %v5778 = vunpack.c.l.b16 %v5296
        %v5779 = vunpack.c.l.b16 %v5297
        %v5780 = vunpack.c.l.b16 %v5298
        %v5781 = vunpack.c.l.b16 %v5299
        %v5782 = vunpack.c.l.b16 %v5300
        %v5783 = vunpack.c.l.b16 %v5301
        %v5784 = vunpack.c.l.b16 %v5302
        %v5785 = vunpack.c.l.b16 %v5303
        %v5786 = vunpack.c.l.b16 %v5304
        %v5787 = vunpack.c.l.b16 %v5305
        %v5788 = vunpack.c.l.b16 %v5306
        %v5789 = vunpack.c.l.b16 %v5307
        %v5790 = vunpack.c.l.b16 %v5308
        %v5791 = vunpack.c.l.b16 %v5309
        %v5792 = vunpack.c.l.b16 %v5310
        %v5793 = vunpack.c.l.b16 %v5311
        %v5794 = vunpack.c.l.b16 %v5312
        %v5795 = vunpack.c.l.b16 %v5313
        %v5796 = vunpack.c.l.b16 %v5314
        %v5797 = vunpack.c.l.b16 %v5315
        %v5798 = vunpack.c.l.b16 %v5316
        %v5799 = vunpack.c.l.b16 %v5317
        %v5800 = vunpack.c.l.b16 %v5318
        %v5801 = vunpack.c.l.b16 %v5319
        %v5802 = vunpack.c.l.b16 %v5320
        %v5803 = vunpack.c.l.b16 %v5321
        %v5804 = vunpack.c.l.b16 %v5322
        %v5805 = vunpack.c.l.b16 %v5323
        %v5806 = vunpack.c.l.b16 %v5324
        %v5807 = vunpack.c.l.b16 %v5325
        %v5808 = vunpack.c.l.b16 %v5326
        %v5809 = vunpack.c.l.b16 %v5327
        %v5810 = vunpack.c.l.b16 %v5328
        %v5811 = vunpack.c.l.b16 %v5329
        %v5812 = vunpack.c.l.b16 %v5330
        %v5813 = vunpack.c.l.b16 %v5331
        %v5814 = vunpack.c.l.b16 %v5332
        %v5815 = vunpack.c.l.b16 %v5333
        %v5816 = vunpack.c.l.b16 %v5334
        %v5817 = vunpack.c.l.b16 %v5335
        %v5818 = vunpack.c.l.b16 %v5336
        %v5819 = vunpack.c.l.b16 %v5337
        %v5820 = vunpack.c.l.b16 %v5338
        %v5821 = vunpack.c.l.b16 %v5339
        %v5822 = vunpack.c.l.b16 %v5340
        %v5823 = vunpack.c.l.b16 %v5341
        %v5824 = vunpack.c.l.b16 %v5342
        %v5825 = vpack.c.b16 %v5778, %v5777
        %v5826 = vpack.c.b16 %v5780, %v5779
        %v5827 = vpack.c.b16 %v5782, %v5781
        %v5828 = vpack.c.b16 %v5784, %v5783
        %v5829 = vpack.c.b16 %v5786, %v5785
        %v5830 = vpack.c.b16 %v5788, %v5787
        %v5831 = vpack.c.b16 %v5790, %v5789
        %v5832 = vpack.c.b16 %v5792, %v5791
        %v5833 = vpack.c.b16 %v5794, %v5793
        %v5834 = vpack.c.b16 %v5796, %v5795
        %v5835 = vpack.c.b16 %v5798, %v5797
        %v5836 = vpack.c.b16 %v5800, %v5799
        %v5837 = vpack.c.b16 %v5802, %v5801
        %v5838 = vpack.c.b16 %v5804, %v5803
        %v5839 = vpack.c.b16 %v5806, %v5805
        %v5840 = vpack.c.b16 %v5808, %v5807
        %v5841 = vpack.c.b16 %v5810, %v5809
        %v5842 = vpack.c.b16 %v5812, %v5811
        %v5843 = vpack.c.b16 %v5814, %v5813
        %v5844 = vpack.c.b16 %v5816, %v5815
        %v5845 = vpack.c.b16 %v5818, %v5817
        %v5846 = vpack.c.b16 %v5820, %v5819
        %v5847 = vpack.c.b16 %v5822, %v5821
        %v5848 = vpack.c.b16 %v5824, %v5823
        %5873 = vmatprep.subr.bf16.mxu0 0
        %5874 = vmatpush1.bf16.msra.mxu0 %v5825
        %5875 = vmatprep.subr.bf16.mxu0 0
        %5876 = vmatpush1.bf16.msra.mxu0 %v5826
        %5877 = vmatprep.subr.bf16.mxu0 0
        %5878 = vmatpush1.bf16.msra.mxu0 %v5827
        %5879 = vmatprep.subr.bf16.mxu0 0
        %5880 = vmatpush1.bf16.msra.mxu0 %v5828
        %5881 = vmatprep.subr.bf16.mxu0 0
        %5882 = vmatpush1.bf16.msra.mxu0 %v5829
        %5883 = vmatprep.subr.bf16.mxu0 0
        %5884 = vmatpush1.bf16.msra.mxu0 %v5830
        %5885 = vmatprep.subr.bf16.mxu0 0
        %5886 = vmatpush1.bf16.msra.mxu0 %v5831
        %5887 = vmatprep.subr.bf16.mxu0 0
        %5888 = vmatpush1.bf16.msra.mxu0 %v5832
        %5889 = vmatprep.subr.bf16.mxu0 0
        %5890 = vmatpush1.bf16.msra.mxu0 %v5833
        %5891 = vmatprep.subr.bf16.mxu0 0
        %5892 = vmatpush1.bf16.msra.mxu0 %v5834
        %5893 = vmatprep.subr.bf16.mxu0 0
        %5894 = vmatpush1.bf16.msra.mxu0 %v5835
        %5895 = vmatprep.subr.bf16.mxu0 0
        %5896 = vmatpush1.bf16.msra.mxu0 %v5836
        %5897 = vmatprep.subr.bf16.mxu0 0
        %5898 = vmatpush1.bf16.msra.mxu0 %v5837
        %5899 = vmatprep.subr.bf16.mxu0 0
        %5900 = vmatpush1.bf16.msra.mxu0 %v5838
        %5901 = vmatprep.subr.bf16.mxu0 0
        %5902 = vmatpush1.bf16.msra.mxu0 %v5839
        %5903 = vmatprep.subr.bf16.mxu0 0
        %5904 = vmatpush1.bf16.msra.mxu0 %v5840
        %5905 = vmatprep.mubr.bf16.mxu0 %v5188
        %5906 = vmatmul.mubr.bf16.gmra.mrb[0].mxu0 %v5176
        %v5907 = vpop.f32.mrb[0].mxu0
        %v5908 = vadd.f32 %v5667, %v5907
        %v5909 = vpop.f32.mrb[0].mxu0
        %v5910 = vpop.f32.mrb[0].mxu0
        %v5911 = vadd.f32 %v5670, %v5910
        %v5912 = vpop.f32.mrb[0].mxu0
        %5913 = vmatprep.mubr.bf16.mxu0 %v5200
        %5914 = vmatmul.mubr.bf16.gmra.mrb[0].mxu0 %v5188
        %v5915 = vpop.f32.mrb[0].mxu0
        %v5916 = vadd.f32 %v5675, %v5915
        %v5917 = vpop.f32.mrb[0].mxu0
        %v5918 = vpop.f32.mrb[0].mxu0
        %v5919 = vadd.f32 %v5678, %v5918
        %v5920 = vpop.f32.mrb[0].mxu0
        %5921 = vmatprep.mubr.bf16.mxu0 %v5212
        %5922 = vmatmul.mubr.bf16.gmra.mrb[0].mxu0 %v5200
        %v5923 = vpop.f32.mrb[0].mxu0
        %v5924 = vadd.f32 %v5683, %v5923
        %v5925 = vpop.f32.mrb[0].mxu0
        %v5926 = vpop.f32.mrb[0].mxu0
        %v5927 = vadd.f32 %v5686, %v5926
        %v5928 = vpop.f32.mrb[0].mxu0
        %5929 = vmatprep.mubr.bf16.mxu0 %v5224
        %5930 = vmatmul.mubr.bf16.gmra.mrb[0].mxu0 %v5212
        %v5931 = vpop.f32.mrb[0].mxu0
        %v5932 = vadd.f32 %v5691, %v5931
        %v5933 = vpop.f32.mrb[0].mxu0
        %v5934 = vpop.f32.mrb[0].mxu0
        %v5935 = vadd.f32 %v5694, %v5934
        %v5936 = vpop.f32.mrb[0].mxu0
        %5937 = vmatprep.mubr.bf16.mxu0 %v5236
        %5938 = vmatmul.mubr.bf16.gmra.mrb[0].mxu0 %v5224
        %v5939 = vpop.f32.mrb[0].mxu0
        %v5940 = vadd.f32 %v5699, %v5939
        %v5941 = vpop.f32.mrb[0].mxu0
        %v5942 = vpop.f32.mrb[0].mxu0
        %v5943 = vadd.f32 %v5702, %v5942
        %v5944 = vpop.f32.mrb[0].mxu0
        %5945 = vmatprep.mubr.bf16.mxu0 %v5248
        %5946 = vmatmul.mubr.bf16.gmra.mrb[0].mxu0 %v5236
        %v5947 = vpop.f32.mrb[0].mxu0
        %v5948 = vadd.f32 %v5707, %v5947
        %v5949 = vpop.f32.mrb[0].mxu0
        %v5950 = vpop.f32.mrb[0].mxu0
        %v5951 = vadd.f32 %v5710, %v5950
        %v5952 = vpop.f32.mrb[0].mxu0
        %5953 = vmatprep.mubr.bf16.mxu0 %v5260
        %5954 = vmatmul.mubr.bf16.gmra.mrb[0].mxu0 %v5248
        %v5955 = vpop.f32.mrb[0].mxu0
        %v5956 = vadd.f32 %v5715, %v5955
        %v5957 = vpop.f32.mrb[0].mxu0
        %v5958 = vpop.f32.mrb[0].mxu0
        %v5959 = vadd.f32 %v5718, %v5958
        %v5960 = vpop.f32.mrb[0].mxu0
        %5961 = vmatprep.mubr.bf16.mxu0 %v5272
        %5962 = vmatmul.mubr.bf16.gmra.mrb[0].mxu0 %v5260
        %v5963 = vpop.f32.mrb[0].mxu0
        %v5964 = vadd.f32 %v5723, %v5963
        %v5965 = vpop.f32.mrb[0].mxu0
        %v5966 = vpop.f32.mrb[0].mxu0
        %v5967 = vadd.f32 %v5726, %v5966
        %v5968 = vpop.f32.mrb[0].mxu0
        %5969 = vdwg.mxu0
        %5970 = vmatprep.subr.bf16.mxu0 0
        %5971 = vmatpush1.bf16.msra.mxu0 %v5841
        %5972 = vmatprep.subr.bf16.mxu0 0
        %5973 = vmatpush1.bf16.msra.mxu0 %v5842
        %5974 = vmatprep.subr.bf16.mxu0 0
        %5975 = vmatpush1.bf16.msra.mxu0 %v5843
        %5976 = vmatprep.subr.bf16.mxu0 0
        %5977 = vmatpush1.bf16.msra.mxu0 %v5844
        %5978 = vmatprep.subr.bf16.mxu0 0
        %5979 = vmatpush1.bf16.msra.mxu0 %v5845
        %5980 = vmatprep.subr.bf16.mxu0 0
        %5981 = vmatpush1.bf16.msra.mxu0 %v5846
        %5982 = vmatprep.subr.bf16.mxu0 0
        %5983 = vmatpush1.bf16.msra.mxu0 %v5847
        %5984 = vmatprep.subr.bf16.mxu0 0
        %5985 = vmatpush1.bf16.msra.mxu0 %v5848
        %5986 = vmatprep.subr.bf16.mxu0 0
        %5987 = vmatpush1.bf16.msra.mxu0 0
        %5988 = vmatprep.subr.bf16.mxu0 0
        %5989 = vmatpush1.bf16.msra.mxu0 0
        %5990 = vmatprep.subr.bf16.mxu0 0
        %5991 = vmatpush1.bf16.msra.mxu0 0
        %5992 = vmatprep.subr.bf16.mxu0 0
        %5993 = vmatpush1.bf16.msra.mxu0 0
        %5994 = vmatprep.subr.bf16.mxu0 0
        %5995 = vmatpush1.bf16.msra.mxu0 0
        %5996 = vmatprep.subr.bf16.mxu0 0
        %5997 = vmatpush1.bf16.msra.mxu0 0
        %5998 = vmatprep.subr.bf16.mxu0 0
        %5999 = vmatpush1.bf16.msra.mxu0 0
        %6000 = vmatprep.subr.bf16.mxu0 0
        %6001 = vmatpush1.bf16.msra.mxu0 0
        %6002 = vmatprep.mubr.bf16.mxu0 0
        %6003 = vmatmul.mubr.bf16.gmra.mrb[0].mxu0 %v5200
        %v6004 = vpop.f32.mrb[0].mxu0
        %v6005 = vadd.f32 %v5908, %v6004
        %v6006 = vpop.f32.mrb[0].mxu0
        %v6007 = vpop.f32.mrb[0].mxu0
        %v6008 = vadd.f32 %v5911, %v6007
        %v6009 = vpop.f32.mrb[0].mxu0
        %6010 = vmatprep.mubr.bf16.mxu0 0
        %6011 = vmatmul.mubr.bf16.gmra.mrb[0].mxu0 %v5212
        %v6012 = vpop.f32.mrb[0].mxu0
        %v6013 = vadd.f32 %v5916, %v6012
        %v6014 = vpop.f32.mrb[0].mxu0
        %v6015 = vpop.f32.mrb[0].mxu0
        %v6016 = vadd.f32 %v5919, %v6015
        %v6017 = vpop.f32.mrb[0].mxu0
        %6018 = vmatprep.mubr.bf16.mxu0 0
        %6019 = vmatmul.mubr.bf16.gmra.mrb[0].mxu0 %v5224
        %v6020 = vpop.f32.mrb[0].mxu0
        %v6021 = vadd.f32 %v5924, %v6020
        %v6022 = vpop.f32.mrb[0].mxu0
        %v6023 = vpop.f32.mrb[0].mxu0
        %v6024 = vadd.f32 %v5927, %v6023
        %v6025 = vpop.f32.mrb[0].mxu0
        %6026 = vmatprep.mubr.bf16.mxu0 0
        %6027 = vmatmul.mubr.bf16.gmra.mrb[0].mxu0 %v5236
        %v6028 = vpop.f32.mrb[0].mxu0
        %v6029 = vadd.f32 %v5932, %v6028
        %v6030 = vpop.f32.mrb[0].mxu0
        %v6031 = vpop.f32.mrb[0].mxu0
        %v6032 = vadd.f32 %v5935, %v6031
        %v6033 = vpop.f32.mrb[0].mxu0
        %6034 = vmatprep.mubr.bf16.mxu0 0
        %6035 = vmatmul.mubr.bf16.gmra.mrb[0].mxu0 %v5248
        %v6036 = vpop.f32.mrb[0].mxu0
        %v6037 = vadd.f32 %v5940, %v6036
        %v6038 = vpop.f32.mrb[0].mxu0
        %v6039 = vpop.f32.mrb[0].mxu0
        %v6040 = vadd.f32 %v5943, %v6039
        %v6041 = vpop.f32.mrb[0].mxu0
        %6042 = vmatprep.mubr.bf16.mxu0 0
        %6043 = vmatmul.mubr.bf16.gmra.mrb[0].mxu0 %v5260
        %v6044 = vpop.f32.mrb[0].mxu0
        %v6045 = vadd.f32 %v5948, %v6044
        %v6046 = vpop.f32.mrb[0].mxu0
        %v6047 = vpop.f32.mrb[0].mxu0
        %v6048 = vadd.f32 %v5951, %v6047
        %v6049 = vpop.f32.mrb[0].mxu0
        %6050 = vmatprep.mubr.bf16.mxu0 0
        %6051 = vmatmul.mubr.bf16.gmra.mrb[0].mxu0 %v5272
        %v6052 = vpop.f32.mrb[0].mxu0
        %v6053 = vadd.f32 %v5956, %v6052
        %v6054 = vpop.f32.mrb[0].mxu0
        %v6055 = vpop.f32.mrb[0].mxu0
        %v6056 = vadd.f32 %v5959, %v6055
        %v6057 = vpop.f32.mrb[0].mxu0
        %6058 = vmatprep.mubr.bf16.mxu0 0
        %6059 = vmatmul.mubr.bf16.gmra.mrb[0].mxu0 %v5284
        %v6060 = vpop.f32.mrb[0].mxu0
        %v6061 = vadd.f32 %v5964, %v6060
        %v6062 = vpop.f32.mrb[0].mxu0
        %v6063 = vpop.f32.mrb[0].mxu0
        %v6064 = vadd.f32 %v5967, %v6063
        %v6065 = vpop.f32.mrb[0].mxu0
        %6066 = vdwg.mxu0
        %v6067 = vld [vmem:[%s5144 + $0x8] sm:$0xff]
        %v6068 = vld [vmem:[%s5144 + $0x10] sm:$0x1]
        %v6069 = vld [vmem:[%s5144 + $0x20] sm:$0xff]
        %v6070 = vld [vmem:[%s5144 + $0x28] sm:$0x1]
        %v6071 = vld [vmem:[%s5144 + $0x38] sm:$0xff]
        %v6072 = vld [vmem:[%s5144 + $0x40] sm:$0x1]
        %v6073 = vld [vmem:[%s5144 + $0x50] sm:$0xff]
        %v6074 = vld [vmem:[%s5144 + $0x58] sm:$0x1]
        %v6075 = vld [vmem:[%s5144 + $0x68] sm:$0xff]
        %v6076 = vld [vmem:[%s5144 + $0x70] sm:$0x1]
        %v6077 = vld [vmem:[%s5144 + $0x80] sm:$0xff]
        %v6078 = vld [vmem:[%s5144 + $0x88] sm:$0x1]
        %v6079 = vld [vmem:[%s5144 + $0x98] sm:$0xff]
        %v6080 = vld [vmem:[%s5144 + $0xa0] sm:$0x1]
        %v6081 = vld [vmem:[%s5144 + $0xb0] sm:$0xff]
        %v6082 = vld [vmem:[%s5144 + $0xb8] sm:$0x1]
        %v6083 = vld [vmem:[%s5144 + $0xc8] sm:$0xff]
        %v6084 = vld [vmem:[%s5144 + $0xd0] sm:$0x1]
        %v6085 = vld [vmem:[%s5144 + $0xe0] sm:$0xff]
        %v6086 = vld [vmem:[%s5144 + $0xe8] sm:$0x1]
        %v6088 = vshrl.u32 %v6067, 16
        %v6090 = vshll.u32 %v6067, 16
        %v6092 = vrot.slane %v6090, 1
        %v6093 = vor.u32 %v6088, %v6092
        %v6095 = vshll.u32 %v6068, 16
        %v6097 = vrot.slane %v6095, 1
        %v6098 = vsel %vm509, %v6093, %v6097
        %v6100 = vshrl.u32 %v6069, 16
        %v6102 = vshll.u32 %v6069, 16
        %v6104 = vrot.slane %v6102, 1
        %v6105 = vor.u32 %v6100, %v6104
        %v6107 = vshll.u32 %v6070, 16
        %v6109 = vrot.slane %v6107, 1
        %v6110 = vsel %vm509, %v6105, %v6109
        %v6112 = vshrl.u32 %v6071, 16
        %v6114 = vshll.u32 %v6071, 16
        %v6116 = vrot.slane %v6114, 1
        %v6117 = vor.u32 %v6112, %v6116
        %v6119 = vshll.u32 %v6072, 16
        %v6121 = vrot.slane %v6119, 1
        %v6122 = vsel %vm509, %v6117, %v6121
        %v6124 = vshrl.u32 %v6073, 16
        %v6126 = vshll.u32 %v6073, 16
        %v6128 = vrot.slane %v6126, 1
        %v6129 = vor.u32 %v6124, %v6128
        %v6131 = vshll.u32 %v6074, 16
        %v6133 = vrot.slane %v6131, 1
        %v6134 = vsel %vm509, %v6129, %v6133
        %v6136 = vshrl.u32 %v6075, 16
        %v6138 = vshll.u32 %v6075, 16
        %v6140 = vrot.slane %v6138, 1
        %v6141 = vor.u32 %v6136, %v6140
        %v6143 = vshll.u32 %v6076, 16
        %v6145 = vrot.slane %v6143, 1
        %v6146 = vsel %vm509, %v6141, %v6145
        %v6148 = vshrl.u32 %v6077, 16
        %v6150 = vshll.u32 %v6077, 16
        %v6152 = vrot.slane %v6150, 1
        %v6153 = vor.u32 %v6148, %v6152
        %v6155 = vshll.u32 %v6078, 16
        %v6157 = vrot.slane %v6155, 1
        %v6158 = vsel %vm509, %v6153, %v6157
        %v6160 = vshrl.u32 %v6079, 16
        %v6162 = vshll.u32 %v6079, 16
        %v6164 = vrot.slane %v6162, 1
        %v6165 = vor.u32 %v6160, %v6164
        %v6167 = vshll.u32 %v6080, 16
        %v6169 = vrot.slane %v6167, 1
        %v6170 = vsel %vm509, %v6165, %v6169
        %v6172 = vshrl.u32 %v6081, 16
        %v6174 = vshll.u32 %v6081, 16
        %v6176 = vrot.slane %v6174, 1
        %v6177 = vor.u32 %v6172, %v6176
        %v6179 = vshll.u32 %v6082, 16
        %v6181 = vrot.slane %v6179, 1
        %v6182 = vsel %vm509, %v6177, %v6181
        %v6184 = vshrl.u32 %v6083, 16
        %v6186 = vshll.u32 %v6083, 16
        %v6188 = vrot.slane %v6186, 1
        %v6189 = vor.u32 %v6184, %v6188
        %v6191 = vshll.u32 %v6084, 16
        %v6193 = vrot.slane %v6191, 1
        %v6194 = vsel %vm509, %v6189, %v6193
        %v6196 = vshrl.u32 %v6085, 16
        %v6198 = vshll.u32 %v6085, 16
        %v6200 = vrot.slane %v6198, 1
        %v6201 = vor.u32 %v6196, %v6200
        %v6203 = vshll.u32 %v6086, 16
        %v6205 = vrot.slane %v6203, 1
        %v6206 = vsel %vm509, %v6201, %v6205
        %v6217 = vld [vmem:[%s4540] sm:$0xf]
        %v6218 = vld [vmem:[%s4540 + $0x4] sm:$0xf]
        %v6219 = vld [vmem:[%s4540 + $0x8] sm:$0xf]
        %v6220 = vld [vmem:[%s4540 + $0xc] sm:$0xf]
        %v6221 = vld [vmem:[%s4540 + $0x10] sm:$0xf]
        %v6222 = vld [vmem:[%s4540 + $0x14] sm:$0xf]
        %v6223 = vld [vmem:[%s4540 + $0x18] sm:$0xf]
        %v6224 = vld [vmem:[%s4540 + $0x1c] sm:$0xf]
        %v6225 = vld [vmem:[%s4540 + $0x20] sm:$0xf]
        %v6226 = vld [vmem:[%s4540 + $0x24] sm:$0xf]
        %v6227 = vld [vmem:[%s4540 + $0x28] sm:$0xf]
        %v6228 = vld [vmem:[%s4540 + $0x2c] sm:$0xf]
        %v6229 = vld [vmem:[%s4540 + $0x30] sm:$0xf]
        %v6230 = vld [vmem:[%s4540 + $0x34] sm:$0xf]
        %v6231 = vld [vmem:[%s4540 + $0x38] sm:$0xf]
        %v6232 = vld [vmem:[%s4540 + $0x3c] sm:$0xf]
        %v6233 = vld [vmem:[%s4540 + $0x40] sm:$0xf]
        %v6234 = vld [vmem:[%s4540 + $0x44] sm:$0xf]
        %v6235 = vld [vmem:[%s4540 + $0x48] sm:$0xf]
        %v6236 = vld [vmem:[%s4540 + $0x4c] sm:$0xf]
        %v6237 = vld [vmem:[%s4540 + $0x50] sm:$0xf]
        %v6238 = vld [vmem:[%s4540 + $0x54] sm:$0xf]
        %v6239 = vld [vmem:[%s4540 + $0x58] sm:$0xf]
        %v6240 = vld [vmem:[%s4540 + $0x5c] sm:$0xf]
        %v6241 = vld [vmem:[%s4540 + $0x60] sm:$0xf]
        %v6242 = vld [vmem:[%s4540 + $0x64] sm:$0xf]
        %v6243 = vld [vmem:[%s4540 + $0x68] sm:$0xf]
        %v6244 = vld [vmem:[%s4540 + $0x6c] sm:$0xf]
        %v6245 = vld [vmem:[%s4540 + $0x70] sm:$0xf]
        %v6246 = vld [vmem:[%s4540 + $0x74] sm:$0xf]
        %v6247 = vld [vmem:[%s4540 + $0x78] sm:$0xf]
        %v6248 = vld [vmem:[%s4540 + $0x7c] sm:$0xf]
        %v6249 = vld [vmem:[%s4540 + $0x80] sm:$0xf]
        %v6250 = vld [vmem:[%s4540 + $0x84] sm:$0xf]
        %v6251 = vld [vmem:[%s4540 + $0x88] sm:$0xf]
        %v6252 = vld [vmem:[%s4540 + $0x8c] sm:$0xf]
        %v6253 = vld [vmem:[%s4540 + $0x90] sm:$0xf]
        %v6254 = vld [vmem:[%s4540 + $0x94] sm:$0xf]
        %v6255 = vld [vmem:[%s4540 + $0x98] sm:$0xf]
        %v6256 = vld [vmem:[%s4540 + $0x9c] sm:$0xf]
        %v6257 = vld [vmem:[%s4540 + $0xa0] sm:$0xf]
        %v6258 = vld [vmem:[%s4540 + $0xa4] sm:$0xf]
        %v6259 = vld [vmem:[%s4540 + $0xa8] sm:$0xf]
        %v6260 = vld [vmem:[%s4540 + $0xac] sm:$0xf]
        %v6261 = vld [vmem:[%s4540 + $0xb0] sm:$0xf]
        %v6262 = vld [vmem:[%s4540 + $0xb4] sm:$0xf]
        %v6263 = vld [vmem:[%s4540 + $0xb8] sm:$0xf]
        %v6264 = vld [vmem:[%s4540 + $0xbc] sm:$0xf]
        %v6313 = vunpack.c.l.b16 %v6217
        %v6314 = vunpack.c.l.b16 %v6218
        %v6315 = vunpack.c.l.b16 %v6219
        %v6316 = vunpack.c.l.b16 %v6220
        %v6317 = vunpack.c.l.b16 %v6221
        %v6318 = vunpack.c.l.b16 %v6222
        %v6319 = vunpack.c.l.b16 %v6223
        %v6320 = vunpack.c.l.b16 %v6224
        %v6321 = vunpack.c.l.b16 %v6225
        %v6322 = vunpack.c.l.b16 %v6226
        %v6323 = vunpack.c.l.b16 %v6227
        %v6324 = vunpack.c.l.b16 %v6228
        %v6325 = vunpack.c.l.b16 %v6229
        %v6326 = vunpack.c.l.b16 %v6230
        %v6327 = vunpack.c.l.b16 %v6231
        %v6328 = vunpack.c.l.b16 %v6232
        %v6329 = vunpack.c.l.b16 %v6233
        %v6330 = vunpack.c.l.b16 %v6234
        %v6331 = vunpack.c.l.b16 %v6235
        %v6332 = vunpack.c.l.b16 %v6236
        %v6333 = vunpack.c.l.b16 %v6237
        %v6334 = vunpack.c.l.b16 %v6238
        %v6335 = vunpack.c.l.b16 %v6239
        %v6336 = vunpack.c.l.b16 %v6240
        %v6337 = vunpack.c.l.b16 %v6241
        %v6338 = vunpack.c.l.b16 %v6242
        %v6339 = vunpack.c.l.b16 %v6243
        %v6340 = vunpack.c.l.b16 %v6244
        %v6341 = vunpack.c.l.b16 %v6245
        %v6342 = vunpack.c.l.b16 %v6246
        %v6343 = vunpack.c.l.b16 %v6247
        %v6344 = vunpack.c.l.b16 %v6248
        %v6345 = vunpack.c.l.b16 %v6249
        %v6346 = vunpack.c.l.b16 %v6250
        %v6347 = vunpack.c.l.b16 %v6251
        %v6348 = vunpack.c.l.b16 %v6252
        %v6349 = vunpack.c.l.b16 %v6253
        %v6350 = vunpack.c.l.b16 %v6254
        %v6351 = vunpack.c.l.b16 %v6255
        %v6352 = vunpack.c.l.b16 %v6256
        %v6353 = vunpack.c.l.b16 %v6257
        %v6354 = vunpack.c.l.b16 %v6258
        %v6355 = vunpack.c.l.b16 %v6259
        %v6356 = vunpack.c.l.b16 %v6260
        %v6357 = vunpack.c.l.b16 %v6261
        %v6358 = vunpack.c.l.b16 %v6262
        %v6359 = vunpack.c.l.b16 %v6263
        %v6360 = vunpack.c.l.b16 %v6264
        %v6361 = vpack.c.b16 %v6314, %v6313
        %v6362 = vpack.c.b16 %v6316, %v6315
        %v6363 = vpack.c.b16 %v6318, %v6317
        %v6364 = vpack.c.b16 %v6320, %v6319
        %v6365 = vpack.c.b16 %v6322, %v6321
        %v6366 = vpack.c.b16 %v6324, %v6323
        %v6367 = vpack.c.b16 %v6326, %v6325
        %v6368 = vpack.c.b16 %v6328, %v6327
        %v6369 = vpack.c.b16 %v6330, %v6329
        %v6370 = vpack.c.b16 %v6332, %v6331
        %v6371 = vpack.c.b16 %v6334, %v6333
        %v6372 = vpack.c.b16 %v6336, %v6335
        %v6373 = vpack.c.b16 %v6338, %v6337
        %v6374 = vpack.c.b16 %v6340, %v6339
        %v6375 = vpack.c.b16 %v6342, %v6341
        %v6376 = vpack.c.b16 %v6344, %v6343
        %v6377 = vpack.c.b16 %v6346, %v6345
        %v6378 = vpack.c.b16 %v6348, %v6347
        %v6379 = vpack.c.b16 %v6350, %v6349
        %v6380 = vpack.c.b16 %v6352, %v6351
        %v6381 = vpack.c.b16 %v6354, %v6353
        %v6382 = vpack.c.b16 %v6356, %v6355
        %v6383 = vpack.c.b16 %v6358, %v6357
        %v6384 = vpack.c.b16 %v6360, %v6359
        %6409 = vmatprep.subr.bf16.mxu0 0
        %6410 = vmatpush1.bf16.msra.mxu0 %v6361
        %6411 = vmatprep.subr.bf16.mxu0 0
        %6412 = vmatpush1.bf16.msra.mxu0 %v6362
        %6413 = vmatprep.subr.bf16.mxu0 0
        %6414 = vmatpush1.bf16.msra.mxu0 %v6363
        %6415 = vmatprep.subr.bf16.mxu0 0
        %6416 = vmatpush1.bf16.msra.mxu0 %v6364
        %6417 = vmatprep.subr.bf16.mxu0 0
        %6418 = vmatpush1.bf16.msra.mxu0 %v6365
        %6419 = vmatprep.subr.bf16.mxu0 0
        %6420 = vmatpush1.bf16.msra.mxu0 %v6366
        %6421 = vmatprep.subr.bf16.mxu0 0
        %6422 = vmatpush1.bf16.msra.mxu0 %v6367
        %6423 = vmatprep.subr.bf16.mxu0 0
        %6424 = vmatpush1.bf16.msra.mxu0 %v6368
        %6425 = vmatprep.subr.bf16.mxu0 0
        %6426 = vmatpush1.bf16.msra.mxu0 %v6369
        %6427 = vmatprep.subr.bf16.mxu0 0
        %6428 = vmatpush1.bf16.msra.mxu0 %v6370
        %6429 = vmatprep.subr.bf16.mxu0 0
        %6430 = vmatpush1.bf16.msra.mxu0 %v6371
        %6431 = vmatprep.subr.bf16.mxu0 0
        %6432 = vmatpush1.bf16.msra.mxu0 %v6372
        %6433 = vmatprep.subr.bf16.mxu0 0
        %6434 = vmatpush1.bf16.msra.mxu0 %v6373
        %6435 = vmatprep.subr.bf16.mxu0 0
        %6436 = vmatpush1.bf16.msra.mxu0 %v6374
        %6437 = vmatprep.subr.bf16.mxu0 0
        %6438 = vmatpush1.bf16.msra.mxu0 %v6375
        %6439 = vmatprep.subr.bf16.mxu0 0
        %6440 = vmatpush1.bf16.msra.mxu0 %v6376
        %6441 = vmatprep.mubr.bf16.mxu0 %v6110
        %6442 = vmatmul.mubr.bf16.gmra.mrb[0].mxu0 %v6098
        %v6443 = vpop.f32.mrb[0].mxu0
        %v6444 = vadd.f32 0.0, %v6443
        %v6445 = vpop.f32.mrb[0].mxu0
        %v6446 = vpop.f32.mrb[0].mxu0
        %v6447 = vadd.f32 0.0, %v6446
        %v6448 = vpop.f32.mrb[0].mxu0
        %6449 = vmatprep.mubr.bf16.mxu0 %v6122
        %6450 = vmatmul.mubr.bf16.gmra.mrb[0].mxu0 %v6110
        %v6451 = vpop.f32.mrb[0].mxu0
        %v6452 = vadd.f32 0.0, %v6451
        %v6453 = vpop.f32.mrb[0].mxu0
        %v6454 = vpop.f32.mrb[0].mxu0
        %v6455 = vadd.f32 0.0, %v6454
        %v6456 = vpop.f32.mrb[0].mxu0
        %6457 = vmatprep.mubr.bf16.mxu0 %v6134
        %6458 = vmatmul.mubr.bf16.gmra.mrb[0].mxu0 %v6122
        %v6459 = vpop.f32.mrb[0].mxu0
        %v6460 = vadd.f32 0.0, %v6459
        %v6461 = vpop.f32.mrb[0].mxu0
        %v6462 = vpop.f32.mrb[0].mxu0
        %v6463 = vadd.f32 0.0, %v6462
        %v6464 = vpop.f32.mrb[0].mxu0
        %6465 = vmatprep.mubr.bf16.mxu0 %v6146
        %6466 = vmatmul.mubr.bf16.gmra.mrb[0].mxu0 %v6134
        %v6467 = vpop.f32.mrb[0].mxu0
        %v6468 = vadd.f32 0.0, %v6467
        %v6469 = vpop.f32.mrb[0].mxu0
        %v6470 = vpop.f32.mrb[0].mxu0
        %v6471 = vadd.f32 0.0, %v6470
        %v6472 = vpop.f32.mrb[0].mxu0
        %6473 = vmatprep.mubr.bf16.mxu0 %v6158
        %6474 = vmatmul.mubr.bf16.gmra.mrb[0].mxu0 %v6146
        %v6475 = vpop.f32.mrb[0].mxu0
        %v6476 = vadd.f32 0.0, %v6475
        %v6477 = vpop.f32.mrb[0].mxu0
        %v6478 = vpop.f32.mrb[0].mxu0
        %v6479 = vadd.f32 0.0, %v6478
        %v6480 = vpop.f32.mrb[0].mxu0
        %6481 = vmatprep.mubr.bf16.mxu0 %v6170
        %6482 = vmatmul.mubr.bf16.gmra.mrb[0].mxu0 %v6158
        %v6483 = vpop.f32.mrb[0].mxu0
        %v6484 = vadd.f32 0.0, %v6483
        %v6485 = vpop.f32.mrb[0].mxu0
        %v6486 = vpop.f32.mrb[0].mxu0
        %v6487 = vadd.f32 0.0, %v6486
        %v6488 = vpop.f32.mrb[0].mxu0
        %6489 = vmatprep.mubr.bf16.mxu0 %v6182
        %6490 = vmatmul.mubr.bf16.gmra.mrb[0].mxu0 %v6170
        %v6491 = vpop.f32.mrb[0].mxu0
        %v6492 = vadd.f32 0.0, %v6491
        %v6493 = vpop.f32.mrb[0].mxu0
        %v6494 = vpop.f32.mrb[0].mxu0
        %v6495 = vadd.f32 0.0, %v6494
        %v6496 = vpop.f32.mrb[0].mxu0
        %6497 = vmatprep.mubr.bf16.mxu0 %v6194
        %6498 = vmatmul.mubr.bf16.gmra.mrb[0].mxu0 %v6182
        %v6499 = vpop.f32.mrb[0].mxu0
        %v6500 = vadd.f32 0.0, %v6499
        %v6501 = vpop.f32.mrb[0].mxu0
        %v6502 = vpop.f32.mrb[0].mxu0
        %v6503 = vadd.f32 0.0, %v6502
        %v6504 = vpop.f32.mrb[0].mxu0
        %6505 = vdwg.mxu0
        %6506 = vmatprep.subr.bf16.mxu0 0
        %6507 = vmatpush1.bf16.msra.mxu0 %v6377
        %6508 = vmatprep.subr.bf16.mxu0 0
        %6509 = vmatpush1.bf16.msra.mxu0 %v6378
        %6510 = vmatprep.subr.bf16.mxu0 0
        %6511 = vmatpush1.bf16.msra.mxu0 %v6379
        %6512 = vmatprep.subr.bf16.mxu0 0
        %6513 = vmatpush1.bf16.msra.mxu0 %v6380
        %6514 = vmatprep.subr.bf16.mxu0 0
        %6515 = vmatpush1.bf16.msra.mxu0 %v6381
        %6516 = vmatprep.subr.bf16.mxu0 0
        %6517 = vmatpush1.bf16.msra.mxu0 %v6382
        %6518 = vmatprep.subr.bf16.mxu0 0
        %6519 = vmatpush1.bf16.msra.mxu0 %v6383
        %6520 = vmatprep.subr.bf16.mxu0 0
        %6521 = vmatpush1.bf16.msra.mxu0 %v6384
        %6522 = vmatprep.subr.bf16.mxu0 0
        %6523 = vmatpush1.bf16.msra.mxu0 0
        %6524 = vmatprep.subr.bf16.mxu0 0
        %6525 = vmatpush1.bf16.msra.mxu0 0
        %6526 = vmatprep.subr.bf16.mxu0 0
        %6527 = vmatpush1.bf16.msra.mxu0 0
        %6528 = vmatprep.subr.bf16.mxu0 0
        %6529 = vmatpush1.bf16.msra.mxu0 0
        %6530 = vmatprep.subr.bf16.mxu0 0
        %6531 = vmatpush1.bf16.msra.mxu0 0
        %6532 = vmatprep.subr.bf16.mxu0 0
        %6533 = vmatpush1.bf16.msra.mxu0 0
        %6534 = vmatprep.subr.bf16.mxu0 0
        %6535 = vmatpush1.bf16.msra.mxu0 0
        %6536 = vmatprep.subr.bf16.mxu0 0
        %6537 = vmatpush1.bf16.msra.mxu0 0
        %6538 = vmatprep.mubr.bf16.mxu0 0
        %6539 = vmatmul.mubr.bf16.gmra.mrb[0].mxu0 %v6122
        %v6540 = vpop.f32.mrb[0].mxu0
        %v6541 = vadd.f32 %v6444, %v6540
        %v6542 = vpop.f32.mrb[0].mxu0
        %v6543 = vpop.f32.mrb[0].mxu0
        %v6544 = vadd.f32 %v6447, %v6543
        %v6545 = vpop.f32.mrb[0].mxu0
        %6546 = vmatprep.mubr.bf16.mxu0 0
        %6547 = vmatmul.mubr.bf16.gmra.mrb[0].mxu0 %v6134
        %v6548 = vpop.f32.mrb[0].mxu0
        %v6549 = vadd.f32 %v6452, %v6548
        %v6550 = vpop.f32.mrb[0].mxu0
        %v6551 = vpop.f32.mrb[0].mxu0
        %v6552 = vadd.f32 %v6455, %v6551
        %v6553 = vpop.f32.mrb[0].mxu0
        %6554 = vmatprep.mubr.bf16.mxu0 0
        %6555 = vmatmul.mubr.bf16.gmra.mrb[0].mxu0 %v6146
        %v6556 = vpop.f32.mrb[0].mxu0
        %v6557 = vadd.f32 %v6460, %v6556
        %v6558 = vpop.f32.mrb[0].mxu0
        %v6559 = vpop.f32.mrb[0].mxu0
        %v6560 = vadd.f32 %v6463, %v6559
        %v6561 = vpop.f32.mrb[0].mxu0
        %6562 = vmatprep.mubr.bf16.mxu0 0
        %6563 = vmatmul.mubr.bf16.gmra.mrb[0].mxu0 %v6158
        %v6564 = vpop.f32.mrb[0].mxu0
        %v6565 = vadd.f32 %v6468, %v6564
        %v6566 = vpop.f32.mrb[0].mxu0
        %v6567 = vpop.f32.mrb[0].mxu0
        %v6568 = vadd.f32 %v6471, %v6567
        %v6569 = vpop.f32.mrb[0].mxu0
        %6570 = vmatprep.mubr.bf16.mxu0 0
        %6571 = vmatmul.mubr.bf16.gmra.mrb[0].mxu0 %v6170
        %v6572 = vpop.f32.mrb[0].mxu0
        %v6573 = vadd.f32 %v6476, %v6572
        %v6574 = vpop.f32.mrb[0].mxu0
        %v6575 = vpop.f32.mrb[0].mxu0
        %v6576 = vadd.f32 %v6479, %v6575
        %v6577 = vpop.f32.mrb[0].mxu0
        %6578 = vmatprep.mubr.bf16.mxu0 0
        %6579 = vmatmul.mubr.bf16.gmra.mrb[0].mxu0 %v6182
        %v6580 = vpop.f32.mrb[0].mxu0
        %v6581 = vadd.f32 %v6484, %v6580
        %v6582 = vpop.f32.mrb[0].mxu0
        %v6583 = vpop.f32.mrb[0].mxu0
        %v6584 = vadd.f32 %v6487, %v6583
        %v6585 = vpop.f32.mrb[0].mxu0
        %6586 = vmatprep.mubr.bf16.mxu0 0
        %6587 = vmatmul.mubr.bf16.gmra.mrb[0].mxu0 %v6194
        %v6588 = vpop.f32.mrb[0].mxu0
        %v6589 = vadd.f32 %v6492, %v6588
        %v6590 = vpop.f32.mrb[0].mxu0
        %v6591 = vpop.f32.mrb[0].mxu0
        %v6592 = vadd.f32 %v6495, %v6591
        %v6593 = vpop.f32.mrb[0].mxu0
        %6594 = vmatprep.mubr.bf16.mxu0 0
        %6595 = vmatmul.mubr.bf16.gmra.mrb[0].mxu0 %v6206
        %v6596 = vpop.f32.mrb[0].mxu0
        %v6597 = vadd.f32 %v6500, %v6596
        %v6598 = vpop.f32.mrb[0].mxu0
        %v6599 = vpop.f32.mrb[0].mxu0
        %v6600 = vadd.f32 %v6503, %v6599
        %v6601 = vpop.f32.mrb[0].mxu0
        %6602 = vdwg.mxu0
        %v6603 = vadd.f32 %v6005, %v6541
        %v6604 = vadd.f32 %v6008, %v6544
        %v6605 = vadd.f32 %v6013, %v6549
        %v6606 = vadd.f32 %v6016, %v6552
        %v6607 = vadd.f32 %v6021, %v6557
        %v6608 = vadd.f32 %v6024, %v6560
        %v6609 = vadd.f32 %v6029, %v6565
        %v6610 = vadd.f32 %v6032, %v6568
        %v6611 = vadd.f32 %v6037, %v6573
        %v6612 = vadd.f32 %v6040, %v6576
        %v6613 = vadd.f32 %v6045, %v6581
        %v6614 = vadd.f32 %v6048, %v6584
        %v6615 = vadd.f32 %v6053, %v6589
        %v6616 = vadd.f32 %v6056, %v6592
        %v6617 = vadd.f32 %v6061, %v6597
        %v6618 = vadd.f32 %v6064, %v6600
        %v6619 = vld [vmem:[#allocation11] sm:$0x1]
        %v6621 = vlaneseq
        %v6622 = vshrl.u32 %v6621, 7
        %v6623 = vsub.s32 0, %v6622
        %v6624 = vrot.slane %v6619, %v6623
        %v6626 = vadd.f32 %v6603, %v6624
        %v6627 = vadd.f32 %v6604, %v6624
        %v6628 = vadd.f32 %v6605, %v6624
        %v6629 = vadd.f32 %v6606, %v6624
        %v6630 = vadd.f32 %v6607, %v6624
        %v6631 = vadd.f32 %v6608, %v6624
        %v6632 = vadd.f32 %v6609, %v6624
        %v6633 = vadd.f32 %v6610, %v6624
        %v6634 = vadd.f32 %v6611, %v6624
        %v6635 = vadd.f32 %v6612, %v6624
        %v6636 = vadd.f32 %v6613, %v6624
        %v6637 = vadd.f32 %v6614, %v6624
        %v6638 = vadd.f32 %v6615, %v6624
        %v6639 = vadd.f32 %v6616, %v6624
        %v6640 = vadd.f32 %v6617, %v6624
        %v6641 = vadd.f32 %v6618, %v6624
        %s6642 = scalar_lea.vmem %s254, 108 [#allocation3]
        %v6643 = vld [vmem:[%s6642] sm:$0xf]
        %v6644 = vld [vmem:[%s6642 + $0x4] sm:$0xf]
        %v6645 = vld [vmem:[%s6642 + $0x8] sm:$0x1]
        %v6646 = vld [vmem:[%s6642 + $0xc] sm:$0xf]
        %v6647 = vld [vmem:[%s6642 + $0x10] sm:$0xf]
        %v6648 = vld [vmem:[%s6642 + $0x14] sm:$0x1]
        %v6649 = vld [vmem:[%s6642 + $0x18] sm:$0xf]
        %v6650 = vld [vmem:[%s6642 + $0x1c] sm:$0xf]
        %v6651 = vld [vmem:[%s6642 + $0x20] sm:$0x1]
        %v6652 = vld [vmem:[%s6642 + $0x24] sm:$0xf]
        %v6653 = vld [vmem:[%s6642 + $0x28] sm:$0xf]
        %v6654 = vld [vmem:[%s6642 + $0x2c] sm:$0x1]
        %v6655 = vld [vmem:[%s6642 + $0x30] sm:$0xf]
        %v6656 = vld [vmem:[%s6642 + $0x34] sm:$0xf]
        %v6657 = vld [vmem:[%s6642 + $0x38] sm:$0x1]
        %v6658 = vld [vmem:[%s6642 + $0x3c] sm:$0xf]
        %v6659 = vld [vmem:[%s6642 + $0x40] sm:$0xf]
        %v6660 = vld [vmem:[%s6642 + $0x44] sm:$0x1]
        %v6661 = vld [vmem:[%s6642 + $0x48] sm:$0xf]
        %v6662 = vld [vmem:[%s6642 + $0x4c] sm:$0xf]
        %v6663 = vld [vmem:[%s6642 + $0x50] sm:$0x1]
        %v6664 = vld [vmem:[%s6642 + $0x54] sm:$0xf]
        %v6665 = vld [vmem:[%s6642 + $0x58] sm:$0xf]
        %v6666 = vld [vmem:[%s6642 + $0x5c] sm:$0x1]
        %v6667 = vunpack.c.l.bf16 %v6643
        %v6668 = vunpack.c.l.bf16 %v6644
        %v6669 = vunpack.c.l.bf16 %v6645
        %v6670 = vunpack.c.l.bf16 %v6646
        %v6671 = vunpack.c.l.bf16 %v6647
        %v6672 = vunpack.c.l.bf16 %v6648
        %v6673 = vunpack.c.l.bf16 %v6649
        %v6674 = vunpack.c.l.bf16 %v6650
        %v6675 = vunpack.c.l.bf16 %v6651
        %v6676 = vunpack.c.l.bf16 %v6652
        %v6677 = vunpack.c.l.bf16 %v6653
        %v6678 = vunpack.c.l.bf16 %v6654
        %v6679 = vunpack.c.l.bf16 %v6655
        %v6680 = vunpack.c.l.bf16 %v6656
        %v6681 = vunpack.c.l.bf16 %v6657
        %v6682 = vunpack.c.l.bf16 %v6658
        %v6683 = vunpack.c.l.bf16 %v6659
        %v6684 = vunpack.c.l.bf16 %v6660
        %v6685 = vunpack.c.l.bf16 %v6661
        %v6686 = vunpack.c.l.bf16 %v6662
        %v6687 = vunpack.c.l.bf16 %v6663
        %v6688 = vunpack.c.l.bf16 %v6664
        %v6689 = vunpack.c.l.bf16 %v6665
        %v6690 = vunpack.c.l.bf16 %v6666
        %v6715 = vrot.slane %v6667, 1
        %v6716 = vrot.slane %v6668, 1
        %v6717 = vsel %vm5039, %v6715, %v6716
        %v6718 = vrot.slane %v6669, 1
        %v6719 = vsel %vm5039, %v6716, %v6718
        %v6720 = vrot.slane %v6670, 1
        %v6721 = vrot.slane %v6671, 1
        %v6722 = vsel %vm5039, %v6720, %v6721
        %v6723 = vrot.slane %v6672, 1
        %v6724 = vsel %vm5039, %v6721, %v6723
        %v6725 = vrot.slane %v6673, 1
        %v6726 = vrot.slane %v6674, 1
        %v6727 = vsel %vm5039, %v6725, %v6726
        %v6728 = vrot.slane %v6675, 1
        %v6729 = vsel %vm5039, %v6726, %v6728
        %v6730 = vrot.slane %v6676, 1
        %v6731 = vrot.slane %v6677, 1
        %v6732 = vsel %vm5039, %v6730, %v6731
        %v6733 = vrot.slane %v6678, 1
        %v6734 = vsel %vm5039, %v6731, %v6733
        %v6735 = vrot.slane %v6679, 1
        %v6736 = vrot.slane %v6680, 1
        %v6737 = vsel %vm5039, %v6735, %v6736
        %v6738 = vrot.slane %v6681, 1
        %v6739 = vsel %vm5039, %v6736, %v6738
        %v6740 = vrot.slane %v6682, 1
        %v6741 = vrot.slane %v6683, 1
        %v6742 = vsel %vm5039, %v6740, %v6741
        %v6743 = vrot.slane %v6684, 1
        %v6744 = vsel %vm5039, %v6741, %v6743
        %v6745 = vrot.slane %v6685, 1
        %v6746 = vrot.slane %v6686, 1
        %v6747 = vsel %vm5039, %v6745, %v6746
        %v6748 = vrot.slane %v6687, 1
        %v6749 = vsel %vm5039, %v6746, %v6748
        %v6750 = vrot.slane %v6688, 1
        %v6751 = vrot.slane %v6689, 1
        %v6752 = vsel %vm5039, %v6750, %v6751
        %v6753 = vrot.slane %v6690, 1
        %v6754 = vsel %vm5039, %v6751, %v6753
        %v6771 = vadd.f32 %v6626, %v6717
        %v6772 = vadd.f32 %v6627, %v6719
        %v6773 = vadd.f32 %v6628, %v6722
        %v6774 = vadd.f32 %v6629, %v6724
        %v6775 = vadd.f32 %v6630, %v6727
        %v6776 = vadd.f32 %v6631, %v6729
        %v6777 = vadd.f32 %v6632, %v6732
        %v6778 = vadd.f32 %v6633, %v6734
        %v6779 = vadd.f32 %v6634, %v6737
        %v6780 = vadd.f32 %v6635, %v6739
        %v6781 = vadd.f32 %v6636, %v6742
        %v6782 = vadd.f32 %v6637, %v6744
        %v6783 = vadd.f32 %v6638, %v6747
        %v6784 = vadd.f32 %v6639, %v6749
        %v6785 = vadd.f32 %v6640, %v6752
        %v6786 = vadd.f32 %v6641, %v6754
        %v6787 = vmax.f32 %v6771, 0.0
        %v6788 = vmax.f32 %v6772, 0.0
        %v6789 = vmax.f32 %v6773, 0.0
        %v6790 = vmax.f32 %v6774, 0.0
        %v6791 = vmax.f32 %v6775, 0.0
        %v6792 = vmax.f32 %v6776, 0.0
        %v6793 = vmax.f32 %v6777, 0.0
        %v6794 = vmax.f32 %v6778, 0.0
        %v6795 = vmax.f32 %v6779, 0.0
        %v6796 = vmax.f32 %v6780, 0.0
        %v6797 = vmax.f32 %v6781, 0.0
        %v6798 = vmax.f32 %v6782, 0.0
        %v6799 = vmax.f32 %v6783, 0.0
        %v6800 = vmax.f32 %v6784, 0.0
        %v6801 = vmax.f32 %v6785, 0.0
        %v6802 = vmax.f32 %v6786, 0.0
        %s6803 = scalar_lea.vmem %s296, 128 [#allocation12]
        %6804 = vst [vmem:[%s6803] sm:$0xff] %v6787
        %6805 = vst [vmem:[%s6803 + $0x8] sm:$0xff] %v6788
        %6806 = vst [vmem:[%s6803 + $0x10] sm:$0xff] %v6789
        %6807 = vst [vmem:[%s6803 + $0x18] sm:$0xff] %v6790
        %6808 = vst [vmem:[%s6803 + $0x20] sm:$0xff] %v6791
        %6809 = vst [vmem:[%s6803 + $0x28] sm:$0xff] %v6792
        %6810 = vst [vmem:[%s6803 + $0x30] sm:$0xff] %v6793
        %6811 = vst [vmem:[%s6803 + $0x38] sm:$0xff] %v6794
        %6812 = vst [vmem:[%s6803 + $0x40] sm:$0xff] %v6795
        %6813 = vst [vmem:[%s6803 + $0x48] sm:$0xff] %v6796
        %6814 = vst [vmem:[%s6803 + $0x50] sm:$0xff] %v6797
        %6815 = vst [vmem:[%s6803 + $0x58] sm:$0xff] %v6798
        %6816 = vst [vmem:[%s6803 + $0x60] sm:$0xff] %v6799
        %6817 = vst [vmem:[%s6803 + $0x68] sm:$0xff] %v6800
        %6818 = vst [vmem:[%s6803 + $0x70] sm:$0xff] %v6801
        %6819 = vst [vmem:[%s6803 + $0x78] sm:$0xff] %v6802
        %s6820 = sand.u32 %s142, 1
        %s6821 = scalar_lea.sflag [#allocation5], %s6820
        %s6822 = sand.u32 %s142, 1
        %s6823 = smul.addr %s6822, 256
        %s6824 = scalar_lea.vmem [#allocation12], %s6823
        // Predicated region
        $region61: #{tpu_custom_call.1} parent=39 // pred_check
          %p6825 = pneg %p152
        $region62: #{tpu_custom_call.1} parent=39 // pred_check_branch
          %6827 = sbr.rel (%p6825) target = $region64
        $region63: #{tpu_custom_call.1} parent=39 // pred_region
          %s6829 = ssub.s32 4096, 4096
          %6830 = vsyncadd %s6821, %s6829
          %s6831 = smul.addr %s24, 32
          %s6832 = smul.addr %s6831, 128
          %s6833 = scalar_lea.hbm %s5, %s6832
          %s6834 = sshll.u32 %s6824, 4
          %s6835 = int_to_ptr.vmem [resolvable:$true] %s6834
          %6840 = dma.vmem_to_hbm [thread:$0]  %s6835, 4096, %s6833, %s6821, 128, 128, 8
        $region64: #{tpu_custom_call.1} parent=39 // pred_fallthru
          _
      $region40: #{tpu_custom_call.1} parent=5 // pred_fallthru
        _
      %p6841 = scmp.le.s32.totalorder 2, %s19
      // Predicated region
      $region65: #{tpu_custom_call.1} parent=5 // pred_check
        %p6842 = pneg %p6841
      $region66: #{tpu_custom_call.1} parent=5 // pred_check_branch
        %6844 = sbr.rel (%p6842) target = $region68
      $region67: #{tpu_custom_call.1} parent=5 // pred_region
        %s6845 = ssub.s32 %s19, 2
        // Predicated region
        $region69: #{tpu_custom_call.1} parent=67 // pred_check
          %p6846 = pneg %p158
        $region70: #{tpu_custom_call.1} parent=67 // pred_check_branch
          %6848 = sbr.rel (%p6846) target = $region72
        $region71: #{tpu_custom_call.1} parent=67 // pred_region
          %s6849 = sand.u32 %s143, 1
          %s6850 = scalar_lea.sflag [#allocation5], %s6849
          %s6851 = sand.u32 %s143, 1
          %s6852 = smul.addr %s6851, 256
          %s6853 = scalar_lea.vmem [#allocation12], %s6852
          %6854 = dma.done %s6850, 4096
        $region72: #{tpu_custom_call.1} parent=67 // pred_fallthru
          _
      $region68: #{tpu_custom_call.1} parent=5 // pred_fallthru
        _
    $region6: #{tpu_custom_call.1} parent=1 // loop_footer
      %s23 = sadd.s32 1, %s19
    $region7: #{tpu_custom_call.1} parent=1 // loop_footer_branch
      %18 = sbr.rel target = $region3
    $region8: #{tpu_custom_call.1} parent=1 // loop_exit
      _
    %6855 = vsyncpa [#allocation4], 1
    %s6856 = scalar_lea.sflag [#allocation4], 1
    %6857 = vsyncpa %s6856, 1
    %6858 = vsyncpa [#allocation7], 1
    %6859 = vsyncpa [#allocation10], 1
    %6860 = vsyncpa [#allocation5], 1
    %s6861 = scalar_lea.sflag [#allocation5], 1
    %6862 = vsyncpa %s6861, 1

</llo_original>
